<compile_context>
chip_gen: v6e
topology: v6e:2x2x1
jax: 0.10.0
libtpu: 0.0.40
codegen_flags: <defaults>
</compile_context>

<pallas_src>
import jax
import jax.numpy as jnp
from jax.experimental import pallas as pl
from jax.experimental.pallas import tpu as pltpu

# ---- module hyper-parameters (from QMixer_WGAN.__init__) -------------------
N_AGENTS = 4                       # args.n_agents  (= in_dim)
STATE_DIM = 24                     # int(np.prod(args.state_shape))
EMBED = 32                         # args.mixing_embed_dim
HYPER = 64                         # args.hypernet_embed
HIDDEN = (32, 32, 32)              # self.hidden_layer_sizes
RANK = 1
STRONG_CONVEXITY = 1e-6


def _elu(x):
    # elu / celu with alpha=1 (identical for alpha=1)
    return jnp.where(x > 0, x, jnp.exp(jnp.minimum(x, 0.0)) - 1.0)


# ---------------------------------------------------------------------------
# Fused mixer kernel: one batch tile of tile_b rows per grid step.
# ---------------------------------------------------------------------------
def qmix_kernel(qs_ref, st_ref,
                stw_ref, stb_ref,            # fused state-conditioned first stage (S, 256)
                linw_ref, linb_ref,          # fused quadratic-layer linear part (A, 96)
                w1b_ref, b1b_ref,            # hyper_w_1 second stage (HYPER, H0*E)
                w2b_ref, b2b_ref,            # hyper_w_2 second stage (HYPER, E*E)
                wfb_ref, bfb_ref,            # hyper_w_final second stage (HYPER, E)
                rep_ref, sel_ref,            # constant 0/1 replicate / select matrices
                fcoef_ref, fbias_ref,        # final-reduction coefficients
                o_ref):
    f32 = jnp.float32
    H0, E, HY = HIDDEN[0], EMBED, HYPER

    qs = qs_ref[...]                                               # (tB, A)
    st = st_ref[...]                                               # (tB, S)

    # ---- one lane-dense matmul for all state-conditioned first stages ----
    st_all = jnp.dot(st, stw_ref[...], preferred_element_type=f32) + stb_ref[...]   # (tB, 256)
    h1 = jnp.maximum(st_all[:, 0:HY], 0.0)                         # relu(hyper_w_1 stage 1)
    h2 = jnp.maximum(st_all[:, HY:2 * HY], 0.0)                    # relu(hyper_w_2 stage 1)
    hf = jnp.maximum(st_all[:, 2 * HY:3 * HY], 0.0)                # relu(hyper_w_final stage 1)
    b1 = st_all[:, 3 * HY:3 * HY + E]                              # hyper_b_1(st)
    b2 = st_all[:, 3 * HY + E:3 * HY + 2 * E]                      # hyper_b_2(st)

    # ---- all three ConvexQuadratic layers in one matmul (quadvec + bias pre-folded) ----
    quad_all = jnp.dot(qs, linw_ref[...], preferred_element_type=f32) + linb_ref[...]  # (tB, 96)
    q0 = quad_all[:, 0:H0]
    q1 = quad_all[:, H0:2 * H0]
    q2 = quad_all[:, 2 * H0:3 * H0]

    rep = rep_ref[...]                                             # (K, K*E) 0/1
    sel = sel_ref[...]                                             # (K*E, E) 0/1

    def bmm_rowwise(x, wflat):
        # hidden[b, e] = sum_k x[b, k] * wflat[b, k*E + e]
        # replicate x onto the MXU, one full-width VPU multiply, selector-matmul reduce.
        x_exp = jnp.dot(x, rep, preferred_element_type=f32)        # (tB, K*E)
        return jnp.dot(x_exp * wflat, sel, preferred_element_type=f32)   # (tB, E)

    # ---- layer 1 ----
    w1 = jnp.abs(jnp.dot(h1, w1b_ref[...], preferred_element_type=f32) + b1b_ref[...])  # (tB, H0*E)
    hidden1 = _elu(bmm_rowwise(q0, w1) + b1)                       # (tB, E)
    out = _elu(hidden1 + q1)                                       # celu

    # ---- layer 2 ----
    w2 = jnp.abs(jnp.dot(h2, w2b_ref[...], preferred_element_type=f32) + b2b_ref[...])  # (tB, E*E)
    hidden2 = _elu(bmm_rowwise(out, w2) + b2)                      # (tB, E)
    out = _elu(hidden2 + q2)                                       # celu

    # ---- final: lane-dense (1, tB) result ----
    wf = -jnp.abs(jnp.dot(hf, wfb_ref[...], preferred_element_type=f32) + bfb_ref[...])  # (tB, E)
    # row[b] = sum_e out*wf + st·hbf_w + 0.5*sc*sum_i qs^2   (coefficients live in fcoef)
    zext = jnp.concatenate([out * wf, st, qs * qs], axis=1)        # (tB, E + S + A)
    row = jax.lax.dot_general(fcoef_ref[...], zext,
                              dimension_numbers=(((1,), (1,)), ((), ())),
                              preferred_element_type=f32)          # (1, tB)
    o_ref[...] = row + fbias_ref[...]                              # + hyper_b_final bias


# ---------------------------------------------------------------------------
# Wrapper
# ---------------------------------------------------------------------------
def qmixer_wgan_forward(agent_qs, states, p, tile_b=256):
    bs, T, A = agent_qs.shape
    assert A == N_AGENTS
    assert HIDDEN[0] == EMBED                       # rep/sel shared by both bmm layers
    assert tile_b % 8 == 0
    B = bs * T
    H0, E = HIDDEN[0], EMBED

    qs2 = agent_qs.reshape(B, A).astype(jnp.float32)
    st2 = states.reshape(B, STATE_DIM).astype(jnp.float32)

    # Batch-global quadratic vectors (torch quirk): computed in plain JAX on the
    # UNPADDED batch so the padding below cannot corrupt them.
    proj = jnp.einsum('ba,jah->jbh', qs2, p['quad_decomposed'])    # (3, B, H0)
    quadvec = jnp.sum(proj * proj, axis=1)                         # (3, H0)

    # ---- fold / concatenate constants once, outside the kernel ----
    lin_w_cat = jnp.transpose(p['lin_w'], (1, 0, 2)).reshape(A, 3 * H0)      # (A, 96)
    lin_b_cat = (p['lin_b'] + quadvec).reshape(1, 3 * H0)                    # (1, 96)

    stw_cat = jnp.concatenate([p['hw1_wa'], p['hw2_wa'], p['hwf_wa'],
                               p['hb1_w'], p['hb2_w']], axis=1)              # (S, 256)
    stb_cat = jnp.concatenate([p['hw1_ba'], p['hw2_ba'], p['hwf_ba'],
                               p['hb1_b'], p['hb2_b']], axis=1)              # (1, 256)

    # constant 0/1 matrices for the row-wise bmm (K = H0 = E = 32)
    m = jnp.arange(H0 * E)
    rep = (m[None, :] // E == jnp.arange(H0)[:, None]).astype(jnp.float32)   # (K, K*E)
    sel = (m[:, None] % E == jnp.arange(E)[None, :]).astype(jnp.float32)     # (K*E, E)

    # final-reduction coefficients: [ones for wf·out | hbf_w for st | 0.5*sc for qs^2]
    fcoef = jnp.concatenate([jnp.ones((1, E), jnp.float32),
                             p['hbf_w'].reshape(1, STATE_DIM),
                             jnp.full((1, A), 0.5 * STRONG_CONVEXITY, jnp.float32)],
                            axis=1)                                          # (1, E+S+A)
    fbias = p['hbf_b'].reshape(1, 1)

    # ---- pad batch to a multiple of tile_b (padded rows are discarded afterwards) ----
    num_tiles = pl.cdiv(B, tile_b)
    B_pad = num_tiles * tile_b
    if B_pad != B:
        qs2 = jnp.pad(qs2, ((0, B_pad - B), (0, 0)))
        st2 = jnp.pad(st2, ((0, B_pad - B), (0, 0)))

    consts = [stw_cat, stb_cat, lin_w_cat, lin_b_cat,
              p['hw1_wb'], p['hw1_bb'], p['hw2_wb'], p['hw2_bb'],
              p['hwf_wb'], p['hwf_bb'], rep, sel, fcoef, fbias]

    def row_spec(n):
        return pl.BlockSpec((tile_b, n), lambda i: (i, 0))

    def full_spec(a):
        return pl.BlockSpec(a.shape, lambda i, nd=a.ndim: (0,) * nd)

    in_specs = [row_spec(A), row_spec(STATE_DIM)] + [full_spec(c) for c in consts]

    out = pl.pallas_call(
        qmix_kernel,
        out_shape=jax.ShapeDtypeStruct((1, B_pad), jnp.float32),
        grid=(num_tiles,),
        in_specs=in_specs,
        out_specs=pl.BlockSpec((1, tile_b), lambda i: (0, i)),      # lane-dense output block
        compiler_params=pltpu.CompilerParams(dimension_semantics=("parallel",)),
    )(qs2, st2, *consts)

    return out[0, :B].reshape(bs, T, 1)                             # q_tot: (bs, T, 1)


# ---------------------------------------------------------------------------
# Deterministic parameter init (shapes from __init__; synthetic, not a checkpoint)
# ---------------------------------------------------------------------------
def init_params(key):
    ks = jax.random.split(key, 12)

    def lin(k, fan_in, fan_out):
        kw, kb = jax.random.split(k)
        lim = 1.0 / jnp.sqrt(jnp.float32(fan_in))
        W = jax.random.uniform(kw, (fan_in, fan_out), jnp.float32, -lim, lim)
        b = jax.random.uniform(kb, (1, fan_out), jnp.float32, -lim, lim)
        return W, b

    p = {}
    # ConvexQuadratic layers (rank=1 squeezed out): quadratic_decomposed (3, A, H0),
    # linear weight stored pre-transposed (3, A, H0), bias (3, H0) (torch init = zeros)
    p['quad_decomposed'] = 0.3 * jax.random.normal(ks[0], (3, N_AGENTS, HIDDEN[0]), jnp.float32)
    p['lin_w'] = 0.3 * jax.random.normal(ks[1], (3, N_AGENTS, HIDDEN[0]), jnp.float32)
    p['lin_b'] = jnp.zeros((3, HIDDEN[0]), jnp.float32)
    # hypernetworks
    p['hw1_wa'], p['hw1_ba'] = lin(ks[2], STATE_DIM, HYPER)
    p['hw1_wb'], p['hw1_bb'] = lin(ks[3], HYPER, EMBED * HIDDEN[0])
    p['hw2_wa'], p['hw2_ba'] = lin(ks[4], STATE_DIM, HYPER)
    p['hw2_wb'], p['hw2_bb'] = lin(ks[5], HYPER, EMBED * EMBED)
    p['hwf_wa'], p['hwf_ba'] = lin(ks[6], STATE_DIM, HYPER)
    p['hwf_wb'], p['hwf_bb'] = lin(ks[7], HYPER, EMBED)
    p['hb1_w'], p['hb1_b'] = lin(ks[8], STATE_DIM, EMBED)
    p['hb2_w'], p['hb2_b'] = lin(ks[9], STATE_DIM, EMBED)
    p['hbf_w'], p['hbf_b'] = lin(ks[10], STATE_DIM, 1)
    return p


# ---------------------------------------------------------------------------
# Pure-JAX reference (mirrors the torch forward semantics exactly)
# ---------------------------------------------------------------------------
def reference_forward(agent_qs, states, p):
    bs, T, A = agent_qs.shape
    B = bs * T
    qs = agent_qs.reshape(B, A)
    st = states.reshape(B, STATE_DIM)

    def quad_layer(j):
        proj = qs @ p['quad_decomposed'][j]                        # (B, H0)
        quad = jnp.sum(proj ** 2, axis=0, keepdims=True)           # (1, H0) batch-summed (torch quirk)
        lin = qs @ p['lin_w'][j] + p['lin_b'][j]
        return lin + quad

    def hyper(wa, ba, wb, bb):
        h = jax.nn.relu(st @ p[wa] + p[ba])
        return h @ p[wb] + p[bb]

    out0 = quad_layer(0)
    w1 = jnp.abs(hyper('hw1_wa', 'hw1_ba', 'hw1_wb', 'hw1_bb')).reshape(B, HIDDEN[0], EMBED)
    b1 = st @ p['hb1_w'] + p['hb1_b']
    hidden1 = _elu(jnp.einsum('bk,bke->be', out0, w1) + b1)
    out = _elu(hidden1 + quad_layer(1))
    w2 = jnp.abs(hyper('hw2_wa', 'hw2_ba', 'hw2_wb', 'hw2_bb')).reshape(B, EMBED, EMBED)
    b2 = st @ p['hb2_w'] + p['hb2_b']
    hidden2 = _elu(jnp.einsum('bk,bke->be', out, w2) + b2)
    out = _elu(hidden2 + quad_layer(2))
    wf = -jnp.abs(hyper('hwf_wa', 'hwf_ba', 'hwf_wb', 'hwf_bb'))
    bf = st @ p['hbf_w'] + p['hbf_b']
    hidden_final = jnp.sum(out * wf, axis=1, keepdims=True) + bf
    out = hidden_final + 0.5 * STRONG_CONVEXITY * jnp.sum(qs ** 2, axis=1, keepdims=True)
    return out.reshape(bs, T, 1)


if __name__ == "__main__":
    key = jax.random.PRNGKey(0)
    kp, kq, ks = jax.random.split(key, 3)
    params = init_params(kp)

    bs, T = 2, 8                                                   # B = 16 rows
    agent_qs = jax.random.normal(kq, (bs, T, N_AGENTS), jnp.float32)
    states = jax.random.normal(ks, (bs, T, STATE_DIM), jnp.float32)

    q_tot = qmixer_wgan_forward(agent_qs, states, params)
    q_tot = jax.block_until_ready(q_tot)

    ref = reference_forward(agent_qs, states, params)
    if not jnp.allclose(q_tot, ref, rtol=1e-3, atol=1e-3):
        raise AssertionError("Pallas kernel output does not match reference")
    print("KERNEL_OK")
</pallas_src>

<mosaic_0001>
module attributes {stable_mosaic.version = 11 : i64} {
  func.func @qmix_kernel(%arg0: i32, %arg1: memref<256x4xf32, #tpu.memory_space<vmem>>, %arg2: memref<256x24xf32, #tpu.memory_space<vmem>>, %arg3: memref<24x256xf32, #tpu.memory_space<vmem>>, %arg4: memref<1x256xf32, #tpu.memory_space<vmem>>, %arg5: memref<4x96xf32, #tpu.memory_space<vmem>>, %arg6: memref<1x96xf32, #tpu.memory_space<vmem>>, %arg7: memref<64x1024xf32, #tpu.memory_space<vmem>>, %arg8: memref<1x1024xf32, #tpu.memory_space<vmem>>, %arg9: memref<64x1024xf32, #tpu.memory_space<vmem>>, %arg10: memref<1x1024xf32, #tpu.memory_space<vmem>>, %arg11: memref<64x32xf32, #tpu.memory_space<vmem>>, %arg12: memref<1x32xf32, #tpu.memory_space<vmem>>, %arg13: memref<32x1024xf32, #tpu.memory_space<vmem>>, %arg14: memref<1024x32xf32, #tpu.memory_space<vmem>>, %arg15: memref<1x60xf32, #tpu.memory_space<vmem>>, %arg16: memref<1x1xf32, #tpu.memory_space<vmem>>, %arg17: memref<1x256xf32, #tpu.memory_space<vmem>>) attributes {dimension_semantics = [#tpu.dimension_semantics<parallel>], iteration_bounds = array<i64: 1>, scalar_prefetch = 0 : i64, scratch_operands = 0 : i64, tpu.core_type = #tpu.core_type<tc>, window_params = [{transform_indices = @transform_0, window_bounds = array<i64: 256, 4>}, {transform_indices = @transform_1, window_bounds = array<i64: 256, 24>}, {pipeline_mode = #tpu.pipeline_mode<synchronous>, transform_indices = @transform_2, window_bounds = array<i64: 24, 256>}, {pipeline_mode = #tpu.pipeline_mode<synchronous>, transform_indices = @transform_3, window_bounds = array<i64: 1, 256>}, {pipeline_mode = #tpu.pipeline_mode<synchronous>, transform_indices = @transform_4, window_bounds = array<i64: 4, 96>}, {pipeline_mode = #tpu.pipeline_mode<synchronous>, transform_indices = @transform_5, window_bounds = array<i64: 1, 96>}, {pipeline_mode = #tpu.pipeline_mode<synchronous>, transform_indices = @transform_6, window_bounds = array<i64: 64, 1024>}, {pipeline_mode = #tpu.pipeline_mode<synchronous>, transform_indices = @transform_7, window_bounds = array<i64: 1, 1024>}, {pipeline_mode = #tpu.pipeline_mode<synchronous>, transform_indices = @transform_8, window_bounds = array<i64: 64, 1024>}, {pipeline_mode = #tpu.pipeline_mode<synchronous>, transform_indices = @transform_9, window_bounds = array<i64: 1, 1024>}, {pipeline_mode = #tpu.pipeline_mode<synchronous>, transform_indices = @transform_10, window_bounds = array<i64: 64, 32>}, {pipeline_mode = #tpu.pipeline_mode<synchronous>, transform_indices = @transform_11, window_bounds = array<i64: 1, 32>}, {pipeline_mode = #tpu.pipeline_mode<synchronous>, transform_indices = @transform_12, window_bounds = array<i64: 32, 1024>}, {pipeline_mode = #tpu.pipeline_mode<synchronous>, transform_indices = @transform_13, window_bounds = array<i64: 1024, 32>}, {pipeline_mode = #tpu.pipeline_mode<synchronous>, transform_indices = @transform_14, window_bounds = array<i64: 1, 60>}, {pipeline_mode = #tpu.pipeline_mode<synchronous>, transform_indices = @transform_15, window_bounds = array<i64: 1, 1>}, {transform_indices = @transform_16, window_bounds = array<i64: 1, 256>}]} {
    %c0 = arith.constant 0 : index
    %c0_0 = arith.constant 0 : index
    %0 = vector.load %arg1[%c0, %c0_0] : memref<256x4xf32, #tpu.memory_space<vmem>>, vector<256x4xf32>
    %c0_1 = arith.constant 0 : index
    %c0_2 = arith.constant 0 : index
    %1 = vector.load %arg2[%c0_1, %c0_2] : memref<256x24xf32, #tpu.memory_space<vmem>>, vector<256x24xf32>
    %c0_3 = arith.constant 0 : index
    %c0_4 = arith.constant 0 : index
    %2 = vector.load %arg3[%c0_3, %c0_4] : memref<24x256xf32, #tpu.memory_space<vmem>>, vector<24x256xf32>
    %cst = arith.constant dense<0.000000e+00> : vector<256x256xf32>
    %3 = tpu.matmul %1, %2, %cst {dimension_numbers = #tpu.dot_dimension_numbers<[1], [0], [0], [1], [0, 0, 1, 1], [], []>} : vector<256x24xf32>, vector<24x256xf32>, vector<256x256xf32> -> vector<256x256xf32>
    %c0_5 = arith.constant 0 : index
    %c0_6 = arith.constant 0 : index
    %4 = vector.load %arg4[%c0_5, %c0_6] : memref<1x256xf32, #tpu.memory_space<vmem>>, vector<1x256xf32>
    %5 = vector.broadcast %4 : vector<1x256xf32> to vector<256x256xf32>
    %6 = arith.addf %3, %5 : vector<256x256xf32>
    %7 = vector.extract_strided_slice %6 {offsets = [0, 0], sizes = [256, 64], strides = [1, 1]} : vector<256x256xf32> to vector<256x64xf32>
    %cst_7 = arith.constant 0.000000e+00 : f32
    %8 = vector.broadcast %cst_7 : f32 to vector<256x64xf32>
    %9 = arith.maximumf %7, %8 : vector<256x64xf32>
    %10 = vector.extract_strided_slice %6 {offsets = [0, 64], sizes = [256, 64], strides = [1, 1]} : vector<256x256xf32> to vector<256x64xf32>
    %cst_8 = arith.constant 0.000000e+00 : f32
    %11 = vector.broadcast %cst_8 : f32 to vector<256x64xf32>
    %12 = arith.maximumf %10, %11 : vector<256x64xf32>
    %13 = vector.extract_strided_slice %6 {offsets = [0, 128], sizes = [256, 64], strides = [1, 1]} : vector<256x256xf32> to vector<256x64xf32>
    %cst_9 = arith.constant 0.000000e+00 : f32
    %14 = vector.broadcast %cst_9 : f32 to vector<256x64xf32>
    %15 = arith.maximumf %13, %14 : vector<256x64xf32>
    %16 = vector.extract_strided_slice %6 {offsets = [0, 192], sizes = [256, 32], strides = [1, 1]} : vector<256x256xf32> to vector<256x32xf32>
    %17 = vector.extract_strided_slice %6 {offsets = [0, 224], sizes = [256, 32], strides = [1, 1]} : vector<256x256xf32> to vector<256x32xf32>
    %c0_10 = arith.constant 0 : index
    %c0_11 = arith.constant 0 : index
    %18 = vector.load %arg5[%c0_10, %c0_11] : memref<4x96xf32, #tpu.memory_space<vmem>>, vector<4x96xf32>
    %cst_12 = arith.constant dense<0.000000e+00> : vector<256x96xf32>
    %19 = tpu.matmul %0, %18, %cst_12 {dimension_numbers = #tpu.dot_dimension_numbers<[1], [0], [0], [1], [0, 0, 1, 1], [], []>} : vector<256x4xf32>, vector<4x96xf32>, vector<256x96xf32> -> vector<256x96xf32>
    %c0_13 = arith.constant 0 : index
    %c0_14 = arith.constant 0 : index
    %20 = vector.load %arg6[%c0_13, %c0_14] : memref<1x96xf32, #tpu.memory_space<vmem>>, vector<1x96xf32>
    %21 = vector.broadcast %20 : vector<1x96xf32> to vector<256x96xf32>
    %22 = arith.addf %19, %21 : vector<256x96xf32>
    %23 = vector.extract_strided_slice %22 {offsets = [0, 0], sizes = [256, 32], strides = [1, 1]} : vector<256x96xf32> to vector<256x32xf32>
    %24 = vector.extract_strided_slice %22 {offsets = [0, 32], sizes = [256, 32], strides = [1, 1]} : vector<256x96xf32> to vector<256x32xf32>
    %25 = vector.extract_strided_slice %22 {offsets = [0, 64], sizes = [256, 32], strides = [1, 1]} : vector<256x96xf32> to vector<256x32xf32>
    %c0_15 = arith.constant 0 : index
    %c0_16 = arith.constant 0 : index
    %26 = vector.load %arg13[%c0_15, %c0_16] : memref<32x1024xf32, #tpu.memory_space<vmem>>, vector<32x1024xf32>
    %c0_17 = arith.constant 0 : index
    %c0_18 = arith.constant 0 : index
    %27 = vector.load %arg14[%c0_17, %c0_18] : memref<1024x32xf32, #tpu.memory_space<vmem>>, vector<1024x32xf32>
    %c0_19 = arith.constant 0 : index
    %c0_20 = arith.constant 0 : index
    %28 = vector.load %arg7[%c0_19, %c0_20] : memref<64x1024xf32, #tpu.memory_space<vmem>>, vector<64x1024xf32>
    %cst_21 = arith.constant dense<0.000000e+00> : vector<256x1024xf32>
    %29 = tpu.matmul %9, %28, %cst_21 {dimension_numbers = #tpu.dot_dimension_numbers<[1], [0], [0], [1], [0, 0, 1, 1], [], []>} : vector<256x64xf32>, vector<64x1024xf32>, vector<256x1024xf32> -> vector<256x1024xf32>
    %c0_22 = arith.constant 0 : index
    %c0_23 = arith.constant 0 : index
    %30 = vector.load %arg8[%c0_22, %c0_23] : memref<1x1024xf32, #tpu.memory_space<vmem>>, vector<1x1024xf32>
    %31 = vector.broadcast %30 : vector<1x1024xf32> to vector<256x1024xf32>
    %32 = arith.addf %29, %31 : vector<256x1024xf32>
    %33 = math.absf %32 : vector<256x1024xf32>
    %cst_24 = arith.constant dense<0.000000e+00> : vector<256x1024xf32>
    %34 = tpu.matmul %23, %26, %cst_24 {dimension_numbers = #tpu.dot_dimension_numbers<[1], [0], [0], [1], [0, 0, 1, 1], [], []>} : vector<256x32xf32>, vector<32x1024xf32>, vector<256x1024xf32> -> vector<256x1024xf32>
    %35 = arith.mulf %34, %33 : vector<256x1024xf32>
    %cst_25 = arith.constant dense<0.000000e+00> : vector<256x32xf32>
    %36 = tpu.matmul %35, %27, %cst_25 {dimension_numbers = #tpu.dot_dimension_numbers<[1], [0], [0], [1], [0, 0, 1, 1], [], []>} : vector<256x1024xf32>, vector<1024x32xf32>, vector<256x32xf32> -> vector<256x32xf32>
    %37 = arith.addf %36, %16 : vector<256x32xf32>
    %cst_26 = arith.constant 0.000000e+00 : f32
    %38 = vector.broadcast %cst_26 : f32 to vector<256x32xf32>
    %39 = arith.cmpf ogt, %37, %38 : vector<256x32xf32>
    %cst_27 = arith.constant 0.000000e+00 : f32
    %40 = vector.broadcast %cst_27 : f32 to vector<256x32xf32>
    %41 = arith.minimumf %37, %40 : vector<256x32xf32>
    %42 = math.exp %41 : vector<256x32xf32>
    %cst_28 = arith.constant 1.000000e+00 : f32
    %43 = vector.broadcast %cst_28 : f32 to vector<256x32xf32>
    %44 = arith.subf %42, %43 : vector<256x32xf32>
    %45 = arith.select %39, %37, %44 : vector<256x32xi1>, vector<256x32xf32>
    %46 = arith.addf %45, %24 : vector<256x32xf32>
    %cst_29 = arith.constant 0.000000e+00 : f32
    %47 = vector.broadcast %cst_29 : f32 to vector<256x32xf32>
    %48 = arith.cmpf ogt, %46, %47 : vector<256x32xf32>
    %cst_30 = arith.constant 0.000000e+00 : f32
    %49 = vector.broadcast %cst_30 : f32 to vector<256x32xf32>
    %50 = arith.minimumf %46, %49 : vector<256x32xf32>
    %51 = math.exp %50 : vector<256x32xf32>
    %cst_31 = arith.constant 1.000000e+00 : f32
    %52 = vector.broadcast %cst_31 : f32 to vector<256x32xf32>
    %53 = arith.subf %51, %52 : vector<256x32xf32>
    %54 = arith.select %48, %46, %53 : vector<256x32xi1>, vector<256x32xf32>
    %c0_32 = arith.constant 0 : index
    %c0_33 = arith.constant 0 : index
    %55 = vector.load %arg9[%c0_32, %c0_33] : memref<64x1024xf32, #tpu.memory_space<vmem>>, vector<64x1024xf32>
    %cst_34 = arith.constant dense<0.000000e+00> : vector<256x1024xf32>
    %56 = tpu.matmul %12, %55, %cst_34 {dimension_numbers = #tpu.dot_dimension_numbers<[1], [0], [0], [1], [0, 0, 1, 1], [], []>} : vector<256x64xf32>, vector<64x1024xf32>, vector<256x1024xf32> -> vector<256x1024xf32>
    %c0_35 = arith.constant 0 : index
    %c0_36 = arith.constant 0 : index
    %57 = vector.load %arg10[%c0_35, %c0_36] : memref<1x1024xf32, #tpu.memory_space<vmem>>, vector<1x1024xf32>
    %58 = vector.broadcast %57 : vector<1x1024xf32> to vector<256x1024xf32>
    %59 = arith.addf %56, %58 : vector<256x1024xf32>
    %60 = math.absf %59 : vector<256x1024xf32>
    %cst_37 = arith.constant dense<0.000000e+00> : vector<256x1024xf32>
    %61 = tpu.matmul %54, %26, %cst_37 {dimension_numbers = #tpu.dot_dimension_numbers<[1], [0], [0], [1], [0, 0, 1, 1], [], []>} : vector<256x32xf32>, vector<32x1024xf32>, vector<256x1024xf32> -> vector<256x1024xf32>
    %62 = arith.mulf %61, %60 : vector<256x1024xf32>
    %cst_38 = arith.constant dense<0.000000e+00> : vector<256x32xf32>
    %63 = tpu.matmul %62, %27, %cst_38 {dimension_numbers = #tpu.dot_dimension_numbers<[1], [0], [0], [1], [0, 0, 1, 1], [], []>} : vector<256x1024xf32>, vector<1024x32xf32>, vector<256x32xf32> -> vector<256x32xf32>
    %64 = arith.addf %63, %17 : vector<256x32xf32>
    %cst_39 = arith.constant 0.000000e+00 : f32
    %65 = vector.broadcast %cst_39 : f32 to vector<256x32xf32>
    %66 = arith.cmpf ogt, %64, %65 : vector<256x32xf32>
    %cst_40 = arith.constant 0.000000e+00 : f32
    %67 = vector.broadcast %cst_40 : f32 to vector<256x32xf32>
    %68 = arith.minimumf %64, %67 : vector<256x32xf32>
    %69 = math.exp %68 : vector<256x32xf32>
    %cst_41 = arith.constant 1.000000e+00 : f32
    %70 = vector.broadcast %cst_41 : f32 to vector<256x32xf32>
    %71 = arith.subf %69, %70 : vector<256x32xf32>
    %72 = arith.select %66, %64, %71 : vector<256x32xi1>, vector<256x32xf32>
    %73 = arith.addf %72, %25 : vector<256x32xf32>
    %cst_42 = arith.constant 0.000000e+00 : f32
    %74 = vector.broadcast %cst_42 : f32 to vector<256x32xf32>
    %75 = arith.cmpf ogt, %73, %74 : vector<256x32xf32>
    %cst_43 = arith.constant 0.000000e+00 : f32
    %76 = vector.broadcast %cst_43 : f32 to vector<256x32xf32>
    %77 = arith.minimumf %73, %76 : vector<256x32xf32>
    %78 = math.exp %77 : vector<256x32xf32>
    %cst_44 = arith.constant 1.000000e+00 : f32
    %79 = vector.broadcast %cst_44 : f32 to vector<256x32xf32>
    %80 = arith.subf %78, %79 : vector<256x32xf32>
    %81 = arith.select %75, %73, %80 : vector<256x32xi1>, vector<256x32xf32>
    %c0_45 = arith.constant 0 : index
    %c0_46 = arith.constant 0 : index
    %82 = vector.load %arg11[%c0_45, %c0_46] : memref<64x32xf32, #tpu.memory_space<vmem>>, vector<64x32xf32>
    %cst_47 = arith.constant dense<0.000000e+00> : vector<256x32xf32>
    %83 = tpu.matmul %15, %82, %cst_47 {dimension_numbers = #tpu.dot_dimension_numbers<[1], [0], [0], [1], [0, 0, 1, 1], [], []>} : vector<256x64xf32>, vector<64x32xf32>, vector<256x32xf32> -> vector<256x32xf32>
    %c0_48 = arith.constant 0 : index
    %c0_49 = arith.constant 0 : index
    %84 = vector.load %arg12[%c0_48, %c0_49] : memref<1x32xf32, #tpu.memory_space<vmem>>, vector<1x32xf32>
    %85 = vector.broadcast %84 : vector<1x32xf32> to vector<256x32xf32>
    %86 = arith.addf %83, %85 : vector<256x32xf32>
    %87 = math.absf %86 : vector<256x32xf32>
    %cst_50 = arith.constant 0.000000e+00 : f32
    %88 = vector.broadcast %cst_50 : f32 to vector<256x32xf32>
    %89 = arith.subf %88, %87 : vector<256x32xf32>
    %90 = arith.mulf %81, %89 : vector<256x32xf32>
    %91 = arith.mulf %0, %0 : vector<256x4xf32>
    %92 = tpu.concatenate %90, %1, %91 in 1 : vector<256x32xf32>, vector<256x24xf32>, vector<256x4xf32> -> vector<256x60xf32>
    %c0_51 = arith.constant 0 : index
    %c0_52 = arith.constant 0 : index
    %93 = vector.load %arg15[%c0_51, %c0_52] : memref<1x60xf32, #tpu.memory_space<vmem>>, vector<1x60xf32>
    %cst_53 = arith.constant dense<0.000000e+00> : vector<1x256xf32>
    %94 = tpu.matmul %93, %92, %cst_53 {dimension_numbers = #tpu.dot_dimension_numbers<[1], [1], [0], [0], [0, 0, 1, 0], [], []>} : vector<1x60xf32>, vector<256x60xf32>, vector<1x256xf32> -> vector<1x256xf32>
    %c0_54 = arith.constant 0 : index
    %c0_55 = arith.constant 0 : index
    %95 = vector.load %arg16[%c0_54, %c0_55] : memref<1x1xf32, #tpu.memory_space<vmem>>, vector<1x1xf32>
    %96 = vector.broadcast %95 : vector<1x1xf32> to vector<1x256xf32>
    %97 = arith.addf %94, %96 : vector<1x256xf32>
    %c0_56 = arith.constant 0 : index
    %c0_57 = arith.constant 0 : index
    %98 = vector.load %arg17[%c0_56, %c0_57] : memref<1x256xf32, #tpu.memory_space<vmem>>, vector<1x256xf32>
    tpu.vector_store %arg17[%c0_56, %c0_57], %97 {strides = array<i32>} : memref<1x256xf32, #tpu.memory_space<vmem>>, vector<1x256xf32>,
    return
  }
  func.func @transform_0(%arg0: i32) -> (i32, i32) {
    %c0_i32 = arith.constant 0 : i32
    %c0_i32_0 = arith.constant 0 : i32
    return %arg0, %c0_i32 : i32, i32
  }
  func.func @transform_1(%arg0: i32) -> (i32, i32) {
    %c0_i32 = arith.constant 0 : i32
    %c0_i32_0 = arith.constant 0 : i32
    return %arg0, %c0_i32 : i32, i32
  }
  func.func @transform_2(%arg0: i32) -> (i32, i32) {
    %c0_i32 = arith.constant 0 : i32
    %c0_i32_0 = arith.constant 0 : i32
    %c0_i32_1 = arith.constant 0 : i32
    return %c0_i32, %c0_i32_0 : i32, i32
  }
  func.func @transform_3(%arg0: i32) -> (i32, i32) {
    %c0_i32 = arith.constant 0 : i32
    %c0_i32_0 = arith.constant 0 : i32
    %c0_i32_1 = arith.constant 0 : i32
    return %c0_i32, %c0_i32_0 : i32, i32
  }
  func.func @transform_4(%arg0: i32) -> (i32, i32) {
    %c0_i32 = arith.constant 0 : i32
    %c0_i32_0 = arith.constant 0 : i32
    %c0_i32_1 = arith.constant 0 : i32
    return %c0_i32, %c0_i32_0 : i32, i32
  }
  func.func @transform_5(%arg0: i32) -> (i32, i32) {
    %c0_i32 = arith.constant 0 : i32
    %c0_i32_0 = arith.constant 0 : i32
    %c0_i32_1 = arith.constant 0 : i32
    return %c0_i32, %c0_i32_0 : i32, i32
  }
  func.func @transform_6(%arg0: i32) -> (i32, i32) {
    %c0_i32 = arith.constant 0 : i32
    %c0_i32_0 = arith.constant 0 : i32
    %c0_i32_1 = arith.constant 0 : i32
    return %c0_i32, %c0_i32_0 : i32, i32
  }
  func.func @transform_7(%arg0: i32) -> (i32, i32) {
    %c0_i32 = arith.constant 0 : i32
    %c0_i32_0 = arith.constant 0 : i32
    %c0_i32_1 = arith.constant 0 : i32
    return %c0_i32, %c0_i32_0 : i32, i32
  }
  func.func @transform_8(%arg0: i32) -> (i32, i32) {
    %c0_i32 = arith.constant 0 : i32
    %c0_i32_0 = arith.constant 0 : i32
    %c0_i32_1 = arith.constant 0 : i32
    return %c0_i32, %c0_i32_0 : i32, i32
  }
  func.func @transform_9(%arg0: i32) -> (i32, i32) {
    %c0_i32 = arith.constant 0 : i32
    %c0_i32_0 = arith.constant 0 : i32
    %c0_i32_1 = arith.constant 0 : i32
    return %c0_i32, %c0_i32_0 : i32, i32
  }
  func.func @transform_10(%arg0: i32) -> (i32, i32) {
    %c0_i32 = arith.constant 0 : i32
    %c0_i32_0 = arith.constant 0 : i32
    %c0_i32_1 = arith.constant 0 : i32
    return %c0_i32, %c0_i32_0 : i32, i32
  }
  func.func @transform_11(%arg0: i32) -> (i32, i32) {
    %c0_i32 = arith.constant 0 : i32
    %c0_i32_0 = arith.constant 0 : i32
    %c0_i32_1 = arith.constant 0 : i32
    return %c0_i32, %c0_i32_0 : i32, i32
  }
  func.func @transform_12(%arg0: i32) -> (i32, i32) {
    %c0_i32 = arith.constant 0 : i32
    %c0_i32_0 = arith.constant 0 : i32
    %c0_i32_1 = arith.constant 0 : i32
    return %c0_i32, %c0_i32_0 : i32, i32
  }
  func.func @transform_13(%arg0: i32) -> (i32, i32) {
    %c0_i32 = arith.constant 0 : i32
    %c0_i32_0 = arith.constant 0 : i32
    %c0_i32_1 = arith.constant 0 : i32
    return %c0_i32, %c0_i32_0 : i32, i32
  }
  func.func @transform_14(%arg0: i32) -> (i32, i32) {
    %c0_i32 = arith.constant 0 : i32
    %c0_i32_0 = arith.constant 0 : i32
    %c0_i32_1 = arith.constant 0 : i32
    return %c0_i32, %c0_i32_0 : i32, i32
  }
  func.func @transform_15(%arg0: i32) -> (i32, i32) {
    %c0_i32 = arith.constant 0 : i32
    %c0_i32_0 = arith.constant 0 : i32
    %c0_i32_1 = arith.constant 0 : i32
    return %c0_i32, %c0_i32_0 : i32, i32
  }
  func.func @transform_16(%arg0: i32) -> (i32, i32) {
    %c0_i32 = arith.constant 0 : i32
    %c0_i32_0 = arith.constant 0 : i32
    return %c0_i32, %arg0 : i32, i32
  }
}

</mosaic_0001>

<llo_original>
// kernel: tpu_custom_call.1
$region0: #{tpu_custom_call.1}
  #allocation0 [shape = 'u32[]', space=smem, size = 0x4, offset = 0x4, fixed_abs, tag = 'smem constant byte address 0x4 - core index']
  #allocation1 [shape = 'u32[144,128]{1,0:T(1,128)}', space=vmem, size = 0x12000, scoped, tag = 'internal scratch']
  #allocation2 [shape = 'f32[1,1]{1,0:T(1,128)S(1)}', space=vmem, size = 0x200, scoped, tag = 'scoped memory for tpu_custom_call.1']
  %s0 = inlined_call_operand.vmem [shape: f32[256,4], index: 0, kind: input, shape index: {}]
  %s1 = inlined_call_operand.vmem [shape: f32[256,24], index: 1, kind: input, shape index: {}]
  %s2 = inlined_call_operand.vmem [shape: f32[24,256], index: 2, kind: input, shape index: {}]
  %s3 = inlined_call_operand.vmem [shape: f32[1,256], index: 3, kind: input, shape index: {}]
  %s4 = inlined_call_operand.vmem [shape: f32[4,96], index: 4, kind: input, shape index: {}]
  %s5 = inlined_call_operand.vmem [shape: f32[1,96], index: 5, kind: input, shape index: {}]
  %s6 = inlined_call_operand.vmem [shape: f32[64,1024], index: 6, kind: input, shape index: {}]
  %s7 = inlined_call_operand.vmem [shape: f32[1,1024], index: 7, kind: input, shape index: {}]
  %s8 = inlined_call_operand.vmem [shape: f32[64,1024], index: 8, kind: input, shape index: {}]
  %s9 = inlined_call_operand.vmem [shape: f32[1,1024], index: 9, kind: input, shape index: {}]
  %s10 = inlined_call_operand.vmem [shape: f32[64,32], index: 10, kind: input, shape index: {}]
  %s11 = inlined_call_operand.vmem [shape: f32[1,32], index: 11, kind: input, shape index: {}]
  %s12 = inlined_call_operand.vmem [shape: f32[32,1024], index: 12, kind: input, shape index: {}]
  %s13 = inlined_call_operand.vmem [shape: f32[1024,32], index: 13, kind: input, shape index: {}]
  %s14 = inlined_call_operand.vmem [shape: f32[1,60], index: 14, kind: input, shape index: {}]
  %s15 = inlined_call_operand.<no memory space> [shape: f32[1,1], index: 15, kind: input, shape index: {}]
  %s16 = inlined_call_operand.hbm [shape: f32[1,256], index: 16, kind: output, shape index: {}]
  %s17 = sld [smem:[#allocation0]]
  $region74: #{tpu_custom_call.1} parent=0
    _
  %s19 = ssub.s32 1, %s17
  %s20 = scalar_select 0, %s19, %s17
  %v21 = vstv %s15
  %22 = vst [vmem:[#allocation2] sm:$0x1] %v21
  $region1: #{tpu_custom_call.1} parent=0
    #allocation3 [shape = 'u8[1024]{0}', space=vmem, size = 0x400, scoped, tag = 'output window, operand 0, single buffered']
    #allocation4 [shape = 's32[1]{0}', space=sflag, size = 0x4, scoped, tag = 'scoped memory for tpu_custom_call.1']
    %23 = vsyncpa [#allocation4], 0
    // Predicated region
    $region2: #{tpu_custom_call.1} parent=1 // pred_check
      _
    $region3: #{tpu_custom_call.1} parent=1 // pred_check_branch
      %25 = sbr.rel (0) target = $region5
    $region4: #{tpu_custom_call.1} parent=1 // pred_region
      _
    $region5: #{tpu_custom_call.1} parent=1 // pred_fallthru
      _
    // Predicated region
    $region6: #{tpu_custom_call.1} parent=1 // pred_check
      _
    $region7: #{tpu_custom_call.1} parent=1 // pred_check_branch
      %27 = sbr.rel (0) target = $region9
    $region8: #{tpu_custom_call.1} parent=1 // pred_region
      _
    $region9: #{tpu_custom_call.1} parent=1 // pred_fallthru
      _
    // Predicated region
    $region10: #{tpu_custom_call.1} parent=1 // pred_check
      _
    $region11: #{tpu_custom_call.1} parent=1 // pred_check_branch
      %29 = sbr.rel (0) target = $region13
    $region12: #{tpu_custom_call.1} parent=1 // pred_region
      _
    $region13: #{tpu_custom_call.1} parent=1 // pred_fallthru
      _
    // Predicated region
    $region14: #{tpu_custom_call.1} parent=1 // pred_check
      _
    $region15: #{tpu_custom_call.1} parent=1 // pred_check_branch
      %31 = sbr.rel (0) target = $region17
    $region16: #{tpu_custom_call.1} parent=1 // pred_region
      _
    $region17: #{tpu_custom_call.1} parent=1 // pred_fallthru
      _
    // Predicated region
    $region18: #{tpu_custom_call.1} parent=1 // pred_check
      _
    $region19: #{tpu_custom_call.1} parent=1 // pred_check_branch
      %33 = sbr.rel (0) target = $region21
    $region20: #{tpu_custom_call.1} parent=1 // pred_region
      _
    $region21: #{tpu_custom_call.1} parent=1 // pred_fallthru
      _
    // Predicated region
    $region22: #{tpu_custom_call.1} parent=1 // pred_check
      _
    $region23: #{tpu_custom_call.1} parent=1 // pred_check_branch
      %35 = sbr.rel (0) target = $region25
    $region24: #{tpu_custom_call.1} parent=1 // pred_region
      _
    $region25: #{tpu_custom_call.1} parent=1 // pred_fallthru
      _
    // Predicated region
    $region26: #{tpu_custom_call.1} parent=1 // pred_check
      _
    $region27: #{tpu_custom_call.1} parent=1 // pred_check_branch
      %37 = sbr.rel (0) target = $region29
    $region28: #{tpu_custom_call.1} parent=1 // pred_region
      _
    $region29: #{tpu_custom_call.1} parent=1 // pred_fallthru
      _
    // Predicated region
    $region30: #{tpu_custom_call.1} parent=1 // pred_check
      _
    $region31: #{tpu_custom_call.1} parent=1 // pred_check_branch
      %39 = sbr.rel (0) target = $region33
    $region32: #{tpu_custom_call.1} parent=1 // pred_region
      _
    $region33: #{tpu_custom_call.1} parent=1 // pred_fallthru
      _
    // Predicated region
    $region34: #{tpu_custom_call.1} parent=1 // pred_check
      _
    $region35: #{tpu_custom_call.1} parent=1 // pred_check_branch
      %41 = sbr.rel (0) target = $region37
    $region36: #{tpu_custom_call.1} parent=1 // pred_region
      _
    $region37: #{tpu_custom_call.1} parent=1 // pred_fallthru
      _
    // Predicated region
    $region38: #{tpu_custom_call.1} parent=1 // pred_check
      _
    $region39: #{tpu_custom_call.1} parent=1 // pred_check_branch
      %43 = sbr.rel (0) target = $region41
    $region40: #{tpu_custom_call.1} parent=1 // pred_region
      _
    $region41: #{tpu_custom_call.1} parent=1 // pred_fallthru
      _
    // Predicated region
    $region42: #{tpu_custom_call.1} parent=1 // pred_check
      _
    $region43: #{tpu_custom_call.1} parent=1 // pred_check_branch
      %45 = sbr.rel (0) target = $region45
    $region44: #{tpu_custom_call.1} parent=1 // pred_region
      _
    $region45: #{tpu_custom_call.1} parent=1 // pred_fallthru
      _
    // Predicated region
    $region46: #{tpu_custom_call.1} parent=1 // pred_check
      _
    $region47: #{tpu_custom_call.1} parent=1 // pred_check_branch
      %47 = sbr.rel (0) target = $region49
    $region48: #{tpu_custom_call.1} parent=1 // pred_region
      _
    $region49: #{tpu_custom_call.1} parent=1 // pred_fallthru
      _
    // Predicated region
    $region50: #{tpu_custom_call.1} parent=1 // pred_check
      _
    $region51: #{tpu_custom_call.1} parent=1 // pred_check_branch
      %49 = sbr.rel (0) target = $region53
    $region52: #{tpu_custom_call.1} parent=1 // pred_region
      _
    $region53: #{tpu_custom_call.1} parent=1 // pred_fallthru
      _
    // Predicated region
    $region54: #{tpu_custom_call.1} parent=1 // pred_check
      _
    $region55: #{tpu_custom_call.1} parent=1 // pred_check_branch
      %51 = sbr.rel (0) target = $region57
    $region56: #{tpu_custom_call.1} parent=1 // pred_region
      _
    $region57: #{tpu_custom_call.1} parent=1 // pred_fallthru
      _
    // Predicated region
    $region58: #{tpu_custom_call.1} parent=1 // pred_check
      _
    $region59: #{tpu_custom_call.1} parent=1 // pred_check_branch
      %53 = sbr.rel (0) target = $region61
    $region60: #{tpu_custom_call.1} parent=1 // pred_region
      _
    $region61: #{tpu_custom_call.1} parent=1 // pred_fallthru
      _
    // Predicated region
    $region62: #{tpu_custom_call.1} parent=1 // pred_check
      _
    $region63: #{tpu_custom_call.1} parent=1 // pred_check_branch
      %55 = sbr.rel (0) target = $region65
    $region64: #{tpu_custom_call.1} parent=1 // pred_region
      _
    $region65: #{tpu_custom_call.1} parent=1 // pred_fallthru
      _
    %v56 = vld [vmem:[%s0] sm:$0xff]
    %v57 = vld [vmem:[%s0 + $0x8] sm:$0xff]
    %v58 = vld [vmem:[%s0 + $0x10] sm:$0xff]
    %v59 = vld [vmem:[%s0 + $0x18] sm:$0xff]
    %v60 = vld [vmem:[%s0 + $0x20] sm:$0xff]
    %v61 = vld [vmem:[%s0 + $0x28] sm:$0xff]
    %v62 = vld [vmem:[%s0 + $0x30] sm:$0xff]
    %v63 = vld [vmem:[%s0 + $0x38] sm:$0xff]
    %v64 = vld [vmem:[%s0 + $0x40] sm:$0xff]
    %v65 = vld [vmem:[%s0 + $0x48] sm:$0xff]
    %v66 = vld [vmem:[%s0 + $0x50] sm:$0xff]
    %v67 = vld [vmem:[%s0 + $0x58] sm:$0xff]
    %v68 = vld [vmem:[%s0 + $0x60] sm:$0xff]
    %v69 = vld [vmem:[%s0 + $0x68] sm:$0xff]
    %v70 = vld [vmem:[%s0 + $0x70] sm:$0xff]
    %v71 = vld [vmem:[%s0 + $0x78] sm:$0xff]
    %v72 = vld [vmem:[%s0 + $0x80] sm:$0xff]
    %v73 = vld [vmem:[%s0 + $0x88] sm:$0xff]
    %v74 = vld [vmem:[%s0 + $0x90] sm:$0xff]
    %v75 = vld [vmem:[%s0 + $0x98] sm:$0xff]
    %v76 = vld [vmem:[%s0 + $0xa0] sm:$0xff]
    %v77 = vld [vmem:[%s0 + $0xa8] sm:$0xff]
    %v78 = vld [vmem:[%s0 + $0xb0] sm:$0xff]
    %v79 = vld [vmem:[%s0 + $0xb8] sm:$0xff]
    %v80 = vld [vmem:[%s0 + $0xc0] sm:$0xff]
    %v81 = vld [vmem:[%s0 + $0xc8] sm:$0xff]
    %v82 = vld [vmem:[%s0 + $0xd0] sm:$0xff]
    %v83 = vld [vmem:[%s0 + $0xd8] sm:$0xff]
    %v84 = vld [vmem:[%s0 + $0xe0] sm:$0xff]
    %v85 = vld [vmem:[%s0 + $0xe8] sm:$0xff]
    %v86 = vld [vmem:[%s0 + $0xf0] sm:$0xff]
    %v87 = vld [vmem:[%s0 + $0xf8] sm:$0xff]
    %v88 = vld [vmem:[%s1] sm:$0xff]
    %v89 = vld [vmem:[%s1 + $0x8] sm:$0xff]
    %v90 = vld [vmem:[%s1 + $0x10] sm:$0xff]
    %v91 = vld [vmem:[%s1 + $0x18] sm:$0xff]
    %v92 = vld [vmem:[%s1 + $0x20] sm:$0xff]
    %v93 = vld [vmem:[%s1 + $0x28] sm:$0xff]
    %v94 = vld [vmem:[%s1 + $0x30] sm:$0xff]
    %v95 = vld [vmem:[%s1 + $0x38] sm:$0xff]
    %v96 = vld [vmem:[%s1 + $0x40] sm:$0xff]
    %v97 = vld [vmem:[%s1 + $0x48] sm:$0xff]
    %v98 = vld [vmem:[%s1 + $0x50] sm:$0xff]
    %v99 = vld [vmem:[%s1 + $0x58] sm:$0xff]
    %v100 = vld [vmem:[%s1 + $0x60] sm:$0xff]
    %v101 = vld [vmem:[%s1 + $0x68] sm:$0xff]
    %v102 = vld [vmem:[%s1 + $0x70] sm:$0xff]
    %v103 = vld [vmem:[%s1 + $0x78] sm:$0xff]
    %v104 = vld [vmem:[%s1 + $0x80] sm:$0xff]
    %v105 = vld [vmem:[%s1 + $0x88] sm:$0xff]
    %v106 = vld [vmem:[%s1 + $0x90] sm:$0xff]
    %v107 = vld [vmem:[%s1 + $0x98] sm:$0xff]
    %v108 = vld [vmem:[%s1 + $0xa0] sm:$0xff]
    %v109 = vld [vmem:[%s1 + $0xa8] sm:$0xff]
    %v110 = vld [vmem:[%s1 + $0xb0] sm:$0xff]
    %v111 = vld [vmem:[%s1 + $0xb8] sm:$0xff]
    %v112 = vld [vmem:[%s1 + $0xc0] sm:$0xff]
    %v113 = vld [vmem:[%s1 + $0xc8] sm:$0xff]
    %v114 = vld [vmem:[%s1 + $0xd0] sm:$0xff]
    %v115 = vld [vmem:[%s1 + $0xd8] sm:$0xff]
    %v116 = vld [vmem:[%s1 + $0xe0] sm:$0xff]
    %v117 = vld [vmem:[%s1 + $0xe8] sm:$0xff]
    %v118 = vld [vmem:[%s1 + $0xf0] sm:$0xff]
    %v119 = vld [vmem:[%s1 + $0xf8] sm:$0xff]
    %v120 = vld [vmem:[%s2] sm:$0xff]
    %v121 = vld [vmem:[%s2 + $0x8] sm:$0xff]
    %v122 = vld [vmem:[%s2 + $0x10] sm:$0xff]
    %v123 = vld [vmem:[%s2 + $0x18] sm:$0xff]
    %v124 = vld [vmem:[%s2 + $0x20] sm:$0xff]
    %v125 = vld [vmem:[%s2 + $0x28] sm:$0xff]
    %v126 = vld [vmem:[%s3] sm:$0x3]
    %v128 = vlaneseq
    %v129 = vshrl.u32 %v128, 7
    %v130 = vsub.s32 0, %v129
    %v131 = vrot.slane %v126, %v130
    %v132 = vlaneseq
    %v133 = vshrl.u32 %v132, 7
    %v134 = vsub.s32 1, %v133
    %v135 = vrot.slane %v126, %v134
    %vm138 = vcmask 195584
    %v140 = vsel %vm138, %v88, 0
    %v143 = vsel %vm138, %v89, 0
    %v146 = vsel %vm138, %v90, 0
    %v149 = vsel %vm138, %v91, 0
    %v152 = vsel %vm138, %v92, 0
    %v155 = vsel %vm138, %v93, 0
    %v158 = vsel %vm138, %v94, 0
    %v161 = vsel %vm138, %v95, 0
    %v164 = vsel %vm138, %v96, 0
    %v167 = vsel %vm138, %v97, 0
    %v170 = vsel %vm138, %v98, 0
    %v173 = vsel %vm138, %v99, 0
    %v176 = vsel %vm138, %v100, 0
    %v179 = vsel %vm138, %v101, 0
    %v182 = vsel %vm138, %v102, 0
    %v185 = vsel %vm138, %v103, 0
    %v188 = vsel %vm138, %v104, 0
    %v191 = vsel %vm138, %v105, 0
    %v194 = vsel %vm138, %v106, 0
    %v197 = vsel %vm138, %v107, 0
    %v200 = vsel %vm138, %v108, 0
    %v203 = vsel %vm138, %v109, 0
    %v206 = vsel %vm138, %v110, 0
    %v209 = vsel %vm138, %v111, 0
    %v212 = vsel %vm138, %v112, 0
    %v215 = vsel %vm138, %v113, 0
    %v218 = vsel %vm138, %v114, 0
    %v221 = vsel %vm138, %v115, 0
    %v224 = vsel %vm138, %v116, 0
    %v227 = vsel %vm138, %v117, 0
    %v230 = vsel %vm138, %v118, 0
    %v233 = vsel %vm138, %v119, 0
    %235 = vmatprep.subr.mxu0 0.0
    %236 = vmatpush1.msra.mxu0 0.0
    %237 = vmatprep.subr.mxu0 0.0
    %238 = vmatpush1.msra.mxu0 0.0
    %239 = vmatprep.subr.mxu0 0.0
    %240 = vmatpush1.msra.mxu0 0.0
    %241 = vmatprep.subr.mxu0 0.0
    %242 = vmatpush1.msra.mxu0 0.0
    %243 = vmatprep.subr.mxu0 0.0
    %244 = vmatpush1.msra.mxu0 0.0
    %245 = vmatprep.subr.mxu0 0.0
    %246 = vmatpush1.msra.mxu0 0.0
    %247 = vmatprep.subr.mxu0 0.0
    %248 = vmatpush1.msra.mxu0 0.0
    %249 = vmatprep.subr.mxu0 0.0
    %250 = vmatpush1.msra.mxu0 0.0
    %251 = vmatprep.subr.mxu0 0.0
    %252 = vmatpush1.msra.mxu0 0.0
    %253 = vmatprep.subr.mxu0 0.0
    %254 = vmatpush1.msra.mxu0 0.0
    %255 = vmatprep.subr.mxu0 0.0
    %256 = vmatpush1.msra.mxu0 0.0
    %257 = vmatprep.subr.mxu0 0.0
    %258 = vmatpush1.msra.mxu0 0.0
    %259 = vmatprep.subr.mxu0 0.0
    %260 = vmatpush1.msra.mxu0 0.0
    %261 = vmatprep.subr.mxu0 %v125
    %262 = vmatpush1.msra.mxu0 %v124
    %263 = vmatprep.subr.mxu0 %v123
    %264 = vmatpush1.msra.mxu0 %v122
    %265 = vmatprep.subr.mxu0 %v121
    %266 = vmatpush1.msra.mxu0 %v120
    %267 = vmatprep.subr.mxu0 0.0
    %268 = vmatpush2.msra.mxu0 0.0
    %269 = vmatprep.subr.mxu0 0.0
    %270 = vmatpush2.msra.mxu0 0.0
    %271 = vmatprep.subr.mxu0 0.0
    %272 = vmatpush2.msra.mxu0 0.0
    %273 = vmatprep.subr.mxu0 0.0
    %274 = vmatpush2.msra.mxu0 0.0
    %275 = vmatprep.subr.mxu0 0.0
    %276 = vmatpush2.msra.mxu0 0.0
    %277 = vmatprep.subr.mxu0 0.0
    %278 = vmatpush2.msra.mxu0 0.0
    %279 = vmatprep.subr.mxu0 0.0
    %280 = vmatpush2.msra.mxu0 0.0
    %281 = vmatprep.subr.mxu0 0.0
    %282 = vmatpush2.msra.mxu0 0.0
    %283 = vmatprep.subr.mxu0 0.0
    %284 = vmatpush2.msra.mxu0 0.0
    %285 = vmatprep.subr.mxu0 0.0
    %286 = vmatpush2.msra.mxu0 0.0
    %287 = vmatprep.subr.mxu0 0.0
    %288 = vmatpush2.msra.mxu0 0.0
    %289 = vmatprep.subr.mxu0 0.0
    %290 = vmatpush2.msra.mxu0 0.0
    %291 = vmatprep.subr.mxu0 0.0
    %292 = vmatpush2.msra.mxu0 0.0
    %293 = vmatprep.subr.mxu0 0.0
    %294 = vmatpush2.msra.mxu0 0.0
    %295 = vmatprep.subr.mxu0 0.0
    %296 = vmatpush2.msra.mxu0 0.0
    %297 = vmatprep.subr.mxu0 0.0
    %298 = vmatpush2.msra.mxu0 0.0
    %299 = vmatprep.mubr.f32.mxu0 0.0
    %300 = vmatmul.mubr.f32.gmra.mxu0 %v140
    %v301 = vpop.f32.mrf.mxu0
    %v302 = vadd.f32 %v131, %v301
    %v303 = vpop.f32.mrf.mxu0
    %v304 = vadd.f32 %v135, %v303
    %305 = vmatprep.mubr.f32.mxu0 0.0
    %306 = vmatmul.mubr.f32.gmra.mxu0 %v143
    %v307 = vpop.f32.mrf.mxu0
    %v308 = vadd.f32 %v131, %v307
    %v309 = vpop.f32.mrf.mxu0
    %v310 = vadd.f32 %v135, %v309
    %311 = vmatprep.mubr.f32.mxu0 0.0
    %312 = vmatmul.mubr.f32.gmra.mxu0 %v146
    %v313 = vpop.f32.mrf.mxu0
    %v314 = vadd.f32 %v131, %v313
    %v315 = vpop.f32.mrf.mxu0
    %v316 = vadd.f32 %v135, %v315
    %317 = vmatprep.mubr.f32.mxu0 0.0
    %318 = vmatmul.mubr.f32.gmra.mxu0 %v149
    %v319 = vpop.f32.mrf.mxu0
    %v320 = vadd.f32 %v131, %v319
    %v321 = vpop.f32.mrf.mxu0
    %v322 = vadd.f32 %v135, %v321
    %323 = vmatprep.mubr.f32.mxu0 0.0
    %324 = vmatmul.mubr.f32.gmra.mxu0 %v152
    %v325 = vpop.f32.mrf.mxu0
    %v326 = vadd.f32 %v131, %v325
    %v327 = vpop.f32.mrf.mxu0
    %v328 = vadd.f32 %v135, %v327
    %329 = vmatprep.mubr.f32.mxu0 0.0
    %330 = vmatmul.mubr.f32.gmra.mxu0 %v155
    %v331 = vpop.f32.mrf.mxu0
    %v332 = vadd.f32 %v131, %v331
    %v333 = vpop.f32.mrf.mxu0
    %v334 = vadd.f32 %v135, %v333
    %335 = vmatprep.mubr.f32.mxu0 0.0
    %336 = vmatmul.mubr.f32.gmra.mxu0 %v158
    %v337 = vpop.f32.mrf.mxu0
    %v338 = vadd.f32 %v131, %v337
    %v339 = vpop.f32.mrf.mxu0
    %v340 = vadd.f32 %v135, %v339
    %341 = vmatprep.mubr.f32.mxu0 0.0
    %342 = vmatmul.mubr.f32.gmra.mxu0 %v161
    %v343 = vpop.f32.mrf.mxu0
    %v344 = vadd.f32 %v131, %v343
    %v345 = vpop.f32.mrf.mxu0
    %v346 = vadd.f32 %v135, %v345
    %347 = vmatprep.mubr.f32.mxu0 0.0
    %348 = vmatmul.mubr.f32.gmra.mxu0 %v164
    %v349 = vpop.f32.mrf.mxu0
    %v350 = vadd.f32 %v131, %v349
    %v351 = vpop.f32.mrf.mxu0
    %v352 = vadd.f32 %v135, %v351
    %353 = vmatprep.mubr.f32.mxu0 0.0
    %354 = vmatmul.mubr.f32.gmra.mxu0 %v167
    %v355 = vpop.f32.mrf.mxu0
    %v356 = vadd.f32 %v131, %v355
    %v357 = vpop.f32.mrf.mxu0
    %v358 = vadd.f32 %v135, %v357
    %359 = vmatprep.mubr.f32.mxu0 0.0
    %360 = vmatmul.mubr.f32.gmra.mxu0 %v170
    %v361 = vpop.f32.mrf.mxu0
    %v362 = vadd.f32 %v131, %v361
    %v363 = vpop.f32.mrf.mxu0
    %v364 = vadd.f32 %v135, %v363
    %365 = vmatprep.mubr.f32.mxu0 0.0
    %366 = vmatmul.mubr.f32.gmra.mxu0 %v173
    %v367 = vpop.f32.mrf.mxu0
    %v368 = vadd.f32 %v131, %v367
    %v369 = vpop.f32.mrf.mxu0
    %v370 = vadd.f32 %v135, %v369
    %371 = vmatprep.mubr.f32.mxu0 0.0
    %372 = vmatmul.mubr.f32.gmra.mxu0 %v176
    %v373 = vpop.f32.mrf.mxu0
    %v374 = vadd.f32 %v131, %v373
    %v375 = vpop.f32.mrf.mxu0
    %v376 = vadd.f32 %v135, %v375
    %377 = vmatprep.mubr.f32.mxu0 0.0
    %378 = vmatmul.mubr.f32.gmra.mxu0 %v179
    %v379 = vpop.f32.mrf.mxu0
    %v380 = vadd.f32 %v131, %v379
    %v381 = vpop.f32.mrf.mxu0
    %v382 = vadd.f32 %v135, %v381
    %383 = vmatprep.mubr.f32.mxu0 0.0
    %384 = vmatmul.mubr.f32.gmra.mxu0 %v182
    %v385 = vpop.f32.mrf.mxu0
    %v386 = vadd.f32 %v131, %v385
    %v387 = vpop.f32.mrf.mxu0
    %v388 = vadd.f32 %v135, %v387
    %389 = vmatprep.mubr.f32.mxu0 0.0
    %390 = vmatmul.mubr.f32.gmra.mxu0 %v185
    %v391 = vpop.f32.mrf.mxu0
    %v392 = vadd.f32 %v131, %v391
    %v393 = vpop.f32.mrf.mxu0
    %v394 = vadd.f32 %v135, %v393
    %395 = vmatprep.mubr.f32.mxu0 0.0
    %396 = vmatmul.mubr.f32.gmra.mxu0 %v188
    %v397 = vpop.f32.mrf.mxu0
    %v398 = vadd.f32 %v131, %v397
    %v399 = vpop.f32.mrf.mxu0
    %v400 = vadd.f32 %v135, %v399
    %401 = vmatprep.mubr.f32.mxu0 0.0
    %402 = vmatmul.mubr.f32.gmra.mxu0 %v191
    %v403 = vpop.f32.mrf.mxu0
    %v404 = vadd.f32 %v131, %v403
    %v405 = vpop.f32.mrf.mxu0
    %v406 = vadd.f32 %v135, %v405
    %407 = vmatprep.mubr.f32.mxu0 0.0
    %408 = vmatmul.mubr.f32.gmra.mxu0 %v194
    %v409 = vpop.f32.mrf.mxu0
    %v410 = vadd.f32 %v131, %v409
    %v411 = vpop.f32.mrf.mxu0
    %v412 = vadd.f32 %v135, %v411
    %413 = vmatprep.mubr.f32.mxu0 0.0
    %414 = vmatmul.mubr.f32.gmra.mxu0 %v197
    %v415 = vpop.f32.mrf.mxu0
    %v416 = vadd.f32 %v131, %v415
    %v417 = vpop.f32.mrf.mxu0
    %v418 = vadd.f32 %v135, %v417
    %419 = vmatprep.mubr.f32.mxu0 0.0
    %420 = vmatmul.mubr.f32.gmra.mxu0 %v200
    %v421 = vpop.f32.mrf.mxu0
    %v422 = vadd.f32 %v131, %v421
    %v423 = vpop.f32.mrf.mxu0
    %v424 = vadd.f32 %v135, %v423
    %425 = vmatprep.mubr.f32.mxu0 0.0
    %426 = vmatmul.mubr.f32.gmra.mxu0 %v203
    %v427 = vpop.f32.mrf.mxu0
    %v428 = vadd.f32 %v131, %v427
    %v429 = vpop.f32.mrf.mxu0
    %v430 = vadd.f32 %v135, %v429
    %431 = vmatprep.mubr.f32.mxu0 0.0
    %432 = vmatmul.mubr.f32.gmra.mxu0 %v206
    %v433 = vpop.f32.mrf.mxu0
    %v434 = vadd.f32 %v131, %v433
    %v435 = vpop.f32.mrf.mxu0
    %v436 = vadd.f32 %v135, %v435
    %437 = vmatprep.mubr.f32.mxu0 0.0
    %438 = vmatmul.mubr.f32.gmra.mxu0 %v209
    %v439 = vpop.f32.mrf.mxu0
    %v440 = vadd.f32 %v131, %v439
    %v441 = vpop.f32.mrf.mxu0
    %v442 = vadd.f32 %v135, %v441
    %443 = vmatprep.mubr.f32.mxu0 0.0
    %444 = vmatmul.mubr.f32.gmra.mxu0 %v212
    %v445 = vpop.f32.mrf.mxu0
    %v446 = vadd.f32 %v131, %v445
    %v447 = vpop.f32.mrf.mxu0
    %v448 = vadd.f32 %v135, %v447
    %449 = vmatprep.mubr.f32.mxu0 0.0
    %450 = vmatmul.mubr.f32.gmra.mxu0 %v215
    %v451 = vpop.f32.mrf.mxu0
    %v452 = vadd.f32 %v131, %v451
    %v453 = vpop.f32.mrf.mxu0
    %v454 = vadd.f32 %v135, %v453
    %455 = vmatprep.mubr.f32.mxu0 0.0
    %456 = vmatmul.mubr.f32.gmra.mxu0 %v218
    %v457 = vpop.f32.mrf.mxu0
    %v458 = vadd.f32 %v131, %v457
    %v459 = vpop.f32.mrf.mxu0
    %v460 = vadd.f32 %v135, %v459
    %461 = vmatprep.mubr.f32.mxu0 0.0
    %462 = vmatmul.mubr.f32.gmra.mxu0 %v221
    %v463 = vpop.f32.mrf.mxu0
    %v464 = vadd.f32 %v131, %v463
    %v465 = vpop.f32.mrf.mxu0
    %v466 = vadd.f32 %v135, %v465
    %467 = vmatprep.mubr.f32.mxu0 0.0
    %468 = vmatmul.mubr.f32.gmra.mxu0 %v224
    %v469 = vpop.f32.mrf.mxu0
    %v470 = vadd.f32 %v131, %v469
    %v471 = vpop.f32.mrf.mxu0
    %v472 = vadd.f32 %v135, %v471
    %473 = vmatprep.mubr.f32.mxu0 0.0
    %474 = vmatmul.mubr.f32.gmra.mxu0 %v227
    %v475 = vpop.f32.mrf.mxu0
    %v476 = vadd.f32 %v131, %v475
    %v477 = vpop.f32.mrf.mxu0
    %v478 = vadd.f32 %v135, %v477
    %479 = vmatprep.mubr.f32.mxu0 0.0
    %480 = vmatmul.mubr.f32.gmra.mxu0 %v230
    %v481 = vpop.f32.mrf.mxu0
    %v482 = vadd.f32 %v131, %v481
    %v483 = vpop.f32.mrf.mxu0
    %v484 = vadd.f32 %v135, %v483
    %485 = vmatprep.mubr.f32.mxu0 0.0
    %486 = vmatmul.mubr.f32.gmra.mxu0 %v233
    %v487 = vpop.f32.mrf.mxu0
    %v488 = vadd.f32 %v131, %v487
    %v489 = vpop.f32.mrf.mxu0
    %v490 = vadd.f32 %v135, %v489
    %491 = vdwg.mxu0
    %v492 = vmax.f32 %v302, 0.0
    %v493 = vmax.f32 %v308, 0.0
    %v494 = vmax.f32 %v314, 0.0
    %v495 = vmax.f32 %v320, 0.0
    %v496 = vmax.f32 %v326, 0.0
    %v497 = vmax.f32 %v332, 0.0
    %v498 = vmax.f32 %v338, 0.0
    %v499 = vmax.f32 %v344, 0.0
    %v500 = vmax.f32 %v350, 0.0
    %v501 = vmax.f32 %v356, 0.0
    %v502 = vmax.f32 %v362, 0.0
    %v503 = vmax.f32 %v368, 0.0
    %v504 = vmax.f32 %v374, 0.0
    %v505 = vmax.f32 %v380, 0.0
    %v506 = vmax.f32 %v386, 0.0
    %v507 = vmax.f32 %v392, 0.0
    %v508 = vmax.f32 %v398, 0.0
    %v509 = vmax.f32 %v404, 0.0
    %v510 = vmax.f32 %v410, 0.0
    %v511 = vmax.f32 %v416, 0.0
    %v512 = vmax.f32 %v422, 0.0
    %v513 = vmax.f32 %v428, 0.0
    %v514 = vmax.f32 %v434, 0.0
    %v515 = vmax.f32 %v440, 0.0
    %v516 = vmax.f32 %v446, 0.0
    %v517 = vmax.f32 %v452, 0.0
    %v518 = vmax.f32 %v458, 0.0
    %v519 = vmax.f32 %v464, 0.0
    %v520 = vmax.f32 %v470, 0.0
    %v521 = vmax.f32 %v476, 0.0
    %v522 = vmax.f32 %v482, 0.0
    %v523 = vmax.f32 %v488, 0.0
    %v524 = vmax.f32 %v304, 0.0
    %v525 = vmax.f32 %v310, 0.0
    %v526 = vmax.f32 %v316, 0.0
    %v527 = vmax.f32 %v322, 0.0
    %v528 = vmax.f32 %v328, 0.0
    %v529 = vmax.f32 %v334, 0.0
    %v530 = vmax.f32 %v340, 0.0
    %v531 = vmax.f32 %v346, 0.0
    %v532 = vmax.f32 %v352, 0.0
    %v533 = vmax.f32 %v358, 0.0
    %v534 = vmax.f32 %v364, 0.0
    %v535 = vmax.f32 %v370, 0.0
    %v536 = vmax.f32 %v376, 0.0
    %v537 = vmax.f32 %v382, 0.0
    %v538 = vmax.f32 %v388, 0.0
    %v539 = vmax.f32 %v394, 0.0
    %v540 = vmax.f32 %v400, 0.0
    %v541 = vmax.f32 %v406, 0.0
    %v542 = vmax.f32 %v412, 0.0
    %v543 = vmax.f32 %v418, 0.0
    %v544 = vmax.f32 %v424, 0.0
    %v545 = vmax.f32 %v430, 0.0
    %v546 = vmax.f32 %v436, 0.0
    %v547 = vmax.f32 %v442, 0.0
    %v548 = vmax.f32 %v448, 0.0
    %v549 = vmax.f32 %v454, 0.0
    %v550 = vmax.f32 %v460, 0.0
    %v551 = vmax.f32 %v466, 0.0
    %v552 = vmax.f32 %v472, 0.0
    %v553 = vmax.f32 %v478, 0.0
    %v554 = vmax.f32 %v484, 0.0
    %v555 = vmax.f32 %v490, 0.0
    %v556 = vld [vmem:[%s4] sm:$0xf]
    %v557 = vld [vmem:[%s5] sm:$0x1]
    %v559 = vlaneseq
    %v560 = vshrl.u32 %v559, 7
    %v561 = vsub.s32 0, %v560
    %v562 = vrot.slane %v557, %v561
    %vm564 = vcmask 31744
    %v566 = vsel %vm564, %v56, 0
    %v569 = vsel %vm564, %v57, 0
    %v572 = vsel %vm564, %v58, 0
    %v575 = vsel %vm564, %v59, 0
    %v578 = vsel %vm564, %v60, 0
    %v581 = vsel %vm564, %v61, 0
    %v584 = vsel %vm564, %v62, 0
    %v587 = vsel %vm564, %v63, 0
    %v590 = vsel %vm564, %v64, 0
    %v593 = vsel %vm564, %v65, 0
    %v596 = vsel %vm564, %v66, 0
    %v599 = vsel %vm564, %v67, 0
    %v602 = vsel %vm564, %v68, 0
    %v605 = vsel %vm564, %v69, 0
    %v608 = vsel %vm564, %v70, 0
    %v611 = vsel %vm564, %v71, 0
    %v614 = vsel %vm564, %v72, 0
    %v617 = vsel %vm564, %v73, 0
    %v620 = vsel %vm564, %v74, 0
    %v623 = vsel %vm564, %v75, 0
    %v626 = vsel %vm564, %v76, 0
    %v629 = vsel %vm564, %v77, 0
    %v632 = vsel %vm564, %v78, 0
    %v635 = vsel %vm564, %v79, 0
    %v638 = vsel %vm564, %v80, 0
    %v641 = vsel %vm564, %v81, 0
    %v644 = vsel %vm564, %v82, 0
    %v647 = vsel %vm564, %v83, 0
    %v650 = vsel %vm564, %v84, 0
    %v653 = vsel %vm564, %v85, 0
    %v656 = vsel %vm564, %v86, 0
    %v659 = vsel %vm564, %v87, 0
    %vm661 = vcmask 1043456
    %v663 = vsel %vm661, %v556, 0
    %665 = vmatprep.subr.mxu0 0.0
    %666 = vmatpush1.msra.mxu0 0.0
    %667 = vmatprep.subr.mxu0 0.0
    %668 = vmatpush1.msra.mxu0 0.0
    %669 = vmatprep.subr.mxu0 0.0
    %670 = vmatpush1.msra.mxu0 0.0
    %671 = vmatprep.subr.mxu0 0.0
    %672 = vmatpush1.msra.mxu0 0.0
    %673 = vmatprep.subr.mxu0 0.0
    %674 = vmatpush1.msra.mxu0 0.0
    %675 = vmatprep.subr.mxu0 0.0
    %676 = vmatpush1.msra.mxu0 0.0
    %677 = vmatprep.subr.mxu0 0.0
    %678 = vmatpush1.msra.mxu0 0.0
    %679 = vmatprep.subr.mxu0 0.0
    %680 = vmatpush1.msra.mxu0 0.0
    %681 = vmatprep.subr.mxu0 0.0
    %682 = vmatpush1.msra.mxu0 0.0
    %683 = vmatprep.subr.mxu0 0.0
    %684 = vmatpush1.msra.mxu0 0.0
    %685 = vmatprep.subr.mxu0 0.0
    %686 = vmatpush1.msra.mxu0 0.0
    %687 = vmatprep.subr.mxu0 0.0
    %688 = vmatpush1.msra.mxu0 0.0
    %689 = vmatprep.subr.mxu0 0.0
    %690 = vmatpush1.msra.mxu0 0.0
    %691 = vmatprep.subr.mxu0 0.0
    %692 = vmatpush1.msra.mxu0 0.0
    %693 = vmatprep.subr.mxu0 0.0
    %694 = vmatpush1.msra.mxu0 0.0
    %695 = vmatprep.subr.mxu0 0.0
    %696 = vmatpush1.msra.mxu0 %v663
    %697 = vmatprep.subr.mxu0 0.0
    %698 = vmatpush2.msra.mxu0 0.0
    %699 = vmatprep.subr.mxu0 0.0
    %700 = vmatpush2.msra.mxu0 0.0
    %701 = vmatprep.subr.mxu0 0.0
    %702 = vmatpush2.msra.mxu0 0.0
    %703 = vmatprep.subr.mxu0 0.0
    %704 = vmatpush2.msra.mxu0 0.0
    %705 = vmatprep.subr.mxu0 0.0
    %706 = vmatpush2.msra.mxu0 0.0
    %707 = vmatprep.subr.mxu0 0.0
    %708 = vmatpush2.msra.mxu0 0.0
    %709 = vmatprep.subr.mxu0 0.0
    %710 = vmatpush2.msra.mxu0 0.0
    %711 = vmatprep.subr.mxu0 0.0
    %712 = vmatpush2.msra.mxu0 0.0
    %713 = vmatprep.subr.mxu0 0.0
    %714 = vmatpush2.msra.mxu0 0.0
    %715 = vmatprep.subr.mxu0 0.0
    %716 = vmatpush2.msra.mxu0 0.0
    %717 = vmatprep.subr.mxu0 0.0
    %718 = vmatpush2.msra.mxu0 0.0
    %719 = vmatprep.subr.mxu0 0.0
    %720 = vmatpush2.msra.mxu0 0.0
    %721 = vmatprep.subr.mxu0 0.0
    %722 = vmatpush2.msra.mxu0 0.0
    %723 = vmatprep.subr.mxu0 0.0
    %724 = vmatpush2.msra.mxu0 0.0
    %725 = vmatprep.subr.mxu0 0.0
    %726 = vmatpush2.msra.mxu0 0.0
    %727 = vmatprep.subr.mxu0 0.0
    %728 = vmatpush2.msra.mxu0 0.0
    %729 = vmatprep.mubr.f32.mxu0 0.0
    %730 = vmatmul.mubr.f32.gmra.mxu0 %v566
    %v731 = vpop.f32.mrf.mxu0
    %v732 = vadd.f32 %v562, %v731
    %v733 = vpop.f32.mrf.mxu0
    %734 = vmatprep.mubr.f32.mxu0 0.0
    %735 = vmatmul.mubr.f32.gmra.mxu0 %v569
    %v736 = vpop.f32.mrf.mxu0
    %v737 = vadd.f32 %v562, %v736
    %v738 = vpop.f32.mrf.mxu0
    %739 = vmatprep.mubr.f32.mxu0 0.0
    %740 = vmatmul.mubr.f32.gmra.mxu0 %v572
    %v741 = vpop.f32.mrf.mxu0
    %v742 = vadd.f32 %v562, %v741
    %v743 = vpop.f32.mrf.mxu0
    %744 = vmatprep.mubr.f32.mxu0 0.0
    %745 = vmatmul.mubr.f32.gmra.mxu0 %v575
    %v746 = vpop.f32.mrf.mxu0
    %v747 = vadd.f32 %v562, %v746
    %v748 = vpop.f32.mrf.mxu0
    %749 = vmatprep.mubr.f32.mxu0 0.0
    %750 = vmatmul.mubr.f32.gmra.mxu0 %v578
    %v751 = vpop.f32.mrf.mxu0
    %v752 = vadd.f32 %v562, %v751
    %v753 = vpop.f32.mrf.mxu0
    %754 = vmatprep.mubr.f32.mxu0 0.0
    %755 = vmatmul.mubr.f32.gmra.mxu0 %v581
    %v756 = vpop.f32.mrf.mxu0
    %v757 = vadd.f32 %v562, %v756
    %v758 = vpop.f32.mrf.mxu0
    %759 = vmatprep.mubr.f32.mxu0 0.0
    %760 = vmatmul.mubr.f32.gmra.mxu0 %v584
    %v761 = vpop.f32.mrf.mxu0
    %v762 = vadd.f32 %v562, %v761
    %v763 = vpop.f32.mrf.mxu0
    %764 = vmatprep.mubr.f32.mxu0 0.0
    %765 = vmatmul.mubr.f32.gmra.mxu0 %v587
    %v766 = vpop.f32.mrf.mxu0
    %v767 = vadd.f32 %v562, %v766
    %v768 = vpop.f32.mrf.mxu0
    %769 = vmatprep.mubr.f32.mxu0 0.0
    %770 = vmatmul.mubr.f32.gmra.mxu0 %v590
    %v771 = vpop.f32.mrf.mxu0
    %v772 = vadd.f32 %v562, %v771
    %v773 = vpop.f32.mrf.mxu0
    %774 = vmatprep.mubr.f32.mxu0 0.0
    %775 = vmatmul.mubr.f32.gmra.mxu0 %v593
    %v776 = vpop.f32.mrf.mxu0
    %v777 = vadd.f32 %v562, %v776
    %v778 = vpop.f32.mrf.mxu0
    %779 = vmatprep.mubr.f32.mxu0 0.0
    %780 = vmatmul.mubr.f32.gmra.mxu0 %v596
    %v781 = vpop.f32.mrf.mxu0
    %v782 = vadd.f32 %v562, %v781
    %v783 = vpop.f32.mrf.mxu0
    %784 = vmatprep.mubr.f32.mxu0 0.0
    %785 = vmatmul.mubr.f32.gmra.mxu0 %v599
    %v786 = vpop.f32.mrf.mxu0
    %v787 = vadd.f32 %v562, %v786
    %v788 = vpop.f32.mrf.mxu0
    %789 = vmatprep.mubr.f32.mxu0 0.0
    %790 = vmatmul.mubr.f32.gmra.mxu0 %v602
    %v791 = vpop.f32.mrf.mxu0
    %v792 = vadd.f32 %v562, %v791
    %v793 = vpop.f32.mrf.mxu0
    %794 = vmatprep.mubr.f32.mxu0 0.0
    %795 = vmatmul.mubr.f32.gmra.mxu0 %v605
    %v796 = vpop.f32.mrf.mxu0
    %v797 = vadd.f32 %v562, %v796
    %v798 = vpop.f32.mrf.mxu0
    %799 = vmatprep.mubr.f32.mxu0 0.0
    %800 = vmatmul.mubr.f32.gmra.mxu0 %v608
    %v801 = vpop.f32.mrf.mxu0
    %v802 = vadd.f32 %v562, %v801
    %v803 = vpop.f32.mrf.mxu0
    %804 = vmatprep.mubr.f32.mxu0 0.0
    %805 = vmatmul.mubr.f32.gmra.mxu0 %v611
    %v806 = vpop.f32.mrf.mxu0
    %v807 = vadd.f32 %v562, %v806
    %v808 = vpop.f32.mrf.mxu0
    %809 = vmatprep.mubr.f32.mxu0 0.0
    %810 = vmatmul.mubr.f32.gmra.mxu0 %v614
    %v811 = vpop.f32.mrf.mxu0
    %v812 = vadd.f32 %v562, %v811
    %v813 = vpop.f32.mrf.mxu0
    %814 = vmatprep.mubr.f32.mxu0 0.0
    %815 = vmatmul.mubr.f32.gmra.mxu0 %v617
    %v816 = vpop.f32.mrf.mxu0
    %v817 = vadd.f32 %v562, %v816
    %v818 = vpop.f32.mrf.mxu0
    %819 = vmatprep.mubr.f32.mxu0 0.0
    %820 = vmatmul.mubr.f32.gmra.mxu0 %v620
    %v821 = vpop.f32.mrf.mxu0
    %v822 = vadd.f32 %v562, %v821
    %v823 = vpop.f32.mrf.mxu0
    %824 = vmatprep.mubr.f32.mxu0 0.0
    %825 = vmatmul.mubr.f32.gmra.mxu0 %v623
    %v826 = vpop.f32.mrf.mxu0
    %v827 = vadd.f32 %v562, %v826
    %v828 = vpop.f32.mrf.mxu0
    %829 = vmatprep.mubr.f32.mxu0 0.0
    %830 = vmatmul.mubr.f32.gmra.mxu0 %v626
    %v831 = vpop.f32.mrf.mxu0
    %v832 = vadd.f32 %v562, %v831
    %v833 = vpop.f32.mrf.mxu0
    %834 = vmatprep.mubr.f32.mxu0 0.0
    %835 = vmatmul.mubr.f32.gmra.mxu0 %v629
    %v836 = vpop.f32.mrf.mxu0
    %v837 = vadd.f32 %v562, %v836
    %v838 = vpop.f32.mrf.mxu0
    %839 = vmatprep.mubr.f32.mxu0 0.0
    %840 = vmatmul.mubr.f32.gmra.mxu0 %v632
    %v841 = vpop.f32.mrf.mxu0
    %v842 = vadd.f32 %v562, %v841
    %v843 = vpop.f32.mrf.mxu0
    %844 = vmatprep.mubr.f32.mxu0 0.0
    %845 = vmatmul.mubr.f32.gmra.mxu0 %v635
    %v846 = vpop.f32.mrf.mxu0
    %v847 = vadd.f32 %v562, %v846
    %v848 = vpop.f32.mrf.mxu0
    %849 = vmatprep.mubr.f32.mxu0 0.0
    %850 = vmatmul.mubr.f32.gmra.mxu0 %v638
    %v851 = vpop.f32.mrf.mxu0
    %v852 = vadd.f32 %v562, %v851
    %v853 = vpop.f32.mrf.mxu0
    %854 = vmatprep.mubr.f32.mxu0 0.0
    %855 = vmatmul.mubr.f32.gmra.mxu0 %v641
    %v856 = vpop.f32.mrf.mxu0
    %v857 = vadd.f32 %v562, %v856
    %v858 = vpop.f32.mrf.mxu0
    %859 = vmatprep.mubr.f32.mxu0 0.0
    %860 = vmatmul.mubr.f32.gmra.mxu0 %v644
    %v861 = vpop.f32.mrf.mxu0
    %v862 = vadd.f32 %v562, %v861
    %v863 = vpop.f32.mrf.mxu0
    %864 = vmatprep.mubr.f32.mxu0 0.0
    %865 = vmatmul.mubr.f32.gmra.mxu0 %v647
    %v866 = vpop.f32.mrf.mxu0
    %v867 = vadd.f32 %v562, %v866
    %v868 = vpop.f32.mrf.mxu0
    %869 = vmatprep.mubr.f32.mxu0 0.0
    %870 = vmatmul.mubr.f32.gmra.mxu0 %v650
    %v871 = vpop.f32.mrf.mxu0
    %v872 = vadd.f32 %v562, %v871
    %v873 = vpop.f32.mrf.mxu0
    %874 = vmatprep.mubr.f32.mxu0 0.0
    %875 = vmatmul.mubr.f32.gmra.mxu0 %v653
    %v876 = vpop.f32.mrf.mxu0
    %v877 = vadd.f32 %v562, %v876
    %v878 = vpop.f32.mrf.mxu0
    %879 = vmatprep.mubr.f32.mxu0 0.0
    %880 = vmatmul.mubr.f32.gmra.mxu0 %v656
    %v881 = vpop.f32.mrf.mxu0
    %v882 = vadd.f32 %v562, %v881
    %v883 = vpop.f32.mrf.mxu0
    %884 = vmatprep.mubr.f32.mxu0 0.0
    %885 = vmatmul.mubr.f32.gmra.mxu0 %v659
    %v886 = vpop.f32.mrf.mxu0
    %v887 = vadd.f32 %v562, %v886
    %v888 = vpop.f32.mrf.mxu0
    %889 = vdwg.mxu0
    %v890 = vld [vmem:[%s12] sm:$0xff]
    %v891 = vld [vmem:[%s12 + $0x8] sm:$0xff]
    %v892 = vld [vmem:[%s12 + $0x10] sm:$0xff]
    %v893 = vld [vmem:[%s12 + $0x18] sm:$0xff]
    %v894 = vld [vmem:[%s12 + $0x20] sm:$0xff]
    %v895 = vld [vmem:[%s12 + $0x28] sm:$0xff]
    %v896 = vld [vmem:[%s12 + $0x30] sm:$0xff]
    %v897 = vld [vmem:[%s12 + $0x38] sm:$0xff]
    %v898 = vld [vmem:[%s12 + $0x40] sm:$0xff]
    %v899 = vld [vmem:[%s12 + $0x48] sm:$0xff]
    %v900 = vld [vmem:[%s12 + $0x50] sm:$0xff]
    %v901 = vld [vmem:[%s12 + $0x58] sm:$0xff]
    %v902 = vld [vmem:[%s12 + $0x60] sm:$0xff]
    %v903 = vld [vmem:[%s12 + $0x68] sm:$0xff]
    %v904 = vld [vmem:[%s12 + $0x70] sm:$0xff]
    %v905 = vld [vmem:[%s12 + $0x78] sm:$0xff]
    %v906 = vld [vmem:[%s12 + $0x80] sm:$0xff]
    %v907 = vld [vmem:[%s12 + $0x88] sm:$0xff]
    %v908 = vld [vmem:[%s12 + $0x90] sm:$0xff]
    %v909 = vld [vmem:[%s12 + $0x98] sm:$0xff]
    %v910 = vld [vmem:[%s12 + $0xa0] sm:$0xff]
    %v911 = vld [vmem:[%s12 + $0xa8] sm:$0xff]
    %v912 = vld [vmem:[%s12 + $0xb0] sm:$0xff]
    %v913 = vld [vmem:[%s12 + $0xb8] sm:$0xff]
    %v914 = vld [vmem:[%s12 + $0xc0] sm:$0xff]
    %v915 = vld [vmem:[%s12 + $0xc8] sm:$0xff]
    %v916 = vld [vmem:[%s12 + $0xd0] sm:$0xff]
    %v917 = vld [vmem:[%s12 + $0xd8] sm:$0xff]
    %v918 = vld [vmem:[%s12 + $0xe0] sm:$0xff]
    %v919 = vld [vmem:[%s12 + $0xe8] sm:$0xff]
    %v920 = vld [vmem:[%s12 + $0xf0] sm:$0xff]
    %v921 = vld [vmem:[%s12 + $0xf8] sm:$0xff]
    %v922 = vld [vmem:[%s13] sm:$0xff]
    %v923 = vld [vmem:[%s13 + $0x8] sm:$0xff]
    %v924 = vld [vmem:[%s13 + $0x10] sm:$0xff]
    %v925 = vld [vmem:[%s13 + $0x18] sm:$0xff]
    %v926 = vld [vmem:[%s13 + $0x20] sm:$0xff]
    %v927 = vld [vmem:[%s13 + $0x28] sm:$0xff]
    %v928 = vld [vmem:[%s13 + $0x30] sm:$0xff]
    %v929 = vld [vmem:[%s13 + $0x38] sm:$0xff]
    %v930 = vld [vmem:[%s13 + $0x40] sm:$0xff]
    %v931 = vld [vmem:[%s13 + $0x48] sm:$0xff]
    %v932 = vld [vmem:[%s13 + $0x50] sm:$0xff]
    %v933 = vld [vmem:[%s13 + $0x58] sm:$0xff]
    %v934 = vld [vmem:[%s13 + $0x60] sm:$0xff]
    %v935 = vld [vmem:[%s13 + $0x68] sm:$0xff]
    %v936 = vld [vmem:[%s13 + $0x70] sm:$0xff]
    %v937 = vld [vmem:[%s13 + $0x78] sm:$0xff]
    %v938 = vld [vmem:[%s13 + $0x80] sm:$0xff]
    %v939 = vld [vmem:[%s13 + $0x88] sm:$0xff]
    %v940 = vld [vmem:[%s13 + $0x90] sm:$0xff]
    %v941 = vld [vmem:[%s13 + $0x98] sm:$0xff]
    %v942 = vld [vmem:[%s13 + $0xa0] sm:$0xff]
    %v943 = vld [vmem:[%s13 + $0xa8] sm:$0xff]
    %v944 = vld [vmem:[%s13 + $0xb0] sm:$0xff]
    %v945 = vld [vmem:[%s13 + $0xb8] sm:$0xff]
    %v946 = vld [vmem:[%s13 + $0xc0] sm:$0xff]
    %v947 = vld [vmem:[%s13 + $0xc8] sm:$0xff]
    %v948 = vld [vmem:[%s13 + $0xd0] sm:$0xff]
    %v949 = vld [vmem:[%s13 + $0xd8] sm:$0xff]
    %v950 = vld [vmem:[%s13 + $0xe0] sm:$0xff]
    %v951 = vld [vmem:[%s13 + $0xe8] sm:$0xff]
    %v952 = vld [vmem:[%s13 + $0xf0] sm:$0xff]
    %v953 = vld [vmem:[%s13 + $0xf8] sm:$0xff]
    %v954 = vld [vmem:[%s13 + $0x100] sm:$0xff]
    %v955 = vld [vmem:[%s13 + $0x108] sm:$0xff]
    %v956 = vld [vmem:[%s13 + $0x110] sm:$0xff]
    %v957 = vld [vmem:[%s13 + $0x118] sm:$0xff]
    %v958 = vld [vmem:[%s13 + $0x120] sm:$0xff]
    %v959 = vld [vmem:[%s13 + $0x128] sm:$0xff]
    %v960 = vld [vmem:[%s13 + $0x130] sm:$0xff]
    %v961 = vld [vmem:[%s13 + $0x138] sm:$0xff]
    %v962 = vld [vmem:[%s13 + $0x140] sm:$0xff]
    %v963 = vld [vmem:[%s13 + $0x148] sm:$0xff]
    %v964 = vld [vmem:[%s13 + $0x150] sm:$0xff]
    %v965 = vld [vmem:[%s13 + $0x158] sm:$0xff]
    %v966 = vld [vmem:[%s13 + $0x160] sm:$0xff]
    %v967 = vld [vmem:[%s13 + $0x168] sm:$0xff]
    %v968 = vld [vmem:[%s13 + $0x170] sm:$0xff]
    %v969 = vld [vmem:[%s13 + $0x178] sm:$0xff]
    %v970 = vld [vmem:[%s13 + $0x180] sm:$0xff]
    %v971 = vld [vmem:[%s13 + $0x188] sm:$0xff]
    %v972 = vld [vmem:[%s13 + $0x190] sm:$0xff]
    %v973 = vld [vmem:[%s13 + $0x198] sm:$0xff]
    %v974 = vld [vmem:[%s13 + $0x1a0] sm:$0xff]
    %v975 = vld [vmem:[%s13 + $0x1a8] sm:$0xff]
    %v976 = vld [vmem:[%s13 + $0x1b0] sm:$0xff]
    %v977 = vld [vmem:[%s13 + $0x1b8] sm:$0xff]
    %v978 = vld [vmem:[%s13 + $0x1c0] sm:$0xff]
    %v979 = vld [vmem:[%s13 + $0x1c8] sm:$0xff]
    %v980 = vld [vmem:[%s13 + $0x1d0] sm:$0xff]
    %v981 = vld [vmem:[%s13 + $0x1d8] sm:$0xff]
    %v982 = vld [vmem:[%s13 + $0x1e0] sm:$0xff]
    %v983 = vld [vmem:[%s13 + $0x1e8] sm:$0xff]
    %v984 = vld [vmem:[%s13 + $0x1f0] sm:$0xff]
    %v985 = vld [vmem:[%s13 + $0x1f8] sm:$0xff]
    %v986 = vld [vmem:[%s13 + $0x200] sm:$0xff]
    %v987 = vld [vmem:[%s13 + $0x208] sm:$0xff]
    %v988 = vld [vmem:[%s13 + $0x210] sm:$0xff]
    %v989 = vld [vmem:[%s13 + $0x218] sm:$0xff]
    %v990 = vld [vmem:[%s13 + $0x220] sm:$0xff]
    %v991 = vld [vmem:[%s13 + $0x228] sm:$0xff]
    %v992 = vld [vmem:[%s13 + $0x230] sm:$0xff]
    %v993 = vld [vmem:[%s13 + $0x238] sm:$0xff]
    %v994 = vld [vmem:[%s13 + $0x240] sm:$0xff]
    %v995 = vld [vmem:[%s13 + $0x248] sm:$0xff]
    %v996 = vld [vmem:[%s13 + $0x250] sm:$0xff]
    %v997 = vld [vmem:[%s13 + $0x258] sm:$0xff]
    %v998 = vld [vmem:[%s13 + $0x260] sm:$0xff]
    %v999 = vld [vmem:[%s13 + $0x268] sm:$0xff]
    %v1000 = vld [vmem:[%s13 + $0x270] sm:$0xff]
    %v1001 = vld [vmem:[%s13 + $0x278] sm:$0xff]
    %v1002 = vld [vmem:[%s13 + $0x280] sm:$0xff]
    %v1003 = vld [vmem:[%s13 + $0x288] sm:$0xff]
    %v1004 = vld [vmem:[%s13 + $0x290] sm:$0xff]
    %v1005 = vld [vmem:[%s13 + $0x298] sm:$0xff]
    %v1006 = vld [vmem:[%s13 + $0x2a0] sm:$0xff]
    %v1007 = vld [vmem:[%s13 + $0x2a8] sm:$0xff]
    %v1008 = vld [vmem:[%s13 + $0x2b0] sm:$0xff]
    %v1009 = vld [vmem:[%s13 + $0x2b8] sm:$0xff]
    %v1010 = vld [vmem:[%s13 + $0x2c0] sm:$0xff]
    %v1011 = vld [vmem:[%s13 + $0x2c8] sm:$0xff]
    %v1012 = vld [vmem:[%s13 + $0x2d0] sm:$0xff]
    %v1013 = vld [vmem:[%s13 + $0x2d8] sm:$0xff]
    %v1014 = vld [vmem:[%s13 + $0x2e0] sm:$0xff]
    %v1015 = vld [vmem:[%s13 + $0x2e8] sm:$0xff]
    %v1016 = vld [vmem:[%s13 + $0x2f0] sm:$0xff]
    %v1017 = vld [vmem:[%s13 + $0x2f8] sm:$0xff]
    %v1018 = vld [vmem:[%s13 + $0x300] sm:$0xff]
    %v1019 = vld [vmem:[%s13 + $0x308] sm:$0xff]
    %v1020 = vld [vmem:[%s13 + $0x310] sm:$0xff]
    %v1021 = vld [vmem:[%s13 + $0x318] sm:$0xff]
    %v1022 = vld [vmem:[%s13 + $0x320] sm:$0xff]
    %v1023 = vld [vmem:[%s13 + $0x328] sm:$0xff]
    %v1024 = vld [vmem:[%s13 + $0x330] sm:$0xff]
    %v1025 = vld [vmem:[%s13 + $0x338] sm:$0xff]
    %v1026 = vld [vmem:[%s13 + $0x340] sm:$0xff]
    %v1027 = vld [vmem:[%s13 + $0x348] sm:$0xff]
    %v1028 = vld [vmem:[%s13 + $0x350] sm:$0xff]
    %v1029 = vld [vmem:[%s13 + $0x358] sm:$0xff]
    %v1030 = vld [vmem:[%s13 + $0x360] sm:$0xff]
    %v1031 = vld [vmem:[%s13 + $0x368] sm:$0xff]
    %v1032 = vld [vmem:[%s13 + $0x370] sm:$0xff]
    %v1033 = vld [vmem:[%s13 + $0x378] sm:$0xff]
    %v1034 = vld [vmem:[%s13 + $0x380] sm:$0xff]
    %v1035 = vld [vmem:[%s13 + $0x388] sm:$0xff]
    %v1036 = vld [vmem:[%s13 + $0x390] sm:$0xff]
    %v1037 = vld [vmem:[%s13 + $0x398] sm:$0xff]
    %v1038 = vld [vmem:[%s13 + $0x3a0] sm:$0xff]
    %v1039 = vld [vmem:[%s13 + $0x3a8] sm:$0xff]
    %v1040 = vld [vmem:[%s13 + $0x3b0] sm:$0xff]
    %v1041 = vld [vmem:[%s13 + $0x3b8] sm:$0xff]
    %v1042 = vld [vmem:[%s13 + $0x3c0] sm:$0xff]
    %v1043 = vld [vmem:[%s13 + $0x3c8] sm:$0xff]
    %v1044 = vld [vmem:[%s13 + $0x3d0] sm:$0xff]
    %v1045 = vld [vmem:[%s13 + $0x3d8] sm:$0xff]
    %v1046 = vld [vmem:[%s13 + $0x3e0] sm:$0xff]
    %v1047 = vld [vmem:[%s13 + $0x3e8] sm:$0xff]
    %v1048 = vld [vmem:[%s13 + $0x3f0] sm:$0xff]
    %v1049 = vld [vmem:[%s13 + $0x3f8] sm:$0xff]
    %v1050 = vld [vmem:[%s6] sm:$0xff]
    %v1051 = vld [vmem:[%s6 + $0x8] sm:$0xff]
    %v1052 = vld [vmem:[%s6 + $0x10] sm:$0xff]
    %v1053 = vld [vmem:[%s6 + $0x18] sm:$0xff]
    %v1054 = vld [vmem:[%s6 + $0x20] sm:$0xff]
    %v1055 = vld [vmem:[%s6 + $0x28] sm:$0xff]
    %v1056 = vld [vmem:[%s6 + $0x30] sm:$0xff]
    %v1057 = vld [vmem:[%s6 + $0x38] sm:$0xff]
    %v1058 = vld [vmem:[%s6 + $0x40] sm:$0xff]
    %v1059 = vld [vmem:[%s6 + $0x48] sm:$0xff]
    %v1060 = vld [vmem:[%s6 + $0x50] sm:$0xff]
    %v1061 = vld [vmem:[%s6 + $0x58] sm:$0xff]
    %v1062 = vld [vmem:[%s6 + $0x60] sm:$0xff]
    %v1063 = vld [vmem:[%s6 + $0x68] sm:$0xff]
    %v1064 = vld [vmem:[%s6 + $0x70] sm:$0xff]
    %v1065 = vld [vmem:[%s6 + $0x78] sm:$0xff]
    %v1066 = vld [vmem:[%s6 + $0x80] sm:$0xff]
    %v1067 = vld [vmem:[%s6 + $0x88] sm:$0xff]
    %v1068 = vld [vmem:[%s6 + $0x90] sm:$0xff]
    %v1069 = vld [vmem:[%s6 + $0x98] sm:$0xff]
    %v1070 = vld [vmem:[%s6 + $0xa0] sm:$0xff]
    %v1071 = vld [vmem:[%s6 + $0xa8] sm:$0xff]
    %v1072 = vld [vmem:[%s6 + $0xb0] sm:$0xff]
    %v1073 = vld [vmem:[%s6 + $0xb8] sm:$0xff]
    %v1074 = vld [vmem:[%s6 + $0xc0] sm:$0xff]
    %v1075 = vld [vmem:[%s6 + $0xc8] sm:$0xff]
    %v1076 = vld [vmem:[%s6 + $0xd0] sm:$0xff]
    %v1077 = vld [vmem:[%s6 + $0xd8] sm:$0xff]
    %v1078 = vld [vmem:[%s6 + $0xe0] sm:$0xff]
    %v1079 = vld [vmem:[%s6 + $0xe8] sm:$0xff]
    %v1080 = vld [vmem:[%s6 + $0xf0] sm:$0xff]
    %v1081 = vld [vmem:[%s6 + $0xf8] sm:$0xff]
    %v1082 = vld [vmem:[%s6 + $0x100] sm:$0xff]
    %v1083 = vld [vmem:[%s6 + $0x108] sm:$0xff]
    %v1084 = vld [vmem:[%s6 + $0x110] sm:$0xff]
    %v1085 = vld [vmem:[%s6 + $0x118] sm:$0xff]
    %v1086 = vld [vmem:[%s6 + $0x120] sm:$0xff]
    %v1087 = vld [vmem:[%s6 + $0x128] sm:$0xff]
    %v1088 = vld [vmem:[%s6 + $0x130] sm:$0xff]
    %v1089 = vld [vmem:[%s6 + $0x138] sm:$0xff]
    %v1090 = vld [vmem:[%s6 + $0x140] sm:$0xff]
    %v1091 = vld [vmem:[%s6 + $0x148] sm:$0xff]
    %v1092 = vld [vmem:[%s6 + $0x150] sm:$0xff]
    %v1093 = vld [vmem:[%s6 + $0x158] sm:$0xff]
    %v1094 = vld [vmem:[%s6 + $0x160] sm:$0xff]
    %v1095 = vld [vmem:[%s6 + $0x168] sm:$0xff]
    %v1096 = vld [vmem:[%s6 + $0x170] sm:$0xff]
    %v1097 = vld [vmem:[%s6 + $0x178] sm:$0xff]
    %v1098 = vld [vmem:[%s6 + $0x180] sm:$0xff]
    %v1099 = vld [vmem:[%s6 + $0x188] sm:$0xff]
    %v1100 = vld [vmem:[%s6 + $0x190] sm:$0xff]
    %v1101 = vld [vmem:[%s6 + $0x198] sm:$0xff]
    %v1102 = vld [vmem:[%s6 + $0x1a0] sm:$0xff]
    %v1103 = vld [vmem:[%s6 + $0x1a8] sm:$0xff]
    %v1104 = vld [vmem:[%s6 + $0x1b0] sm:$0xff]
    %v1105 = vld [vmem:[%s6 + $0x1b8] sm:$0xff]
    %v1106 = vld [vmem:[%s6 + $0x1c0] sm:$0xff]
    %v1107 = vld [vmem:[%s6 + $0x1c8] sm:$0xff]
    %v1108 = vld [vmem:[%s6 + $0x1d0] sm:$0xff]
    %v1109 = vld [vmem:[%s6 + $0x1d8] sm:$0xff]
    %v1110 = vld [vmem:[%s6 + $0x1e0] sm:$0xff]
    %v1111 = vld [vmem:[%s6 + $0x1e8] sm:$0xff]
    %v1112 = vld [vmem:[%s6 + $0x1f0] sm:$0xff]
    %v1113 = vld [vmem:[%s6 + $0x1f8] sm:$0xff]
    %v1114 = vld [vmem:[%s7] sm:$0xff]
    %v1116 = vlaneseq
    %v1117 = vshrl.u32 %v1116, 7
    %v1118 = vsub.s32 0, %v1117
    %v1119 = vrot.slane %v1114, %v1118
    %v1120 = vlaneseq
    %v1121 = vshrl.u32 %v1120, 7
    %v1122 = vsub.s32 1, %v1121
    %v1123 = vrot.slane %v1114, %v1122
    %v1124 = vlaneseq
    %v1125 = vshrl.u32 %v1124, 7
    %v1126 = vsub.s32 2, %v1125
    %v1127 = vrot.slane %v1114, %v1126
    %v1128 = vlaneseq
    %v1129 = vshrl.u32 %v1128, 7
    %v1130 = vsub.s32 3, %v1129
    %v1131 = vrot.slane %v1114, %v1130
    %v1132 = vlaneseq
    %v1133 = vshrl.u32 %v1132, 7
    %v1134 = vsub.s32 4, %v1133
    %v1135 = vrot.slane %v1114, %v1134
    %v1136 = vlaneseq
    %v1137 = vshrl.u32 %v1136, 7
    %v1138 = vsub.s32 5, %v1137
    %v1139 = vrot.slane %v1114, %v1138
    %v1140 = vlaneseq
    %v1141 = vshrl.u32 %v1140, 7
    %v1142 = vsub.s32 6, %v1141
    %v1143 = vrot.slane %v1114, %v1142
    %v1144 = vlaneseq
    %v1145 = vshrl.u32 %v1144, 7
    %v1146 = vsub.s32 7, %v1145
    %v1147 = vrot.slane %v1114, %v1146
    %vm1156 = vcmask 523264
    %v1158 = vsel %vm1156, %v492, 0
    %v1161 = vsel %vm1156, %v493, 0
    %v1164 = vsel %vm1156, %v494, 0
    %v1167 = vsel %vm1156, %v495, 0
    %v1170 = vsel %vm1156, %v496, 0
    %v1173 = vsel %vm1156, %v497, 0
    %v1176 = vsel %vm1156, %v498, 0
    %v1179 = vsel %vm1156, %v499, 0
    %v1182 = vsel %vm1156, %v500, 0
    %v1185 = vsel %vm1156, %v501, 0
    %v1188 = vsel %vm1156, %v502, 0
    %v1191 = vsel %vm1156, %v503, 0
    %v1194 = vsel %vm1156, %v504, 0
    %v1197 = vsel %vm1156, %v505, 0
    %v1200 = vsel %vm1156, %v506, 0
    %v1203 = vsel %vm1156, %v507, 0
    %v1206 = vsel %vm1156, %v508, 0
    %v1209 = vsel %vm1156, %v509, 0
    %v1212 = vsel %vm1156, %v510, 0
    %v1215 = vsel %vm1156, %v511, 0
    %v1218 = vsel %vm1156, %v512, 0
    %v1221 = vsel %vm1156, %v513, 0
    %v1224 = vsel %vm1156, %v514, 0
    %v1227 = vsel %vm1156, %v515, 0
    %v1230 = vsel %vm1156, %v516, 0
    %v1233 = vsel %vm1156, %v517, 0
    %v1236 = vsel %vm1156, %v518, 0
    %v1239 = vsel %vm1156, %v519, 0
    %v1242 = vsel %vm1156, %v520, 0
    %v1245 = vsel %vm1156, %v521, 0
    %v1248 = vsel %vm1156, %v522, 0
    %v1251 = vsel %vm1156, %v523, 0
    %1253 = vmatprep.subr.mxu0 0.0
    %1254 = vmatpush1.msra.mxu0 0.0
    %1255 = vmatprep.subr.mxu0 0.0
    %1256 = vmatpush1.msra.mxu0 0.0
    %1257 = vmatprep.subr.mxu0 0.0
    %1258 = vmatpush1.msra.mxu0 0.0
    %1259 = vmatprep.subr.mxu0 0.0
    %1260 = vmatpush1.msra.mxu0 0.0
    %1261 = vmatprep.subr.mxu0 0.0
    %1262 = vmatpush1.msra.mxu0 0.0
    %1263 = vmatprep.subr.mxu0 0.0
    %1264 = vmatpush1.msra.mxu0 0.0
    %1265 = vmatprep.subr.mxu0 0.0
    %1266 = vmatpush1.msra.mxu0 0.0
    %1267 = vmatprep.subr.mxu0 0.0
    %1268 = vmatpush1.msra.mxu0 0.0
    %1269 = vmatprep.subr.mxu0 %v1107
    %1270 = vmatpush1.msra.mxu0 %v1106
    %1271 = vmatprep.subr.mxu0 %v1099
    %1272 = vmatpush1.msra.mxu0 %v1098
    %1273 = vmatprep.subr.mxu0 %v1091
    %1274 = vmatpush1.msra.mxu0 %v1090
    %1275 = vmatprep.subr.mxu0 %v1083
    %1276 = vmatpush1.msra.mxu0 %v1082
    %1277 = vmatprep.subr.mxu0 %v1075
    %1278 = vmatpush1.msra.mxu0 %v1074
    %1279 = vmatprep.subr.mxu0 %v1067
    %1280 = vmatpush1.msra.mxu0 %v1066
    %1281 = vmatprep.subr.mxu0 %v1059
    %1282 = vmatpush1.msra.mxu0 %v1058
    %1283 = vmatprep.subr.mxu0 %v1051
    %1284 = vmatpush1.msra.mxu0 %v1050
    %1285 = vmatprep.subr.mxu0 0.0
    %1286 = vmatpush2.msra.mxu0 0.0
    %1287 = vmatprep.subr.mxu0 0.0
    %1288 = vmatpush2.msra.mxu0 0.0
    %1289 = vmatprep.subr.mxu0 0.0
    %1290 = vmatpush2.msra.mxu0 0.0
    %1291 = vmatprep.subr.mxu0 0.0
    %1292 = vmatpush2.msra.mxu0 0.0
    %1293 = vmatprep.subr.mxu0 0.0
    %1294 = vmatpush2.msra.mxu0 0.0
    %1295 = vmatprep.subr.mxu0 0.0
    %1296 = vmatpush2.msra.mxu0 0.0
    %1297 = vmatprep.subr.mxu0 0.0
    %1298 = vmatpush2.msra.mxu0 0.0
    %1299 = vmatprep.subr.mxu0 0.0
    %1300 = vmatpush2.msra.mxu0 0.0
    %1301 = vmatprep.subr.mxu0 0.0
    %1302 = vmatpush2.msra.mxu0 0.0
    %1303 = vmatprep.subr.mxu0 0.0
    %1304 = vmatpush2.msra.mxu0 0.0
    %1305 = vmatprep.subr.mxu0 0.0
    %1306 = vmatpush2.msra.mxu0 0.0
    %1307 = vmatprep.subr.mxu0 0.0
    %1308 = vmatpush2.msra.mxu0 0.0
    %1309 = vmatprep.subr.mxu0 0.0
    %1310 = vmatpush2.msra.mxu0 0.0
    %1311 = vmatprep.subr.mxu0 0.0
    %1312 = vmatpush2.msra.mxu0 0.0
    %1313 = vmatprep.subr.mxu0 0.0
    %1314 = vmatpush2.msra.mxu0 0.0
    %1315 = vmatprep.subr.mxu0 0.0
    %1316 = vmatpush2.msra.mxu0 0.0
    %1317 = vmatprep.mubr.f32.mxu0 0.0
    %1318 = vmatmul.mubr.f32.gmra.mxu0 %v1158
    %v1319 = vpop.f32.mrf.mxu0
    %v1320 = vadd.f32 %v1119, %v1319
    %v1321 = vpop.f32.mrf.mxu0
    %v1322 = vadd.f32 %v1123, %v1321
    %1323 = vmatprep.mubr.f32.mxu0 0.0
    %1324 = vmatmul.mubr.f32.gmra.mxu0 %v1161
    %v1325 = vpop.f32.mrf.mxu0
    %v1326 = vadd.f32 %v1119, %v1325
    %v1327 = vpop.f32.mrf.mxu0
    %v1328 = vadd.f32 %v1123, %v1327
    %1329 = vmatprep.mubr.f32.mxu0 0.0
    %1330 = vmatmul.mubr.f32.gmra.mxu0 %v1164
    %v1331 = vpop.f32.mrf.mxu0
    %v1332 = vadd.f32 %v1119, %v1331
    %v1333 = vpop.f32.mrf.mxu0
    %v1334 = vadd.f32 %v1123, %v1333
    %1335 = vmatprep.mubr.f32.mxu0 0.0
    %1336 = vmatmul.mubr.f32.gmra.mxu0 %v1167
    %v1337 = vpop.f32.mrf.mxu0
    %v1338 = vadd.f32 %v1119, %v1337
    %v1339 = vpop.f32.mrf.mxu0
    %v1340 = vadd.f32 %v1123, %v1339
    %1341 = vmatprep.mubr.f32.mxu0 0.0
    %1342 = vmatmul.mubr.f32.gmra.mxu0 %v1170
    %v1343 = vpop.f32.mrf.mxu0
    %v1344 = vadd.f32 %v1119, %v1343
    %v1345 = vpop.f32.mrf.mxu0
    %v1346 = vadd.f32 %v1123, %v1345
    %1347 = vmatprep.mubr.f32.mxu0 0.0
    %1348 = vmatmul.mubr.f32.gmra.mxu0 %v1173
    %v1349 = vpop.f32.mrf.mxu0
    %v1350 = vadd.f32 %v1119, %v1349
    %v1351 = vpop.f32.mrf.mxu0
    %v1352 = vadd.f32 %v1123, %v1351
    %1353 = vmatprep.mubr.f32.mxu0 0.0
    %1354 = vmatmul.mubr.f32.gmra.mxu0 %v1176
    %v1355 = vpop.f32.mrf.mxu0
    %v1356 = vadd.f32 %v1119, %v1355
    %v1357 = vpop.f32.mrf.mxu0
    %v1358 = vadd.f32 %v1123, %v1357
    %1359 = vmatprep.mubr.f32.mxu0 0.0
    %1360 = vmatmul.mubr.f32.gmra.mxu0 %v1179
    %v1361 = vpop.f32.mrf.mxu0
    %v1362 = vadd.f32 %v1119, %v1361
    %v1363 = vpop.f32.mrf.mxu0
    %v1364 = vadd.f32 %v1123, %v1363
    %1365 = vmatprep.mubr.f32.mxu0 0.0
    %1366 = vmatmul.mubr.f32.gmra.mxu0 %v1182
    %v1367 = vpop.f32.mrf.mxu0
    %v1368 = vadd.f32 %v1119, %v1367
    %v1369 = vpop.f32.mrf.mxu0
    %v1370 = vadd.f32 %v1123, %v1369
    %1371 = vmatprep.mubr.f32.mxu0 0.0
    %1372 = vmatmul.mubr.f32.gmra.mxu0 %v1185
    %v1373 = vpop.f32.mrf.mxu0
    %v1374 = vadd.f32 %v1119, %v1373
    %v1375 = vpop.f32.mrf.mxu0
    %v1376 = vadd.f32 %v1123, %v1375
    %1377 = vmatprep.mubr.f32.mxu0 0.0
    %1378 = vmatmul.mubr.f32.gmra.mxu0 %v1188
    %v1379 = vpop.f32.mrf.mxu0
    %v1380 = vadd.f32 %v1119, %v1379
    %v1381 = vpop.f32.mrf.mxu0
    %v1382 = vadd.f32 %v1123, %v1381
    %1383 = vmatprep.mubr.f32.mxu0 0.0
    %1384 = vmatmul.mubr.f32.gmra.mxu0 %v1191
    %v1385 = vpop.f32.mrf.mxu0
    %v1386 = vadd.f32 %v1119, %v1385
    %v1387 = vpop.f32.mrf.mxu0
    %v1388 = vadd.f32 %v1123, %v1387
    %1389 = vmatprep.mubr.f32.mxu0 0.0
    %1390 = vmatmul.mubr.f32.gmra.mxu0 %v1194
    %v1391 = vpop.f32.mrf.mxu0
    %v1392 = vadd.f32 %v1119, %v1391
    %v1393 = vpop.f32.mrf.mxu0
    %v1394 = vadd.f32 %v1123, %v1393
    %1395 = vmatprep.mubr.f32.mxu0 0.0
    %1396 = vmatmul.mubr.f32.gmra.mxu0 %v1197
    %v1397 = vpop.f32.mrf.mxu0
    %v1398 = vadd.f32 %v1119, %v1397
    %v1399 = vpop.f32.mrf.mxu0
    %v1400 = vadd.f32 %v1123, %v1399
    %1401 = vmatprep.mubr.f32.mxu0 0.0
    %1402 = vmatmul.mubr.f32.gmra.mxu0 %v1200
    %v1403 = vpop.f32.mrf.mxu0
    %v1404 = vadd.f32 %v1119, %v1403
    %v1405 = vpop.f32.mrf.mxu0
    %v1406 = vadd.f32 %v1123, %v1405
    %1407 = vmatprep.mubr.f32.mxu0 0.0
    %1408 = vmatmul.mubr.f32.gmra.mxu0 %v1203
    %v1409 = vpop.f32.mrf.mxu0
    %v1410 = vadd.f32 %v1119, %v1409
    %v1411 = vpop.f32.mrf.mxu0
    %v1412 = vadd.f32 %v1123, %v1411
    %1413 = vmatprep.mubr.f32.mxu0 0.0
    %1414 = vmatmul.mubr.f32.gmra.mxu0 %v1206
    %v1415 = vpop.f32.mrf.mxu0
    %v1416 = vadd.f32 %v1119, %v1415
    %v1417 = vpop.f32.mrf.mxu0
    %v1418 = vadd.f32 %v1123, %v1417
    %1419 = vmatprep.mubr.f32.mxu0 0.0
    %1420 = vmatmul.mubr.f32.gmra.mxu0 %v1209
    %v1421 = vpop.f32.mrf.mxu0
    %v1422 = vadd.f32 %v1119, %v1421
    %v1423 = vpop.f32.mrf.mxu0
    %v1424 = vadd.f32 %v1123, %v1423
    %1425 = vmatprep.mubr.f32.mxu0 0.0
    %1426 = vmatmul.mubr.f32.gmra.mxu0 %v1212
    %v1427 = vpop.f32.mrf.mxu0
    %v1428 = vadd.f32 %v1119, %v1427
    %v1429 = vpop.f32.mrf.mxu0
    %v1430 = vadd.f32 %v1123, %v1429
    %1431 = vmatprep.mubr.f32.mxu0 0.0
    %1432 = vmatmul.mubr.f32.gmra.mxu0 %v1215
    %v1433 = vpop.f32.mrf.mxu0
    %v1434 = vadd.f32 %v1119, %v1433
    %v1435 = vpop.f32.mrf.mxu0
    %v1436 = vadd.f32 %v1123, %v1435
    %1437 = vmatprep.mubr.f32.mxu0 0.0
    %1438 = vmatmul.mubr.f32.gmra.mxu0 %v1218
    %v1439 = vpop.f32.mrf.mxu0
    %v1440 = vadd.f32 %v1119, %v1439
    %v1441 = vpop.f32.mrf.mxu0
    %v1442 = vadd.f32 %v1123, %v1441
    %1443 = vmatprep.mubr.f32.mxu0 0.0
    %1444 = vmatmul.mubr.f32.gmra.mxu0 %v1221
    %v1445 = vpop.f32.mrf.mxu0
    %v1446 = vadd.f32 %v1119, %v1445
    %v1447 = vpop.f32.mrf.mxu0
    %v1448 = vadd.f32 %v1123, %v1447
    %1449 = vmatprep.mubr.f32.mxu0 0.0
    %1450 = vmatmul.mubr.f32.gmra.mxu0 %v1224
    %v1451 = vpop.f32.mrf.mxu0
    %v1452 = vadd.f32 %v1119, %v1451
    %v1453 = vpop.f32.mrf.mxu0
    %v1454 = vadd.f32 %v1123, %v1453
    %1455 = vmatprep.mubr.f32.mxu0 0.0
    %1456 = vmatmul.mubr.f32.gmra.mxu0 %v1227
    %v1457 = vpop.f32.mrf.mxu0
    %v1458 = vadd.f32 %v1119, %v1457
    %v1459 = vpop.f32.mrf.mxu0
    %v1460 = vadd.f32 %v1123, %v1459
    %1461 = vmatprep.mubr.f32.mxu0 0.0
    %1462 = vmatmul.mubr.f32.gmra.mxu0 %v1230
    %v1463 = vpop.f32.mrf.mxu0
    %v1464 = vadd.f32 %v1119, %v1463
    %v1465 = vpop.f32.mrf.mxu0
    %v1466 = vadd.f32 %v1123, %v1465
    %1467 = vmatprep.mubr.f32.mxu0 0.0
    %1468 = vmatmul.mubr.f32.gmra.mxu0 %v1233
    %v1469 = vpop.f32.mrf.mxu0
    %v1470 = vadd.f32 %v1119, %v1469
    %v1471 = vpop.f32.mrf.mxu0
    %v1472 = vadd.f32 %v1123, %v1471
    %1473 = vmatprep.mubr.f32.mxu0 0.0
    %1474 = vmatmul.mubr.f32.gmra.mxu0 %v1236
    %v1475 = vpop.f32.mrf.mxu0
    %v1476 = vadd.f32 %v1119, %v1475
    %v1477 = vpop.f32.mrf.mxu0
    %v1478 = vadd.f32 %v1123, %v1477
    %1479 = vmatprep.mubr.f32.mxu0 0.0
    %1480 = vmatmul.mubr.f32.gmra.mxu0 %v1239
    %v1481 = vpop.f32.mrf.mxu0
    %v1482 = vadd.f32 %v1119, %v1481
    %v1483 = vpop.f32.mrf.mxu0
    %v1484 = vadd.f32 %v1123, %v1483
    %1485 = vmatprep.mubr.f32.mxu0 0.0
    %1486 = vmatmul.mubr.f32.gmra.mxu0 %v1242
    %v1487 = vpop.f32.mrf.mxu0
    %v1488 = vadd.f32 %v1119, %v1487
    %v1489 = vpop.f32.mrf.mxu0
    %v1490 = vadd.f32 %v1123, %v1489
    %1491 = vmatprep.mubr.f32.mxu0 0.0
    %1492 = vmatmul.mubr.f32.gmra.mxu0 %v1245
    %v1493 = vpop.f32.mrf.mxu0
    %v1494 = vadd.f32 %v1119, %v1493
    %v1495 = vpop.f32.mrf.mxu0
    %v1496 = vadd.f32 %v1123, %v1495
    %1497 = vmatprep.mubr.f32.mxu0 0.0
    %1498 = vmatmul.mubr.f32.gmra.mxu0 %v1248
    %v1499 = vpop.f32.mrf.mxu0
    %v1500 = vadd.f32 %v1119, %v1499
    %v1501 = vpop.f32.mrf.mxu0
    %v1502 = vadd.f32 %v1123, %v1501
    %1503 = vmatprep.mubr.f32.mxu0 0.0
    %1504 = vmatmul.mubr.f32.gmra.mxu0 %v1251
    %v1505 = vpop.f32.mrf.mxu0
    %v1506 = vadd.f32 %v1119, %v1505
    %v1507 = vpop.f32.mrf.mxu0
    %v1508 = vadd.f32 %v1123, %v1507
    %1509 = vdwg.mxu0
    %1510 = vmatprep.subr.mxu0 0.0
    %1511 = vmatpush1.msra.mxu0 0.0
    %1512 = vmatprep.subr.mxu0 0.0
    %1513 = vmatpush1.msra.mxu0 0.0
    %1514 = vmatprep.subr.mxu0 0.0
    %1515 = vmatpush1.msra.mxu0 0.0
    %1516 = vmatprep.subr.mxu0 0.0
    %1517 = vmatpush1.msra.mxu0 0.0
    %1518 = vmatprep.subr.mxu0 0.0
    %1519 = vmatpush1.msra.mxu0 0.0
    %1520 = vmatprep.subr.mxu0 0.0
    %1521 = vmatpush1.msra.mxu0 0.0
    %1522 = vmatprep.subr.mxu0 0.0
    %1523 = vmatpush1.msra.mxu0 0.0
    %1524 = vmatprep.subr.mxu0 0.0
    %1525 = vmatpush1.msra.mxu0 0.0
    %1526 = vmatprep.subr.mxu0 %v1109
    %1527 = vmatpush1.msra.mxu0 %v1108
    %1528 = vmatprep.subr.mxu0 %v1101
    %1529 = vmatpush1.msra.mxu0 %v1100
    %1530 = vmatprep.subr.mxu0 %v1093
    %1531 = vmatpush1.msra.mxu0 %v1092
    %1532 = vmatprep.subr.mxu0 %v1085
    %1533 = vmatpush1.msra.mxu0 %v1084
    %1534 = vmatprep.subr.mxu0 %v1077
    %1535 = vmatpush1.msra.mxu0 %v1076
    %1536 = vmatprep.subr.mxu0 %v1069
    %1537 = vmatpush1.msra.mxu0 %v1068
    %1538 = vmatprep.subr.mxu0 %v1061
    %1539 = vmatpush1.msra.mxu0 %v1060
    %1540 = vmatprep.subr.mxu0 %v1053
    %1541 = vmatpush1.msra.mxu0 %v1052
    %1542 = vmatprep.subr.mxu0 0.0
    %1543 = vmatpush2.msra.mxu0 0.0
    %1544 = vmatprep.subr.mxu0 0.0
    %1545 = vmatpush2.msra.mxu0 0.0
    %1546 = vmatprep.subr.mxu0 0.0
    %1547 = vmatpush2.msra.mxu0 0.0
    %1548 = vmatprep.subr.mxu0 0.0
    %1549 = vmatpush2.msra.mxu0 0.0
    %1550 = vmatprep.subr.mxu0 0.0
    %1551 = vmatpush2.msra.mxu0 0.0
    %1552 = vmatprep.subr.mxu0 0.0
    %1553 = vmatpush2.msra.mxu0 0.0
    %1554 = vmatprep.subr.mxu0 0.0
    %1555 = vmatpush2.msra.mxu0 0.0
    %1556 = vmatprep.subr.mxu0 0.0
    %1557 = vmatpush2.msra.mxu0 0.0
    %1558 = vmatprep.subr.mxu0 0.0
    %1559 = vmatpush2.msra.mxu0 0.0
    %1560 = vmatprep.subr.mxu0 0.0
    %1561 = vmatpush2.msra.mxu0 0.0
    %1562 = vmatprep.subr.mxu0 0.0
    %1563 = vmatpush2.msra.mxu0 0.0
    %1564 = vmatprep.subr.mxu0 0.0
    %1565 = vmatpush2.msra.mxu0 0.0
    %1566 = vmatprep.subr.mxu0 0.0
    %1567 = vmatpush2.msra.mxu0 0.0
    %1568 = vmatprep.subr.mxu0 0.0
    %1569 = vmatpush2.msra.mxu0 0.0
    %1570 = vmatprep.subr.mxu0 0.0
    %1571 = vmatpush2.msra.mxu0 0.0
    %1572 = vmatprep.subr.mxu0 0.0
    %1573 = vmatpush2.msra.mxu0 0.0
    %1574 = vmatprep.mubr.f32.mxu0 0.0
    %1575 = vmatmul.mubr.f32.gmra.mxu0 %v1158
    %v1576 = vpop.f32.mrf.mxu0
    %v1577 = vadd.f32 %v1127, %v1576
    %v1578 = vpop.f32.mrf.mxu0
    %v1579 = vadd.f32 %v1131, %v1578
    %1580 = vmatprep.mubr.f32.mxu0 0.0
    %1581 = vmatmul.mubr.f32.gmra.mxu0 %v1161
    %v1582 = vpop.f32.mrf.mxu0
    %v1583 = vadd.f32 %v1127, %v1582
    %v1584 = vpop.f32.mrf.mxu0
    %v1585 = vadd.f32 %v1131, %v1584
    %1586 = vmatprep.mubr.f32.mxu0 0.0
    %1587 = vmatmul.mubr.f32.gmra.mxu0 %v1164
    %v1588 = vpop.f32.mrf.mxu0
    %v1589 = vadd.f32 %v1127, %v1588
    %v1590 = vpop.f32.mrf.mxu0
    %v1591 = vadd.f32 %v1131, %v1590
    %1592 = vmatprep.mubr.f32.mxu0 0.0
    %1593 = vmatmul.mubr.f32.gmra.mxu0 %v1167
    %v1594 = vpop.f32.mrf.mxu0
    %v1595 = vadd.f32 %v1127, %v1594
    %v1596 = vpop.f32.mrf.mxu0
    %v1597 = vadd.f32 %v1131, %v1596
    %1598 = vmatprep.mubr.f32.mxu0 0.0
    %1599 = vmatmul.mubr.f32.gmra.mxu0 %v1170
    %v1600 = vpop.f32.mrf.mxu0
    %v1601 = vadd.f32 %v1127, %v1600
    %v1602 = vpop.f32.mrf.mxu0
    %v1603 = vadd.f32 %v1131, %v1602
    %1604 = vmatprep.mubr.f32.mxu0 0.0
    %1605 = vmatmul.mubr.f32.gmra.mxu0 %v1173
    %v1606 = vpop.f32.mrf.mxu0
    %v1607 = vadd.f32 %v1127, %v1606
    %v1608 = vpop.f32.mrf.mxu0
    %v1609 = vadd.f32 %v1131, %v1608
    %1610 = vmatprep.mubr.f32.mxu0 0.0
    %1611 = vmatmul.mubr.f32.gmra.mxu0 %v1176
    %v1612 = vpop.f32.mrf.mxu0
    %v1613 = vadd.f32 %v1127, %v1612
    %v1614 = vpop.f32.mrf.mxu0
    %v1615 = vadd.f32 %v1131, %v1614
    %1616 = vmatprep.mubr.f32.mxu0 0.0
    %1617 = vmatmul.mubr.f32.gmra.mxu0 %v1179
    %v1618 = vpop.f32.mrf.mxu0
    %v1619 = vadd.f32 %v1127, %v1618
    %v1620 = vpop.f32.mrf.mxu0
    %v1621 = vadd.f32 %v1131, %v1620
    %1622 = vmatprep.mubr.f32.mxu0 0.0
    %1623 = vmatmul.mubr.f32.gmra.mxu0 %v1182
    %v1624 = vpop.f32.mrf.mxu0
    %v1625 = vadd.f32 %v1127, %v1624
    %v1626 = vpop.f32.mrf.mxu0
    %v1627 = vadd.f32 %v1131, %v1626
    %1628 = vmatprep.mubr.f32.mxu0 0.0
    %1629 = vmatmul.mubr.f32.gmra.mxu0 %v1185
    %v1630 = vpop.f32.mrf.mxu0
    %v1631 = vadd.f32 %v1127, %v1630
    %v1632 = vpop.f32.mrf.mxu0
    %v1633 = vadd.f32 %v1131, %v1632
    %1634 = vmatprep.mubr.f32.mxu0 0.0
    %1635 = vmatmul.mubr.f32.gmra.mxu0 %v1188
    %v1636 = vpop.f32.mrf.mxu0
    %v1637 = vadd.f32 %v1127, %v1636
    %v1638 = vpop.f32.mrf.mxu0
    %v1639 = vadd.f32 %v1131, %v1638
    %1640 = vmatprep.mubr.f32.mxu0 0.0
    %1641 = vmatmul.mubr.f32.gmra.mxu0 %v1191
    %v1642 = vpop.f32.mrf.mxu0
    %v1643 = vadd.f32 %v1127, %v1642
    %v1644 = vpop.f32.mrf.mxu0
    %v1645 = vadd.f32 %v1131, %v1644
    %1646 = vmatprep.mubr.f32.mxu0 0.0
    %1647 = vmatmul.mubr.f32.gmra.mxu0 %v1194
    %v1648 = vpop.f32.mrf.mxu0
    %v1649 = vadd.f32 %v1127, %v1648
    %v1650 = vpop.f32.mrf.mxu0
    %v1651 = vadd.f32 %v1131, %v1650
    %1652 = vmatprep.mubr.f32.mxu0 0.0
    %1653 = vmatmul.mubr.f32.gmra.mxu0 %v1197
    %v1654 = vpop.f32.mrf.mxu0
    %v1655 = vadd.f32 %v1127, %v1654
    %v1656 = vpop.f32.mrf.mxu0
    %v1657 = vadd.f32 %v1131, %v1656
    %1658 = vmatprep.mubr.f32.mxu0 0.0
    %1659 = vmatmul.mubr.f32.gmra.mxu0 %v1200
    %v1660 = vpop.f32.mrf.mxu0
    %v1661 = vadd.f32 %v1127, %v1660
    %v1662 = vpop.f32.mrf.mxu0
    %v1663 = vadd.f32 %v1131, %v1662
    %1664 = vmatprep.mubr.f32.mxu0 0.0
    %1665 = vmatmul.mubr.f32.gmra.mxu0 %v1203
    %v1666 = vpop.f32.mrf.mxu0
    %v1667 = vadd.f32 %v1127, %v1666
    %v1668 = vpop.f32.mrf.mxu0
    %v1669 = vadd.f32 %v1131, %v1668
    %1670 = vmatprep.mubr.f32.mxu0 0.0
    %1671 = vmatmul.mubr.f32.gmra.mxu0 %v1206
    %v1672 = vpop.f32.mrf.mxu0
    %v1673 = vadd.f32 %v1127, %v1672
    %v1674 = vpop.f32.mrf.mxu0
    %v1675 = vadd.f32 %v1131, %v1674
    %1676 = vmatprep.mubr.f32.mxu0 0.0
    %1677 = vmatmul.mubr.f32.gmra.mxu0 %v1209
    %v1678 = vpop.f32.mrf.mxu0
    %v1679 = vadd.f32 %v1127, %v1678
    %v1680 = vpop.f32.mrf.mxu0
    %v1681 = vadd.f32 %v1131, %v1680
    %1682 = vmatprep.mubr.f32.mxu0 0.0
    %1683 = vmatmul.mubr.f32.gmra.mxu0 %v1212
    %v1684 = vpop.f32.mrf.mxu0
    %v1685 = vadd.f32 %v1127, %v1684
    %v1686 = vpop.f32.mrf.mxu0
    %v1687 = vadd.f32 %v1131, %v1686
    %1688 = vmatprep.mubr.f32.mxu0 0.0
    %1689 = vmatmul.mubr.f32.gmra.mxu0 %v1215
    %v1690 = vpop.f32.mrf.mxu0
    %v1691 = vadd.f32 %v1127, %v1690
    %v1692 = vpop.f32.mrf.mxu0
    %v1693 = vadd.f32 %v1131, %v1692
    %1694 = vmatprep.mubr.f32.mxu0 0.0
    %1695 = vmatmul.mubr.f32.gmra.mxu0 %v1218
    %v1696 = vpop.f32.mrf.mxu0
    %v1697 = vadd.f32 %v1127, %v1696
    %v1698 = vpop.f32.mrf.mxu0
    %v1699 = vadd.f32 %v1131, %v1698
    %1700 = vmatprep.mubr.f32.mxu0 0.0
    %1701 = vmatmul.mubr.f32.gmra.mxu0 %v1221
    %v1702 = vpop.f32.mrf.mxu0
    %v1703 = vadd.f32 %v1127, %v1702
    %v1704 = vpop.f32.mrf.mxu0
    %v1705 = vadd.f32 %v1131, %v1704
    %1706 = vmatprep.mubr.f32.mxu0 0.0
    %1707 = vmatmul.mubr.f32.gmra.mxu0 %v1224
    %v1708 = vpop.f32.mrf.mxu0
    %v1709 = vadd.f32 %v1127, %v1708
    %v1710 = vpop.f32.mrf.mxu0
    %v1711 = vadd.f32 %v1131, %v1710
    %1712 = vmatprep.mubr.f32.mxu0 0.0
    %1713 = vmatmul.mubr.f32.gmra.mxu0 %v1227
    %v1714 = vpop.f32.mrf.mxu0
    %v1715 = vadd.f32 %v1127, %v1714
    %v1716 = vpop.f32.mrf.mxu0
    %v1717 = vadd.f32 %v1131, %v1716
    %1718 = vmatprep.mubr.f32.mxu0 0.0
    %1719 = vmatmul.mubr.f32.gmra.mxu0 %v1230
    %v1720 = vpop.f32.mrf.mxu0
    %v1721 = vadd.f32 %v1127, %v1720
    %v1722 = vpop.f32.mrf.mxu0
    %v1723 = vadd.f32 %v1131, %v1722
    %1724 = vmatprep.mubr.f32.mxu0 0.0
    %1725 = vmatmul.mubr.f32.gmra.mxu0 %v1233
    %v1726 = vpop.f32.mrf.mxu0
    %v1727 = vadd.f32 %v1127, %v1726
    %v1728 = vpop.f32.mrf.mxu0
    %v1729 = vadd.f32 %v1131, %v1728
    %1730 = vmatprep.mubr.f32.mxu0 0.0
    %1731 = vmatmul.mubr.f32.gmra.mxu0 %v1236
    %v1732 = vpop.f32.mrf.mxu0
    %v1733 = vadd.f32 %v1127, %v1732
    %v1734 = vpop.f32.mrf.mxu0
    %v1735 = vadd.f32 %v1131, %v1734
    %1736 = vmatprep.mubr.f32.mxu0 0.0
    %1737 = vmatmul.mubr.f32.gmra.mxu0 %v1239
    %v1738 = vpop.f32.mrf.mxu0
    %v1739 = vadd.f32 %v1127, %v1738
    %v1740 = vpop.f32.mrf.mxu0
    %v1741 = vadd.f32 %v1131, %v1740
    %1742 = vmatprep.mubr.f32.mxu0 0.0
    %1743 = vmatmul.mubr.f32.gmra.mxu0 %v1242
    %v1744 = vpop.f32.mrf.mxu0
    %v1745 = vadd.f32 %v1127, %v1744
    %v1746 = vpop.f32.mrf.mxu0
    %v1747 = vadd.f32 %v1131, %v1746
    %1748 = vmatprep.mubr.f32.mxu0 0.0
    %1749 = vmatmul.mubr.f32.gmra.mxu0 %v1245
    %v1750 = vpop.f32.mrf.mxu0
    %v1751 = vadd.f32 %v1127, %v1750
    %v1752 = vpop.f32.mrf.mxu0
    %v1753 = vadd.f32 %v1131, %v1752
    %1754 = vmatprep.mubr.f32.mxu0 0.0
    %1755 = vmatmul.mubr.f32.gmra.mxu0 %v1248
    %v1756 = vpop.f32.mrf.mxu0
    %v1757 = vadd.f32 %v1127, %v1756
    %v1758 = vpop.f32.mrf.mxu0
    %v1759 = vadd.f32 %v1131, %v1758
    %1760 = vmatprep.mubr.f32.mxu0 0.0
    %1761 = vmatmul.mubr.f32.gmra.mxu0 %v1251
    %v1762 = vpop.f32.mrf.mxu0
    %v1763 = vadd.f32 %v1127, %v1762
    %v1764 = vpop.f32.mrf.mxu0
    %v1765 = vadd.f32 %v1131, %v1764
    %1766 = vdwg.mxu0
    %1767 = vmatprep.subr.mxu0 0.0
    %1768 = vmatpush1.msra.mxu0 0.0
    %1769 = vmatprep.subr.mxu0 0.0
    %1770 = vmatpush1.msra.mxu0 0.0
    %1771 = vmatprep.subr.mxu0 0.0
    %1772 = vmatpush1.msra.mxu0 0.0
    %1773 = vmatprep.subr.mxu0 0.0
    %1774 = vmatpush1.msra.mxu0 0.0
    %1775 = vmatprep.subr.mxu0 0.0
    %1776 = vmatpush1.msra.mxu0 0.0
    %1777 = vmatprep.subr.mxu0 0.0
    %1778 = vmatpush1.msra.mxu0 0.0
    %1779 = vmatprep.subr.mxu0 0.0
    %1780 = vmatpush1.msra.mxu0 0.0
    %1781 = vmatprep.subr.mxu0 0.0
    %1782 = vmatpush1.msra.mxu0 0.0
    %1783 = vmatprep.subr.mxu0 %v1111
    %1784 = vmatpush1.msra.mxu0 %v1110
    %1785 = vmatprep.subr.mxu0 %v1103
    %1786 = vmatpush1.msra.mxu0 %v1102
    %1787 = vmatprep.subr.mxu0 %v1095
    %1788 = vmatpush1.msra.mxu0 %v1094
    %1789 = vmatprep.subr.mxu0 %v1087
    %1790 = vmatpush1.msra.mxu0 %v1086
    %1791 = vmatprep.subr.mxu0 %v1079
    %1792 = vmatpush1.msra.mxu0 %v1078
    %1793 = vmatprep.subr.mxu0 %v1071
    %1794 = vmatpush1.msra.mxu0 %v1070
    %1795 = vmatprep.subr.mxu0 %v1063
    %1796 = vmatpush1.msra.mxu0 %v1062
    %1797 = vmatprep.subr.mxu0 %v1055
    %1798 = vmatpush1.msra.mxu0 %v1054
    %1799 = vmatprep.subr.mxu0 0.0
    %1800 = vmatpush2.msra.mxu0 0.0
    %1801 = vmatprep.subr.mxu0 0.0
    %1802 = vmatpush2.msra.mxu0 0.0
    %1803 = vmatprep.subr.mxu0 0.0
    %1804 = vmatpush2.msra.mxu0 0.0
    %1805 = vmatprep.subr.mxu0 0.0
    %1806 = vmatpush2.msra.mxu0 0.0
    %1807 = vmatprep.subr.mxu0 0.0
    %1808 = vmatpush2.msra.mxu0 0.0
    %1809 = vmatprep.subr.mxu0 0.0
    %1810 = vmatpush2.msra.mxu0 0.0
    %1811 = vmatprep.subr.mxu0 0.0
    %1812 = vmatpush2.msra.mxu0 0.0
    %1813 = vmatprep.subr.mxu0 0.0
    %1814 = vmatpush2.msra.mxu0 0.0
    %1815 = vmatprep.subr.mxu0 0.0
    %1816 = vmatpush2.msra.mxu0 0.0
    %1817 = vmatprep.subr.mxu0 0.0
    %1818 = vmatpush2.msra.mxu0 0.0
    %1819 = vmatprep.subr.mxu0 0.0
    %1820 = vmatpush2.msra.mxu0 0.0
    %1821 = vmatprep.subr.mxu0 0.0
    %1822 = vmatpush2.msra.mxu0 0.0
    %1823 = vmatprep.subr.mxu0 0.0
    %1824 = vmatpush2.msra.mxu0 0.0
    %1825 = vmatprep.subr.mxu0 0.0
    %1826 = vmatpush2.msra.mxu0 0.0
    %1827 = vmatprep.subr.mxu0 0.0
    %1828 = vmatpush2.msra.mxu0 0.0
    %1829 = vmatprep.subr.mxu0 0.0
    %1830 = vmatpush2.msra.mxu0 0.0
    %1831 = vmatprep.mubr.f32.mxu0 0.0
    %1832 = vmatmul.mubr.f32.gmra.mxu0 %v1158
    %v1833 = vpop.f32.mrf.mxu0
    %v1834 = vadd.f32 %v1135, %v1833
    %v1835 = vpop.f32.mrf.mxu0
    %v1836 = vadd.f32 %v1139, %v1835
    %1837 = vmatprep.mubr.f32.mxu0 0.0
    %1838 = vmatmul.mubr.f32.gmra.mxu0 %v1161
    %v1839 = vpop.f32.mrf.mxu0
    %v1840 = vadd.f32 %v1135, %v1839
    %v1841 = vpop.f32.mrf.mxu0
    %v1842 = vadd.f32 %v1139, %v1841
    %1843 = vmatprep.mubr.f32.mxu0 0.0
    %1844 = vmatmul.mubr.f32.gmra.mxu0 %v1164
    %v1845 = vpop.f32.mrf.mxu0
    %v1846 = vadd.f32 %v1135, %v1845
    %v1847 = vpop.f32.mrf.mxu0
    %v1848 = vadd.f32 %v1139, %v1847
    %1849 = vmatprep.mubr.f32.mxu0 0.0
    %1850 = vmatmul.mubr.f32.gmra.mxu0 %v1167
    %v1851 = vpop.f32.mrf.mxu0
    %v1852 = vadd.f32 %v1135, %v1851
    %v1853 = vpop.f32.mrf.mxu0
    %v1854 = vadd.f32 %v1139, %v1853
    %1855 = vmatprep.mubr.f32.mxu0 0.0
    %1856 = vmatmul.mubr.f32.gmra.mxu0 %v1170
    %v1857 = vpop.f32.mrf.mxu0
    %v1858 = vadd.f32 %v1135, %v1857
    %v1859 = vpop.f32.mrf.mxu0
    %v1860 = vadd.f32 %v1139, %v1859
    %1861 = vmatprep.mubr.f32.mxu0 0.0
    %1862 = vmatmul.mubr.f32.gmra.mxu0 %v1173
    %v1863 = vpop.f32.mrf.mxu0
    %v1864 = vadd.f32 %v1135, %v1863
    %v1865 = vpop.f32.mrf.mxu0
    %v1866 = vadd.f32 %v1139, %v1865
    %1867 = vmatprep.mubr.f32.mxu0 0.0
    %1868 = vmatmul.mubr.f32.gmra.mxu0 %v1176
    %v1869 = vpop.f32.mrf.mxu0
    %v1870 = vadd.f32 %v1135, %v1869
    %v1871 = vpop.f32.mrf.mxu0
    %v1872 = vadd.f32 %v1139, %v1871
    %1873 = vmatprep.mubr.f32.mxu0 0.0
    %1874 = vmatmul.mubr.f32.gmra.mxu0 %v1179
    %v1875 = vpop.f32.mrf.mxu0
    %v1876 = vadd.f32 %v1135, %v1875
    %v1877 = vpop.f32.mrf.mxu0
    %v1878 = vadd.f32 %v1139, %v1877
    %1879 = vmatprep.mubr.f32.mxu0 0.0
    %1880 = vmatmul.mubr.f32.gmra.mxu0 %v1182
    %v1881 = vpop.f32.mrf.mxu0
    %v1882 = vadd.f32 %v1135, %v1881
    %v1883 = vpop.f32.mrf.mxu0
    %v1884 = vadd.f32 %v1139, %v1883
    %1885 = vmatprep.mubr.f32.mxu0 0.0
    %1886 = vmatmul.mubr.f32.gmra.mxu0 %v1185
    %v1887 = vpop.f32.mrf.mxu0
    %v1888 = vadd.f32 %v1135, %v1887
    %v1889 = vpop.f32.mrf.mxu0
    %v1890 = vadd.f32 %v1139, %v1889
    %1891 = vmatprep.mubr.f32.mxu0 0.0
    %1892 = vmatmul.mubr.f32.gmra.mxu0 %v1188
    %v1893 = vpop.f32.mrf.mxu0
    %v1894 = vadd.f32 %v1135, %v1893
    %v1895 = vpop.f32.mrf.mxu0
    %v1896 = vadd.f32 %v1139, %v1895
    %1897 = vmatprep.mubr.f32.mxu0 0.0
    %1898 = vmatmul.mubr.f32.gmra.mxu0 %v1191
    %v1899 = vpop.f32.mrf.mxu0
    %v1900 = vadd.f32 %v1135, %v1899
    %v1901 = vpop.f32.mrf.mxu0
    %v1902 = vadd.f32 %v1139, %v1901
    %1903 = vmatprep.mubr.f32.mxu0 0.0
    %1904 = vmatmul.mubr.f32.gmra.mxu0 %v1194
    %v1905 = vpop.f32.mrf.mxu0
    %v1906 = vadd.f32 %v1135, %v1905
    %v1907 = vpop.f32.mrf.mxu0
    %v1908 = vadd.f32 %v1139, %v1907
    %1909 = vmatprep.mubr.f32.mxu0 0.0
    %1910 = vmatmul.mubr.f32.gmra.mxu0 %v1197
    %v1911 = vpop.f32.mrf.mxu0
    %v1912 = vadd.f32 %v1135, %v1911
    %v1913 = vpop.f32.mrf.mxu0
    %v1914 = vadd.f32 %v1139, %v1913
    %1915 = vmatprep.mubr.f32.mxu0 0.0
    %1916 = vmatmul.mubr.f32.gmra.mxu0 %v1200
    %v1917 = vpop.f32.mrf.mxu0
    %v1918 = vadd.f32 %v1135, %v1917
    %v1919 = vpop.f32.mrf.mxu0
    %v1920 = vadd.f32 %v1139, %v1919
    %1921 = vmatprep.mubr.f32.mxu0 0.0
    %1922 = vmatmul.mubr.f32.gmra.mxu0 %v1203
    %v1923 = vpop.f32.mrf.mxu0
    %v1924 = vadd.f32 %v1135, %v1923
    %v1925 = vpop.f32.mrf.mxu0
    %v1926 = vadd.f32 %v1139, %v1925
    %1927 = vmatprep.mubr.f32.mxu0 0.0
    %1928 = vmatmul.mubr.f32.gmra.mxu0 %v1206
    %v1929 = vpop.f32.mrf.mxu0
    %v1930 = vadd.f32 %v1135, %v1929
    %v1931 = vpop.f32.mrf.mxu0
    %v1932 = vadd.f32 %v1139, %v1931
    %1933 = vmatprep.mubr.f32.mxu0 0.0
    %1934 = vmatmul.mubr.f32.gmra.mxu0 %v1209
    %v1935 = vpop.f32.mrf.mxu0
    %v1936 = vadd.f32 %v1135, %v1935
    %v1937 = vpop.f32.mrf.mxu0
    %v1938 = vadd.f32 %v1139, %v1937
    %1939 = vmatprep.mubr.f32.mxu0 0.0
    %1940 = vmatmul.mubr.f32.gmra.mxu0 %v1212
    %v1941 = vpop.f32.mrf.mxu0
    %v1942 = vadd.f32 %v1135, %v1941
    %v1943 = vpop.f32.mrf.mxu0
    %v1944 = vadd.f32 %v1139, %v1943
    %1945 = vmatprep.mubr.f32.mxu0 0.0
    %1946 = vmatmul.mubr.f32.gmra.mxu0 %v1215
    %v1947 = vpop.f32.mrf.mxu0
    %v1948 = vadd.f32 %v1135, %v1947
    %v1949 = vpop.f32.mrf.mxu0
    %v1950 = vadd.f32 %v1139, %v1949
    %1951 = vmatprep.mubr.f32.mxu0 0.0
    %1952 = vmatmul.mubr.f32.gmra.mxu0 %v1218
    %v1953 = vpop.f32.mrf.mxu0
    %v1954 = vadd.f32 %v1135, %v1953
    %v1955 = vpop.f32.mrf.mxu0
    %v1956 = vadd.f32 %v1139, %v1955
    %1957 = vmatprep.mubr.f32.mxu0 0.0
    %1958 = vmatmul.mubr.f32.gmra.mxu0 %v1221
    %v1959 = vpop.f32.mrf.mxu0
    %v1960 = vadd.f32 %v1135, %v1959
    %v1961 = vpop.f32.mrf.mxu0
    %v1962 = vadd.f32 %v1139, %v1961
    %1963 = vmatprep.mubr.f32.mxu0 0.0
    %1964 = vmatmul.mubr.f32.gmra.mxu0 %v1224
    %v1965 = vpop.f32.mrf.mxu0
    %v1966 = vadd.f32 %v1135, %v1965
    %v1967 = vpop.f32.mrf.mxu0
    %v1968 = vadd.f32 %v1139, %v1967
    %1969 = vmatprep.mubr.f32.mxu0 0.0
    %1970 = vmatmul.mubr.f32.gmra.mxu0 %v1227
    %v1971 = vpop.f32.mrf.mxu0
    %v1972 = vadd.f32 %v1135, %v1971
    %v1973 = vpop.f32.mrf.mxu0
    %v1974 = vadd.f32 %v1139, %v1973
    %1975 = vmatprep.mubr.f32.mxu0 0.0
    %1976 = vmatmul.mubr.f32.gmra.mxu0 %v1230
    %v1977 = vpop.f32.mrf.mxu0
    %v1978 = vadd.f32 %v1135, %v1977
    %v1979 = vpop.f32.mrf.mxu0
    %v1980 = vadd.f32 %v1139, %v1979
    %1981 = vmatprep.mubr.f32.mxu0 0.0
    %1982 = vmatmul.mubr.f32.gmra.mxu0 %v1233
    %v1983 = vpop.f32.mrf.mxu0
    %v1984 = vadd.f32 %v1135, %v1983
    %v1985 = vpop.f32.mrf.mxu0
    %v1986 = vadd.f32 %v1139, %v1985
    %1987 = vmatprep.mubr.f32.mxu0 0.0
    %1988 = vmatmul.mubr.f32.gmra.mxu0 %v1236
    %v1989 = vpop.f32.mrf.mxu0
    %v1990 = vadd.f32 %v1135, %v1989
    %v1991 = vpop.f32.mrf.mxu0
    %v1992 = vadd.f32 %v1139, %v1991
    %1993 = vmatprep.mubr.f32.mxu0 0.0
    %1994 = vmatmul.mubr.f32.gmra.mxu0 %v1239
    %v1995 = vpop.f32.mrf.mxu0
    %v1996 = vadd.f32 %v1135, %v1995
    %v1997 = vpop.f32.mrf.mxu0
    %v1998 = vadd.f32 %v1139, %v1997
    %1999 = vmatprep.mubr.f32.mxu0 0.0
    %2000 = vmatmul.mubr.f32.gmra.mxu0 %v1242
    %v2001 = vpop.f32.mrf.mxu0
    %v2002 = vadd.f32 %v1135, %v2001
    %v2003 = vpop.f32.mrf.mxu0
    %v2004 = vadd.f32 %v1139, %v2003
    %2005 = vmatprep.mubr.f32.mxu0 0.0
    %2006 = vmatmul.mubr.f32.gmra.mxu0 %v1245
    %v2007 = vpop.f32.mrf.mxu0
    %v2008 = vadd.f32 %v1135, %v2007
    %v2009 = vpop.f32.mrf.mxu0
    %v2010 = vadd.f32 %v1139, %v2009
    %2011 = vmatprep.mubr.f32.mxu0 0.0
    %2012 = vmatmul.mubr.f32.gmra.mxu0 %v1248
    %v2013 = vpop.f32.mrf.mxu0
    %v2014 = vadd.f32 %v1135, %v2013
    %v2015 = vpop.f32.mrf.mxu0
    %v2016 = vadd.f32 %v1139, %v2015
    %2017 = vmatprep.mubr.f32.mxu0 0.0
    %2018 = vmatmul.mubr.f32.gmra.mxu0 %v1251
    %v2019 = vpop.f32.mrf.mxu0
    %v2020 = vadd.f32 %v1135, %v2019
    %v2021 = vpop.f32.mrf.mxu0
    %v2022 = vadd.f32 %v1139, %v2021
    %2023 = vdwg.mxu0
    %2024 = vmatprep.subr.mxu0 0.0
    %2025 = vmatpush1.msra.mxu0 0.0
    %2026 = vmatprep.subr.mxu0 0.0
    %2027 = vmatpush1.msra.mxu0 0.0
    %2028 = vmatprep.subr.mxu0 0.0
    %2029 = vmatpush1.msra.mxu0 0.0
    %2030 = vmatprep.subr.mxu0 0.0
    %2031 = vmatpush1.msra.mxu0 0.0
    %2032 = vmatprep.subr.mxu0 0.0
    %2033 = vmatpush1.msra.mxu0 0.0
    %2034 = vmatprep.subr.mxu0 0.0
    %2035 = vmatpush1.msra.mxu0 0.0
    %2036 = vmatprep.subr.mxu0 0.0
    %2037 = vmatpush1.msra.mxu0 0.0
    %2038 = vmatprep.subr.mxu0 0.0
    %2039 = vmatpush1.msra.mxu0 0.0
    %2040 = vmatprep.subr.mxu0 %v1113
    %2041 = vmatpush1.msra.mxu0 %v1112
    %2042 = vmatprep.subr.mxu0 %v1105
    %2043 = vmatpush1.msra.mxu0 %v1104
    %2044 = vmatprep.subr.mxu0 %v1097
    %2045 = vmatpush1.msra.mxu0 %v1096
    %2046 = vmatprep.subr.mxu0 %v1089
    %2047 = vmatpush1.msra.mxu0 %v1088
    %2048 = vmatprep.subr.mxu0 %v1081
    %2049 = vmatpush1.msra.mxu0 %v1080
    %2050 = vmatprep.subr.mxu0 %v1073
    %2051 = vmatpush1.msra.mxu0 %v1072
    %2052 = vmatprep.subr.mxu0 %v1065
    %2053 = vmatpush1.msra.mxu0 %v1064
    %2054 = vmatprep.subr.mxu0 %v1057
    %2055 = vmatpush1.msra.mxu0 %v1056
    %2056 = vmatprep.subr.mxu0 0.0
    %2057 = vmatpush2.msra.mxu0 0.0
    %2058 = vmatprep.subr.mxu0 0.0
    %2059 = vmatpush2.msra.mxu0 0.0
    %2060 = vmatprep.subr.mxu0 0.0
    %2061 = vmatpush2.msra.mxu0 0.0
    %2062 = vmatprep.subr.mxu0 0.0
    %2063 = vmatpush2.msra.mxu0 0.0
    %2064 = vmatprep.subr.mxu0 0.0
    %2065 = vmatpush2.msra.mxu0 0.0
    %2066 = vmatprep.subr.mxu0 0.0
    %2067 = vmatpush2.msra.mxu0 0.0
    %2068 = vmatprep.subr.mxu0 0.0
    %2069 = vmatpush2.msra.mxu0 0.0
    %2070 = vmatprep.subr.mxu0 0.0
    %2071 = vmatpush2.msra.mxu0 0.0
    %2072 = vmatprep.subr.mxu0 0.0
    %2073 = vmatpush2.msra.mxu0 0.0
    %2074 = vmatprep.subr.mxu0 0.0
    %2075 = vmatpush2.msra.mxu0 0.0
    %2076 = vmatprep.subr.mxu0 0.0
    %2077 = vmatpush2.msra.mxu0 0.0
    %2078 = vmatprep.subr.mxu0 0.0
    %2079 = vmatpush2.msra.mxu0 0.0
    %2080 = vmatprep.subr.mxu0 0.0
    %2081 = vmatpush2.msra.mxu0 0.0
    %2082 = vmatprep.subr.mxu0 0.0
    %2083 = vmatpush2.msra.mxu0 0.0
    %2084 = vmatprep.subr.mxu0 0.0
    %2085 = vmatpush2.msra.mxu0 0.0
    %2086 = vmatprep.subr.mxu0 0.0
    %2087 = vmatpush2.msra.mxu0 0.0
    %2088 = vmatprep.mubr.f32.mxu0 0.0
    %2089 = vmatmul.mubr.f32.gmra.mxu0 %v1158
    %v2090 = vpop.f32.mrf.mxu0
    %v2091 = vadd.f32 %v1143, %v2090
    %v2092 = vpop.f32.mrf.mxu0
    %v2093 = vadd.f32 %v1147, %v2092
    %2094 = vmatprep.mubr.f32.mxu0 0.0
    %2095 = vmatmul.mubr.f32.gmra.mxu0 %v1161
    %v2096 = vpop.f32.mrf.mxu0
    %v2097 = vadd.f32 %v1143, %v2096
    %v2098 = vpop.f32.mrf.mxu0
    %v2099 = vadd.f32 %v1147, %v2098
    %2100 = vmatprep.mubr.f32.mxu0 0.0
    %2101 = vmatmul.mubr.f32.gmra.mxu0 %v1164
    %v2102 = vpop.f32.mrf.mxu0
    %v2103 = vadd.f32 %v1143, %v2102
    %v2104 = vpop.f32.mrf.mxu0
    %v2105 = vadd.f32 %v1147, %v2104
    %2106 = vmatprep.mubr.f32.mxu0 0.0
    %2107 = vmatmul.mubr.f32.gmra.mxu0 %v1167
    %v2108 = vpop.f32.mrf.mxu0
    %v2109 = vadd.f32 %v1143, %v2108
    %v2110 = vpop.f32.mrf.mxu0
    %v2111 = vadd.f32 %v1147, %v2110
    %2112 = vmatprep.mubr.f32.mxu0 0.0
    %2113 = vmatmul.mubr.f32.gmra.mxu0 %v1170
    %v2114 = vpop.f32.mrf.mxu0
    %v2115 = vadd.f32 %v1143, %v2114
    %v2116 = vpop.f32.mrf.mxu0
    %v2117 = vadd.f32 %v1147, %v2116
    %2118 = vmatprep.mubr.f32.mxu0 0.0
    %2119 = vmatmul.mubr.f32.gmra.mxu0 %v1173
    %v2120 = vpop.f32.mrf.mxu0
    %v2121 = vadd.f32 %v1143, %v2120
    %v2122 = vpop.f32.mrf.mxu0
    %v2123 = vadd.f32 %v1147, %v2122
    %2124 = vmatprep.mubr.f32.mxu0 0.0
    %2125 = vmatmul.mubr.f32.gmra.mxu0 %v1176
    %v2126 = vpop.f32.mrf.mxu0
    %v2127 = vadd.f32 %v1143, %v2126
    %v2128 = vpop.f32.mrf.mxu0
    %v2129 = vadd.f32 %v1147, %v2128
    %2130 = vmatprep.mubr.f32.mxu0 0.0
    %2131 = vmatmul.mubr.f32.gmra.mxu0 %v1179
    %v2132 = vpop.f32.mrf.mxu0
    %v2133 = vadd.f32 %v1143, %v2132
    %v2134 = vpop.f32.mrf.mxu0
    %v2135 = vadd.f32 %v1147, %v2134
    %2136 = vmatprep.mubr.f32.mxu0 0.0
    %2137 = vmatmul.mubr.f32.gmra.mxu0 %v1182
    %v2138 = vpop.f32.mrf.mxu0
    %v2139 = vadd.f32 %v1143, %v2138
    %v2140 = vpop.f32.mrf.mxu0
    %v2141 = vadd.f32 %v1147, %v2140
    %2142 = vmatprep.mubr.f32.mxu0 0.0
    %2143 = vmatmul.mubr.f32.gmra.mxu0 %v1185
    %v2144 = vpop.f32.mrf.mxu0
    %v2145 = vadd.f32 %v1143, %v2144
    %v2146 = vpop.f32.mrf.mxu0
    %v2147 = vadd.f32 %v1147, %v2146
    %2148 = vmatprep.mubr.f32.mxu0 0.0
    %2149 = vmatmul.mubr.f32.gmra.mxu0 %v1188
    %v2150 = vpop.f32.mrf.mxu0
    %v2151 = vadd.f32 %v1143, %v2150
    %v2152 = vpop.f32.mrf.mxu0
    %v2153 = vadd.f32 %v1147, %v2152
    %2154 = vmatprep.mubr.f32.mxu0 0.0
    %2155 = vmatmul.mubr.f32.gmra.mxu0 %v1191
    %v2156 = vpop.f32.mrf.mxu0
    %v2157 = vadd.f32 %v1143, %v2156
    %v2158 = vpop.f32.mrf.mxu0
    %v2159 = vadd.f32 %v1147, %v2158
    %2160 = vmatprep.mubr.f32.mxu0 0.0
    %2161 = vmatmul.mubr.f32.gmra.mxu0 %v1194
    %v2162 = vpop.f32.mrf.mxu0
    %v2163 = vadd.f32 %v1143, %v2162
    %v2164 = vpop.f32.mrf.mxu0
    %v2165 = vadd.f32 %v1147, %v2164
    %2166 = vmatprep.mubr.f32.mxu0 0.0
    %2167 = vmatmul.mubr.f32.gmra.mxu0 %v1197
    %v2168 = vpop.f32.mrf.mxu0
    %v2169 = vadd.f32 %v1143, %v2168
    %v2170 = vpop.f32.mrf.mxu0
    %v2171 = vadd.f32 %v1147, %v2170
    %2172 = vmatprep.mubr.f32.mxu0 0.0
    %2173 = vmatmul.mubr.f32.gmra.mxu0 %v1200
    %v2174 = vpop.f32.mrf.mxu0
    %v2175 = vadd.f32 %v1143, %v2174
    %v2176 = vpop.f32.mrf.mxu0
    %v2177 = vadd.f32 %v1147, %v2176
    %2178 = vmatprep.mubr.f32.mxu0 0.0
    %2179 = vmatmul.mubr.f32.gmra.mxu0 %v1203
    %v2180 = vpop.f32.mrf.mxu0
    %v2181 = vadd.f32 %v1143, %v2180
    %v2182 = vpop.f32.mrf.mxu0
    %v2183 = vadd.f32 %v1147, %v2182
    %2184 = vmatprep.mubr.f32.mxu0 0.0
    %2185 = vmatmul.mubr.f32.gmra.mxu0 %v1206
    %v2186 = vpop.f32.mrf.mxu0
    %v2187 = vadd.f32 %v1143, %v2186
    %v2188 = vpop.f32.mrf.mxu0
    %v2189 = vadd.f32 %v1147, %v2188
    %2190 = vmatprep.mubr.f32.mxu0 0.0
    %2191 = vmatmul.mubr.f32.gmra.mxu0 %v1209
    %v2192 = vpop.f32.mrf.mxu0
    %v2193 = vadd.f32 %v1143, %v2192
    %v2194 = vpop.f32.mrf.mxu0
    %v2195 = vadd.f32 %v1147, %v2194
    %2196 = vmatprep.mubr.f32.mxu0 0.0
    %2197 = vmatmul.mubr.f32.gmra.mxu0 %v1212
    %v2198 = vpop.f32.mrf.mxu0
    %v2199 = vadd.f32 %v1143, %v2198
    %v2200 = vpop.f32.mrf.mxu0
    %v2201 = vadd.f32 %v1147, %v2200
    %2202 = vmatprep.mubr.f32.mxu0 0.0
    %2203 = vmatmul.mubr.f32.gmra.mxu0 %v1215
    %v2204 = vpop.f32.mrf.mxu0
    %v2205 = vadd.f32 %v1143, %v2204
    %v2206 = vpop.f32.mrf.mxu0
    %v2207 = vadd.f32 %v1147, %v2206
    %2208 = vmatprep.mubr.f32.mxu0 0.0
    %2209 = vmatmul.mubr.f32.gmra.mxu0 %v1218
    %v2210 = vpop.f32.mrf.mxu0
    %v2211 = vadd.f32 %v1143, %v2210
    %v2212 = vpop.f32.mrf.mxu0
    %v2213 = vadd.f32 %v1147, %v2212
    %2214 = vmatprep.mubr.f32.mxu0 0.0
    %2215 = vmatmul.mubr.f32.gmra.mxu0 %v1221
    %v2216 = vpop.f32.mrf.mxu0
    %v2217 = vadd.f32 %v1143, %v2216
    %v2218 = vpop.f32.mrf.mxu0
    %v2219 = vadd.f32 %v1147, %v2218
    %2220 = vmatprep.mubr.f32.mxu0 0.0
    %2221 = vmatmul.mubr.f32.gmra.mxu0 %v1224
    %v2222 = vpop.f32.mrf.mxu0
    %v2223 = vadd.f32 %v1143, %v2222
    %v2224 = vpop.f32.mrf.mxu0
    %v2225 = vadd.f32 %v1147, %v2224
    %2226 = vmatprep.mubr.f32.mxu0 0.0
    %2227 = vmatmul.mubr.f32.gmra.mxu0 %v1227
    %v2228 = vpop.f32.mrf.mxu0
    %v2229 = vadd.f32 %v1143, %v2228
    %v2230 = vpop.f32.mrf.mxu0
    %v2231 = vadd.f32 %v1147, %v2230
    %2232 = vmatprep.mubr.f32.mxu0 0.0
    %2233 = vmatmul.mubr.f32.gmra.mxu0 %v1230
    %v2234 = vpop.f32.mrf.mxu0
    %v2235 = vadd.f32 %v1143, %v2234
    %v2236 = vpop.f32.mrf.mxu0
    %v2237 = vadd.f32 %v1147, %v2236
    %2238 = vmatprep.mubr.f32.mxu0 0.0
    %2239 = vmatmul.mubr.f32.gmra.mxu0 %v1233
    %v2240 = vpop.f32.mrf.mxu0
    %v2241 = vadd.f32 %v1143, %v2240
    %v2242 = vpop.f32.mrf.mxu0
    %v2243 = vadd.f32 %v1147, %v2242
    %2244 = vmatprep.mubr.f32.mxu0 0.0
    %2245 = vmatmul.mubr.f32.gmra.mxu0 %v1236
    %v2246 = vpop.f32.mrf.mxu0
    %v2247 = vadd.f32 %v1143, %v2246
    %v2248 = vpop.f32.mrf.mxu0
    %v2249 = vadd.f32 %v1147, %v2248
    %2250 = vmatprep.mubr.f32.mxu0 0.0
    %2251 = vmatmul.mubr.f32.gmra.mxu0 %v1239
    %v2252 = vpop.f32.mrf.mxu0
    %v2253 = vadd.f32 %v1143, %v2252
    %v2254 = vpop.f32.mrf.mxu0
    %v2255 = vadd.f32 %v1147, %v2254
    %2256 = vmatprep.mubr.f32.mxu0 0.0
    %2257 = vmatmul.mubr.f32.gmra.mxu0 %v1242
    %v2258 = vpop.f32.mrf.mxu0
    %v2259 = vadd.f32 %v1143, %v2258
    %v2260 = vpop.f32.mrf.mxu0
    %v2261 = vadd.f32 %v1147, %v2260
    %2262 = vmatprep.mubr.f32.mxu0 0.0
    %2263 = vmatmul.mubr.f32.gmra.mxu0 %v1245
    %v2264 = vpop.f32.mrf.mxu0
    %v2265 = vadd.f32 %v1143, %v2264
    %v2266 = vpop.f32.mrf.mxu0
    %v2267 = vadd.f32 %v1147, %v2266
    %2268 = vmatprep.mubr.f32.mxu0 0.0
    %2269 = vmatmul.mubr.f32.gmra.mxu0 %v1248
    %v2270 = vpop.f32.mrf.mxu0
    %v2271 = vadd.f32 %v1143, %v2270
    %v2272 = vpop.f32.mrf.mxu0
    %v2273 = vadd.f32 %v1147, %v2272
    %2274 = vmatprep.mubr.f32.mxu0 0.0
    %2275 = vmatmul.mubr.f32.gmra.mxu0 %v1251
    %v2276 = vpop.f32.mrf.mxu0
    %v2277 = vadd.f32 %v1143, %v2276
    %v2278 = vpop.f32.mrf.mxu0
    %v2279 = vadd.f32 %v1147, %v2278
    %2280 = vdwg.mxu0
    %v2281 = vand.u32 2147483647, %v1320
    %v2282 = vand.u32 2147483647, %v1322
    %v2283 = vand.u32 2147483647, %v1577
    %v2284 = vand.u32 2147483647, %v1579
    %v2285 = vand.u32 2147483647, %v1834
    %v2286 = vand.u32 2147483647, %v1836
    %v2287 = vand.u32 2147483647, %v2091
    %v2288 = vand.u32 2147483647, %v2093
    %v2289 = vand.u32 2147483647, %v1326
    %v2290 = vand.u32 2147483647, %v1328
    %v2291 = vand.u32 2147483647, %v1583
    %v2292 = vand.u32 2147483647, %v1585
    %v2293 = vand.u32 2147483647, %v1840
    %v2294 = vand.u32 2147483647, %v1842
    %v2295 = vand.u32 2147483647, %v2097
    %v2296 = vand.u32 2147483647, %v2099
    %v2297 = vand.u32 2147483647, %v1332
    %v2298 = vand.u32 2147483647, %v1334
    %v2299 = vand.u32 2147483647, %v1589
    %v2300 = vand.u32 2147483647, %v1591
    %v2301 = vand.u32 2147483647, %v1846
    %v2302 = vand.u32 2147483647, %v1848
    %v2303 = vand.u32 2147483647, %v2103
    %v2304 = vand.u32 2147483647, %v2105
    %v2305 = vand.u32 2147483647, %v1338
    %v2306 = vand.u32 2147483647, %v1340
    %v2307 = vand.u32 2147483647, %v1595
    %v2308 = vand.u32 2147483647, %v1597
    %v2309 = vand.u32 2147483647, %v1852
    %v2310 = vand.u32 2147483647, %v1854
    %v2311 = vand.u32 2147483647, %v2109
    %v2312 = vand.u32 2147483647, %v2111
    %v2313 = vand.u32 2147483647, %v1344
    %v2314 = vand.u32 2147483647, %v1346
    %v2315 = vand.u32 2147483647, %v1601
    %v2316 = vand.u32 2147483647, %v1603
    %v2317 = vand.u32 2147483647, %v1858
    %v2318 = vand.u32 2147483647, %v1860
    %v2319 = vand.u32 2147483647, %v2115
    %v2320 = vand.u32 2147483647, %v2117
    %v2321 = vand.u32 2147483647, %v1350
    %v2322 = vand.u32 2147483647, %v1352
    %v2323 = vand.u32 2147483647, %v1607
    %v2324 = vand.u32 2147483647, %v1609
    %v2325 = vand.u32 2147483647, %v1864
    %v2326 = vand.u32 2147483647, %v1866
    %v2327 = vand.u32 2147483647, %v2121
    %v2328 = vand.u32 2147483647, %v2123
    %v2329 = vand.u32 2147483647, %v1356
    %v2330 = vand.u32 2147483647, %v1358
    %v2331 = vand.u32 2147483647, %v1613
    %v2332 = vand.u32 2147483647, %v1615
    %v2333 = vand.u32 2147483647, %v1870
    %v2334 = vand.u32 2147483647, %v1872
    %v2335 = vand.u32 2147483647, %v2127
    %v2336 = vand.u32 2147483647, %v2129
    %v2337 = vand.u32 2147483647, %v1362
    %v2338 = vand.u32 2147483647, %v1364
    %v2339 = vand.u32 2147483647, %v1619
    %v2340 = vand.u32 2147483647, %v1621
    %v2341 = vand.u32 2147483647, %v1876
    %v2342 = vand.u32 2147483647, %v1878
    %v2343 = vand.u32 2147483647, %v2133
    %v2344 = vand.u32 2147483647, %v2135
    %v2345 = vand.u32 2147483647, %v1368
    %v2346 = vand.u32 2147483647, %v1370
    %v2347 = vand.u32 2147483647, %v1625
    %v2348 = vand.u32 2147483647, %v1627
    %v2349 = vand.u32 2147483647, %v1882
    %v2350 = vand.u32 2147483647, %v1884
    %v2351 = vand.u32 2147483647, %v2139
    %v2352 = vand.u32 2147483647, %v2141
    %v2353 = vand.u32 2147483647, %v1374
    %v2354 = vand.u32 2147483647, %v1376
    %v2355 = vand.u32 2147483647, %v1631
    %v2356 = vand.u32 2147483647, %v1633
    %v2357 = vand.u32 2147483647, %v1888
    %v2358 = vand.u32 2147483647, %v1890
    %v2359 = vand.u32 2147483647, %v2145
    %v2360 = vand.u32 2147483647, %v2147
    %v2361 = vand.u32 2147483647, %v1380
    %v2362 = vand.u32 2147483647, %v1382
    %v2363 = vand.u32 2147483647, %v1637
    %v2364 = vand.u32 2147483647, %v1639
    %v2365 = vand.u32 2147483647, %v1894
    %v2366 = vand.u32 2147483647, %v1896
    %v2367 = vand.u32 2147483647, %v2151
    %v2368 = vand.u32 2147483647, %v2153
    %v2369 = vand.u32 2147483647, %v1386
    %v2370 = vand.u32 2147483647, %v1388
    %v2371 = vand.u32 2147483647, %v1643
    %v2372 = vand.u32 2147483647, %v1645
    %v2373 = vand.u32 2147483647, %v1900
    %v2374 = vand.u32 2147483647, %v1902
    %v2375 = vand.u32 2147483647, %v2157
    %v2376 = vand.u32 2147483647, %v2159
    %v2377 = vand.u32 2147483647, %v1392
    %v2378 = vand.u32 2147483647, %v1394
    %v2379 = vand.u32 2147483647, %v1649
    %v2380 = vand.u32 2147483647, %v1651
    %v2381 = vand.u32 2147483647, %v1906
    %v2382 = vand.u32 2147483647, %v1908
    %v2383 = vand.u32 2147483647, %v2163
    %v2384 = vand.u32 2147483647, %v2165
    %v2385 = vand.u32 2147483647, %v1398
    %v2386 = vand.u32 2147483647, %v1400
    %v2387 = vand.u32 2147483647, %v1655
    %v2388 = vand.u32 2147483647, %v1657
    %v2389 = vand.u32 2147483647, %v1912
    %v2390 = vand.u32 2147483647, %v1914
    %v2391 = vand.u32 2147483647, %v2169
    %v2392 = vand.u32 2147483647, %v2171
    %v2393 = vand.u32 2147483647, %v1404
    %v2394 = vand.u32 2147483647, %v1406
    %v2395 = vand.u32 2147483647, %v1661
    %v2396 = vand.u32 2147483647, %v1663
    %v2397 = vand.u32 2147483647, %v1918
    %v2398 = vand.u32 2147483647, %v1920
    %v2399 = vand.u32 2147483647, %v2175
    %v2400 = vand.u32 2147483647, %v2177
    %v2401 = vand.u32 2147483647, %v1410
    %v2402 = vand.u32 2147483647, %v1412
    %v2403 = vand.u32 2147483647, %v1667
    %v2404 = vand.u32 2147483647, %v1669
    %v2405 = vand.u32 2147483647, %v1924
    %v2406 = vand.u32 2147483647, %v1926
    %v2407 = vand.u32 2147483647, %v2181
    %v2408 = vand.u32 2147483647, %v2183
    %v2409 = vand.u32 2147483647, %v1416
    %v2410 = vand.u32 2147483647, %v1418
    %v2411 = vand.u32 2147483647, %v1673
    %v2412 = vand.u32 2147483647, %v1675
    %v2413 = vand.u32 2147483647, %v1930
    %v2414 = vand.u32 2147483647, %v1932
    %v2415 = vand.u32 2147483647, %v2187
    %v2416 = vand.u32 2147483647, %v2189
    %v2417 = vand.u32 2147483647, %v1422
    %v2418 = vand.u32 2147483647, %v1424
    %v2419 = vand.u32 2147483647, %v1679
    %v2420 = vand.u32 2147483647, %v1681
    %v2421 = vand.u32 2147483647, %v1936
    %v2422 = vand.u32 2147483647, %v1938
    %v2423 = vand.u32 2147483647, %v2193
    %v2424 = vand.u32 2147483647, %v2195
    %v2425 = vand.u32 2147483647, %v1428
    %v2426 = vand.u32 2147483647, %v1430
    %v2427 = vand.u32 2147483647, %v1685
    %v2428 = vand.u32 2147483647, %v1687
    %v2429 = vand.u32 2147483647, %v1942
    %v2430 = vand.u32 2147483647, %v1944
    %v2431 = vand.u32 2147483647, %v2199
    %v2432 = vand.u32 2147483647, %v2201
    %v2433 = vand.u32 2147483647, %v1434
    %v2434 = vand.u32 2147483647, %v1436
    %v2435 = vand.u32 2147483647, %v1691
    %v2436 = vand.u32 2147483647, %v1693
    %v2437 = vand.u32 2147483647, %v1948
    %v2438 = vand.u32 2147483647, %v1950
    %v2439 = vand.u32 2147483647, %v2205
    %v2440 = vand.u32 2147483647, %v2207
    %v2441 = vand.u32 2147483647, %v1440
    %v2442 = vand.u32 2147483647, %v1442
    %v2443 = vand.u32 2147483647, %v1697
    %v2444 = vand.u32 2147483647, %v1699
    %v2445 = vand.u32 2147483647, %v1954
    %v2446 = vand.u32 2147483647, %v1956
    %v2447 = vand.u32 2147483647, %v2211
    %v2448 = vand.u32 2147483647, %v2213
    %v2449 = vand.u32 2147483647, %v1446
    %v2450 = vand.u32 2147483647, %v1448
    %v2451 = vand.u32 2147483647, %v1703
    %v2452 = vand.u32 2147483647, %v1705
    %v2453 = vand.u32 2147483647, %v1960
    %v2454 = vand.u32 2147483647, %v1962
    %v2455 = vand.u32 2147483647, %v2217
    %v2456 = vand.u32 2147483647, %v2219
    %v2457 = vand.u32 2147483647, %v1452
    %v2458 = vand.u32 2147483647, %v1454
    %v2459 = vand.u32 2147483647, %v1709
    %v2460 = vand.u32 2147483647, %v1711
    %v2461 = vand.u32 2147483647, %v1966
    %v2462 = vand.u32 2147483647, %v1968
    %v2463 = vand.u32 2147483647, %v2223
    %v2464 = vand.u32 2147483647, %v2225
    %v2465 = vand.u32 2147483647, %v1458
    %v2466 = vand.u32 2147483647, %v1460
    %v2467 = vand.u32 2147483647, %v1715
    %v2468 = vand.u32 2147483647, %v1717
    %v2469 = vand.u32 2147483647, %v1972
    %v2470 = vand.u32 2147483647, %v1974
    %v2471 = vand.u32 2147483647, %v2229
    %v2472 = vand.u32 2147483647, %v2231
    %v2473 = vand.u32 2147483647, %v1464
    %v2474 = vand.u32 2147483647, %v1466
    %v2475 = vand.u32 2147483647, %v1721
    %v2476 = vand.u32 2147483647, %v1723
    %v2477 = vand.u32 2147483647, %v1978
    %v2478 = vand.u32 2147483647, %v1980
    %v2479 = vand.u32 2147483647, %v2235
    %v2480 = vand.u32 2147483647, %v2237
    %v2481 = vand.u32 2147483647, %v1470
    %v2482 = vand.u32 2147483647, %v1472
    %v2483 = vand.u32 2147483647, %v1727
    %v2484 = vand.u32 2147483647, %v1729
    %v2485 = vand.u32 2147483647, %v1984
    %v2486 = vand.u32 2147483647, %v1986
    %v2487 = vand.u32 2147483647, %v2241
    %v2488 = vand.u32 2147483647, %v2243
    %v2489 = vand.u32 2147483647, %v1476
    %v2490 = vand.u32 2147483647, %v1478
    %v2491 = vand.u32 2147483647, %v1733
    %v2492 = vand.u32 2147483647, %v1735
    %v2493 = vand.u32 2147483647, %v1990
    %v2494 = vand.u32 2147483647, %v1992
    %v2495 = vand.u32 2147483647, %v2247
    %v2496 = vand.u32 2147483647, %v2249
    %v2497 = vand.u32 2147483647, %v1482
    %v2498 = vand.u32 2147483647, %v1484
    %v2499 = vand.u32 2147483647, %v1739
    %v2500 = vand.u32 2147483647, %v1741
    %v2501 = vand.u32 2147483647, %v1996
    %v2502 = vand.u32 2147483647, %v1998
    %v2503 = vand.u32 2147483647, %v2253
    %v2504 = vand.u32 2147483647, %v2255
    %v2505 = vand.u32 2147483647, %v1488
    %v2506 = vand.u32 2147483647, %v1490
    %v2507 = vand.u32 2147483647, %v1745
    %v2508 = vand.u32 2147483647, %v1747
    %v2509 = vand.u32 2147483647, %v2002
    %v2510 = vand.u32 2147483647, %v2004
    %v2511 = vand.u32 2147483647, %v2259
    %v2512 = vand.u32 2147483647, %v2261
    %v2513 = vand.u32 2147483647, %v1494
    %v2514 = vand.u32 2147483647, %v1496
    %v2515 = vand.u32 2147483647, %v1751
    %v2516 = vand.u32 2147483647, %v1753
    %v2517 = vand.u32 2147483647, %v2008
    %v2518 = vand.u32 2147483647, %v2010
    %v2519 = vand.u32 2147483647, %v2265
    %v2520 = vand.u32 2147483647, %v2267
    %v2521 = vand.u32 2147483647, %v1500
    %v2522 = vand.u32 2147483647, %v1502
    %v2523 = vand.u32 2147483647, %v1757
    %v2524 = vand.u32 2147483647, %v1759
    %v2525 = vand.u32 2147483647, %v2014
    %v2526 = vand.u32 2147483647, %v2016
    %v2527 = vand.u32 2147483647, %v2271
    %v2528 = vand.u32 2147483647, %v2273
    %v2529 = vand.u32 2147483647, %v1506
    %v2530 = vand.u32 2147483647, %v1508
    %v2531 = vand.u32 2147483647, %v1763
    %v2532 = vand.u32 2147483647, %v1765
    %v2533 = vand.u32 2147483647, %v2020
    %v2534 = vand.u32 2147483647, %v2022
    %v2535 = vand.u32 2147483647, %v2277
    %v2536 = vand.u32 2147483647, %v2279
    %vm2537 = vcmask 261120
    %v2539 = vsel %vm2537, %v732, 0
    %v2542 = vsel %vm2537, %v737, 0
    %v2545 = vsel %vm2537, %v742, 0
    %v2548 = vsel %vm2537, %v747, 0
    %v2551 = vsel %vm2537, %v752, 0
    %v2554 = vsel %vm2537, %v757, 0
    %v2557 = vsel %vm2537, %v762, 0
    %v2560 = vsel %vm2537, %v767, 0
    %v2563 = vsel %vm2537, %v772, 0
    %v2566 = vsel %vm2537, %v777, 0
    %v2569 = vsel %vm2537, %v782, 0
    %v2572 = vsel %vm2537, %v787, 0
    %v2575 = vsel %vm2537, %v792, 0
    %v2578 = vsel %vm2537, %v797, 0
    %v2581 = vsel %vm2537, %v802, 0
    %v2584 = vsel %vm2537, %v807, 0
    %v2587 = vsel %vm2537, %v812, 0
    %v2590 = vsel %vm2537, %v817, 0
    %v2593 = vsel %vm2537, %v822, 0
    %v2596 = vsel %vm2537, %v827, 0
    %v2599 = vsel %vm2537, %v832, 0
    %v2602 = vsel %vm2537, %v837, 0
    %v2605 = vsel %vm2537, %v842, 0
    %v2608 = vsel %vm2537, %v847, 0
    %v2611 = vsel %vm2537, %v852, 0
    %v2614 = vsel %vm2537, %v857, 0
    %v2617 = vsel %vm2537, %v862, 0
    %v2620 = vsel %vm2537, %v867, 0
    %v2623 = vsel %vm2537, %v872, 0
    %v2626 = vsel %vm2537, %v877, 0
    %v2629 = vsel %vm2537, %v882, 0
    %v2632 = vsel %vm2537, %v887, 0
    %2634 = vmatprep.subr.mxu0 0.0
    %2635 = vmatpush1.msra.mxu0 0.0
    %2636 = vmatprep.subr.mxu0 0.0
    %2637 = vmatpush1.msra.mxu0 0.0
    %2638 = vmatprep.subr.mxu0 0.0
    %2639 = vmatpush1.msra.mxu0 0.0
    %2640 = vmatprep.subr.mxu0 0.0
    %2641 = vmatpush1.msra.mxu0 0.0
    %2642 = vmatprep.subr.mxu0 0.0
    %2643 = vmatpush1.msra.mxu0 0.0
    %2644 = vmatprep.subr.mxu0 0.0
    %2645 = vmatpush1.msra.mxu0 0.0
    %2646 = vmatprep.subr.mxu0 0.0
    %2647 = vmatpush1.msra.mxu0 0.0
    %2648 = vmatprep.subr.mxu0 0.0
    %2649 = vmatpush1.msra.mxu0 0.0
    %2650 = vmatprep.subr.mxu0 0.0
    %2651 = vmatpush1.msra.mxu0 0.0
    %2652 = vmatprep.subr.mxu0 0.0
    %2653 = vmatpush1.msra.mxu0 0.0
    %2654 = vmatprep.subr.mxu0 0.0
    %2655 = vmatpush1.msra.mxu0 0.0
    %2656 = vmatprep.subr.mxu0 0.0
    %2657 = vmatpush1.msra.mxu0 0.0
    %2658 = vmatprep.subr.mxu0 %v915
    %2659 = vmatpush1.msra.mxu0 %v914
    %2660 = vmatprep.subr.mxu0 %v907
    %2661 = vmatpush1.msra.mxu0 %v906
    %2662 = vmatprep.subr.mxu0 %v899
    %2663 = vmatpush1.msra.mxu0 %v898
    %2664 = vmatprep.subr.mxu0 %v891
    %2665 = vmatpush1.msra.mxu0 %v890
    %2666 = vmatprep.subr.mxu0 0.0
    %2667 = vmatpush2.msra.mxu0 0.0
    %2668 = vmatprep.subr.mxu0 0.0
    %2669 = vmatpush2.msra.mxu0 0.0
    %2670 = vmatprep.subr.mxu0 0.0
    %2671 = vmatpush2.msra.mxu0 0.0
    %2672 = vmatprep.subr.mxu0 0.0
    %2673 = vmatpush2.msra.mxu0 0.0
    %2674 = vmatprep.subr.mxu0 0.0
    %2675 = vmatpush2.msra.mxu0 0.0
    %2676 = vmatprep.subr.mxu0 0.0
    %2677 = vmatpush2.msra.mxu0 0.0
    %2678 = vmatprep.subr.mxu0 0.0
    %2679 = vmatpush2.msra.mxu0 0.0
    %2680 = vmatprep.subr.mxu0 0.0
    %2681 = vmatpush2.msra.mxu0 0.0
    %2682 = vmatprep.subr.mxu0 0.0
    %2683 = vmatpush2.msra.mxu0 0.0
    %2684 = vmatprep.subr.mxu0 0.0
    %2685 = vmatpush2.msra.mxu0 0.0
    %2686 = vmatprep.subr.mxu0 0.0
    %2687 = vmatpush2.msra.mxu0 0.0
    %2688 = vmatprep.subr.mxu0 0.0
    %2689 = vmatpush2.msra.mxu0 0.0
    %2690 = vmatprep.subr.mxu0 0.0
    %2691 = vmatpush2.msra.mxu0 0.0
    %2692 = vmatprep.subr.mxu0 0.0
    %2693 = vmatpush2.msra.mxu0 0.0
    %2694 = vmatprep.subr.mxu0 0.0
    %2695 = vmatpush2.msra.mxu0 0.0
    %2696 = vmatprep.subr.mxu0 0.0
    %2697 = vmatpush2.msra.mxu0 0.0
    %2698 = vmatprep.mubr.f32.mxu0 0.0
    %2699 = vmatmul.mubr.f32.gmra.mxu0 %v2539
    %v2700 = vpop.f32.mrf.mxu0
    %v2701 = vadd.f32 0.0, %v2700
    %v2702 = vpop.f32.mrf.mxu0
    %v2703 = vadd.f32 0.0, %v2702
    %2704 = vmatprep.mubr.f32.mxu0 0.0
    %2705 = vmatmul.mubr.f32.gmra.mxu0 %v2542
    %v2706 = vpop.f32.mrf.mxu0
    %v2707 = vadd.f32 0.0, %v2706
    %v2708 = vpop.f32.mrf.mxu0
    %v2709 = vadd.f32 0.0, %v2708
    %2710 = vmatprep.mubr.f32.mxu0 0.0
    %2711 = vmatmul.mubr.f32.gmra.mxu0 %v2545
    %v2712 = vpop.f32.mrf.mxu0
    %v2713 = vadd.f32 0.0, %v2712
    %v2714 = vpop.f32.mrf.mxu0
    %v2715 = vadd.f32 0.0, %v2714
    %2716 = vmatprep.mubr.f32.mxu0 0.0
    %2717 = vmatmul.mubr.f32.gmra.mxu0 %v2548
    %v2718 = vpop.f32.mrf.mxu0
    %v2719 = vadd.f32 0.0, %v2718
    %v2720 = vpop.f32.mrf.mxu0
    %v2721 = vadd.f32 0.0, %v2720
    %2722 = vmatprep.mubr.f32.mxu0 0.0
    %2723 = vmatmul.mubr.f32.gmra.mxu0 %v2551
    %v2724 = vpop.f32.mrf.mxu0
    %v2725 = vadd.f32 0.0, %v2724
    %v2726 = vpop.f32.mrf.mxu0
    %v2727 = vadd.f32 0.0, %v2726
    %2728 = vmatprep.mubr.f32.mxu0 0.0
    %2729 = vmatmul.mubr.f32.gmra.mxu0 %v2554
    %v2730 = vpop.f32.mrf.mxu0
    %v2731 = vadd.f32 0.0, %v2730
    %v2732 = vpop.f32.mrf.mxu0
    %v2733 = vadd.f32 0.0, %v2732
    %2734 = vmatprep.mubr.f32.mxu0 0.0
    %2735 = vmatmul.mubr.f32.gmra.mxu0 %v2557
    %v2736 = vpop.f32.mrf.mxu0
    %v2737 = vadd.f32 0.0, %v2736
    %v2738 = vpop.f32.mrf.mxu0
    %v2739 = vadd.f32 0.0, %v2738
    %2740 = vmatprep.mubr.f32.mxu0 0.0
    %2741 = vmatmul.mubr.f32.gmra.mxu0 %v2560
    %v2742 = vpop.f32.mrf.mxu0
    %v2743 = vadd.f32 0.0, %v2742
    %v2744 = vpop.f32.mrf.mxu0
    %v2745 = vadd.f32 0.0, %v2744
    %2746 = vmatprep.mubr.f32.mxu0 0.0
    %2747 = vmatmul.mubr.f32.gmra.mxu0 %v2563
    %v2748 = vpop.f32.mrf.mxu0
    %v2749 = vadd.f32 0.0, %v2748
    %v2750 = vpop.f32.mrf.mxu0
    %v2751 = vadd.f32 0.0, %v2750
    %2752 = vmatprep.mubr.f32.mxu0 0.0
    %2753 = vmatmul.mubr.f32.gmra.mxu0 %v2566
    %v2754 = vpop.f32.mrf.mxu0
    %v2755 = vadd.f32 0.0, %v2754
    %v2756 = vpop.f32.mrf.mxu0
    %v2757 = vadd.f32 0.0, %v2756
    %2758 = vmatprep.mubr.f32.mxu0 0.0
    %2759 = vmatmul.mubr.f32.gmra.mxu0 %v2569
    %v2760 = vpop.f32.mrf.mxu0
    %v2761 = vadd.f32 0.0, %v2760
    %v2762 = vpop.f32.mrf.mxu0
    %v2763 = vadd.f32 0.0, %v2762
    %2764 = vmatprep.mubr.f32.mxu0 0.0
    %2765 = vmatmul.mubr.f32.gmra.mxu0 %v2572
    %v2766 = vpop.f32.mrf.mxu0
    %v2767 = vadd.f32 0.0, %v2766
    %v2768 = vpop.f32.mrf.mxu0
    %v2769 = vadd.f32 0.0, %v2768
    %2770 = vmatprep.mubr.f32.mxu0 0.0
    %2771 = vmatmul.mubr.f32.gmra.mxu0 %v2575
    %v2772 = vpop.f32.mrf.mxu0
    %v2773 = vadd.f32 0.0, %v2772
    %v2774 = vpop.f32.mrf.mxu0
    %v2775 = vadd.f32 0.0, %v2774
    %2776 = vmatprep.mubr.f32.mxu0 0.0
    %2777 = vmatmul.mubr.f32.gmra.mxu0 %v2578
    %v2778 = vpop.f32.mrf.mxu0
    %v2779 = vadd.f32 0.0, %v2778
    %v2780 = vpop.f32.mrf.mxu0
    %v2781 = vadd.f32 0.0, %v2780
    %2782 = vmatprep.mubr.f32.mxu0 0.0
    %2783 = vmatmul.mubr.f32.gmra.mxu0 %v2581
    %v2784 = vpop.f32.mrf.mxu0
    %v2785 = vadd.f32 0.0, %v2784
    %v2786 = vpop.f32.mrf.mxu0
    %v2787 = vadd.f32 0.0, %v2786
    %2788 = vmatprep.mubr.f32.mxu0 0.0
    %2789 = vmatmul.mubr.f32.gmra.mxu0 %v2584
    %v2790 = vpop.f32.mrf.mxu0
    %v2791 = vadd.f32 0.0, %v2790
    %v2792 = vpop.f32.mrf.mxu0
    %v2793 = vadd.f32 0.0, %v2792
    %2794 = vmatprep.mubr.f32.mxu0 0.0
    %2795 = vmatmul.mubr.f32.gmra.mxu0 %v2587
    %v2796 = vpop.f32.mrf.mxu0
    %v2797 = vadd.f32 0.0, %v2796
    %v2798 = vpop.f32.mrf.mxu0
    %v2799 = vadd.f32 0.0, %v2798
    %2800 = vmatprep.mubr.f32.mxu0 0.0
    %2801 = vmatmul.mubr.f32.gmra.mxu0 %v2590
    %v2802 = vpop.f32.mrf.mxu0
    %v2803 = vadd.f32 0.0, %v2802
    %v2804 = vpop.f32.mrf.mxu0
    %v2805 = vadd.f32 0.0, %v2804
    %2806 = vmatprep.mubr.f32.mxu0 0.0
    %2807 = vmatmul.mubr.f32.gmra.mxu0 %v2593
    %v2808 = vpop.f32.mrf.mxu0
    %v2809 = vadd.f32 0.0, %v2808
    %v2810 = vpop.f32.mrf.mxu0
    %v2811 = vadd.f32 0.0, %v2810
    %2812 = vmatprep.mubr.f32.mxu0 0.0
    %2813 = vmatmul.mubr.f32.gmra.mxu0 %v2596
    %v2814 = vpop.f32.mrf.mxu0
    %v2815 = vadd.f32 0.0, %v2814
    %v2816 = vpop.f32.mrf.mxu0
    %v2817 = vadd.f32 0.0, %v2816
    %2818 = vmatprep.mubr.f32.mxu0 0.0
    %2819 = vmatmul.mubr.f32.gmra.mxu0 %v2599
    %v2820 = vpop.f32.mrf.mxu0
    %v2821 = vadd.f32 0.0, %v2820
    %v2822 = vpop.f32.mrf.mxu0
    %v2823 = vadd.f32 0.0, %v2822
    %2824 = vmatprep.mubr.f32.mxu0 0.0
    %2825 = vmatmul.mubr.f32.gmra.mxu0 %v2602
    %v2826 = vpop.f32.mrf.mxu0
    %v2827 = vadd.f32 0.0, %v2826
    %v2828 = vpop.f32.mrf.mxu0
    %v2829 = vadd.f32 0.0, %v2828
    %2830 = vmatprep.mubr.f32.mxu0 0.0
    %2831 = vmatmul.mubr.f32.gmra.mxu0 %v2605
    %v2832 = vpop.f32.mrf.mxu0
    %v2833 = vadd.f32 0.0, %v2832
    %v2834 = vpop.f32.mrf.mxu0
    %v2835 = vadd.f32 0.0, %v2834
    %2836 = vmatprep.mubr.f32.mxu0 0.0
    %2837 = vmatmul.mubr.f32.gmra.mxu0 %v2608
    %v2838 = vpop.f32.mrf.mxu0
    %v2839 = vadd.f32 0.0, %v2838
    %v2840 = vpop.f32.mrf.mxu0
    %v2841 = vadd.f32 0.0, %v2840
    %2842 = vmatprep.mubr.f32.mxu0 0.0
    %2843 = vmatmul.mubr.f32.gmra.mxu0 %v2611
    %v2844 = vpop.f32.mrf.mxu0
    %v2845 = vadd.f32 0.0, %v2844
    %v2846 = vpop.f32.mrf.mxu0
    %v2847 = vadd.f32 0.0, %v2846
    %2848 = vmatprep.mubr.f32.mxu0 0.0
    %2849 = vmatmul.mubr.f32.gmra.mxu0 %v2614
    %v2850 = vpop.f32.mrf.mxu0
    %v2851 = vadd.f32 0.0, %v2850
    %v2852 = vpop.f32.mrf.mxu0
    %v2853 = vadd.f32 0.0, %v2852
    %2854 = vmatprep.mubr.f32.mxu0 0.0
    %2855 = vmatmul.mubr.f32.gmra.mxu0 %v2617
    %v2856 = vpop.f32.mrf.mxu0
    %v2857 = vadd.f32 0.0, %v2856
    %v2858 = vpop.f32.mrf.mxu0
    %v2859 = vadd.f32 0.0, %v2858
    %2860 = vmatprep.mubr.f32.mxu0 0.0
    %2861 = vmatmul.mubr.f32.gmra.mxu0 %v2620
    %v2862 = vpop.f32.mrf.mxu0
    %v2863 = vadd.f32 0.0, %v2862
    %v2864 = vpop.f32.mrf.mxu0
    %v2865 = vadd.f32 0.0, %v2864
    %2866 = vmatprep.mubr.f32.mxu0 0.0
    %2867 = vmatmul.mubr.f32.gmra.mxu0 %v2623
    %v2868 = vpop.f32.mrf.mxu0
    %v2869 = vadd.f32 0.0, %v2868
    %v2870 = vpop.f32.mrf.mxu0
    %v2871 = vadd.f32 0.0, %v2870
    %2872 = vmatprep.mubr.f32.mxu0 0.0
    %2873 = vmatmul.mubr.f32.gmra.mxu0 %v2626
    %v2874 = vpop.f32.mrf.mxu0
    %v2875 = vadd.f32 0.0, %v2874
    %v2876 = vpop.f32.mrf.mxu0
    %v2877 = vadd.f32 0.0, %v2876
    %2878 = vmatprep.mubr.f32.mxu0 0.0
    %2879 = vmatmul.mubr.f32.gmra.mxu0 %v2629
    %v2880 = vpop.f32.mrf.mxu0
    %v2881 = vadd.f32 0.0, %v2880
    %v2882 = vpop.f32.mrf.mxu0
    %v2883 = vadd.f32 0.0, %v2882
    %2884 = vmatprep.mubr.f32.mxu0 0.0
    %2885 = vmatmul.mubr.f32.gmra.mxu0 %v2632
    %v2886 = vpop.f32.mrf.mxu0
    %v2887 = vadd.f32 0.0, %v2886
    %v2888 = vpop.f32.mrf.mxu0
    %v2889 = vadd.f32 0.0, %v2888
    %2890 = vdwg.mxu0
    %2891 = vmatprep.subr.mxu0 0.0
    %2892 = vmatpush1.msra.mxu0 0.0
    %2893 = vmatprep.subr.mxu0 0.0
    %2894 = vmatpush1.msra.mxu0 0.0
    %2895 = vmatprep.subr.mxu0 0.0
    %2896 = vmatpush1.msra.mxu0 0.0
    %2897 = vmatprep.subr.mxu0 0.0
    %2898 = vmatpush1.msra.mxu0 0.0
    %2899 = vmatprep.subr.mxu0 0.0
    %2900 = vmatpush1.msra.mxu0 0.0
    %2901 = vmatprep.subr.mxu0 0.0
    %2902 = vmatpush1.msra.mxu0 0.0
    %2903 = vmatprep.subr.mxu0 0.0
    %2904 = vmatpush1.msra.mxu0 0.0
    %2905 = vmatprep.subr.mxu0 0.0
    %2906 = vmatpush1.msra.mxu0 0.0
    %2907 = vmatprep.subr.mxu0 0.0
    %2908 = vmatpush1.msra.mxu0 0.0
    %2909 = vmatprep.subr.mxu0 0.0
    %2910 = vmatpush1.msra.mxu0 0.0
    %2911 = vmatprep.subr.mxu0 0.0
    %2912 = vmatpush1.msra.mxu0 0.0
    %2913 = vmatprep.subr.mxu0 0.0
    %2914 = vmatpush1.msra.mxu0 0.0
    %2915 = vmatprep.subr.mxu0 %v917
    %2916 = vmatpush1.msra.mxu0 %v916
    %2917 = vmatprep.subr.mxu0 %v909
    %2918 = vmatpush1.msra.mxu0 %v908
    %2919 = vmatprep.subr.mxu0 %v901
    %2920 = vmatpush1.msra.mxu0 %v900
    %2921 = vmatprep.subr.mxu0 %v893
    %2922 = vmatpush1.msra.mxu0 %v892
    %2923 = vmatprep.subr.mxu0 0.0
    %2924 = vmatpush2.msra.mxu0 0.0
    %2925 = vmatprep.subr.mxu0 0.0
    %2926 = vmatpush2.msra.mxu0 0.0
    %2927 = vmatprep.subr.mxu0 0.0
    %2928 = vmatpush2.msra.mxu0 0.0
    %2929 = vmatprep.subr.mxu0 0.0
    %2930 = vmatpush2.msra.mxu0 0.0
    %2931 = vmatprep.subr.mxu0 0.0
    %2932 = vmatpush2.msra.mxu0 0.0
    %2933 = vmatprep.subr.mxu0 0.0
    %2934 = vmatpush2.msra.mxu0 0.0
    %2935 = vmatprep.subr.mxu0 0.0
    %2936 = vmatpush2.msra.mxu0 0.0
    %2937 = vmatprep.subr.mxu0 0.0
    %2938 = vmatpush2.msra.mxu0 0.0
    %2939 = vmatprep.subr.mxu0 0.0
    %2940 = vmatpush2.msra.mxu0 0.0
    %2941 = vmatprep.subr.mxu0 0.0
    %2942 = vmatpush2.msra.mxu0 0.0
    %2943 = vmatprep.subr.mxu0 0.0
    %2944 = vmatpush2.msra.mxu0 0.0
    %2945 = vmatprep.subr.mxu0 0.0
    %2946 = vmatpush2.msra.mxu0 0.0
    %2947 = vmatprep.subr.mxu0 0.0
    %2948 = vmatpush2.msra.mxu0 0.0
    %2949 = vmatprep.subr.mxu0 0.0
    %2950 = vmatpush2.msra.mxu0 0.0
    %2951 = vmatprep.subr.mxu0 0.0
    %2952 = vmatpush2.msra.mxu0 0.0
    %2953 = vmatprep.subr.mxu0 0.0
    %2954 = vmatpush2.msra.mxu0 0.0
    %2955 = vmatprep.mubr.f32.mxu0 0.0
    %2956 = vmatmul.mubr.f32.gmra.mxu0 %v2539
    %v2957 = vpop.f32.mrf.mxu0
    %v2958 = vadd.f32 0.0, %v2957
    %v2959 = vpop.f32.mrf.mxu0
    %v2960 = vadd.f32 0.0, %v2959
    %2961 = vmatprep.mubr.f32.mxu0 0.0
    %2962 = vmatmul.mubr.f32.gmra.mxu0 %v2542
    %v2963 = vpop.f32.mrf.mxu0
    %v2964 = vadd.f32 0.0, %v2963
    %v2965 = vpop.f32.mrf.mxu0
    %v2966 = vadd.f32 0.0, %v2965
    %2967 = vmatprep.mubr.f32.mxu0 0.0
    %2968 = vmatmul.mubr.f32.gmra.mxu0 %v2545
    %v2969 = vpop.f32.mrf.mxu0
    %v2970 = vadd.f32 0.0, %v2969
    %v2971 = vpop.f32.mrf.mxu0
    %v2972 = vadd.f32 0.0, %v2971
    %2973 = vmatprep.mubr.f32.mxu0 0.0
    %2974 = vmatmul.mubr.f32.gmra.mxu0 %v2548
    %v2975 = vpop.f32.mrf.mxu0
    %v2976 = vadd.f32 0.0, %v2975
    %v2977 = vpop.f32.mrf.mxu0
    %v2978 = vadd.f32 0.0, %v2977
    %2979 = vmatprep.mubr.f32.mxu0 0.0
    %2980 = vmatmul.mubr.f32.gmra.mxu0 %v2551
    %v2981 = vpop.f32.mrf.mxu0
    %v2982 = vadd.f32 0.0, %v2981
    %v2983 = vpop.f32.mrf.mxu0
    %v2984 = vadd.f32 0.0, %v2983
    %2985 = vmatprep.mubr.f32.mxu0 0.0
    %2986 = vmatmul.mubr.f32.gmra.mxu0 %v2554
    %v2987 = vpop.f32.mrf.mxu0
    %v2988 = vadd.f32 0.0, %v2987
    %v2989 = vpop.f32.mrf.mxu0
    %v2990 = vadd.f32 0.0, %v2989
    %2991 = vmatprep.mubr.f32.mxu0 0.0
    %2992 = vmatmul.mubr.f32.gmra.mxu0 %v2557
    %v2993 = vpop.f32.mrf.mxu0
    %v2994 = vadd.f32 0.0, %v2993
    %v2995 = vpop.f32.mrf.mxu0
    %v2996 = vadd.f32 0.0, %v2995
    %2997 = vmatprep.mubr.f32.mxu0 0.0
    %2998 = vmatmul.mubr.f32.gmra.mxu0 %v2560
    %v2999 = vpop.f32.mrf.mxu0
    %v3000 = vadd.f32 0.0, %v2999
    %v3001 = vpop.f32.mrf.mxu0
    %v3002 = vadd.f32 0.0, %v3001
    %3003 = vmatprep.mubr.f32.mxu0 0.0
    %3004 = vmatmul.mubr.f32.gmra.mxu0 %v2563
    %v3005 = vpop.f32.mrf.mxu0
    %v3006 = vadd.f32 0.0, %v3005
    %v3007 = vpop.f32.mrf.mxu0
    %v3008 = vadd.f32 0.0, %v3007
    %3009 = vmatprep.mubr.f32.mxu0 0.0
    %3010 = vmatmul.mubr.f32.gmra.mxu0 %v2566
    %v3011 = vpop.f32.mrf.mxu0
    %v3012 = vadd.f32 0.0, %v3011
    %v3013 = vpop.f32.mrf.mxu0
    %v3014 = vadd.f32 0.0, %v3013
    %3015 = vmatprep.mubr.f32.mxu0 0.0
    %3016 = vmatmul.mubr.f32.gmra.mxu0 %v2569
    %v3017 = vpop.f32.mrf.mxu0
    %v3018 = vadd.f32 0.0, %v3017
    %v3019 = vpop.f32.mrf.mxu0
    %v3020 = vadd.f32 0.0, %v3019
    %3021 = vmatprep.mubr.f32.mxu0 0.0
    %3022 = vmatmul.mubr.f32.gmra.mxu0 %v2572
    %v3023 = vpop.f32.mrf.mxu0
    %v3024 = vadd.f32 0.0, %v3023
    %v3025 = vpop.f32.mrf.mxu0
    %v3026 = vadd.f32 0.0, %v3025
    %3027 = vmatprep.mubr.f32.mxu0 0.0
    %3028 = vmatmul.mubr.f32.gmra.mxu0 %v2575
    %v3029 = vpop.f32.mrf.mxu0
    %v3030 = vadd.f32 0.0, %v3029
    %v3031 = vpop.f32.mrf.mxu0
    %v3032 = vadd.f32 0.0, %v3031
    %3033 = vmatprep.mubr.f32.mxu0 0.0
    %3034 = vmatmul.mubr.f32.gmra.mxu0 %v2578
    %v3035 = vpop.f32.mrf.mxu0
    %v3036 = vadd.f32 0.0, %v3035
    %v3037 = vpop.f32.mrf.mxu0
    %v3038 = vadd.f32 0.0, %v3037
    %3039 = vmatprep.mubr.f32.mxu0 0.0
    %3040 = vmatmul.mubr.f32.gmra.mxu0 %v2581
    %v3041 = vpop.f32.mrf.mxu0
    %v3042 = vadd.f32 0.0, %v3041
    %v3043 = vpop.f32.mrf.mxu0
    %v3044 = vadd.f32 0.0, %v3043
    %3045 = vmatprep.mubr.f32.mxu0 0.0
    %3046 = vmatmul.mubr.f32.gmra.mxu0 %v2584
    %v3047 = vpop.f32.mrf.mxu0
    %v3048 = vadd.f32 0.0, %v3047
    %v3049 = vpop.f32.mrf.mxu0
    %v3050 = vadd.f32 0.0, %v3049
    %3051 = vmatprep.mubr.f32.mxu0 0.0
    %3052 = vmatmul.mubr.f32.gmra.mxu0 %v2587
    %v3053 = vpop.f32.mrf.mxu0
    %v3054 = vadd.f32 0.0, %v3053
    %v3055 = vpop.f32.mrf.mxu0
    %v3056 = vadd.f32 0.0, %v3055
    %3057 = vmatprep.mubr.f32.mxu0 0.0
    %3058 = vmatmul.mubr.f32.gmra.mxu0 %v2590
    %v3059 = vpop.f32.mrf.mxu0
    %v3060 = vadd.f32 0.0, %v3059
    %v3061 = vpop.f32.mrf.mxu0
    %v3062 = vadd.f32 0.0, %v3061
    %3063 = vmatprep.mubr.f32.mxu0 0.0
    %3064 = vmatmul.mubr.f32.gmra.mxu0 %v2593
    %v3065 = vpop.f32.mrf.mxu0
    %v3066 = vadd.f32 0.0, %v3065
    %v3067 = vpop.f32.mrf.mxu0
    %v3068 = vadd.f32 0.0, %v3067
    %3069 = vmatprep.mubr.f32.mxu0 0.0
    %3070 = vmatmul.mubr.f32.gmra.mxu0 %v2596
    %v3071 = vpop.f32.mrf.mxu0
    %v3072 = vadd.f32 0.0, %v3071
    %v3073 = vpop.f32.mrf.mxu0
    %v3074 = vadd.f32 0.0, %v3073
    %3075 = vmatprep.mubr.f32.mxu0 0.0
    %3076 = vmatmul.mubr.f32.gmra.mxu0 %v2599
    %v3077 = vpop.f32.mrf.mxu0
    %v3078 = vadd.f32 0.0, %v3077
    %v3079 = vpop.f32.mrf.mxu0
    %v3080 = vadd.f32 0.0, %v3079
    %3081 = vmatprep.mubr.f32.mxu0 0.0
    %3082 = vmatmul.mubr.f32.gmra.mxu0 %v2602
    %v3083 = vpop.f32.mrf.mxu0
    %v3084 = vadd.f32 0.0, %v3083
    %v3085 = vpop.f32.mrf.mxu0
    %v3086 = vadd.f32 0.0, %v3085
    %3087 = vmatprep.mubr.f32.mxu0 0.0
    %3088 = vmatmul.mubr.f32.gmra.mxu0 %v2605
    %v3089 = vpop.f32.mrf.mxu0
    %v3090 = vadd.f32 0.0, %v3089
    %v3091 = vpop.f32.mrf.mxu0
    %v3092 = vadd.f32 0.0, %v3091
    %3093 = vmatprep.mubr.f32.mxu0 0.0
    %3094 = vmatmul.mubr.f32.gmra.mxu0 %v2608
    %v3095 = vpop.f32.mrf.mxu0
    %v3096 = vadd.f32 0.0, %v3095
    %v3097 = vpop.f32.mrf.mxu0
    %v3098 = vadd.f32 0.0, %v3097
    %3099 = vmatprep.mubr.f32.mxu0 0.0
    %3100 = vmatmul.mubr.f32.gmra.mxu0 %v2611
    %v3101 = vpop.f32.mrf.mxu0
    %v3102 = vadd.f32 0.0, %v3101
    %v3103 = vpop.f32.mrf.mxu0
    %v3104 = vadd.f32 0.0, %v3103
    %3105 = vmatprep.mubr.f32.mxu0 0.0
    %3106 = vmatmul.mubr.f32.gmra.mxu0 %v2614
    %v3107 = vpop.f32.mrf.mxu0
    %v3108 = vadd.f32 0.0, %v3107
    %v3109 = vpop.f32.mrf.mxu0
    %v3110 = vadd.f32 0.0, %v3109
    %3111 = vmatprep.mubr.f32.mxu0 0.0
    %3112 = vmatmul.mubr.f32.gmra.mxu0 %v2617
    %v3113 = vpop.f32.mrf.mxu0
    %v3114 = vadd.f32 0.0, %v3113
    %v3115 = vpop.f32.mrf.mxu0
    %v3116 = vadd.f32 0.0, %v3115
    %3117 = vmatprep.mubr.f32.mxu0 0.0
    %3118 = vmatmul.mubr.f32.gmra.mxu0 %v2620
    %v3119 = vpop.f32.mrf.mxu0
    %v3120 = vadd.f32 0.0, %v3119
    %v3121 = vpop.f32.mrf.mxu0
    %v3122 = vadd.f32 0.0, %v3121
    %3123 = vmatprep.mubr.f32.mxu0 0.0
    %3124 = vmatmul.mubr.f32.gmra.mxu0 %v2623
    %v3125 = vpop.f32.mrf.mxu0
    %v3126 = vadd.f32 0.0, %v3125
    %v3127 = vpop.f32.mrf.mxu0
    %v3128 = vadd.f32 0.0, %v3127
    %3129 = vmatprep.mubr.f32.mxu0 0.0
    %3130 = vmatmul.mubr.f32.gmra.mxu0 %v2626
    %v3131 = vpop.f32.mrf.mxu0
    %v3132 = vadd.f32 0.0, %v3131
    %v3133 = vpop.f32.mrf.mxu0
    %v3134 = vadd.f32 0.0, %v3133
    %3135 = vmatprep.mubr.f32.mxu0 0.0
    %3136 = vmatmul.mubr.f32.gmra.mxu0 %v2629
    %v3137 = vpop.f32.mrf.mxu0
    %v3138 = vadd.f32 0.0, %v3137
    %v3139 = vpop.f32.mrf.mxu0
    %v3140 = vadd.f32 0.0, %v3139
    %3141 = vmatprep.mubr.f32.mxu0 0.0
    %3142 = vmatmul.mubr.f32.gmra.mxu0 %v2632
    %v3143 = vpop.f32.mrf.mxu0
    %v3144 = vadd.f32 0.0, %v3143
    %v3145 = vpop.f32.mrf.mxu0
    %v3146 = vadd.f32 0.0, %v3145
    %3147 = vdwg.mxu0
    %3148 = vmatprep.subr.mxu0 0.0
    %3149 = vmatpush1.msra.mxu0 0.0
    %3150 = vmatprep.subr.mxu0 0.0
    %3151 = vmatpush1.msra.mxu0 0.0
    %3152 = vmatprep.subr.mxu0 0.0
    %3153 = vmatpush1.msra.mxu0 0.0
    %3154 = vmatprep.subr.mxu0 0.0
    %3155 = vmatpush1.msra.mxu0 0.0
    %3156 = vmatprep.subr.mxu0 0.0
    %3157 = vmatpush1.msra.mxu0 0.0
    %3158 = vmatprep.subr.mxu0 0.0
    %3159 = vmatpush1.msra.mxu0 0.0
    %3160 = vmatprep.subr.mxu0 0.0
    %3161 = vmatpush1.msra.mxu0 0.0
    %3162 = vmatprep.subr.mxu0 0.0
    %3163 = vmatpush1.msra.mxu0 0.0
    %3164 = vmatprep.subr.mxu0 0.0
    %3165 = vmatpush1.msra.mxu0 0.0
    %3166 = vmatprep.subr.mxu0 0.0
    %3167 = vmatpush1.msra.mxu0 0.0
    %3168 = vmatprep.subr.mxu0 0.0
    %3169 = vmatpush1.msra.mxu0 0.0
    %3170 = vmatprep.subr.mxu0 0.0
    %3171 = vmatpush1.msra.mxu0 0.0
    %3172 = vmatprep.subr.mxu0 %v919
    %3173 = vmatpush1.msra.mxu0 %v918
    %3174 = vmatprep.subr.mxu0 %v911
    %3175 = vmatpush1.msra.mxu0 %v910
    %3176 = vmatprep.subr.mxu0 %v903
    %3177 = vmatpush1.msra.mxu0 %v902
    %3178 = vmatprep.subr.mxu0 %v895
    %3179 = vmatpush1.msra.mxu0 %v894
    %3180 = vmatprep.subr.mxu0 0.0
    %3181 = vmatpush2.msra.mxu0 0.0
    %3182 = vmatprep.subr.mxu0 0.0
    %3183 = vmatpush2.msra.mxu0 0.0
    %3184 = vmatprep.subr.mxu0 0.0
    %3185 = vmatpush2.msra.mxu0 0.0
    %3186 = vmatprep.subr.mxu0 0.0
    %3187 = vmatpush2.msra.mxu0 0.0
    %3188 = vmatprep.subr.mxu0 0.0
    %3189 = vmatpush2.msra.mxu0 0.0
    %3190 = vmatprep.subr.mxu0 0.0
    %3191 = vmatpush2.msra.mxu0 0.0
    %3192 = vmatprep.subr.mxu0 0.0
    %3193 = vmatpush2.msra.mxu0 0.0
    %3194 = vmatprep.subr.mxu0 0.0
    %3195 = vmatpush2.msra.mxu0 0.0
    %3196 = vmatprep.subr.mxu0 0.0
    %3197 = vmatpush2.msra.mxu0 0.0
    %3198 = vmatprep.subr.mxu0 0.0
    %3199 = vmatpush2.msra.mxu0 0.0
    %3200 = vmatprep.subr.mxu0 0.0
    %3201 = vmatpush2.msra.mxu0 0.0
    %3202 = vmatprep.subr.mxu0 0.0
    %3203 = vmatpush2.msra.mxu0 0.0
    %3204 = vmatprep.subr.mxu0 0.0
    %3205 = vmatpush2.msra.mxu0 0.0
    %3206 = vmatprep.subr.mxu0 0.0
    %3207 = vmatpush2.msra.mxu0 0.0
    %3208 = vmatprep.subr.mxu0 0.0
    %3209 = vmatpush2.msra.mxu0 0.0
    %3210 = vmatprep.subr.mxu0 0.0
    %3211 = vmatpush2.msra.mxu0 0.0
    %3212 = vmatprep.mubr.f32.mxu0 0.0
    %3213 = vmatmul.mubr.f32.gmra.mxu0 %v2539
    %v3214 = vpop.f32.mrf.mxu0
    %v3215 = vadd.f32 0.0, %v3214
    %v3216 = vpop.f32.mrf.mxu0
    %v3217 = vadd.f32 0.0, %v3216
    %3218 = vmatprep.mubr.f32.mxu0 0.0
    %3219 = vmatmul.mubr.f32.gmra.mxu0 %v2542
    %v3220 = vpop.f32.mrf.mxu0
    %v3221 = vadd.f32 0.0, %v3220
    %v3222 = vpop.f32.mrf.mxu0
    %v3223 = vadd.f32 0.0, %v3222
    %3224 = vmatprep.mubr.f32.mxu0 0.0
    %3225 = vmatmul.mubr.f32.gmra.mxu0 %v2545
    %v3226 = vpop.f32.mrf.mxu0
    %v3227 = vadd.f32 0.0, %v3226
    %v3228 = vpop.f32.mrf.mxu0
    %v3229 = vadd.f32 0.0, %v3228
    %3230 = vmatprep.mubr.f32.mxu0 0.0
    %3231 = vmatmul.mubr.f32.gmra.mxu0 %v2548
    %v3232 = vpop.f32.mrf.mxu0
    %v3233 = vadd.f32 0.0, %v3232
    %v3234 = vpop.f32.mrf.mxu0
    %v3235 = vadd.f32 0.0, %v3234
    %3236 = vmatprep.mubr.f32.mxu0 0.0
    %3237 = vmatmul.mubr.f32.gmra.mxu0 %v2551
    %v3238 = vpop.f32.mrf.mxu0
    %v3239 = vadd.f32 0.0, %v3238
    %v3240 = vpop.f32.mrf.mxu0
    %v3241 = vadd.f32 0.0, %v3240
    %3242 = vmatprep.mubr.f32.mxu0 0.0
    %3243 = vmatmul.mubr.f32.gmra.mxu0 %v2554
    %v3244 = vpop.f32.mrf.mxu0
    %v3245 = vadd.f32 0.0, %v3244
    %v3246 = vpop.f32.mrf.mxu0
    %v3247 = vadd.f32 0.0, %v3246
    %3248 = vmatprep.mubr.f32.mxu0 0.0
    %3249 = vmatmul.mubr.f32.gmra.mxu0 %v2557
    %v3250 = vpop.f32.mrf.mxu0
    %v3251 = vadd.f32 0.0, %v3250
    %v3252 = vpop.f32.mrf.mxu0
    %v3253 = vadd.f32 0.0, %v3252
    %3254 = vmatprep.mubr.f32.mxu0 0.0
    %3255 = vmatmul.mubr.f32.gmra.mxu0 %v2560
    %v3256 = vpop.f32.mrf.mxu0
    %v3257 = vadd.f32 0.0, %v3256
    %v3258 = vpop.f32.mrf.mxu0
    %v3259 = vadd.f32 0.0, %v3258
    %3260 = vmatprep.mubr.f32.mxu0 0.0
    %3261 = vmatmul.mubr.f32.gmra.mxu0 %v2563
    %v3262 = vpop.f32.mrf.mxu0
    %v3263 = vadd.f32 0.0, %v3262
    %v3264 = vpop.f32.mrf.mxu0
    %v3265 = vadd.f32 0.0, %v3264
    %3266 = vmatprep.mubr.f32.mxu0 0.0
    %3267 = vmatmul.mubr.f32.gmra.mxu0 %v2566
    %v3268 = vpop.f32.mrf.mxu0
    %v3269 = vadd.f32 0.0, %v3268
    %v3270 = vpop.f32.mrf.mxu0
    %v3271 = vadd.f32 0.0, %v3270
    %3272 = vmatprep.mubr.f32.mxu0 0.0
    %3273 = vmatmul.mubr.f32.gmra.mxu0 %v2569
    %v3274 = vpop.f32.mrf.mxu0
    %v3275 = vadd.f32 0.0, %v3274
    %v3276 = vpop.f32.mrf.mxu0
    %v3277 = vadd.f32 0.0, %v3276
    %3278 = vmatprep.mubr.f32.mxu0 0.0
    %3279 = vmatmul.mubr.f32.gmra.mxu0 %v2572
    %v3280 = vpop.f32.mrf.mxu0
    %v3281 = vadd.f32 0.0, %v3280
    %v3282 = vpop.f32.mrf.mxu0
    %v3283 = vadd.f32 0.0, %v3282
    %3284 = vmatprep.mubr.f32.mxu0 0.0
    %3285 = vmatmul.mubr.f32.gmra.mxu0 %v2575
    %v3286 = vpop.f32.mrf.mxu0
    %v3287 = vadd.f32 0.0, %v3286
    %v3288 = vpop.f32.mrf.mxu0
    %v3289 = vadd.f32 0.0, %v3288
    %3290 = vmatprep.mubr.f32.mxu0 0.0
    %3291 = vmatmul.mubr.f32.gmra.mxu0 %v2578
    %v3292 = vpop.f32.mrf.mxu0
    %v3293 = vadd.f32 0.0, %v3292
    %v3294 = vpop.f32.mrf.mxu0
    %v3295 = vadd.f32 0.0, %v3294
    %3296 = vmatprep.mubr.f32.mxu0 0.0
    %3297 = vmatmul.mubr.f32.gmra.mxu0 %v2581
    %v3298 = vpop.f32.mrf.mxu0
    %v3299 = vadd.f32 0.0, %v3298
    %v3300 = vpop.f32.mrf.mxu0
    %v3301 = vadd.f32 0.0, %v3300
    %3302 = vmatprep.mubr.f32.mxu0 0.0
    %3303 = vmatmul.mubr.f32.gmra.mxu0 %v2584
    %v3304 = vpop.f32.mrf.mxu0
    %v3305 = vadd.f32 0.0, %v3304
    %v3306 = vpop.f32.mrf.mxu0
    %v3307 = vadd.f32 0.0, %v3306
    %3308 = vmatprep.mubr.f32.mxu0 0.0
    %3309 = vmatmul.mubr.f32.gmra.mxu0 %v2587
    %v3310 = vpop.f32.mrf.mxu0
    %v3311 = vadd.f32 0.0, %v3310
    %v3312 = vpop.f32.mrf.mxu0
    %v3313 = vadd.f32 0.0, %v3312
    %3314 = vmatprep.mubr.f32.mxu0 0.0
    %3315 = vmatmul.mubr.f32.gmra.mxu0 %v2590
    %v3316 = vpop.f32.mrf.mxu0
    %v3317 = vadd.f32 0.0, %v3316
    %v3318 = vpop.f32.mrf.mxu0
    %v3319 = vadd.f32 0.0, %v3318
    %3320 = vmatprep.mubr.f32.mxu0 0.0
    %3321 = vmatmul.mubr.f32.gmra.mxu0 %v2593
    %v3322 = vpop.f32.mrf.mxu0
    %v3323 = vadd.f32 0.0, %v3322
    %v3324 = vpop.f32.mrf.mxu0
    %v3325 = vadd.f32 0.0, %v3324
    %3326 = vmatprep.mubr.f32.mxu0 0.0
    %3327 = vmatmul.mubr.f32.gmra.mxu0 %v2596
    %v3328 = vpop.f32.mrf.mxu0
    %v3329 = vadd.f32 0.0, %v3328
    %v3330 = vpop.f32.mrf.mxu0
    %v3331 = vadd.f32 0.0, %v3330
    %3332 = vmatprep.mubr.f32.mxu0 0.0
    %3333 = vmatmul.mubr.f32.gmra.mxu0 %v2599
    %v3334 = vpop.f32.mrf.mxu0
    %v3335 = vadd.f32 0.0, %v3334
    %v3336 = vpop.f32.mrf.mxu0
    %v3337 = vadd.f32 0.0, %v3336
    %3338 = vmatprep.mubr.f32.mxu0 0.0
    %3339 = vmatmul.mubr.f32.gmra.mxu0 %v2602
    %v3340 = vpop.f32.mrf.mxu0
    %v3341 = vadd.f32 0.0, %v3340
    %v3342 = vpop.f32.mrf.mxu0
    %v3343 = vadd.f32 0.0, %v3342
    %3344 = vmatprep.mubr.f32.mxu0 0.0
    %3345 = vmatmul.mubr.f32.gmra.mxu0 %v2605
    %v3346 = vpop.f32.mrf.mxu0
    %v3347 = vadd.f32 0.0, %v3346
    %v3348 = vpop.f32.mrf.mxu0
    %v3349 = vadd.f32 0.0, %v3348
    %3350 = vmatprep.mubr.f32.mxu0 0.0
    %3351 = vmatmul.mubr.f32.gmra.mxu0 %v2608
    %v3352 = vpop.f32.mrf.mxu0
    %v3353 = vadd.f32 0.0, %v3352
    %v3354 = vpop.f32.mrf.mxu0
    %v3355 = vadd.f32 0.0, %v3354
    %3356 = vmatprep.mubr.f32.mxu0 0.0
    %3357 = vmatmul.mubr.f32.gmra.mxu0 %v2611
    %v3358 = vpop.f32.mrf.mxu0
    %v3359 = vadd.f32 0.0, %v3358
    %v3360 = vpop.f32.mrf.mxu0
    %v3361 = vadd.f32 0.0, %v3360
    %3362 = vmatprep.mubr.f32.mxu0 0.0
    %3363 = vmatmul.mubr.f32.gmra.mxu0 %v2614
    %v3364 = vpop.f32.mrf.mxu0
    %v3365 = vadd.f32 0.0, %v3364
    %v3366 = vpop.f32.mrf.mxu0
    %v3367 = vadd.f32 0.0, %v3366
    %3368 = vmatprep.mubr.f32.mxu0 0.0
    %3369 = vmatmul.mubr.f32.gmra.mxu0 %v2617
    %v3370 = vpop.f32.mrf.mxu0
    %v3371 = vadd.f32 0.0, %v3370
    %v3372 = vpop.f32.mrf.mxu0
    %v3373 = vadd.f32 0.0, %v3372
    %3374 = vmatprep.mubr.f32.mxu0 0.0
    %3375 = vmatmul.mubr.f32.gmra.mxu0 %v2620
    %v3376 = vpop.f32.mrf.mxu0
    %v3377 = vadd.f32 0.0, %v3376
    %v3378 = vpop.f32.mrf.mxu0
    %v3379 = vadd.f32 0.0, %v3378
    %3380 = vmatprep.mubr.f32.mxu0 0.0
    %3381 = vmatmul.mubr.f32.gmra.mxu0 %v2623
    %v3382 = vpop.f32.mrf.mxu0
    %v3383 = vadd.f32 0.0, %v3382
    %v3384 = vpop.f32.mrf.mxu0
    %v3385 = vadd.f32 0.0, %v3384
    %3386 = vmatprep.mubr.f32.mxu0 0.0
    %3387 = vmatmul.mubr.f32.gmra.mxu0 %v2626
    %v3388 = vpop.f32.mrf.mxu0
    %v3389 = vadd.f32 0.0, %v3388
    %v3390 = vpop.f32.mrf.mxu0
    %v3391 = vadd.f32 0.0, %v3390
    %3392 = vmatprep.mubr.f32.mxu0 0.0
    %3393 = vmatmul.mubr.f32.gmra.mxu0 %v2629
    %v3394 = vpop.f32.mrf.mxu0
    %v3395 = vadd.f32 0.0, %v3394
    %v3396 = vpop.f32.mrf.mxu0
    %v3397 = vadd.f32 0.0, %v3396
    %3398 = vmatprep.mubr.f32.mxu0 0.0
    %3399 = vmatmul.mubr.f32.gmra.mxu0 %v2632
    %v3400 = vpop.f32.mrf.mxu0
    %v3401 = vadd.f32 0.0, %v3400
    %v3402 = vpop.f32.mrf.mxu0
    %v3403 = vadd.f32 0.0, %v3402
    %3404 = vdwg.mxu0
    %3405 = vmatprep.subr.mxu0 0.0
    %3406 = vmatpush1.msra.mxu0 0.0
    %3407 = vmatprep.subr.mxu0 0.0
    %3408 = vmatpush1.msra.mxu0 0.0
    %3409 = vmatprep.subr.mxu0 0.0
    %3410 = vmatpush1.msra.mxu0 0.0
    %3411 = vmatprep.subr.mxu0 0.0
    %3412 = vmatpush1.msra.mxu0 0.0
    %3413 = vmatprep.subr.mxu0 0.0
    %3414 = vmatpush1.msra.mxu0 0.0
    %3415 = vmatprep.subr.mxu0 0.0
    %3416 = vmatpush1.msra.mxu0 0.0
    %3417 = vmatprep.subr.mxu0 0.0
    %3418 = vmatpush1.msra.mxu0 0.0
    %3419 = vmatprep.subr.mxu0 0.0
    %3420 = vmatpush1.msra.mxu0 0.0
    %3421 = vmatprep.subr.mxu0 0.0
    %3422 = vmatpush1.msra.mxu0 0.0
    %3423 = vmatprep.subr.mxu0 0.0
    %3424 = vmatpush1.msra.mxu0 0.0
    %3425 = vmatprep.subr.mxu0 0.0
    %3426 = vmatpush1.msra.mxu0 0.0
    %3427 = vmatprep.subr.mxu0 0.0
    %3428 = vmatpush1.msra.mxu0 0.0
    %3429 = vmatprep.subr.mxu0 %v921
    %3430 = vmatpush1.msra.mxu0 %v920
    %3431 = vmatprep.subr.mxu0 %v913
    %3432 = vmatpush1.msra.mxu0 %v912
    %3433 = vmatprep.subr.mxu0 %v905
    %3434 = vmatpush1.msra.mxu0 %v904
    %3435 = vmatprep.subr.mxu0 %v897
    %3436 = vmatpush1.msra.mxu0 %v896
    %3437 = vmatprep.subr.mxu0 0.0
    %3438 = vmatpush2.msra.mxu0 0.0
    %3439 = vmatprep.subr.mxu0 0.0
    %3440 = vmatpush2.msra.mxu0 0.0
    %3441 = vmatprep.subr.mxu0 0.0
    %3442 = vmatpush2.msra.mxu0 0.0
    %3443 = vmatprep.subr.mxu0 0.0
    %3444 = vmatpush2.msra.mxu0 0.0
    %3445 = vmatprep.subr.mxu0 0.0
    %3446 = vmatpush2.msra.mxu0 0.0
    %3447 = vmatprep.subr.mxu0 0.0
    %3448 = vmatpush2.msra.mxu0 0.0
    %3449 = vmatprep.subr.mxu0 0.0
    %3450 = vmatpush2.msra.mxu0 0.0
    %3451 = vmatprep.subr.mxu0 0.0
    %3452 = vmatpush2.msra.mxu0 0.0
    %3453 = vmatprep.subr.mxu0 0.0
    %3454 = vmatpush2.msra.mxu0 0.0
    %3455 = vmatprep.subr.mxu0 0.0
    %3456 = vmatpush2.msra.mxu0 0.0
    %3457 = vmatprep.subr.mxu0 0.0
    %3458 = vmatpush2.msra.mxu0 0.0
    %3459 = vmatprep.subr.mxu0 0.0
    %3460 = vmatpush2.msra.mxu0 0.0
    %3461 = vmatprep.subr.mxu0 0.0
    %3462 = vmatpush2.msra.mxu0 0.0
    %3463 = vmatprep.subr.mxu0 0.0
    %3464 = vmatpush2.msra.mxu0 0.0
    %3465 = vmatprep.subr.mxu0 0.0
    %3466 = vmatpush2.msra.mxu0 0.0
    %3467 = vmatprep.subr.mxu0 0.0
    %3468 = vmatpush2.msra.mxu0 0.0
    %3469 = vmatprep.mubr.f32.mxu0 0.0
    %3470 = vmatmul.mubr.f32.gmra.mxu0 %v2539
    %v3471 = vpop.f32.mrf.mxu0
    %v3472 = vadd.f32 0.0, %v3471
    %v3473 = vpop.f32.mrf.mxu0
    %v3474 = vadd.f32 0.0, %v3473
    %3475 = vmatprep.mubr.f32.mxu0 0.0
    %3476 = vmatmul.mubr.f32.gmra.mxu0 %v2542
    %v3477 = vpop.f32.mrf.mxu0
    %v3478 = vadd.f32 0.0, %v3477
    %v3479 = vpop.f32.mrf.mxu0
    %v3480 = vadd.f32 0.0, %v3479
    %3481 = vmatprep.mubr.f32.mxu0 0.0
    %3482 = vmatmul.mubr.f32.gmra.mxu0 %v2545
    %v3483 = vpop.f32.mrf.mxu0
    %v3484 = vadd.f32 0.0, %v3483
    %v3485 = vpop.f32.mrf.mxu0
    %v3486 = vadd.f32 0.0, %v3485
    %3487 = vmatprep.mubr.f32.mxu0 0.0
    %3488 = vmatmul.mubr.f32.gmra.mxu0 %v2548
    %v3489 = vpop.f32.mrf.mxu0
    %v3490 = vadd.f32 0.0, %v3489
    %v3491 = vpop.f32.mrf.mxu0
    %v3492 = vadd.f32 0.0, %v3491
    %3493 = vmatprep.mubr.f32.mxu0 0.0
    %3494 = vmatmul.mubr.f32.gmra.mxu0 %v2551
    %v3495 = vpop.f32.mrf.mxu0
    %v3496 = vadd.f32 0.0, %v3495
    %v3497 = vpop.f32.mrf.mxu0
    %v3498 = vadd.f32 0.0, %v3497
    %3499 = vmatprep.mubr.f32.mxu0 0.0
    %3500 = vmatmul.mubr.f32.gmra.mxu0 %v2554
    %v3501 = vpop.f32.mrf.mxu0
    %v3502 = vadd.f32 0.0, %v3501
    %v3503 = vpop.f32.mrf.mxu0
    %v3504 = vadd.f32 0.0, %v3503
    %3505 = vmatprep.mubr.f32.mxu0 0.0
    %3506 = vmatmul.mubr.f32.gmra.mxu0 %v2557
    %v3507 = vpop.f32.mrf.mxu0
    %v3508 = vadd.f32 0.0, %v3507
    %v3509 = vpop.f32.mrf.mxu0
    %v3510 = vadd.f32 0.0, %v3509
    %3511 = vmatprep.mubr.f32.mxu0 0.0
    %3512 = vmatmul.mubr.f32.gmra.mxu0 %v2560
    %v3513 = vpop.f32.mrf.mxu0
    %v3514 = vadd.f32 0.0, %v3513
    %v3515 = vpop.f32.mrf.mxu0
    %v3516 = vadd.f32 0.0, %v3515
    %3517 = vmatprep.mubr.f32.mxu0 0.0
    %3518 = vmatmul.mubr.f32.gmra.mxu0 %v2563
    %v3519 = vpop.f32.mrf.mxu0
    %v3520 = vadd.f32 0.0, %v3519
    %v3521 = vpop.f32.mrf.mxu0
    %v3522 = vadd.f32 0.0, %v3521
    %3523 = vmatprep.mubr.f32.mxu0 0.0
    %3524 = vmatmul.mubr.f32.gmra.mxu0 %v2566
    %v3525 = vpop.f32.mrf.mxu0
    %v3526 = vadd.f32 0.0, %v3525
    %v3527 = vpop.f32.mrf.mxu0
    %v3528 = vadd.f32 0.0, %v3527
    %3529 = vmatprep.mubr.f32.mxu0 0.0
    %3530 = vmatmul.mubr.f32.gmra.mxu0 %v2569
    %v3531 = vpop.f32.mrf.mxu0
    %v3532 = vadd.f32 0.0, %v3531
    %v3533 = vpop.f32.mrf.mxu0
    %v3534 = vadd.f32 0.0, %v3533
    %3535 = vmatprep.mubr.f32.mxu0 0.0
    %3536 = vmatmul.mubr.f32.gmra.mxu0 %v2572
    %v3537 = vpop.f32.mrf.mxu0
    %v3538 = vadd.f32 0.0, %v3537
    %v3539 = vpop.f32.mrf.mxu0
    %v3540 = vadd.f32 0.0, %v3539
    %3541 = vmatprep.mubr.f32.mxu0 0.0
    %3542 = vmatmul.mubr.f32.gmra.mxu0 %v2575
    %v3543 = vpop.f32.mrf.mxu0
    %v3544 = vadd.f32 0.0, %v3543
    %v3545 = vpop.f32.mrf.mxu0
    %v3546 = vadd.f32 0.0, %v3545
    %3547 = vmatprep.mubr.f32.mxu0 0.0
    %3548 = vmatmul.mubr.f32.gmra.mxu0 %v2578
    %v3549 = vpop.f32.mrf.mxu0
    %v3550 = vadd.f32 0.0, %v3549
    %v3551 = vpop.f32.mrf.mxu0
    %v3552 = vadd.f32 0.0, %v3551
    %3553 = vmatprep.mubr.f32.mxu0 0.0
    %3554 = vmatmul.mubr.f32.gmra.mxu0 %v2581
    %v3555 = vpop.f32.mrf.mxu0
    %v3556 = vadd.f32 0.0, %v3555
    %v3557 = vpop.f32.mrf.mxu0
    %v3558 = vadd.f32 0.0, %v3557
    %3559 = vmatprep.mubr.f32.mxu0 0.0
    %3560 = vmatmul.mubr.f32.gmra.mxu0 %v2584
    %v3561 = vpop.f32.mrf.mxu0
    %v3562 = vadd.f32 0.0, %v3561
    %v3563 = vpop.f32.mrf.mxu0
    %v3564 = vadd.f32 0.0, %v3563
    %3565 = vmatprep.mubr.f32.mxu0 0.0
    %3566 = vmatmul.mubr.f32.gmra.mxu0 %v2587
    %v3567 = vpop.f32.mrf.mxu0
    %v3568 = vadd.f32 0.0, %v3567
    %v3569 = vpop.f32.mrf.mxu0
    %v3570 = vadd.f32 0.0, %v3569
    %3571 = vmatprep.mubr.f32.mxu0 0.0
    %3572 = vmatmul.mubr.f32.gmra.mxu0 %v2590
    %v3573 = vpop.f32.mrf.mxu0
    %v3574 = vadd.f32 0.0, %v3573
    %v3575 = vpop.f32.mrf.mxu0
    %v3576 = vadd.f32 0.0, %v3575
    %3577 = vmatprep.mubr.f32.mxu0 0.0
    %3578 = vmatmul.mubr.f32.gmra.mxu0 %v2593
    %v3579 = vpop.f32.mrf.mxu0
    %v3580 = vadd.f32 0.0, %v3579
    %v3581 = vpop.f32.mrf.mxu0
    %v3582 = vadd.f32 0.0, %v3581
    %3583 = vmatprep.mubr.f32.mxu0 0.0
    %3584 = vmatmul.mubr.f32.gmra.mxu0 %v2596
    %v3585 = vpop.f32.mrf.mxu0
    %v3586 = vadd.f32 0.0, %v3585
    %v3587 = vpop.f32.mrf.mxu0
    %v3588 = vadd.f32 0.0, %v3587
    %3589 = vmatprep.mubr.f32.mxu0 0.0
    %3590 = vmatmul.mubr.f32.gmra.mxu0 %v2599
    %v3591 = vpop.f32.mrf.mxu0
    %v3592 = vadd.f32 0.0, %v3591
    %v3593 = vpop.f32.mrf.mxu0
    %v3594 = vadd.f32 0.0, %v3593
    %3595 = vmatprep.mubr.f32.mxu0 0.0
    %3596 = vmatmul.mubr.f32.gmra.mxu0 %v2602
    %v3597 = vpop.f32.mrf.mxu0
    %v3598 = vadd.f32 0.0, %v3597
    %v3599 = vpop.f32.mrf.mxu0
    %v3600 = vadd.f32 0.0, %v3599
    %3601 = vmatprep.mubr.f32.mxu0 0.0
    %3602 = vmatmul.mubr.f32.gmra.mxu0 %v2605
    %v3603 = vpop.f32.mrf.mxu0
    %v3604 = vadd.f32 0.0, %v3603
    %v3605 = vpop.f32.mrf.mxu0
    %v3606 = vadd.f32 0.0, %v3605
    %3607 = vmatprep.mubr.f32.mxu0 0.0
    %3608 = vmatmul.mubr.f32.gmra.mxu0 %v2608
    %v3609 = vpop.f32.mrf.mxu0
    %v3610 = vadd.f32 0.0, %v3609
    %v3611 = vpop.f32.mrf.mxu0
    %v3612 = vadd.f32 0.0, %v3611
    %3613 = vmatprep.mubr.f32.mxu0 0.0
    %3614 = vmatmul.mubr.f32.gmra.mxu0 %v2611
    %v3615 = vpop.f32.mrf.mxu0
    %v3616 = vadd.f32 0.0, %v3615
    %v3617 = vpop.f32.mrf.mxu0
    %v3618 = vadd.f32 0.0, %v3617
    %3619 = vmatprep.mubr.f32.mxu0 0.0
    %3620 = vmatmul.mubr.f32.gmra.mxu0 %v2614
    %v3621 = vpop.f32.mrf.mxu0
    %v3622 = vadd.f32 0.0, %v3621
    %v3623 = vpop.f32.mrf.mxu0
    %v3624 = vadd.f32 0.0, %v3623
    %3625 = vmatprep.mubr.f32.mxu0 0.0
    %3626 = vmatmul.mubr.f32.gmra.mxu0 %v2617
    %v3627 = vpop.f32.mrf.mxu0
    %v3628 = vadd.f32 0.0, %v3627
    %v3629 = vpop.f32.mrf.mxu0
    %v3630 = vadd.f32 0.0, %v3629
    %3631 = vmatprep.mubr.f32.mxu0 0.0
    %3632 = vmatmul.mubr.f32.gmra.mxu0 %v2620
    %v3633 = vpop.f32.mrf.mxu0
    %v3634 = vadd.f32 0.0, %v3633
    %v3635 = vpop.f32.mrf.mxu0
    %v3636 = vadd.f32 0.0, %v3635
    %3637 = vmatprep.mubr.f32.mxu0 0.0
    %3638 = vmatmul.mubr.f32.gmra.mxu0 %v2623
    %v3639 = vpop.f32.mrf.mxu0
    %v3640 = vadd.f32 0.0, %v3639
    %v3641 = vpop.f32.mrf.mxu0
    %v3642 = vadd.f32 0.0, %v3641
    %3643 = vmatprep.mubr.f32.mxu0 0.0
    %3644 = vmatmul.mubr.f32.gmra.mxu0 %v2626
    %v3645 = vpop.f32.mrf.mxu0
    %v3646 = vadd.f32 0.0, %v3645
    %v3647 = vpop.f32.mrf.mxu0
    %v3648 = vadd.f32 0.0, %v3647
    %3649 = vmatprep.mubr.f32.mxu0 0.0
    %3650 = vmatmul.mubr.f32.gmra.mxu0 %v2629
    %v3651 = vpop.f32.mrf.mxu0
    %v3652 = vadd.f32 0.0, %v3651
    %v3653 = vpop.f32.mrf.mxu0
    %v3654 = vadd.f32 0.0, %v3653
    %3655 = vmatprep.mubr.f32.mxu0 0.0
    %3656 = vmatmul.mubr.f32.gmra.mxu0 %v2632
    %v3657 = vpop.f32.mrf.mxu0
    %v3658 = vadd.f32 0.0, %v3657
    %v3659 = vpop.f32.mrf.mxu0
    %v3660 = vadd.f32 0.0, %v3659
    %3661 = vdwg.mxu0
    %v3662 = vmul.f32 %v2701, %v2281
    %v3663 = vmul.f32 %v2703, %v2282
    %v3664 = vmul.f32 %v2958, %v2283
    %v3665 = vmul.f32 %v2960, %v2284
    %v3666 = vmul.f32 %v3215, %v2285
    %v3667 = vmul.f32 %v3217, %v2286
    %v3668 = vmul.f32 %v3472, %v2287
    %v3669 = vmul.f32 %v3474, %v2288
    %v3670 = vmul.f32 %v2707, %v2289
    %v3671 = vmul.f32 %v2709, %v2290
    %v3672 = vmul.f32 %v2964, %v2291
    %v3673 = vmul.f32 %v2966, %v2292
    %v3674 = vmul.f32 %v3221, %v2293
    %v3675 = vmul.f32 %v3223, %v2294
    %v3676 = vmul.f32 %v3478, %v2295
    %v3677 = vmul.f32 %v3480, %v2296
    %v3678 = vmul.f32 %v2713, %v2297
    %v3679 = vmul.f32 %v2715, %v2298
    %v3680 = vmul.f32 %v2970, %v2299
    %v3681 = vmul.f32 %v2972, %v2300
    %v3682 = vmul.f32 %v3227, %v2301
    %v3683 = vmul.f32 %v3229, %v2302
    %v3684 = vmul.f32 %v3484, %v2303
    %v3685 = vmul.f32 %v3486, %v2304
    %v3686 = vmul.f32 %v2719, %v2305
    %v3687 = vmul.f32 %v2721, %v2306
    %v3688 = vmul.f32 %v2976, %v2307
    %v3689 = vmul.f32 %v2978, %v2308
    %v3690 = vmul.f32 %v3233, %v2309
    %v3691 = vmul.f32 %v3235, %v2310
    %v3692 = vmul.f32 %v3490, %v2311
    %v3693 = vmul.f32 %v3492, %v2312
    %v3694 = vmul.f32 %v2725, %v2313
    %v3695 = vmul.f32 %v2727, %v2314
    %v3696 = vmul.f32 %v2982, %v2315
    %v3697 = vmul.f32 %v2984, %v2316
    %v3698 = vmul.f32 %v3239, %v2317
    %v3699 = vmul.f32 %v3241, %v2318
    %v3700 = vmul.f32 %v3496, %v2319
    %v3701 = vmul.f32 %v3498, %v2320
    %v3702 = vmul.f32 %v2731, %v2321
    %v3703 = vmul.f32 %v2733, %v2322
    %v3704 = vmul.f32 %v2988, %v2323
    %v3705 = vmul.f32 %v2990, %v2324
    %v3706 = vmul.f32 %v3245, %v2325
    %v3707 = vmul.f32 %v3247, %v2326
    %v3708 = vmul.f32 %v3502, %v2327
    %v3709 = vmul.f32 %v3504, %v2328
    %v3710 = vmul.f32 %v2737, %v2329
    %v3711 = vmul.f32 %v2739, %v2330
    %v3712 = vmul.f32 %v2994, %v2331
    %v3713 = vmul.f32 %v2996, %v2332
    %v3714 = vmul.f32 %v3251, %v2333
    %v3715 = vmul.f32 %v3253, %v2334
    %v3716 = vmul.f32 %v3508, %v2335
    %v3717 = vmul.f32 %v3510, %v2336
    %v3718 = vmul.f32 %v2743, %v2337
    %v3719 = vmul.f32 %v2745, %v2338
    %v3720 = vmul.f32 %v3000, %v2339
    %v3721 = vmul.f32 %v3002, %v2340
    %v3722 = vmul.f32 %v3257, %v2341
    %v3723 = vmul.f32 %v3259, %v2342
    %v3724 = vmul.f32 %v3514, %v2343
    %v3725 = vmul.f32 %v3516, %v2344
    %v3726 = vmul.f32 %v2749, %v2345
    %v3727 = vmul.f32 %v2751, %v2346
    %v3728 = vmul.f32 %v3006, %v2347
    %v3729 = vmul.f32 %v3008, %v2348
    %v3730 = vmul.f32 %v3263, %v2349
    %v3731 = vmul.f32 %v3265, %v2350
    %v3732 = vmul.f32 %v3520, %v2351
    %v3733 = vmul.f32 %v3522, %v2352
    %v3734 = vmul.f32 %v2755, %v2353
    %v3735 = vmul.f32 %v2757, %v2354
    %v3736 = vmul.f32 %v3012, %v2355
    %v3737 = vmul.f32 %v3014, %v2356
    %v3738 = vmul.f32 %v3269, %v2357
    %v3739 = vmul.f32 %v3271, %v2358
    %v3740 = vmul.f32 %v3526, %v2359
    %v3741 = vmul.f32 %v3528, %v2360
    %v3742 = vmul.f32 %v2761, %v2361
    %v3743 = vmul.f32 %v2763, %v2362
    %v3744 = vmul.f32 %v3018, %v2363
    %v3745 = vmul.f32 %v3020, %v2364
    %v3746 = vmul.f32 %v3275, %v2365
    %v3747 = vmul.f32 %v3277, %v2366
    %v3748 = vmul.f32 %v3532, %v2367
    %v3749 = vmul.f32 %v3534, %v2368
    %v3750 = vmul.f32 %v2767, %v2369
    %v3751 = vmul.f32 %v2769, %v2370
    %v3752 = vmul.f32 %v3024, %v2371
    %v3753 = vmul.f32 %v3026, %v2372
    %v3754 = vmul.f32 %v3281, %v2373
    %v3755 = vmul.f32 %v3283, %v2374
    %v3756 = vmul.f32 %v3538, %v2375
    %v3757 = vmul.f32 %v3540, %v2376
    %v3758 = vmul.f32 %v2773, %v2377
    %v3759 = vmul.f32 %v2775, %v2378
    %v3760 = vmul.f32 %v3030, %v2379
    %v3761 = vmul.f32 %v3032, %v2380
    %v3762 = vmul.f32 %v3287, %v2381
    %v3763 = vmul.f32 %v3289, %v2382
    %v3764 = vmul.f32 %v3544, %v2383
    %v3765 = vmul.f32 %v3546, %v2384
    %v3766 = vmul.f32 %v2779, %v2385
    %v3767 = vmul.f32 %v2781, %v2386
    %v3768 = vmul.f32 %v3036, %v2387
    %v3769 = vmul.f32 %v3038, %v2388
    %v3770 = vmul.f32 %v3293, %v2389
    %v3771 = vmul.f32 %v3295, %v2390
    %v3772 = vmul.f32 %v3550, %v2391
    %v3773 = vmul.f32 %v3552, %v2392
    %v3774 = vmul.f32 %v2785, %v2393
    %v3775 = vmul.f32 %v2787, %v2394
    %v3776 = vmul.f32 %v3042, %v2395
    %v3777 = vmul.f32 %v3044, %v2396
    %v3778 = vmul.f32 %v3299, %v2397
    %v3779 = vmul.f32 %v3301, %v2398
    %v3780 = vmul.f32 %v3556, %v2399
    %v3781 = vmul.f32 %v3558, %v2400
    %v3782 = vmul.f32 %v2791, %v2401
    %v3783 = vmul.f32 %v2793, %v2402
    %v3784 = vmul.f32 %v3048, %v2403
    %v3785 = vmul.f32 %v3050, %v2404
    %v3786 = vmul.f32 %v3305, %v2405
    %v3787 = vmul.f32 %v3307, %v2406
    %v3788 = vmul.f32 %v3562, %v2407
    %v3789 = vmul.f32 %v3564, %v2408
    %v3790 = vmul.f32 %v2797, %v2409
    %v3791 = vmul.f32 %v2799, %v2410
    %v3792 = vmul.f32 %v3054, %v2411
    %v3793 = vmul.f32 %v3056, %v2412
    %v3794 = vmul.f32 %v3311, %v2413
    %v3795 = vmul.f32 %v3313, %v2414
    %v3796 = vmul.f32 %v3568, %v2415
    %v3797 = vmul.f32 %v3570, %v2416
    %v3798 = vmul.f32 %v2803, %v2417
    %v3799 = vmul.f32 %v2805, %v2418
    %v3800 = vmul.f32 %v3060, %v2419
    %v3801 = vmul.f32 %v3062, %v2420
    %v3802 = vmul.f32 %v3317, %v2421
    %v3803 = vmul.f32 %v3319, %v2422
    %v3804 = vmul.f32 %v3574, %v2423
    %v3805 = vmul.f32 %v3576, %v2424
    %v3806 = vmul.f32 %v2809, %v2425
    %v3807 = vmul.f32 %v2811, %v2426
    %v3808 = vmul.f32 %v3066, %v2427
    %v3809 = vmul.f32 %v3068, %v2428
    %v3810 = vmul.f32 %v3323, %v2429
    %v3811 = vmul.f32 %v3325, %v2430
    %v3812 = vmul.f32 %v3580, %v2431
    %v3813 = vmul.f32 %v3582, %v2432
    %v3814 = vmul.f32 %v2815, %v2433
    %v3815 = vmul.f32 %v2817, %v2434
    %v3816 = vmul.f32 %v3072, %v2435
    %v3817 = vmul.f32 %v3074, %v2436
    %v3818 = vmul.f32 %v3329, %v2437
    %v3819 = vmul.f32 %v3331, %v2438
    %v3820 = vmul.f32 %v3586, %v2439
    %v3821 = vmul.f32 %v3588, %v2440
    %v3822 = vmul.f32 %v2821, %v2441
    %v3823 = vmul.f32 %v2823, %v2442
    %v3824 = vmul.f32 %v3078, %v2443
    %v3825 = vmul.f32 %v3080, %v2444
    %v3826 = vmul.f32 %v3335, %v2445
    %v3827 = vmul.f32 %v3337, %v2446
    %v3828 = vmul.f32 %v3592, %v2447
    %v3829 = vmul.f32 %v3594, %v2448
    %v3830 = vmul.f32 %v2827, %v2449
    %v3831 = vmul.f32 %v2829, %v2450
    %v3832 = vmul.f32 %v3084, %v2451
    %v3833 = vmul.f32 %v3086, %v2452
    %v3834 = vmul.f32 %v3341, %v2453
    %v3835 = vmul.f32 %v3343, %v2454
    %v3836 = vmul.f32 %v3598, %v2455
    %v3837 = vmul.f32 %v3600, %v2456
    %v3838 = vmul.f32 %v2833, %v2457
    %v3839 = vmul.f32 %v2835, %v2458
    %v3840 = vmul.f32 %v3090, %v2459
    %v3841 = vmul.f32 %v3092, %v2460
    %v3842 = vmul.f32 %v3347, %v2461
    %v3843 = vmul.f32 %v3349, %v2462
    %v3844 = vmul.f32 %v3604, %v2463
    %v3845 = vmul.f32 %v3606, %v2464
    %v3846 = vmul.f32 %v2839, %v2465
    %v3847 = vmul.f32 %v2841, %v2466
    %v3848 = vmul.f32 %v3096, %v2467
    %v3849 = vmul.f32 %v3098, %v2468
    %v3850 = vmul.f32 %v3353, %v2469
    %v3851 = vmul.f32 %v3355, %v2470
    %v3852 = vmul.f32 %v3610, %v2471
    %v3853 = vmul.f32 %v3612, %v2472
    %v3854 = vmul.f32 %v2845, %v2473
    %v3855 = vmul.f32 %v2847, %v2474
    %v3856 = vmul.f32 %v3102, %v2475
    %v3857 = vmul.f32 %v3104, %v2476
    %v3858 = vmul.f32 %v3359, %v2477
    %v3859 = vmul.f32 %v3361, %v2478
    %v3860 = vmul.f32 %v3616, %v2479
    %v3861 = vmul.f32 %v3618, %v2480
    %v3862 = vmul.f32 %v2851, %v2481
    %v3863 = vmul.f32 %v2853, %v2482
    %v3864 = vmul.f32 %v3108, %v2483
    %v3865 = vmul.f32 %v3110, %v2484
    %v3866 = vmul.f32 %v3365, %v2485
    %v3867 = vmul.f32 %v3367, %v2486
    %v3868 = vmul.f32 %v3622, %v2487
    %v3869 = vmul.f32 %v3624, %v2488
    %v3870 = vmul.f32 %v2857, %v2489
    %v3871 = vmul.f32 %v2859, %v2490
    %v3872 = vmul.f32 %v3114, %v2491
    %v3873 = vmul.f32 %v3116, %v2492
    %v3874 = vmul.f32 %v3371, %v2493
    %v3875 = vmul.f32 %v3373, %v2494
    %v3876 = vmul.f32 %v3628, %v2495
    %v3877 = vmul.f32 %v3630, %v2496
    %v3878 = vmul.f32 %v2863, %v2497
    %v3879 = vmul.f32 %v2865, %v2498
    %v3880 = vmul.f32 %v3120, %v2499
    %v3881 = vmul.f32 %v3122, %v2500
    %v3882 = vmul.f32 %v3377, %v2501
    %v3883 = vmul.f32 %v3379, %v2502
    %v3884 = vmul.f32 %v3634, %v2503
    %v3885 = vmul.f32 %v3636, %v2504
    %v3886 = vmul.f32 %v2869, %v2505
    %v3887 = vmul.f32 %v2871, %v2506
    %v3888 = vmul.f32 %v3126, %v2507
    %v3889 = vmul.f32 %v3128, %v2508
    %v3890 = vmul.f32 %v3383, %v2509
    %v3891 = vmul.f32 %v3385, %v2510
    %v3892 = vmul.f32 %v3640, %v2511
    %v3893 = vmul.f32 %v3642, %v2512
    %v3894 = vmul.f32 %v2875, %v2513
    %v3895 = vmul.f32 %v2877, %v2514
    %v3896 = vmul.f32 %v3132, %v2515
    %v3897 = vmul.f32 %v3134, %v2516
    %v3898 = vmul.f32 %v3389, %v2517
    %v3899 = vmul.f32 %v3391, %v2518
    %v3900 = vmul.f32 %v3646, %v2519
    %v3901 = vmul.f32 %v3648, %v2520
    %v3902 = vmul.f32 %v2881, %v2521
    %v3903 = vmul.f32 %v2883, %v2522
    %v3904 = vmul.f32 %v3138, %v2523
    %v3905 = vmul.f32 %v3140, %v2524
    %v3906 = vmul.f32 %v3395, %v2525
    %v3907 = vmul.f32 %v3397, %v2526
    %v3908 = vmul.f32 %v3652, %v2527
    %v3909 = vmul.f32 %v3654, %v2528
    %v3910 = vmul.f32 %v2887, %v2529
    %v3911 = vmul.f32 %v2889, %v2530
    %v3912 = vmul.f32 %v3144, %v2531
    %v3913 = vmul.f32 %v3146, %v2532
    %v3914 = vmul.f32 %v3401, %v2533
    %v3915 = vmul.f32 %v3403, %v2534
    %v3916 = vmul.f32 %v3658, %v2535
    %v3917 = vmul.f32 %v3660, %v2536
    %3950 = vrot.lane.b32.xlu0 %v304, 64
    %v3951 = vpop.permute.xlu0 %3950
    %3952 = vrot.lane.b32.xlu0 %v310, 64
    %v3953 = vpop.permute.xlu0 %3952
    %3954 = vrot.lane.b32.xlu0 %v316, 64
    %v3955 = vpop.permute.xlu0 %3954
    %3956 = vrot.lane.b32.xlu0 %v322, 64
    %v3957 = vpop.permute.xlu0 %3956
    %3958 = vrot.lane.b32.xlu0 %v328, 64
    %v3959 = vpop.permute.xlu0 %3958
    %3960 = vrot.lane.b32.xlu0 %v334, 64
    %v3961 = vpop.permute.xlu0 %3960
    %3962 = vrot.lane.b32.xlu0 %v340, 64
    %v3963 = vpop.permute.xlu0 %3962
    %3964 = vrot.lane.b32.xlu0 %v346, 64
    %v3965 = vpop.permute.xlu0 %3964
    %3966 = vrot.lane.b32.xlu0 %v352, 64
    %v3967 = vpop.permute.xlu0 %3966
    %3968 = vrot.lane.b32.xlu0 %v358, 64
    %v3969 = vpop.permute.xlu0 %3968
    %3970 = vrot.lane.b32.xlu0 %v364, 64
    %v3971 = vpop.permute.xlu0 %3970
    %3972 = vrot.lane.b32.xlu0 %v370, 64
    %v3973 = vpop.permute.xlu0 %3972
    %3974 = vrot.lane.b32.xlu0 %v376, 64
    %v3975 = vpop.permute.xlu0 %3974
    %3976 = vrot.lane.b32.xlu0 %v382, 64
    %v3977 = vpop.permute.xlu0 %3976
    %3978 = vrot.lane.b32.xlu0 %v388, 64
    %v3979 = vpop.permute.xlu0 %3978
    %3980 = vrot.lane.b32.xlu0 %v394, 64
    %v3981 = vpop.permute.xlu0 %3980
    %3982 = vrot.lane.b32.xlu0 %v400, 64
    %v3983 = vpop.permute.xlu0 %3982
    %3984 = vrot.lane.b32.xlu0 %v406, 64
    %v3985 = vpop.permute.xlu0 %3984
    %3986 = vrot.lane.b32.xlu0 %v412, 64
    %v3987 = vpop.permute.xlu0 %3986
    %3988 = vrot.lane.b32.xlu0 %v418, 64
    %v3989 = vpop.permute.xlu0 %3988
    %3990 = vrot.lane.b32.xlu0 %v424, 64
    %v3991 = vpop.permute.xlu0 %3990
    %3992 = vrot.lane.b32.xlu0 %v430, 64
    %v3993 = vpop.permute.xlu0 %3992
    %3994 = vrot.lane.b32.xlu0 %v436, 64
    %v3995 = vpop.permute.xlu0 %3994
    %3996 = vrot.lane.b32.xlu0 %v442, 64
    %v3997 = vpop.permute.xlu0 %3996
    %3998 = vrot.lane.b32.xlu0 %v448, 64
    %v3999 = vpop.permute.xlu0 %3998
    %4000 = vrot.lane.b32.xlu0 %v454, 64
    %v4001 = vpop.permute.xlu0 %4000
    %4002 = vrot.lane.b32.xlu0 %v460, 64
    %v4003 = vpop.permute.xlu0 %4002
    %4004 = vrot.lane.b32.xlu0 %v466, 64
    %v4005 = vpop.permute.xlu0 %4004
    %4006 = vrot.lane.b32.xlu0 %v472, 64
    %v4007 = vpop.permute.xlu0 %4006
    %4008 = vrot.lane.b32.xlu0 %v478, 64
    %v4009 = vpop.permute.xlu0 %4008
    %4010 = vrot.lane.b32.xlu0 %v484, 64
    %v4011 = vpop.permute.xlu0 %4010
    %4012 = vrot.lane.b32.xlu0 %v490, 64
    %v4013 = vpop.permute.xlu0 %4012
    %4046 = vmatprep.subr.mxu0 0.0
    %4047 = vmatpush1.msra.mxu0 %v937
    %4048 = vmatprep.subr.mxu0 0.0
    %4049 = vmatpush1.msra.mxu0 %v936
    %4050 = vmatprep.subr.mxu0 0.0
    %4051 = vmatpush1.msra.mxu0 %v935
    %4052 = vmatprep.subr.mxu0 0.0
    %4053 = vmatpush1.msra.mxu0 %v934
    %4054 = vmatprep.subr.mxu0 0.0
    %4055 = vmatpush1.msra.mxu0 %v933
    %4056 = vmatprep.subr.mxu0 0.0
    %4057 = vmatpush1.msra.mxu0 %v932
    %4058 = vmatprep.subr.mxu0 0.0
    %4059 = vmatpush1.msra.mxu0 %v931
    %4060 = vmatprep.subr.mxu0 0.0
    %4061 = vmatpush1.msra.mxu0 %v930
    %4062 = vmatprep.subr.mxu0 0.0
    %4063 = vmatpush1.msra.mxu0 %v929
    %4064 = vmatprep.subr.mxu0 0.0
    %4065 = vmatpush1.msra.mxu0 %v928
    %4066 = vmatprep.subr.mxu0 0.0
    %4067 = vmatpush1.msra.mxu0 %v927
    %4068 = vmatprep.subr.mxu0 0.0
    %4069 = vmatpush1.msra.mxu0 %v926
    %4070 = vmatprep.subr.mxu0 0.0
    %4071 = vmatpush1.msra.mxu0 %v925
    %4072 = vmatprep.subr.mxu0 0.0
    %4073 = vmatpush1.msra.mxu0 %v924
    %4074 = vmatprep.subr.mxu0 0.0
    %4075 = vmatpush1.msra.mxu0 %v923
    %4076 = vmatprep.subr.mxu0 0.0
    %4077 = vmatpush1.msra.mxu0 %v922
    %4078 = vmatprep.subr.mxu0 0.0
    %4079 = vmatpush2.msra.mxu0 %v953
    %4080 = vmatprep.subr.mxu0 0.0
    %4081 = vmatpush2.msra.mxu0 %v952
    %4082 = vmatprep.subr.mxu0 0.0
    %4083 = vmatpush2.msra.mxu0 %v951
    %4084 = vmatprep.subr.mxu0 0.0
    %4085 = vmatpush2.msra.mxu0 %v950
    %4086 = vmatprep.subr.mxu0 0.0
    %4087 = vmatpush2.msra.mxu0 %v949
    %4088 = vmatprep.subr.mxu0 0.0
    %4089 = vmatpush2.msra.mxu0 %v948
    %4090 = vmatprep.subr.mxu0 0.0
    %4091 = vmatpush2.msra.mxu0 %v947
    %4092 = vmatprep.subr.mxu0 0.0
    %4093 = vmatpush2.msra.mxu0 %v946
    %4094 = vmatprep.subr.mxu0 0.0
    %4095 = vmatpush2.msra.mxu0 %v945
    %4096 = vmatprep.subr.mxu0 0.0
    %4097 = vmatpush2.msra.mxu0 %v944
    %4098 = vmatprep.subr.mxu0 0.0
    %4099 = vmatpush2.msra.mxu0 %v943
    %4100 = vmatprep.subr.mxu0 0.0
    %4101 = vmatpush2.msra.mxu0 %v942
    %4102 = vmatprep.subr.mxu0 0.0
    %4103 = vmatpush2.msra.mxu0 %v941
    %4104 = vmatprep.subr.mxu0 0.0
    %4105 = vmatpush2.msra.mxu0 %v940
    %4106 = vmatprep.subr.mxu0 0.0
    %4107 = vmatpush2.msra.mxu0 %v939
    %4108 = vmatprep.subr.mxu0 0.0
    %4109 = vmatpush2.msra.mxu0 %v938
    %4110 = vmatprep.mubr.f32.mxu0 %v3663
    %4111 = vmatmul.mubr.f32.gmra.mxu0 %v3662
    %v4112 = vpop.f32.mrf.mxu0
    %v4113 = vadd.f32 %v3951, %v4112
    %v4114 = vpop.f32.mrf.mxu0
    %4115 = vmatprep.mubr.f32.mxu0 %v3671
    %4116 = vmatmul.mubr.f32.gmra.mxu0 %v3670
    %v4117 = vpop.f32.mrf.mxu0
    %v4118 = vadd.f32 %v3953, %v4117
    %v4119 = vpop.f32.mrf.mxu0
    %4120 = vmatprep.mubr.f32.mxu0 %v3679
    %4121 = vmatmul.mubr.f32.gmra.mxu0 %v3678
    %v4122 = vpop.f32.mrf.mxu0
    %v4123 = vadd.f32 %v3955, %v4122
    %v4124 = vpop.f32.mrf.mxu0
    %4125 = vmatprep.mubr.f32.mxu0 %v3687
    %4126 = vmatmul.mubr.f32.gmra.mxu0 %v3686
    %v4127 = vpop.f32.mrf.mxu0
    %v4128 = vadd.f32 %v3957, %v4127
    %v4129 = vpop.f32.mrf.mxu0
    %4130 = vmatprep.mubr.f32.mxu0 %v3695
    %4131 = vmatmul.mubr.f32.gmra.mxu0 %v3694
    %v4132 = vpop.f32.mrf.mxu0
    %v4133 = vadd.f32 %v3959, %v4132
    %v4134 = vpop.f32.mrf.mxu0
    %4135 = vmatprep.mubr.f32.mxu0 %v3703
    %4136 = vmatmul.mubr.f32.gmra.mxu0 %v3702
    %v4137 = vpop.f32.mrf.mxu0
    %v4138 = vadd.f32 %v3961, %v4137
    %v4139 = vpop.f32.mrf.mxu0
    %4140 = vmatprep.mubr.f32.mxu0 %v3711
    %4141 = vmatmul.mubr.f32.gmra.mxu0 %v3710
    %v4142 = vpop.f32.mrf.mxu0
    %v4143 = vadd.f32 %v3963, %v4142
    %v4144 = vpop.f32.mrf.mxu0
    %4145 = vmatprep.mubr.f32.mxu0 %v3719
    %4146 = vmatmul.mubr.f32.gmra.mxu0 %v3718
    %v4147 = vpop.f32.mrf.mxu0
    %v4148 = vadd.f32 %v3965, %v4147
    %v4149 = vpop.f32.mrf.mxu0
    %4150 = vmatprep.mubr.f32.mxu0 %v3727
    %4151 = vmatmul.mubr.f32.gmra.mxu0 %v3726
    %v4152 = vpop.f32.mrf.mxu0
    %v4153 = vadd.f32 %v3967, %v4152
    %v4154 = vpop.f32.mrf.mxu0
    %4155 = vmatprep.mubr.f32.mxu0 %v3735
    %4156 = vmatmul.mubr.f32.gmra.mxu0 %v3734
    %v4157 = vpop.f32.mrf.mxu0
    %v4158 = vadd.f32 %v3969, %v4157
    %v4159 = vpop.f32.mrf.mxu0
    %4160 = vmatprep.mubr.f32.mxu0 %v3743
    %4161 = vmatmul.mubr.f32.gmra.mxu0 %v3742
    %v4162 = vpop.f32.mrf.mxu0
    %v4163 = vadd.f32 %v3971, %v4162
    %v4164 = vpop.f32.mrf.mxu0
    %4165 = vmatprep.mubr.f32.mxu0 %v3751
    %4166 = vmatmul.mubr.f32.gmra.mxu0 %v3750
    %v4167 = vpop.f32.mrf.mxu0
    %v4168 = vadd.f32 %v3973, %v4167
    %v4169 = vpop.f32.mrf.mxu0
    %4170 = vmatprep.mubr.f32.mxu0 %v3759
    %4171 = vmatmul.mubr.f32.gmra.mxu0 %v3758
    %v4172 = vpop.f32.mrf.mxu0
    %v4173 = vadd.f32 %v3975, %v4172
    %v4174 = vpop.f32.mrf.mxu0
    %4175 = vmatprep.mubr.f32.mxu0 %v3767
    %4176 = vmatmul.mubr.f32.gmra.mxu0 %v3766
    %v4177 = vpop.f32.mrf.mxu0
    %v4178 = vadd.f32 %v3977, %v4177
    %v4179 = vpop.f32.mrf.mxu0
    %4180 = vmatprep.mubr.f32.mxu0 %v3775
    %4181 = vmatmul.mubr.f32.gmra.mxu0 %v3774
    %v4182 = vpop.f32.mrf.mxu0
    %v4183 = vadd.f32 %v3979, %v4182
    %v4184 = vpop.f32.mrf.mxu0
    %4185 = vmatprep.mubr.f32.mxu0 %v3783
    %4186 = vmatmul.mubr.f32.gmra.mxu0 %v3782
    %v4187 = vpop.f32.mrf.mxu0
    %v4188 = vadd.f32 %v3981, %v4187
    %v4189 = vpop.f32.mrf.mxu0
    %4190 = vmatprep.mubr.f32.mxu0 %v3791
    %4191 = vmatmul.mubr.f32.gmra.mxu0 %v3790
    %v4192 = vpop.f32.mrf.mxu0
    %v4193 = vadd.f32 %v3983, %v4192
    %v4194 = vpop.f32.mrf.mxu0
    %4195 = vmatprep.mubr.f32.mxu0 %v3799
    %4196 = vmatmul.mubr.f32.gmra.mxu0 %v3798
    %v4197 = vpop.f32.mrf.mxu0
    %v4198 = vadd.f32 %v3985, %v4197
    %v4199 = vpop.f32.mrf.mxu0
    %4200 = vmatprep.mubr.f32.mxu0 %v3807
    %4201 = vmatmul.mubr.f32.gmra.mxu0 %v3806
    %v4202 = vpop.f32.mrf.mxu0
    %v4203 = vadd.f32 %v3987, %v4202
    %v4204 = vpop.f32.mrf.mxu0
    %4205 = vmatprep.mubr.f32.mxu0 %v3815
    %4206 = vmatmul.mubr.f32.gmra.mxu0 %v3814
    %v4207 = vpop.f32.mrf.mxu0
    %v4208 = vadd.f32 %v3989, %v4207
    %v4209 = vpop.f32.mrf.mxu0
    %4210 = vmatprep.mubr.f32.mxu0 %v3823
    %4211 = vmatmul.mubr.f32.gmra.mxu0 %v3822
    %v4212 = vpop.f32.mrf.mxu0
    %v4213 = vadd.f32 %v3991, %v4212
    %v4214 = vpop.f32.mrf.mxu0
    %4215 = vmatprep.mubr.f32.mxu0 %v3831
    %4216 = vmatmul.mubr.f32.gmra.mxu0 %v3830
    %v4217 = vpop.f32.mrf.mxu0
    %v4218 = vadd.f32 %v3993, %v4217
    %v4219 = vpop.f32.mrf.mxu0
    %4220 = vmatprep.mubr.f32.mxu0 %v3839
    %4221 = vmatmul.mubr.f32.gmra.mxu0 %v3838
    %v4222 = vpop.f32.mrf.mxu0
    %v4223 = vadd.f32 %v3995, %v4222
    %v4224 = vpop.f32.mrf.mxu0
    %4225 = vmatprep.mubr.f32.mxu0 %v3847
    %4226 = vmatmul.mubr.f32.gmra.mxu0 %v3846
    %v4227 = vpop.f32.mrf.mxu0
    %v4228 = vadd.f32 %v3997, %v4227
    %v4229 = vpop.f32.mrf.mxu0
    %4230 = vmatprep.mubr.f32.mxu0 %v3855
    %4231 = vmatmul.mubr.f32.gmra.mxu0 %v3854
    %v4232 = vpop.f32.mrf.mxu0
    %v4233 = vadd.f32 %v3999, %v4232
    %v4234 = vpop.f32.mrf.mxu0
    %4235 = vmatprep.mubr.f32.mxu0 %v3863
    %4236 = vmatmul.mubr.f32.gmra.mxu0 %v3862
    %v4237 = vpop.f32.mrf.mxu0
    %v4238 = vadd.f32 %v4001, %v4237
    %v4239 = vpop.f32.mrf.mxu0
    %4240 = vmatprep.mubr.f32.mxu0 %v3871
    %4241 = vmatmul.mubr.f32.gmra.mxu0 %v3870
    %v4242 = vpop.f32.mrf.mxu0
    %v4243 = vadd.f32 %v4003, %v4242
    %v4244 = vpop.f32.mrf.mxu0
    %4245 = vmatprep.mubr.f32.mxu0 %v3879
    %4246 = vmatmul.mubr.f32.gmra.mxu0 %v3878
    %v4247 = vpop.f32.mrf.mxu0
    %v4248 = vadd.f32 %v4005, %v4247
    %v4249 = vpop.f32.mrf.mxu0
    %4250 = vmatprep.mubr.f32.mxu0 %v3887
    %4251 = vmatmul.mubr.f32.gmra.mxu0 %v3886
    %v4252 = vpop.f32.mrf.mxu0
    %v4253 = vadd.f32 %v4007, %v4252
    %v4254 = vpop.f32.mrf.mxu0
    %4255 = vmatprep.mubr.f32.mxu0 %v3895
    %4256 = vmatmul.mubr.f32.gmra.mxu0 %v3894
    %v4257 = vpop.f32.mrf.mxu0
    %v4258 = vadd.f32 %v4009, %v4257
    %v4259 = vpop.f32.mrf.mxu0
    %4260 = vmatprep.mubr.f32.mxu0 %v3903
    %4261 = vmatmul.mubr.f32.gmra.mxu0 %v3902
    %v4262 = vpop.f32.mrf.mxu0
    %v4263 = vadd.f32 %v4011, %v4262
    %v4264 = vpop.f32.mrf.mxu0
    %4265 = vmatprep.mubr.f32.mxu0 %v3911
    %4266 = vmatmul.mubr.f32.gmra.mxu0 %v3910
    %v4267 = vpop.f32.mrf.mxu0
    %v4268 = vadd.f32 %v4013, %v4267
    %v4269 = vpop.f32.mrf.mxu0
    %4270 = vdwg.mxu0
    %4271 = vmatprep.subr.mxu0 0.0
    %4272 = vmatpush1.msra.mxu0 %v969
    %4273 = vmatprep.subr.mxu0 0.0
    %4274 = vmatpush1.msra.mxu0 %v968
    %4275 = vmatprep.subr.mxu0 0.0
    %4276 = vmatpush1.msra.mxu0 %v967
    %4277 = vmatprep.subr.mxu0 0.0
    %4278 = vmatpush1.msra.mxu0 %v966
    %4279 = vmatprep.subr.mxu0 0.0
    %4280 = vmatpush1.msra.mxu0 %v965
    %4281 = vmatprep.subr.mxu0 0.0
    %4282 = vmatpush1.msra.mxu0 %v964
    %4283 = vmatprep.subr.mxu0 0.0
    %4284 = vmatpush1.msra.mxu0 %v963
    %4285 = vmatprep.subr.mxu0 0.0
    %4286 = vmatpush1.msra.mxu0 %v962
    %4287 = vmatprep.subr.mxu0 0.0
    %4288 = vmatpush1.msra.mxu0 %v961
    %4289 = vmatprep.subr.mxu0 0.0
    %4290 = vmatpush1.msra.mxu0 %v960
    %4291 = vmatprep.subr.mxu0 0.0
    %4292 = vmatpush1.msra.mxu0 %v959
    %4293 = vmatprep.subr.mxu0 0.0
    %4294 = vmatpush1.msra.mxu0 %v958
    %4295 = vmatprep.subr.mxu0 0.0
    %4296 = vmatpush1.msra.mxu0 %v957
    %4297 = vmatprep.subr.mxu0 0.0
    %4298 = vmatpush1.msra.mxu0 %v956
    %4299 = vmatprep.subr.mxu0 0.0
    %4300 = vmatpush1.msra.mxu0 %v955
    %4301 = vmatprep.subr.mxu0 0.0
    %4302 = vmatpush1.msra.mxu0 %v954
    %4303 = vmatprep.subr.mxu0 0.0
    %4304 = vmatpush2.msra.mxu0 %v985
    %4305 = vmatprep.subr.mxu0 0.0
    %4306 = vmatpush2.msra.mxu0 %v984
    %4307 = vmatprep.subr.mxu0 0.0
    %4308 = vmatpush2.msra.mxu0 %v983
    %4309 = vmatprep.subr.mxu0 0.0
    %4310 = vmatpush2.msra.mxu0 %v982
    %4311 = vmatprep.subr.mxu0 0.0
    %4312 = vmatpush2.msra.mxu0 %v981
    %4313 = vmatprep.subr.mxu0 0.0
    %4314 = vmatpush2.msra.mxu0 %v980
    %4315 = vmatprep.subr.mxu0 0.0
    %4316 = vmatpush2.msra.mxu0 %v979
    %4317 = vmatprep.subr.mxu0 0.0
    %4318 = vmatpush2.msra.mxu0 %v978
    %4319 = vmatprep.subr.mxu0 0.0
    %4320 = vmatpush2.msra.mxu0 %v977
    %4321 = vmatprep.subr.mxu0 0.0
    %4322 = vmatpush2.msra.mxu0 %v976
    %4323 = vmatprep.subr.mxu0 0.0
    %4324 = vmatpush2.msra.mxu0 %v975
    %4325 = vmatprep.subr.mxu0 0.0
    %4326 = vmatpush2.msra.mxu0 %v974
    %4327 = vmatprep.subr.mxu0 0.0
    %4328 = vmatpush2.msra.mxu0 %v973
    %4329 = vmatprep.subr.mxu0 0.0
    %4330 = vmatpush2.msra.mxu0 %v972
    %4331 = vmatprep.subr.mxu0 0.0
    %4332 = vmatpush2.msra.mxu0 %v971
    %4333 = vmatprep.subr.mxu0 0.0
    %4334 = vmatpush2.msra.mxu0 %v970
    %4335 = vmatprep.mubr.f32.mxu0 %v3665
    %4336 = vmatmul.mubr.f32.gmra.mxu0 %v3664
    %v4337 = vpop.f32.mrf.mxu0
    %v4338 = vadd.f32 %v4113, %v4337
    %v4339 = vpop.f32.mrf.mxu0
    %4340 = vmatprep.mubr.f32.mxu0 %v3673
    %4341 = vmatmul.mubr.f32.gmra.mxu0 %v3672
    %v4342 = vpop.f32.mrf.mxu0
    %v4343 = vadd.f32 %v4118, %v4342
    %v4344 = vpop.f32.mrf.mxu0
    %4345 = vmatprep.mubr.f32.mxu0 %v3681
    %4346 = vmatmul.mubr.f32.gmra.mxu0 %v3680
    %v4347 = vpop.f32.mrf.mxu0
    %v4348 = vadd.f32 %v4123, %v4347
    %v4349 = vpop.f32.mrf.mxu0
    %4350 = vmatprep.mubr.f32.mxu0 %v3689
    %4351 = vmatmul.mubr.f32.gmra.mxu0 %v3688
    %v4352 = vpop.f32.mrf.mxu0
    %v4353 = vadd.f32 %v4128, %v4352
    %v4354 = vpop.f32.mrf.mxu0
    %4355 = vmatprep.mubr.f32.mxu0 %v3697
    %4356 = vmatmul.mubr.f32.gmra.mxu0 %v3696
    %v4357 = vpop.f32.mrf.mxu0
    %v4358 = vadd.f32 %v4133, %v4357
    %v4359 = vpop.f32.mrf.mxu0
    %4360 = vmatprep.mubr.f32.mxu0 %v3705
    %4361 = vmatmul.mubr.f32.gmra.mxu0 %v3704
    %v4362 = vpop.f32.mrf.mxu0
    %v4363 = vadd.f32 %v4138, %v4362
    %v4364 = vpop.f32.mrf.mxu0
    %4365 = vmatprep.mubr.f32.mxu0 %v3713
    %4366 = vmatmul.mubr.f32.gmra.mxu0 %v3712
    %v4367 = vpop.f32.mrf.mxu0
    %v4368 = vadd.f32 %v4143, %v4367
    %v4369 = vpop.f32.mrf.mxu0
    %4370 = vmatprep.mubr.f32.mxu0 %v3721
    %4371 = vmatmul.mubr.f32.gmra.mxu0 %v3720
    %v4372 = vpop.f32.mrf.mxu0
    %v4373 = vadd.f32 %v4148, %v4372
    %v4374 = vpop.f32.mrf.mxu0
    %4375 = vmatprep.mubr.f32.mxu0 %v3729
    %4376 = vmatmul.mubr.f32.gmra.mxu0 %v3728
    %v4377 = vpop.f32.mrf.mxu0
    %v4378 = vadd.f32 %v4153, %v4377
    %v4379 = vpop.f32.mrf.mxu0
    %4380 = vmatprep.mubr.f32.mxu0 %v3737
    %4381 = vmatmul.mubr.f32.gmra.mxu0 %v3736
    %v4382 = vpop.f32.mrf.mxu0
    %v4383 = vadd.f32 %v4158, %v4382
    %v4384 = vpop.f32.mrf.mxu0
    %4385 = vmatprep.mubr.f32.mxu0 %v3745
    %4386 = vmatmul.mubr.f32.gmra.mxu0 %v3744
    %v4387 = vpop.f32.mrf.mxu0
    %v4388 = vadd.f32 %v4163, %v4387
    %v4389 = vpop.f32.mrf.mxu0
    %4390 = vmatprep.mubr.f32.mxu0 %v3753
    %4391 = vmatmul.mubr.f32.gmra.mxu0 %v3752
    %v4392 = vpop.f32.mrf.mxu0
    %v4393 = vadd.f32 %v4168, %v4392
    %v4394 = vpop.f32.mrf.mxu0
    %4395 = vmatprep.mubr.f32.mxu0 %v3761
    %4396 = vmatmul.mubr.f32.gmra.mxu0 %v3760
    %v4397 = vpop.f32.mrf.mxu0
    %v4398 = vadd.f32 %v4173, %v4397
    %v4399 = vpop.f32.mrf.mxu0
    %4400 = vmatprep.mubr.f32.mxu0 %v3769
    %4401 = vmatmul.mubr.f32.gmra.mxu0 %v3768
    %v4402 = vpop.f32.mrf.mxu0
    %v4403 = vadd.f32 %v4178, %v4402
    %v4404 = vpop.f32.mrf.mxu0
    %4405 = vmatprep.mubr.f32.mxu0 %v3777
    %4406 = vmatmul.mubr.f32.gmra.mxu0 %v3776
    %v4407 = vpop.f32.mrf.mxu0
    %v4408 = vadd.f32 %v4183, %v4407
    %v4409 = vpop.f32.mrf.mxu0
    %4410 = vmatprep.mubr.f32.mxu0 %v3785
    %4411 = vmatmul.mubr.f32.gmra.mxu0 %v3784
    %v4412 = vpop.f32.mrf.mxu0
    %v4413 = vadd.f32 %v4188, %v4412
    %v4414 = vpop.f32.mrf.mxu0
    %4415 = vmatprep.mubr.f32.mxu0 %v3793
    %4416 = vmatmul.mubr.f32.gmra.mxu0 %v3792
    %v4417 = vpop.f32.mrf.mxu0
    %v4418 = vadd.f32 %v4193, %v4417
    %v4419 = vpop.f32.mrf.mxu0
    %4420 = vmatprep.mubr.f32.mxu0 %v3801
    %4421 = vmatmul.mubr.f32.gmra.mxu0 %v3800
    %v4422 = vpop.f32.mrf.mxu0
    %v4423 = vadd.f32 %v4198, %v4422
    %v4424 = vpop.f32.mrf.mxu0
    %4425 = vmatprep.mubr.f32.mxu0 %v3809
    %4426 = vmatmul.mubr.f32.gmra.mxu0 %v3808
    %v4427 = vpop.f32.mrf.mxu0
    %v4428 = vadd.f32 %v4203, %v4427
    %v4429 = vpop.f32.mrf.mxu0
    %4430 = vmatprep.mubr.f32.mxu0 %v3817
    %4431 = vmatmul.mubr.f32.gmra.mxu0 %v3816
    %v4432 = vpop.f32.mrf.mxu0
    %v4433 = vadd.f32 %v4208, %v4432
    %v4434 = vpop.f32.mrf.mxu0
    %4435 = vmatprep.mubr.f32.mxu0 %v3825
    %4436 = vmatmul.mubr.f32.gmra.mxu0 %v3824
    %v4437 = vpop.f32.mrf.mxu0
    %v4438 = vadd.f32 %v4213, %v4437
    %v4439 = vpop.f32.mrf.mxu0
    %4440 = vmatprep.mubr.f32.mxu0 %v3833
    %4441 = vmatmul.mubr.f32.gmra.mxu0 %v3832
    %v4442 = vpop.f32.mrf.mxu0
    %v4443 = vadd.f32 %v4218, %v4442
    %v4444 = vpop.f32.mrf.mxu0
    %4445 = vmatprep.mubr.f32.mxu0 %v3841
    %4446 = vmatmul.mubr.f32.gmra.mxu0 %v3840
    %v4447 = vpop.f32.mrf.mxu0
    %v4448 = vadd.f32 %v4223, %v4447
    %v4449 = vpop.f32.mrf.mxu0
    %4450 = vmatprep.mubr.f32.mxu0 %v3849
    %4451 = vmatmul.mubr.f32.gmra.mxu0 %v3848
    %v4452 = vpop.f32.mrf.mxu0
    %v4453 = vadd.f32 %v4228, %v4452
    %v4454 = vpop.f32.mrf.mxu0
    %4455 = vmatprep.mubr.f32.mxu0 %v3857
    %4456 = vmatmul.mubr.f32.gmra.mxu0 %v3856
    %v4457 = vpop.f32.mrf.mxu0
    %v4458 = vadd.f32 %v4233, %v4457
    %v4459 = vpop.f32.mrf.mxu0
    %4460 = vmatprep.mubr.f32.mxu0 %v3865
    %4461 = vmatmul.mubr.f32.gmra.mxu0 %v3864
    %v4462 = vpop.f32.mrf.mxu0
    %v4463 = vadd.f32 %v4238, %v4462
    %v4464 = vpop.f32.mrf.mxu0
    %4465 = vmatprep.mubr.f32.mxu0 %v3873
    %4466 = vmatmul.mubr.f32.gmra.mxu0 %v3872
    %v4467 = vpop.f32.mrf.mxu0
    %v4468 = vadd.f32 %v4243, %v4467
    %v4469 = vpop.f32.mrf.mxu0
    %4470 = vmatprep.mubr.f32.mxu0 %v3881
    %4471 = vmatmul.mubr.f32.gmra.mxu0 %v3880
    %v4472 = vpop.f32.mrf.mxu0
    %v4473 = vadd.f32 %v4248, %v4472
    %v4474 = vpop.f32.mrf.mxu0
    %4475 = vmatprep.mubr.f32.mxu0 %v3889
    %4476 = vmatmul.mubr.f32.gmra.mxu0 %v3888
    %v4477 = vpop.f32.mrf.mxu0
    %v4478 = vadd.f32 %v4253, %v4477
    %v4479 = vpop.f32.mrf.mxu0
    %4480 = vmatprep.mubr.f32.mxu0 %v3897
    %4481 = vmatmul.mubr.f32.gmra.mxu0 %v3896
    %v4482 = vpop.f32.mrf.mxu0
    %v4483 = vadd.f32 %v4258, %v4482
    %v4484 = vpop.f32.mrf.mxu0
    %4485 = vmatprep.mubr.f32.mxu0 %v3905
    %4486 = vmatmul.mubr.f32.gmra.mxu0 %v3904
    %v4487 = vpop.f32.mrf.mxu0
    %v4488 = vadd.f32 %v4263, %v4487
    %v4489 = vpop.f32.mrf.mxu0
    %4490 = vmatprep.mubr.f32.mxu0 %v3913
    %4491 = vmatmul.mubr.f32.gmra.mxu0 %v3912
    %v4492 = vpop.f32.mrf.mxu0
    %v4493 = vadd.f32 %v4268, %v4492
    %v4494 = vpop.f32.mrf.mxu0
    %4495 = vdwg.mxu0
    %4496 = vmatprep.subr.mxu0 0.0
    %4497 = vmatpush1.msra.mxu0 %v1001
    %4498 = vmatprep.subr.mxu0 0.0
    %4499 = vmatpush1.msra.mxu0 %v1000
    %4500 = vmatprep.subr.mxu0 0.0
    %4501 = vmatpush1.msra.mxu0 %v999
    %4502 = vmatprep.subr.mxu0 0.0
    %4503 = vmatpush1.msra.mxu0 %v998
    %4504 = vmatprep.subr.mxu0 0.0
    %4505 = vmatpush1.msra.mxu0 %v997
    %4506 = vmatprep.subr.mxu0 0.0
    %4507 = vmatpush1.msra.mxu0 %v996
    %4508 = vmatprep.subr.mxu0 0.0
    %4509 = vmatpush1.msra.mxu0 %v995
    %4510 = vmatprep.subr.mxu0 0.0
    %4511 = vmatpush1.msra.mxu0 %v994
    %4512 = vmatprep.subr.mxu0 0.0
    %4513 = vmatpush1.msra.mxu0 %v993
    %4514 = vmatprep.subr.mxu0 0.0
    %4515 = vmatpush1.msra.mxu0 %v992
    %4516 = vmatprep.subr.mxu0 0.0
    %4517 = vmatpush1.msra.mxu0 %v991
    %4518 = vmatprep.subr.mxu0 0.0
    %4519 = vmatpush1.msra.mxu0 %v990
    %4520 = vmatprep.subr.mxu0 0.0
    %4521 = vmatpush1.msra.mxu0 %v989
    %4522 = vmatprep.subr.mxu0 0.0
    %4523 = vmatpush1.msra.mxu0 %v988
    %4524 = vmatprep.subr.mxu0 0.0
    %4525 = vmatpush1.msra.mxu0 %v987
    %4526 = vmatprep.subr.mxu0 0.0
    %4527 = vmatpush1.msra.mxu0 %v986
    %4528 = vmatprep.subr.mxu0 0.0
    %4529 = vmatpush2.msra.mxu0 %v1017
    %4530 = vmatprep.subr.mxu0 0.0
    %4531 = vmatpush2.msra.mxu0 %v1016
    %4532 = vmatprep.subr.mxu0 0.0
    %4533 = vmatpush2.msra.mxu0 %v1015
    %4534 = vmatprep.subr.mxu0 0.0
    %4535 = vmatpush2.msra.mxu0 %v1014
    %4536 = vmatprep.subr.mxu0 0.0
    %4537 = vmatpush2.msra.mxu0 %v1013
    %4538 = vmatprep.subr.mxu0 0.0
    %4539 = vmatpush2.msra.mxu0 %v1012
    %4540 = vmatprep.subr.mxu0 0.0
    %4541 = vmatpush2.msra.mxu0 %v1011
    %4542 = vmatprep.subr.mxu0 0.0
    %4543 = vmatpush2.msra.mxu0 %v1010
    %4544 = vmatprep.subr.mxu0 0.0
    %4545 = vmatpush2.msra.mxu0 %v1009
    %4546 = vmatprep.subr.mxu0 0.0
    %4547 = vmatpush2.msra.mxu0 %v1008
    %4548 = vmatprep.subr.mxu0 0.0
    %4549 = vmatpush2.msra.mxu0 %v1007
    %4550 = vmatprep.subr.mxu0 0.0
    %4551 = vmatpush2.msra.mxu0 %v1006
    %4552 = vmatprep.subr.mxu0 0.0
    %4553 = vmatpush2.msra.mxu0 %v1005
    %4554 = vmatprep.subr.mxu0 0.0
    %4555 = vmatpush2.msra.mxu0 %v1004
    %4556 = vmatprep.subr.mxu0 0.0
    %4557 = vmatpush2.msra.mxu0 %v1003
    %4558 = vmatprep.subr.mxu0 0.0
    %4559 = vmatpush2.msra.mxu0 %v1002
    %4560 = vmatprep.mubr.f32.mxu0 %v3667
    %4561 = vmatmul.mubr.f32.gmra.mxu0 %v3666
    %v4562 = vpop.f32.mrf.mxu0
    %v4563 = vadd.f32 %v4338, %v4562
    %v4564 = vpop.f32.mrf.mxu0
    %4565 = vmatprep.mubr.f32.mxu0 %v3675
    %4566 = vmatmul.mubr.f32.gmra.mxu0 %v3674
    %v4567 = vpop.f32.mrf.mxu0
    %v4568 = vadd.f32 %v4343, %v4567
    %v4569 = vpop.f32.mrf.mxu0
    %4570 = vmatprep.mubr.f32.mxu0 %v3683
    %4571 = vmatmul.mubr.f32.gmra.mxu0 %v3682
    %v4572 = vpop.f32.mrf.mxu0
    %v4573 = vadd.f32 %v4348, %v4572
    %v4574 = vpop.f32.mrf.mxu0
    %4575 = vmatprep.mubr.f32.mxu0 %v3691
    %4576 = vmatmul.mubr.f32.gmra.mxu0 %v3690
    %v4577 = vpop.f32.mrf.mxu0
    %v4578 = vadd.f32 %v4353, %v4577
    %v4579 = vpop.f32.mrf.mxu0
    %4580 = vmatprep.mubr.f32.mxu0 %v3699
    %4581 = vmatmul.mubr.f32.gmra.mxu0 %v3698
    %v4582 = vpop.f32.mrf.mxu0
    %v4583 = vadd.f32 %v4358, %v4582
    %v4584 = vpop.f32.mrf.mxu0
    %4585 = vmatprep.mubr.f32.mxu0 %v3707
    %4586 = vmatmul.mubr.f32.gmra.mxu0 %v3706
    %v4587 = vpop.f32.mrf.mxu0
    %v4588 = vadd.f32 %v4363, %v4587
    %v4589 = vpop.f32.mrf.mxu0
    %4590 = vmatprep.mubr.f32.mxu0 %v3715
    %4591 = vmatmul.mubr.f32.gmra.mxu0 %v3714
    %v4592 = vpop.f32.mrf.mxu0
    %v4593 = vadd.f32 %v4368, %v4592
    %v4594 = vpop.f32.mrf.mxu0
    %4595 = vmatprep.mubr.f32.mxu0 %v3723
    %4596 = vmatmul.mubr.f32.gmra.mxu0 %v3722
    %v4597 = vpop.f32.mrf.mxu0
    %v4598 = vadd.f32 %v4373, %v4597
    %v4599 = vpop.f32.mrf.mxu0
    %4600 = vmatprep.mubr.f32.mxu0 %v3731
    %4601 = vmatmul.mubr.f32.gmra.mxu0 %v3730
    %v4602 = vpop.f32.mrf.mxu0
    %v4603 = vadd.f32 %v4378, %v4602
    %v4604 = vpop.f32.mrf.mxu0
    %4605 = vmatprep.mubr.f32.mxu0 %v3739
    %4606 = vmatmul.mubr.f32.gmra.mxu0 %v3738
    %v4607 = vpop.f32.mrf.mxu0
    %v4608 = vadd.f32 %v4383, %v4607
    %v4609 = vpop.f32.mrf.mxu0
    %4610 = vmatprep.mubr.f32.mxu0 %v3747
    %4611 = vmatmul.mubr.f32.gmra.mxu0 %v3746
    %v4612 = vpop.f32.mrf.mxu0
    %v4613 = vadd.f32 %v4388, %v4612
    %v4614 = vpop.f32.mrf.mxu0
    %4615 = vmatprep.mubr.f32.mxu0 %v3755
    %4616 = vmatmul.mubr.f32.gmra.mxu0 %v3754
    %v4617 = vpop.f32.mrf.mxu0
    %v4618 = vadd.f32 %v4393, %v4617
    %v4619 = vpop.f32.mrf.mxu0
    %4620 = vmatprep.mubr.f32.mxu0 %v3763
    %4621 = vmatmul.mubr.f32.gmra.mxu0 %v3762
    %v4622 = vpop.f32.mrf.mxu0
    %v4623 = vadd.f32 %v4398, %v4622
    %v4624 = vpop.f32.mrf.mxu0
    %4625 = vmatprep.mubr.f32.mxu0 %v3771
    %4626 = vmatmul.mubr.f32.gmra.mxu0 %v3770
    %v4627 = vpop.f32.mrf.mxu0
    %v4628 = vadd.f32 %v4403, %v4627
    %v4629 = vpop.f32.mrf.mxu0
    %4630 = vmatprep.mubr.f32.mxu0 %v3779
    %4631 = vmatmul.mubr.f32.gmra.mxu0 %v3778
    %v4632 = vpop.f32.mrf.mxu0
    %v4633 = vadd.f32 %v4408, %v4632
    %v4634 = vpop.f32.mrf.mxu0
    %4635 = vmatprep.mubr.f32.mxu0 %v3787
    %4636 = vmatmul.mubr.f32.gmra.mxu0 %v3786
    %v4637 = vpop.f32.mrf.mxu0
    %v4638 = vadd.f32 %v4413, %v4637
    %v4639 = vpop.f32.mrf.mxu0
    %4640 = vmatprep.mubr.f32.mxu0 %v3795
    %4641 = vmatmul.mubr.f32.gmra.mxu0 %v3794
    %v4642 = vpop.f32.mrf.mxu0
    %v4643 = vadd.f32 %v4418, %v4642
    %v4644 = vpop.f32.mrf.mxu0
    %4645 = vmatprep.mubr.f32.mxu0 %v3803
    %4646 = vmatmul.mubr.f32.gmra.mxu0 %v3802
    %v4647 = vpop.f32.mrf.mxu0
    %v4648 = vadd.f32 %v4423, %v4647
    %v4649 = vpop.f32.mrf.mxu0
    %4650 = vmatprep.mubr.f32.mxu0 %v3811
    %4651 = vmatmul.mubr.f32.gmra.mxu0 %v3810
    %v4652 = vpop.f32.mrf.mxu0
    %v4653 = vadd.f32 %v4428, %v4652
    %v4654 = vpop.f32.mrf.mxu0
    %4655 = vmatprep.mubr.f32.mxu0 %v3819
    %4656 = vmatmul.mubr.f32.gmra.mxu0 %v3818
    %v4657 = vpop.f32.mrf.mxu0
    %v4658 = vadd.f32 %v4433, %v4657
    %v4659 = vpop.f32.mrf.mxu0
    %4660 = vmatprep.mubr.f32.mxu0 %v3827
    %4661 = vmatmul.mubr.f32.gmra.mxu0 %v3826
    %v4662 = vpop.f32.mrf.mxu0
    %v4663 = vadd.f32 %v4438, %v4662
    %v4664 = vpop.f32.mrf.mxu0
    %4665 = vmatprep.mubr.f32.mxu0 %v3835
    %4666 = vmatmul.mubr.f32.gmra.mxu0 %v3834
    %v4667 = vpop.f32.mrf.mxu0
    %v4668 = vadd.f32 %v4443, %v4667
    %v4669 = vpop.f32.mrf.mxu0
    %4670 = vmatprep.mubr.f32.mxu0 %v3843
    %4671 = vmatmul.mubr.f32.gmra.mxu0 %v3842
    %v4672 = vpop.f32.mrf.mxu0
    %v4673 = vadd.f32 %v4448, %v4672
    %v4674 = vpop.f32.mrf.mxu0
    %4675 = vmatprep.mubr.f32.mxu0 %v3851
    %4676 = vmatmul.mubr.f32.gmra.mxu0 %v3850
    %v4677 = vpop.f32.mrf.mxu0
    %v4678 = vadd.f32 %v4453, %v4677
    %v4679 = vpop.f32.mrf.mxu0
    %4680 = vmatprep.mubr.f32.mxu0 %v3859
    %4681 = vmatmul.mubr.f32.gmra.mxu0 %v3858
    %v4682 = vpop.f32.mrf.mxu0
    %v4683 = vadd.f32 %v4458, %v4682
    %v4684 = vpop.f32.mrf.mxu0
    %4685 = vmatprep.mubr.f32.mxu0 %v3867
    %4686 = vmatmul.mubr.f32.gmra.mxu0 %v3866
    %v4687 = vpop.f32.mrf.mxu0
    %v4688 = vadd.f32 %v4463, %v4687
    %v4689 = vpop.f32.mrf.mxu0
    %4690 = vmatprep.mubr.f32.mxu0 %v3875
    %4691 = vmatmul.mubr.f32.gmra.mxu0 %v3874
    %v4692 = vpop.f32.mrf.mxu0
    %v4693 = vadd.f32 %v4468, %v4692
    %v4694 = vpop.f32.mrf.mxu0
    %4695 = vmatprep.mubr.f32.mxu0 %v3883
    %4696 = vmatmul.mubr.f32.gmra.mxu0 %v3882
    %v4697 = vpop.f32.mrf.mxu0
    %v4698 = vadd.f32 %v4473, %v4697
    %v4699 = vpop.f32.mrf.mxu0
    %4700 = vmatprep.mubr.f32.mxu0 %v3891
    %4701 = vmatmul.mubr.f32.gmra.mxu0 %v3890
    %v4702 = vpop.f32.mrf.mxu0
    %v4703 = vadd.f32 %v4478, %v4702
    %v4704 = vpop.f32.mrf.mxu0
    %4705 = vmatprep.mubr.f32.mxu0 %v3899
    %4706 = vmatmul.mubr.f32.gmra.mxu0 %v3898
    %v4707 = vpop.f32.mrf.mxu0
    %v4708 = vadd.f32 %v4483, %v4707
    %v4709 = vpop.f32.mrf.mxu0
    %4710 = vmatprep.mubr.f32.mxu0 %v3907
    %4711 = vmatmul.mubr.f32.gmra.mxu0 %v3906
    %v4712 = vpop.f32.mrf.mxu0
    %v4713 = vadd.f32 %v4488, %v4712
    %v4714 = vpop.f32.mrf.mxu0
    %4715 = vmatprep.mubr.f32.mxu0 %v3915
    %4716 = vmatmul.mubr.f32.gmra.mxu0 %v3914
    %v4717 = vpop.f32.mrf.mxu0
    %v4718 = vadd.f32 %v4493, %v4717
    %v4719 = vpop.f32.mrf.mxu0
    %4720 = vdwg.mxu0
    %4721 = vmatprep.subr.mxu0 0.0
    %4722 = vmatpush1.msra.mxu0 %v1033
    %4723 = vmatprep.subr.mxu0 0.0
    %4724 = vmatpush1.msra.mxu0 %v1032
    %4725 = vmatprep.subr.mxu0 0.0
    %4726 = vmatpush1.msra.mxu0 %v1031
    %4727 = vmatprep.subr.mxu0 0.0
    %4728 = vmatpush1.msra.mxu0 %v1030
    %4729 = vmatprep.subr.mxu0 0.0
    %4730 = vmatpush1.msra.mxu0 %v1029
    %4731 = vmatprep.subr.mxu0 0.0
    %4732 = vmatpush1.msra.mxu0 %v1028
    %4733 = vmatprep.subr.mxu0 0.0
    %4734 = vmatpush1.msra.mxu0 %v1027
    %4735 = vmatprep.subr.mxu0 0.0
    %4736 = vmatpush1.msra.mxu0 %v1026
    %4737 = vmatprep.subr.mxu0 0.0
    %4738 = vmatpush1.msra.mxu0 %v1025
    %4739 = vmatprep.subr.mxu0 0.0
    %4740 = vmatpush1.msra.mxu0 %v1024
    %4741 = vmatprep.subr.mxu0 0.0
    %4742 = vmatpush1.msra.mxu0 %v1023
    %4743 = vmatprep.subr.mxu0 0.0
    %4744 = vmatpush1.msra.mxu0 %v1022
    %4745 = vmatprep.subr.mxu0 0.0
    %4746 = vmatpush1.msra.mxu0 %v1021
    %4747 = vmatprep.subr.mxu0 0.0
    %4748 = vmatpush1.msra.mxu0 %v1020
    %4749 = vmatprep.subr.mxu0 0.0
    %4750 = vmatpush1.msra.mxu0 %v1019
    %4751 = vmatprep.subr.mxu0 0.0
    %4752 = vmatpush1.msra.mxu0 %v1018
    %4753 = vmatprep.subr.mxu0 0.0
    %4754 = vmatpush2.msra.mxu0 %v1049
    %4755 = vmatprep.subr.mxu0 0.0
    %4756 = vmatpush2.msra.mxu0 %v1048
    %4757 = vmatprep.subr.mxu0 0.0
    %4758 = vmatpush2.msra.mxu0 %v1047
    %4759 = vmatprep.subr.mxu0 0.0
    %4760 = vmatpush2.msra.mxu0 %v1046
    %4761 = vmatprep.subr.mxu0 0.0
    %4762 = vmatpush2.msra.mxu0 %v1045
    %4763 = vmatprep.subr.mxu0 0.0
    %4764 = vmatpush2.msra.mxu0 %v1044
    %4765 = vmatprep.subr.mxu0 0.0
    %4766 = vmatpush2.msra.mxu0 %v1043
    %4767 = vmatprep.subr.mxu0 0.0
    %4768 = vmatpush2.msra.mxu0 %v1042
    %4769 = vmatprep.subr.mxu0 0.0
    %4770 = vmatpush2.msra.mxu0 %v1041
    %4771 = vmatprep.subr.mxu0 0.0
    %4772 = vmatpush2.msra.mxu0 %v1040
    %4773 = vmatprep.subr.mxu0 0.0
    %4774 = vmatpush2.msra.mxu0 %v1039
    %4775 = vmatprep.subr.mxu0 0.0
    %4776 = vmatpush2.msra.mxu0 %v1038
    %4777 = vmatprep.subr.mxu0 0.0
    %4778 = vmatpush2.msra.mxu0 %v1037
    %4779 = vmatprep.subr.mxu0 0.0
    %4780 = vmatpush2.msra.mxu0 %v1036
    %4781 = vmatprep.subr.mxu0 0.0
    %4782 = vmatpush2.msra.mxu0 %v1035
    %4783 = vmatprep.subr.mxu0 0.0
    %4784 = vmatpush2.msra.mxu0 %v1034
    %4785 = vmatprep.mubr.f32.mxu0 %v3669
    %4786 = vmatmul.mubr.f32.gmra.mxu0 %v3668
    %v4787 = vpop.f32.mrf.mxu0
    %v4788 = vadd.f32 %v4563, %v4787
    %v4789 = vpop.f32.mrf.mxu0
    %4790 = vmatprep.mubr.f32.mxu0 %v3677
    %4791 = vmatmul.mubr.f32.gmra.mxu0 %v3676
    %v4792 = vpop.f32.mrf.mxu0
    %v4793 = vadd.f32 %v4568, %v4792
    %v4794 = vpop.f32.mrf.mxu0
    %4795 = vmatprep.mubr.f32.mxu0 %v3685
    %4796 = vmatmul.mubr.f32.gmra.mxu0 %v3684
    %v4797 = vpop.f32.mrf.mxu0
    %v4798 = vadd.f32 %v4573, %v4797
    %v4799 = vpop.f32.mrf.mxu0
    %4800 = vmatprep.mubr.f32.mxu0 %v3693
    %4801 = vmatmul.mubr.f32.gmra.mxu0 %v3692
    %v4802 = vpop.f32.mrf.mxu0
    %v4803 = vadd.f32 %v4578, %v4802
    %v4804 = vpop.f32.mrf.mxu0
    %4805 = vmatprep.mubr.f32.mxu0 %v3701
    %4806 = vmatmul.mubr.f32.gmra.mxu0 %v3700
    %v4807 = vpop.f32.mrf.mxu0
    %v4808 = vadd.f32 %v4583, %v4807
    %v4809 = vpop.f32.mrf.mxu0
    %4810 = vmatprep.mubr.f32.mxu0 %v3709
    %4811 = vmatmul.mubr.f32.gmra.mxu0 %v3708
    %v4812 = vpop.f32.mrf.mxu0
    %v4813 = vadd.f32 %v4588, %v4812
    %v4814 = vpop.f32.mrf.mxu0
    %4815 = vmatprep.mubr.f32.mxu0 %v3717
    %4816 = vmatmul.mubr.f32.gmra.mxu0 %v3716
    %v4817 = vpop.f32.mrf.mxu0
    %v4818 = vadd.f32 %v4593, %v4817
    %v4819 = vpop.f32.mrf.mxu0
    %4820 = vmatprep.mubr.f32.mxu0 %v3725
    %4821 = vmatmul.mubr.f32.gmra.mxu0 %v3724
    %v4822 = vpop.f32.mrf.mxu0
    %v4823 = vadd.f32 %v4598, %v4822
    %v4824 = vpop.f32.mrf.mxu0
    %4825 = vmatprep.mubr.f32.mxu0 %v3733
    %4826 = vmatmul.mubr.f32.gmra.mxu0 %v3732
    %v4827 = vpop.f32.mrf.mxu0
    %v4828 = vadd.f32 %v4603, %v4827
    %v4829 = vpop.f32.mrf.mxu0
    %4830 = vmatprep.mubr.f32.mxu0 %v3741
    %4831 = vmatmul.mubr.f32.gmra.mxu0 %v3740
    %v4832 = vpop.f32.mrf.mxu0
    %v4833 = vadd.f32 %v4608, %v4832
    %v4834 = vpop.f32.mrf.mxu0
    %4835 = vmatprep.mubr.f32.mxu0 %v3749
    %4836 = vmatmul.mubr.f32.gmra.mxu0 %v3748
    %v4837 = vpop.f32.mrf.mxu0
    %v4838 = vadd.f32 %v4613, %v4837
    %v4839 = vpop.f32.mrf.mxu0
    %4840 = vmatprep.mubr.f32.mxu0 %v3757
    %4841 = vmatmul.mubr.f32.gmra.mxu0 %v3756
    %v4842 = vpop.f32.mrf.mxu0
    %v4843 = vadd.f32 %v4618, %v4842
    %v4844 = vpop.f32.mrf.mxu0
    %4845 = vmatprep.mubr.f32.mxu0 %v3765
    %4846 = vmatmul.mubr.f32.gmra.mxu0 %v3764
    %v4847 = vpop.f32.mrf.mxu0
    %v4848 = vadd.f32 %v4623, %v4847
    %v4849 = vpop.f32.mrf.mxu0
    %4850 = vmatprep.mubr.f32.mxu0 %v3773
    %4851 = vmatmul.mubr.f32.gmra.mxu0 %v3772
    %v4852 = vpop.f32.mrf.mxu0
    %v4853 = vadd.f32 %v4628, %v4852
    %v4854 = vpop.f32.mrf.mxu0
    %4855 = vmatprep.mubr.f32.mxu0 %v3781
    %4856 = vmatmul.mubr.f32.gmra.mxu0 %v3780
    %v4857 = vpop.f32.mrf.mxu0
    %v4858 = vadd.f32 %v4633, %v4857
    %v4859 = vpop.f32.mrf.mxu0
    %4860 = vmatprep.mubr.f32.mxu0 %v3789
    %4861 = vmatmul.mubr.f32.gmra.mxu0 %v3788
    %v4862 = vpop.f32.mrf.mxu0
    %v4863 = vadd.f32 %v4638, %v4862
    %v4864 = vpop.f32.mrf.mxu0
    %4865 = vmatprep.mubr.f32.mxu0 %v3797
    %4866 = vmatmul.mubr.f32.gmra.mxu0 %v3796
    %v4867 = vpop.f32.mrf.mxu0
    %v4868 = vadd.f32 %v4643, %v4867
    %v4869 = vpop.f32.mrf.mxu0
    %4870 = vmatprep.mubr.f32.mxu0 %v3805
    %4871 = vmatmul.mubr.f32.gmra.mxu0 %v3804
    %v4872 = vpop.f32.mrf.mxu0
    %v4873 = vadd.f32 %v4648, %v4872
    %v4874 = vpop.f32.mrf.mxu0
    %4875 = vmatprep.mubr.f32.mxu0 %v3813
    %4876 = vmatmul.mubr.f32.gmra.mxu0 %v3812
    %v4877 = vpop.f32.mrf.mxu0
    %v4878 = vadd.f32 %v4653, %v4877
    %v4879 = vpop.f32.mrf.mxu0
    %4880 = vmatprep.mubr.f32.mxu0 %v3821
    %4881 = vmatmul.mubr.f32.gmra.mxu0 %v3820
    %v4882 = vpop.f32.mrf.mxu0
    %v4883 = vadd.f32 %v4658, %v4882
    %v4884 = vpop.f32.mrf.mxu0
    %4885 = vmatprep.mubr.f32.mxu0 %v3829
    %4886 = vmatmul.mubr.f32.gmra.mxu0 %v3828
    %v4887 = vpop.f32.mrf.mxu0
    %v4888 = vadd.f32 %v4663, %v4887
    %v4889 = vpop.f32.mrf.mxu0
    %4890 = vmatprep.mubr.f32.mxu0 %v3837
    %4891 = vmatmul.mubr.f32.gmra.mxu0 %v3836
    %v4892 = vpop.f32.mrf.mxu0
    %v4893 = vadd.f32 %v4668, %v4892
    %v4894 = vpop.f32.mrf.mxu0
    %4895 = vmatprep.mubr.f32.mxu0 %v3845
    %4896 = vmatmul.mubr.f32.gmra.mxu0 %v3844
    %v4897 = vpop.f32.mrf.mxu0
    %v4898 = vadd.f32 %v4673, %v4897
    %v4899 = vpop.f32.mrf.mxu0
    %4900 = vmatprep.mubr.f32.mxu0 %v3853
    %4901 = vmatmul.mubr.f32.gmra.mxu0 %v3852
    %v4902 = vpop.f32.mrf.mxu0
    %v4903 = vadd.f32 %v4678, %v4902
    %v4904 = vpop.f32.mrf.mxu0
    %4905 = vmatprep.mubr.f32.mxu0 %v3861
    %4906 = vmatmul.mubr.f32.gmra.mxu0 %v3860
    %v4907 = vpop.f32.mrf.mxu0
    %v4908 = vadd.f32 %v4683, %v4907
    %v4909 = vpop.f32.mrf.mxu0
    %4910 = vmatprep.mubr.f32.mxu0 %v3869
    %4911 = vmatmul.mubr.f32.gmra.mxu0 %v3868
    %v4912 = vpop.f32.mrf.mxu0
    %v4913 = vadd.f32 %v4688, %v4912
    %v4914 = vpop.f32.mrf.mxu0
    %4915 = vmatprep.mubr.f32.mxu0 %v3877
    %4916 = vmatmul.mubr.f32.gmra.mxu0 %v3876
    %v4917 = vpop.f32.mrf.mxu0
    %v4918 = vadd.f32 %v4693, %v4917
    %v4919 = vpop.f32.mrf.mxu0
    %4920 = vmatprep.mubr.f32.mxu0 %v3885
    %4921 = vmatmul.mubr.f32.gmra.mxu0 %v3884
    %v4922 = vpop.f32.mrf.mxu0
    %v4923 = vadd.f32 %v4698, %v4922
    %v4924 = vpop.f32.mrf.mxu0
    %4925 = vmatprep.mubr.f32.mxu0 %v3893
    %4926 = vmatmul.mubr.f32.gmra.mxu0 %v3892
    %v4927 = vpop.f32.mrf.mxu0
    %v4928 = vadd.f32 %v4703, %v4927
    %v4929 = vpop.f32.mrf.mxu0
    %4930 = vmatprep.mubr.f32.mxu0 %v3901
    %4931 = vmatmul.mubr.f32.gmra.mxu0 %v3900
    %v4932 = vpop.f32.mrf.mxu0
    %v4933 = vadd.f32 %v4708, %v4932
    %v4934 = vpop.f32.mrf.mxu0
    %4935 = vmatprep.mubr.f32.mxu0 %v3909
    %4936 = vmatmul.mubr.f32.gmra.mxu0 %v3908
    %v4937 = vpop.f32.mrf.mxu0
    %v4938 = vadd.f32 %v4713, %v4937
    %v4939 = vpop.f32.mrf.mxu0
    %4940 = vmatprep.mubr.f32.mxu0 %v3917
    %4941 = vmatmul.mubr.f32.gmra.mxu0 %v3916
    %v4942 = vpop.f32.mrf.mxu0
    %v4943 = vadd.f32 %v4718, %v4942
    %v4944 = vpop.f32.mrf.mxu0
    %4945 = vdwg.mxu0
    %vm4946 = vcmp.gt.f32.partialorder %v4788, 0.0
    %vm4947 = vcmp.gt.f32.partialorder %v4793, 0.0
    %vm4948 = vcmp.gt.f32.partialorder %v4798, 0.0
    %vm4949 = vcmp.gt.f32.partialorder %v4803, 0.0
    %vm4950 = vcmp.gt.f32.partialorder %v4808, 0.0
    %vm4951 = vcmp.gt.f32.partialorder %v4813, 0.0
    %vm4952 = vcmp.gt.f32.partialorder %v4818, 0.0
    %vm4953 = vcmp.gt.f32.partialorder %v4823, 0.0
    %vm4954 = vcmp.gt.f32.partialorder %v4828, 0.0
    %vm4955 = vcmp.gt.f32.partialorder %v4833, 0.0
    %vm4956 = vcmp.gt.f32.partialorder %v4838, 0.0
    %vm4957 = vcmp.gt.f32.partialorder %v4843, 0.0
    %vm4958 = vcmp.gt.f32.partialorder %v4848, 0.0
    %vm4959 = vcmp.gt.f32.partialorder %v4853, 0.0
    %vm4960 = vcmp.gt.f32.partialorder %v4858, 0.0
    %vm4961 = vcmp.gt.f32.partialorder %v4863, 0.0
    %vm4962 = vcmp.gt.f32.partialorder %v4868, 0.0
    %vm4963 = vcmp.gt.f32.partialorder %v4873, 0.0
    %vm4964 = vcmp.gt.f32.partialorder %v4878, 0.0
    %vm4965 = vcmp.gt.f32.partialorder %v4883, 0.0
    %vm4966 = vcmp.gt.f32.partialorder %v4888, 0.0
    %vm4967 = vcmp.gt.f32.partialorder %v4893, 0.0
    %vm4968 = vcmp.gt.f32.partialorder %v4898, 0.0
    %vm4969 = vcmp.gt.f32.partialorder %v4903, 0.0
    %vm4970 = vcmp.gt.f32.partialorder %v4908, 0.0
    %vm4971 = vcmp.gt.f32.partialorder %v4913, 0.0
    %vm4972 = vcmp.gt.f32.partialorder %v4918, 0.0
    %vm4973 = vcmp.gt.f32.partialorder %v4923, 0.0
    %vm4974 = vcmp.gt.f32.partialorder %v4928, 0.0
    %vm4975 = vcmp.gt.f32.partialorder %v4933, 0.0
    %vm4976 = vcmp.gt.f32.partialorder %v4938, 0.0
    %vm4977 = vcmp.gt.f32.partialorder %v4943, 0.0
    %v4978 = vmin.f32 %v4788, 0.0
    %v4979 = vmin.f32 %v4793, 0.0
    %v4980 = vmin.f32 %v4798, 0.0
    %v4981 = vmin.f32 %v4803, 0.0
    %v4982 = vmin.f32 %v4808, 0.0
    %v4983 = vmin.f32 %v4813, 0.0
    %v4984 = vmin.f32 %v4818, 0.0
    %v4985 = vmin.f32 %v4823, 0.0
    %v4986 = vmin.f32 %v4828, 0.0
    %v4987 = vmin.f32 %v4833, 0.0
    %v4988 = vmin.f32 %v4838, 0.0
    %v4989 = vmin.f32 %v4843, 0.0
    %v4990 = vmin.f32 %v4848, 0.0
    %v4991 = vmin.f32 %v4853, 0.0
    %v4992 = vmin.f32 %v4858, 0.0
    %v4993 = vmin.f32 %v4863, 0.0
    %v4994 = vmin.f32 %v4868, 0.0
    %v4995 = vmin.f32 %v4873, 0.0
    %v4996 = vmin.f32 %v4878, 0.0
    %v4997 = vmin.f32 %v4883, 0.0
    %v4998 = vmin.f32 %v4888, 0.0
    %v4999 = vmin.f32 %v4893, 0.0
    %v5000 = vmin.f32 %v4898, 0.0
    %v5001 = vmin.f32 %v4903, 0.0
    %v5002 = vmin.f32 %v4908, 0.0
    %v5003 = vmin.f32 %v4913, 0.0
    %v5004 = vmin.f32 %v4918, 0.0
    %v5005 = vmin.f32 %v4923, 0.0
    %v5006 = vmin.f32 %v4928, 0.0
    %v5007 = vmin.f32 %v4933, 0.0
    %v5008 = vmin.f32 %v4938, 0.0
    %v5009 = vmin.f32 %v4943, 0.0
    %v5010 = vmul.f32 %v4978, 1.442695
    %v5011 = vpow.pop %v5010
    %v5012 = vmul.f32 %v4979, 1.442695
    %v5013 = vpow.pop %v5012
    %v5014 = vmul.f32 %v4980, 1.442695
    %v5015 = vpow.pop %v5014
    %v5016 = vmul.f32 %v4981, 1.442695
    %v5017 = vpow.pop %v5016
    %v5018 = vmul.f32 %v4982, 1.442695
    %v5019 = vpow.pop %v5018
    %v5020 = vmul.f32 %v4983, 1.442695
    %v5021 = vpow.pop %v5020
    %v5022 = vmul.f32 %v4984, 1.442695
    %v5023 = vpow.pop %v5022
    %v5024 = vmul.f32 %v4985, 1.442695
    %v5025 = vpow.pop %v5024
    %v5026 = vmul.f32 %v4986, 1.442695
    %v5027 = vpow.pop %v5026
    %v5028 = vmul.f32 %v4987, 1.442695
    %v5029 = vpow.pop %v5028
    %v5030 = vmul.f32 %v4988, 1.442695
    %v5031 = vpow.pop %v5030
    %v5032 = vmul.f32 %v4989, 1.442695
    %v5033 = vpow.pop %v5032
    %v5034 = vmul.f32 %v4990, 1.442695
    %v5035 = vpow.pop %v5034
    %v5036 = vmul.f32 %v4991, 1.442695
    %v5037 = vpow.pop %v5036
    %v5038 = vmul.f32 %v4992, 1.442695
    %v5039 = vpow.pop %v5038
    %v5040 = vmul.f32 %v4993, 1.442695
    %v5041 = vpow.pop %v5040
    %v5042 = vmul.f32 %v4994, 1.442695
    %v5043 = vpow.pop %v5042
    %v5044 = vmul.f32 %v4995, 1.442695
    %v5045 = vpow.pop %v5044
    %v5046 = vmul.f32 %v4996, 1.442695
    %v5047 = vpow.pop %v5046
    %v5048 = vmul.f32 %v4997, 1.442695
    %v5049 = vpow.pop %v5048
    %v5050 = vmul.f32 %v4998, 1.442695
    %v5051 = vpow.pop %v5050
    %v5052 = vmul.f32 %v4999, 1.442695
    %v5053 = vpow.pop %v5052
    %v5054 = vmul.f32 %v5000, 1.442695
    %v5055 = vpow.pop %v5054
    %v5056 = vmul.f32 %v5001, 1.442695
    %v5057 = vpow.pop %v5056
    %v5058 = vmul.f32 %v5002, 1.442695
    %v5059 = vpow.pop %v5058
    %v5060 = vmul.f32 %v5003, 1.442695
    %v5061 = vpow.pop %v5060
    %v5062 = vmul.f32 %v5004, 1.442695
    %v5063 = vpow.pop %v5062
    %v5064 = vmul.f32 %v5005, 1.442695
    %v5065 = vpow.pop %v5064
    %v5066 = vmul.f32 %v5006, 1.442695
    %v5067 = vpow.pop %v5066
    %v5068 = vmul.f32 %v5007, 1.442695
    %v5069 = vpow.pop %v5068
    %v5070 = vmul.f32 %v5008, 1.442695
    %v5071 = vpow.pop %v5070
    %v5072 = vmul.f32 %v5009, 1.442695
    %v5073 = vpow.pop %v5072
    %v5074 = vsub.f32 %v5011, 1.0
    %v5075 = vsub.f32 %v5013, 1.0
    %v5076 = vsub.f32 %v5015, 1.0
    %v5077 = vsub.f32 %v5017, 1.0
    %v5078 = vsub.f32 %v5019, 1.0
    %v5079 = vsub.f32 %v5021, 1.0
    %v5080 = vsub.f32 %v5023, 1.0
    %v5081 = vsub.f32 %v5025, 1.0
    %v5082 = vsub.f32 %v5027, 1.0
    %v5083 = vsub.f32 %v5029, 1.0
    %v5084 = vsub.f32 %v5031, 1.0
    %v5085 = vsub.f32 %v5033, 1.0
    %v5086 = vsub.f32 %v5035, 1.0
    %v5087 = vsub.f32 %v5037, 1.0
    %v5088 = vsub.f32 %v5039, 1.0
    %v5089 = vsub.f32 %v5041, 1.0
    %v5090 = vsub.f32 %v5043, 1.0
    %v5091 = vsub.f32 %v5045, 1.0
    %v5092 = vsub.f32 %v5047, 1.0
    %v5093 = vsub.f32 %v5049, 1.0
    %v5094 = vsub.f32 %v5051, 1.0
    %v5095 = vsub.f32 %v5053, 1.0
    %v5096 = vsub.f32 %v5055, 1.0
    %v5097 = vsub.f32 %v5057, 1.0
    %v5098 = vsub.f32 %v5059, 1.0
    %v5099 = vsub.f32 %v5061, 1.0
    %v5100 = vsub.f32 %v5063, 1.0
    %v5101 = vsub.f32 %v5065, 1.0
    %v5102 = vsub.f32 %v5067, 1.0
    %v5103 = vsub.f32 %v5069, 1.0
    %v5104 = vsub.f32 %v5071, 1.0
    %v5105 = vsub.f32 %v5073, 1.0
    %v5106 = vsel %vm4946, %v4788, %v5074
    %v5107 = vsel %vm4947, %v4793, %v5075
    %v5108 = vsel %vm4948, %v4798, %v5076
    %v5109 = vsel %vm4949, %v4803, %v5077
    %v5110 = vsel %vm4950, %v4808, %v5078
    %v5111 = vsel %vm4951, %v4813, %v5079
    %v5112 = vsel %vm4952, %v4818, %v5080
    %v5113 = vsel %vm4953, %v4823, %v5081
    %v5114 = vsel %vm4954, %v4828, %v5082
    %v5115 = vsel %vm4955, %v4833, %v5083
    %v5116 = vsel %vm4956, %v4838, %v5084
    %v5117 = vsel %vm4957, %v4843, %v5085
    %v5118 = vsel %vm4958, %v4848, %v5086
    %v5119 = vsel %vm4959, %v4853, %v5087
    %v5120 = vsel %vm4960, %v4858, %v5088
    %v5121 = vsel %vm4961, %v4863, %v5089
    %v5122 = vsel %vm4962, %v4868, %v5090
    %v5123 = vsel %vm4963, %v4873, %v5091
    %v5124 = vsel %vm4964, %v4878, %v5092
    %v5125 = vsel %vm4965, %v4883, %v5093
    %v5126 = vsel %vm4966, %v4888, %v5094
    %v5127 = vsel %vm4967, %v4893, %v5095
    %v5128 = vsel %vm4968, %v4898, %v5096
    %v5129 = vsel %vm4969, %v4903, %v5097
    %v5130 = vsel %vm4970, %v4908, %v5098
    %v5131 = vsel %vm4971, %v4913, %v5099
    %v5132 = vsel %vm4972, %v4918, %v5100
    %v5133 = vsel %vm4973, %v4923, %v5101
    %v5134 = vsel %vm4974, %v4928, %v5102
    %v5135 = vsel %vm4975, %v4933, %v5103
    %v5136 = vsel %vm4976, %v4938, %v5104
    %v5137 = vsel %vm4977, %v4943, %v5105
    %5138 = vrot.lane.b32.xlu0 %v732, 96
    %v5139 = vpop.permute.xlu0 %5138
    %5140 = vrot.lane.b32.xlu0 %v737, 96
    %v5141 = vpop.permute.xlu0 %5140
    %5142 = vrot.lane.b32.xlu0 %v742, 96
    %v5143 = vpop.permute.xlu0 %5142
    %5144 = vrot.lane.b32.xlu0 %v747, 96
    %v5145 = vpop.permute.xlu0 %5144
    %5146 = vrot.lane.b32.xlu0 %v752, 96
    %v5147 = vpop.permute.xlu0 %5146
    %5148 = vrot.lane.b32.xlu0 %v757, 96
    %v5149 = vpop.permute.xlu0 %5148
    %5150 = vrot.lane.b32.xlu0 %v762, 96
    %v5151 = vpop.permute.xlu0 %5150
    %5152 = vrot.lane.b32.xlu0 %v767, 96
    %v5153 = vpop.permute.xlu0 %5152
    %5154 = vrot.lane.b32.xlu0 %v772, 96
    %v5155 = vpop.permute.xlu0 %5154
    %5156 = vrot.lane.b32.xlu0 %v777, 96
    %v5157 = vpop.permute.xlu0 %5156
    %5158 = vrot.lane.b32.xlu0 %v782, 96
    %v5159 = vpop.permute.xlu0 %5158
    %5160 = vrot.lane.b32.xlu0 %v787, 96
    %v5161 = vpop.permute.xlu0 %5160
    %5162 = vrot.lane.b32.xlu0 %v792, 96
    %v5163 = vpop.permute.xlu0 %5162
    %5164 = vrot.lane.b32.xlu0 %v797, 96
    %v5165 = vpop.permute.xlu0 %5164
    %5166 = vrot.lane.b32.xlu0 %v802, 96
    %v5167 = vpop.permute.xlu0 %5166
    %5168 = vrot.lane.b32.xlu0 %v807, 96
    %v5169 = vpop.permute.xlu0 %5168
    %5170 = vrot.lane.b32.xlu0 %v812, 96
    %v5171 = vpop.permute.xlu0 %5170
    %5172 = vrot.lane.b32.xlu0 %v817, 96
    %v5173 = vpop.permute.xlu0 %5172
    %5174 = vrot.lane.b32.xlu0 %v822, 96
    %v5175 = vpop.permute.xlu0 %5174
    %5176 = vrot.lane.b32.xlu0 %v827, 96
    %v5177 = vpop.permute.xlu0 %5176
    %5178 = vrot.lane.b32.xlu0 %v832, 96
    %v5179 = vpop.permute.xlu0 %5178
    %5180 = vrot.lane.b32.xlu0 %v837, 96
    %v5181 = vpop.permute.xlu0 %5180
    %5182 = vrot.lane.b32.xlu0 %v842, 96
    %v5183 = vpop.permute.xlu0 %5182
    %5184 = vrot.lane.b32.xlu0 %v847, 96
    %v5185 = vpop.permute.xlu0 %5184
    %5186 = vrot.lane.b32.xlu0 %v852, 96
    %v5187 = vpop.permute.xlu0 %5186
    %5188 = vrot.lane.b32.xlu0 %v857, 96
    %v5189 = vpop.permute.xlu0 %5188
    %5190 = vrot.lane.b32.xlu0 %v862, 96
    %v5191 = vpop.permute.xlu0 %5190
    %5192 = vrot.lane.b32.xlu0 %v867, 96
    %v5193 = vpop.permute.xlu0 %5192
    %5194 = vrot.lane.b32.xlu0 %v872, 96
    %v5195 = vpop.permute.xlu0 %5194
    %5196 = vrot.lane.b32.xlu0 %v877, 96
    %v5197 = vpop.permute.xlu0 %5196
    %5198 = vrot.lane.b32.xlu0 %v882, 96
    %v5199 = vpop.permute.xlu0 %5198
    %5200 = vrot.lane.b32.xlu0 %v887, 96
    %v5201 = vpop.permute.xlu0 %5200
    %v5234 = vadd.f32 %v5106, %v5139
    %v5235 = vadd.f32 %v5107, %v5141
    %v5236 = vadd.f32 %v5108, %v5143
    %v5237 = vadd.f32 %v5109, %v5145
    %v5238 = vadd.f32 %v5110, %v5147
    %v5239 = vadd.f32 %v5111, %v5149
    %v5240 = vadd.f32 %v5112, %v5151
    %v5241 = vadd.f32 %v5113, %v5153
    %v5242 = vadd.f32 %v5114, %v5155
    %v5243 = vadd.f32 %v5115, %v5157
    %v5244 = vadd.f32 %v5116, %v5159
    %v5245 = vadd.f32 %v5117, %v5161
    %v5246 = vadd.f32 %v5118, %v5163
    %v5247 = vadd.f32 %v5119, %v5165
    %v5248 = vadd.f32 %v5120, %v5167
    %v5249 = vadd.f32 %v5121, %v5169
    %v5250 = vadd.f32 %v5122, %v5171
    %v5251 = vadd.f32 %v5123, %v5173
    %v5252 = vadd.f32 %v5124, %v5175
    %v5253 = vadd.f32 %v5125, %v5177
    %v5254 = vadd.f32 %v5126, %v5179
    %v5255 = vadd.f32 %v5127, %v5181
    %v5256 = vadd.f32 %v5128, %v5183
    %v5257 = vadd.f32 %v5129, %v5185
    %v5258 = vadd.f32 %v5130, %v5187
    %v5259 = vadd.f32 %v5131, %v5189
    %v5260 = vadd.f32 %v5132, %v5191
    %v5261 = vadd.f32 %v5133, %v5193
    %v5262 = vadd.f32 %v5134, %v5195
    %v5263 = vadd.f32 %v5135, %v5197
    %v5264 = vadd.f32 %v5136, %v5199
    %v5265 = vadd.f32 %v5137, %v5201
    %vm5266 = vcmp.gt.f32.partialorder %v5234, 0.0
    %vm5267 = vcmp.gt.f32.partialorder %v5235, 0.0
    %vm5268 = vcmp.gt.f32.partialorder %v5236, 0.0
    %vm5269 = vcmp.gt.f32.partialorder %v5237, 0.0
    %vm5270 = vcmp.gt.f32.partialorder %v5238, 0.0
    %vm5271 = vcmp.gt.f32.partialorder %v5239, 0.0
    %vm5272 = vcmp.gt.f32.partialorder %v5240, 0.0
    %vm5273 = vcmp.gt.f32.partialorder %v5241, 0.0
    %vm5274 = vcmp.gt.f32.partialorder %v5242, 0.0
    %vm5275 = vcmp.gt.f32.partialorder %v5243, 0.0
    %vm5276 = vcmp.gt.f32.partialorder %v5244, 0.0
    %vm5277 = vcmp.gt.f32.partialorder %v5245, 0.0
    %vm5278 = vcmp.gt.f32.partialorder %v5246, 0.0
    %vm5279 = vcmp.gt.f32.partialorder %v5247, 0.0
    %vm5280 = vcmp.gt.f32.partialorder %v5248, 0.0
    %vm5281 = vcmp.gt.f32.partialorder %v5249, 0.0
    %vm5282 = vcmp.gt.f32.partialorder %v5250, 0.0
    %vm5283 = vcmp.gt.f32.partialorder %v5251, 0.0
    %vm5284 = vcmp.gt.f32.partialorder %v5252, 0.0
    %vm5285 = vcmp.gt.f32.partialorder %v5253, 0.0
    %vm5286 = vcmp.gt.f32.partialorder %v5254, 0.0
    %vm5287 = vcmp.gt.f32.partialorder %v5255, 0.0
    %vm5288 = vcmp.gt.f32.partialorder %v5256, 0.0
    %vm5289 = vcmp.gt.f32.partialorder %v5257, 0.0
    %vm5290 = vcmp.gt.f32.partialorder %v5258, 0.0
    %vm5291 = vcmp.gt.f32.partialorder %v5259, 0.0
    %vm5292 = vcmp.gt.f32.partialorder %v5260, 0.0
    %vm5293 = vcmp.gt.f32.partialorder %v5261, 0.0
    %vm5294 = vcmp.gt.f32.partialorder %v5262, 0.0
    %vm5295 = vcmp.gt.f32.partialorder %v5263, 0.0
    %vm5296 = vcmp.gt.f32.partialorder %v5264, 0.0
    %vm5297 = vcmp.gt.f32.partialorder %v5265, 0.0
    %v5298 = vmin.f32 %v5234, 0.0
    %v5299 = vmin.f32 %v5235, 0.0
    %v5300 = vmin.f32 %v5236, 0.0
    %v5301 = vmin.f32 %v5237, 0.0
    %v5302 = vmin.f32 %v5238, 0.0
    %v5303 = vmin.f32 %v5239, 0.0
    %v5304 = vmin.f32 %v5240, 0.0
    %v5305 = vmin.f32 %v5241, 0.0
    %v5306 = vmin.f32 %v5242, 0.0
    %v5307 = vmin.f32 %v5243, 0.0
    %v5308 = vmin.f32 %v5244, 0.0
    %v5309 = vmin.f32 %v5245, 0.0
    %v5310 = vmin.f32 %v5246, 0.0
    %v5311 = vmin.f32 %v5247, 0.0
    %v5312 = vmin.f32 %v5248, 0.0
    %v5313 = vmin.f32 %v5249, 0.0
    %v5314 = vmin.f32 %v5250, 0.0
    %v5315 = vmin.f32 %v5251, 0.0
    %v5316 = vmin.f32 %v5252, 0.0
    %v5317 = vmin.f32 %v5253, 0.0
    %v5318 = vmin.f32 %v5254, 0.0
    %v5319 = vmin.f32 %v5255, 0.0
    %v5320 = vmin.f32 %v5256, 0.0
    %v5321 = vmin.f32 %v5257, 0.0
    %v5322 = vmin.f32 %v5258, 0.0
    %v5323 = vmin.f32 %v5259, 0.0
    %v5324 = vmin.f32 %v5260, 0.0
    %v5325 = vmin.f32 %v5261, 0.0
    %v5326 = vmin.f32 %v5262, 0.0
    %v5327 = vmin.f32 %v5263, 0.0
    %v5328 = vmin.f32 %v5264, 0.0
    %v5329 = vmin.f32 %v5265, 0.0
    %v5330 = vmul.f32 %v5298, 1.442695
    %v5331 = vpow.pop %v5330
    %v5332 = vmul.f32 %v5299, 1.442695
    %v5333 = vpow.pop %v5332
    %v5334 = vmul.f32 %v5300, 1.442695
    %v5335 = vpow.pop %v5334
    %v5336 = vmul.f32 %v5301, 1.442695
    %v5337 = vpow.pop %v5336
    %v5338 = vmul.f32 %v5302, 1.442695
    %v5339 = vpow.pop %v5338
    %v5340 = vmul.f32 %v5303, 1.442695
    %v5341 = vpow.pop %v5340
    %v5342 = vmul.f32 %v5304, 1.442695
    %v5343 = vpow.pop %v5342
    %v5344 = vmul.f32 %v5305, 1.442695
    %v5345 = vpow.pop %v5344
    %v5346 = vmul.f32 %v5306, 1.442695
    %v5347 = vpow.pop %v5346
    %v5348 = vmul.f32 %v5307, 1.442695
    %v5349 = vpow.pop %v5348
    %v5350 = vmul.f32 %v5308, 1.442695
    %v5351 = vpow.pop %v5350
    %v5352 = vmul.f32 %v5309, 1.442695
    %v5353 = vpow.pop %v5352
    %v5354 = vmul.f32 %v5310, 1.442695
    %v5355 = vpow.pop %v5354
    %v5356 = vmul.f32 %v5311, 1.442695
    %v5357 = vpow.pop %v5356
    %v5358 = vmul.f32 %v5312, 1.442695
    %v5359 = vpow.pop %v5358
    %v5360 = vmul.f32 %v5313, 1.442695
    %v5361 = vpow.pop %v5360
    %v5362 = vmul.f32 %v5314, 1.442695
    %v5363 = vpow.pop %v5362
    %v5364 = vmul.f32 %v5315, 1.442695
    %v5365 = vpow.pop %v5364
    %v5366 = vmul.f32 %v5316, 1.442695
    %v5367 = vpow.pop %v5366
    %v5368 = vmul.f32 %v5317, 1.442695
    %v5369 = vpow.pop %v5368
    %v5370 = vmul.f32 %v5318, 1.442695
    %v5371 = vpow.pop %v5370
    %v5372 = vmul.f32 %v5319, 1.442695
    %v5373 = vpow.pop %v5372
    %v5374 = vmul.f32 %v5320, 1.442695
    %v5375 = vpow.pop %v5374
    %v5376 = vmul.f32 %v5321, 1.442695
    %v5377 = vpow.pop %v5376
    %v5378 = vmul.f32 %v5322, 1.442695
    %v5379 = vpow.pop %v5378
    %v5380 = vmul.f32 %v5323, 1.442695
    %v5381 = vpow.pop %v5380
    %v5382 = vmul.f32 %v5324, 1.442695
    %v5383 = vpow.pop %v5382
    %v5384 = vmul.f32 %v5325, 1.442695
    %v5385 = vpow.pop %v5384
    %v5386 = vmul.f32 %v5326, 1.442695
    %v5387 = vpow.pop %v5386
    %v5388 = vmul.f32 %v5327, 1.442695
    %v5389 = vpow.pop %v5388
    %v5390 = vmul.f32 %v5328, 1.442695
    %v5391 = vpow.pop %v5390
    %v5392 = vmul.f32 %v5329, 1.442695
    %v5393 = vpow.pop %v5392
    %v5394 = vsub.f32 %v5331, 1.0
    %v5395 = vsub.f32 %v5333, 1.0
    %v5396 = vsub.f32 %v5335, 1.0
    %v5397 = vsub.f32 %v5337, 1.0
    %v5398 = vsub.f32 %v5339, 1.0
    %v5399 = vsub.f32 %v5341, 1.0
    %v5400 = vsub.f32 %v5343, 1.0
    %v5401 = vsub.f32 %v5345, 1.0
    %v5402 = vsub.f32 %v5347, 1.0
    %v5403 = vsub.f32 %v5349, 1.0
    %v5404 = vsub.f32 %v5351, 1.0
    %v5405 = vsub.f32 %v5353, 1.0
    %v5406 = vsub.f32 %v5355, 1.0
    %v5407 = vsub.f32 %v5357, 1.0
    %v5408 = vsub.f32 %v5359, 1.0
    %v5409 = vsub.f32 %v5361, 1.0
    %v5410 = vsub.f32 %v5363, 1.0
    %v5411 = vsub.f32 %v5365, 1.0
    %v5412 = vsub.f32 %v5367, 1.0
    %v5413 = vsub.f32 %v5369, 1.0
    %v5414 = vsub.f32 %v5371, 1.0
    %v5415 = vsub.f32 %v5373, 1.0
    %v5416 = vsub.f32 %v5375, 1.0
    %v5417 = vsub.f32 %v5377, 1.0
    %v5418 = vsub.f32 %v5379, 1.0
    %v5419 = vsub.f32 %v5381, 1.0
    %v5420 = vsub.f32 %v5383, 1.0
    %v5421 = vsub.f32 %v5385, 1.0
    %v5422 = vsub.f32 %v5387, 1.0
    %v5423 = vsub.f32 %v5389, 1.0
    %v5424 = vsub.f32 %v5391, 1.0
    %v5425 = vsub.f32 %v5393, 1.0
    %v5426 = vsel %vm5266, %v5234, %v5394
    %v5427 = vsel %vm5267, %v5235, %v5395
    %v5428 = vsel %vm5268, %v5236, %v5396
    %v5429 = vsel %vm5269, %v5237, %v5397
    %v5430 = vsel %vm5270, %v5238, %v5398
    %v5431 = vsel %vm5271, %v5239, %v5399
    %v5432 = vsel %vm5272, %v5240, %v5400
    %v5433 = vsel %vm5273, %v5241, %v5401
    %v5434 = vsel %vm5274, %v5242, %v5402
    %v5435 = vsel %vm5275, %v5243, %v5403
    %v5436 = vsel %vm5276, %v5244, %v5404
    %v5437 = vsel %vm5277, %v5245, %v5405
    %v5438 = vsel %vm5278, %v5246, %v5406
    %v5439 = vsel %vm5279, %v5247, %v5407
    %v5440 = vsel %vm5280, %v5248, %v5408
    %v5441 = vsel %vm5281, %v5249, %v5409
    %v5442 = vsel %vm5282, %v5250, %v5410
    %v5443 = vsel %vm5283, %v5251, %v5411
    %v5444 = vsel %vm5284, %v5252, %v5412
    %v5445 = vsel %vm5285, %v5253, %v5413
    %v5446 = vsel %vm5286, %v5254, %v5414
    %v5447 = vsel %vm5287, %v5255, %v5415
    %v5448 = vsel %vm5288, %v5256, %v5416
    %v5449 = vsel %vm5289, %v5257, %v5417
    %v5450 = vsel %vm5290, %v5258, %v5418
    %v5451 = vsel %vm5291, %v5259, %v5419
    %v5452 = vsel %vm5292, %v5260, %v5420
    %v5453 = vsel %vm5293, %v5261, %v5421
    %v5454 = vsel %vm5294, %v5262, %v5422
    %v5455 = vsel %vm5295, %v5263, %v5423
    %v5456 = vsel %vm5296, %v5264, %v5424
    %v5457 = vsel %vm5297, %v5265, %v5425
    %v5458 = vld [vmem:[%s8] sm:$0xff]
    %v5459 = vld [vmem:[%s8 + $0x8] sm:$0xff]
    %v5460 = vld [vmem:[%s8 + $0x10] sm:$0xff]
    %v5461 = vld [vmem:[%s8 + $0x18] sm:$0xff]
    %v5462 = vld [vmem:[%s8 + $0x20] sm:$0xff]
    %v5463 = vld [vmem:[%s8 + $0x28] sm:$0xff]
    %v5464 = vld [vmem:[%s8 + $0x30] sm:$0xff]
    %v5465 = vld [vmem:[%s8 + $0x38] sm:$0xff]
    %v5466 = vld [vmem:[%s8 + $0x40] sm:$0xff]
    %v5467 = vld [vmem:[%s8 + $0x48] sm:$0xff]
    %v5468 = vld [vmem:[%s8 + $0x50] sm:$0xff]
    %v5469 = vld [vmem:[%s8 + $0x58] sm:$0xff]
    %v5470 = vld [vmem:[%s8 + $0x60] sm:$0xff]
    %v5471 = vld [vmem:[%s8 + $0x68] sm:$0xff]
    %v5472 = vld [vmem:[%s8 + $0x70] sm:$0xff]
    %v5473 = vld [vmem:[%s8 + $0x78] sm:$0xff]
    %v5474 = vld [vmem:[%s8 + $0x80] sm:$0xff]
    %v5475 = vld [vmem:[%s8 + $0x88] sm:$0xff]
    %v5476 = vld [vmem:[%s8 + $0x90] sm:$0xff]
    %v5477 = vld [vmem:[%s8 + $0x98] sm:$0xff]
    %v5478 = vld [vmem:[%s8 + $0xa0] sm:$0xff]
    %v5479 = vld [vmem:[%s8 + $0xa8] sm:$0xff]
    %v5480 = vld [vmem:[%s8 + $0xb0] sm:$0xff]
    %v5481 = vld [vmem:[%s8 + $0xb8] sm:$0xff]
    %v5482 = vld [vmem:[%s8 + $0xc0] sm:$0xff]
    %v5483 = vld [vmem:[%s8 + $0xc8] sm:$0xff]
    %v5484 = vld [vmem:[%s8 + $0xd0] sm:$0xff]
    %v5485 = vld [vmem:[%s8 + $0xd8] sm:$0xff]
    %v5486 = vld [vmem:[%s8 + $0xe0] sm:$0xff]
    %v5487 = vld [vmem:[%s8 + $0xe8] sm:$0xff]
    %v5488 = vld [vmem:[%s8 + $0xf0] sm:$0xff]
    %v5489 = vld [vmem:[%s8 + $0xf8] sm:$0xff]
    %v5490 = vld [vmem:[%s8 + $0x100] sm:$0xff]
    %v5491 = vld [vmem:[%s8 + $0x108] sm:$0xff]
    %v5492 = vld [vmem:[%s8 + $0x110] sm:$0xff]
    %v5493 = vld [vmem:[%s8 + $0x118] sm:$0xff]
    %v5494 = vld [vmem:[%s8 + $0x120] sm:$0xff]
    %v5495 = vld [vmem:[%s8 + $0x128] sm:$0xff]
    %v5496 = vld [vmem:[%s8 + $0x130] sm:$0xff]
    %v5497 = vld [vmem:[%s8 + $0x138] sm:$0xff]
    %v5498 = vld [vmem:[%s8 + $0x140] sm:$0xff]
    %v5499 = vld [vmem:[%s8 + $0x148] sm:$0xff]
    %v5500 = vld [vmem:[%s8 + $0x150] sm:$0xff]
    %v5501 = vld [vmem:[%s8 + $0x158] sm:$0xff]
    %v5502 = vld [vmem:[%s8 + $0x160] sm:$0xff]
    %v5503 = vld [vmem:[%s8 + $0x168] sm:$0xff]
    %v5504 = vld [vmem:[%s8 + $0x170] sm:$0xff]
    %v5505 = vld [vmem:[%s8 + $0x178] sm:$0xff]
    %v5506 = vld [vmem:[%s8 + $0x180] sm:$0xff]
    %v5507 = vld [vmem:[%s8 + $0x188] sm:$0xff]
    %v5508 = vld [vmem:[%s8 + $0x190] sm:$0xff]
    %v5509 = vld [vmem:[%s8 + $0x198] sm:$0xff]
    %v5510 = vld [vmem:[%s8 + $0x1a0] sm:$0xff]
    %v5511 = vld [vmem:[%s8 + $0x1a8] sm:$0xff]
    %v5512 = vld [vmem:[%s8 + $0x1b0] sm:$0xff]
    %v5513 = vld [vmem:[%s8 + $0x1b8] sm:$0xff]
    %v5514 = vld [vmem:[%s8 + $0x1c0] sm:$0xff]
    %v5515 = vld [vmem:[%s8 + $0x1c8] sm:$0xff]
    %v5516 = vld [vmem:[%s8 + $0x1d0] sm:$0xff]
    %v5517 = vld [vmem:[%s8 + $0x1d8] sm:$0xff]
    %v5518 = vld [vmem:[%s8 + $0x1e0] sm:$0xff]
    %v5519 = vld [vmem:[%s8 + $0x1e8] sm:$0xff]
    %v5520 = vld [vmem:[%s8 + $0x1f0] sm:$0xff]
    %v5521 = vld [vmem:[%s8 + $0x1f8] sm:$0xff]
    %v5522 = vld [vmem:[%s9] sm:$0xff]
    %v5524 = vlaneseq
    %v5525 = vshrl.u32 %v5524, 7
    %v5526 = vsub.s32 0, %v5525
    %v5527 = vrot.slane %v5522, %v5526
    %v5528 = vlaneseq
    %v5529 = vshrl.u32 %v5528, 7
    %v5530 = vsub.s32 1, %v5529
    %v5531 = vrot.slane %v5522, %v5530
    %v5532 = vlaneseq
    %v5533 = vshrl.u32 %v5532, 7
    %v5534 = vsub.s32 2, %v5533
    %v5535 = vrot.slane %v5522, %v5534
    %v5536 = vlaneseq
    %v5537 = vshrl.u32 %v5536, 7
    %v5538 = vsub.s32 3, %v5537
    %v5539 = vrot.slane %v5522, %v5538
    %v5540 = vlaneseq
    %v5541 = vshrl.u32 %v5540, 7
    %v5542 = vsub.s32 4, %v5541
    %v5543 = vrot.slane %v5522, %v5542
    %v5544 = vlaneseq
    %v5545 = vshrl.u32 %v5544, 7
    %v5546 = vsub.s32 5, %v5545
    %v5547 = vrot.slane %v5522, %v5546
    %v5548 = vlaneseq
    %v5549 = vshrl.u32 %v5548, 7
    %v5550 = vsub.s32 6, %v5549
    %v5551 = vrot.slane %v5522, %v5550
    %v5552 = vlaneseq
    %v5553 = vshrl.u32 %v5552, 7
    %v5554 = vsub.s32 7, %v5553
    %v5555 = vrot.slane %v5522, %v5554
    %5564 = vrot.lane.b32.xlu0 %v492, 64
    %v5565 = vpop.permute.xlu0 %5564
    %5566 = vrot.lane.b32.xlu0 %v493, 64
    %v5567 = vpop.permute.xlu0 %5566
    %5568 = vrot.lane.b32.xlu0 %v494, 64
    %v5569 = vpop.permute.xlu0 %5568
    %5570 = vrot.lane.b32.xlu0 %v495, 64
    %v5571 = vpop.permute.xlu0 %5570
    %5572 = vrot.lane.b32.xlu0 %v496, 64
    %v5573 = vpop.permute.xlu0 %5572
    %5574 = vrot.lane.b32.xlu0 %v497, 64
    %v5575 = vpop.permute.xlu0 %5574
    %5576 = vrot.lane.b32.xlu0 %v498, 64
    %v5577 = vpop.permute.xlu0 %5576
    %5578 = vrot.lane.b32.xlu0 %v499, 64
    %v5579 = vpop.permute.xlu0 %5578
    %5580 = vrot.lane.b32.xlu0 %v500, 64
    %v5581 = vpop.permute.xlu0 %5580
    %5582 = vrot.lane.b32.xlu0 %v501, 64
    %v5583 = vpop.permute.xlu0 %5582
    %5584 = vrot.lane.b32.xlu0 %v502, 64
    %v5585 = vpop.permute.xlu0 %5584
    %5586 = vrot.lane.b32.xlu0 %v503, 64
    %v5587 = vpop.permute.xlu0 %5586
    %5588 = vrot.lane.b32.xlu0 %v504, 64
    %v5589 = vpop.permute.xlu0 %5588
    %5590 = vrot.lane.b32.xlu0 %v505, 64
    %v5591 = vpop.permute.xlu0 %5590
    %5592 = vrot.lane.b32.xlu0 %v506, 64
    %v5593 = vpop.permute.xlu0 %5592
    %5594 = vrot.lane.b32.xlu0 %v507, 64
    %v5595 = vpop.permute.xlu0 %5594
    %5596 = vrot.lane.b32.xlu0 %v508, 64
    %v5597 = vpop.permute.xlu0 %5596
    %5598 = vrot.lane.b32.xlu0 %v509, 64
    %v5599 = vpop.permute.xlu0 %5598
    %5600 = vrot.lane.b32.xlu0 %v510, 64
    %v5601 = vpop.permute.xlu0 %5600
    %5602 = vrot.lane.b32.xlu0 %v511, 64
    %v5603 = vpop.permute.xlu0 %5602
    %5604 = vrot.lane.b32.xlu0 %v512, 64
    %v5605 = vpop.permute.xlu0 %5604
    %5606 = vrot.lane.b32.xlu0 %v513, 64
    %v5607 = vpop.permute.xlu0 %5606
    %5608 = vrot.lane.b32.xlu0 %v514, 64
    %v5609 = vpop.permute.xlu0 %5608
    %5610 = vrot.lane.b32.xlu0 %v515, 64
    %v5611 = vpop.permute.xlu0 %5610
    %5612 = vrot.lane.b32.xlu0 %v516, 64
    %v5613 = vpop.permute.xlu0 %5612
    %5614 = vrot.lane.b32.xlu0 %v517, 64
    %v5615 = vpop.permute.xlu0 %5614
    %5616 = vrot.lane.b32.xlu0 %v518, 64
    %v5617 = vpop.permute.xlu0 %5616
    %5618 = vrot.lane.b32.xlu0 %v519, 64
    %v5619 = vpop.permute.xlu0 %5618
    %5620 = vrot.lane.b32.xlu0 %v520, 64
    %v5621 = vpop.permute.xlu0 %5620
    %5622 = vrot.lane.b32.xlu0 %v521, 64
    %v5623 = vpop.permute.xlu0 %5622
    %5624 = vrot.lane.b32.xlu0 %v522, 64
    %v5625 = vpop.permute.xlu0 %5624
    %5626 = vrot.lane.b32.xlu0 %v523, 64
    %v5627 = vpop.permute.xlu0 %5626
    %v5628 = vsel %vm1156, %v5565, 0
    %v5630 = vsel %vm1156, %v5567, 0
    %v5632 = vsel %vm1156, %v5569, 0
    %v5634 = vsel %vm1156, %v5571, 0
    %v5636 = vsel %vm1156, %v5573, 0
    %v5638 = vsel %vm1156, %v5575, 0
    %v5640 = vsel %vm1156, %v5577, 0
    %v5642 = vsel %vm1156, %v5579, 0
    %v5644 = vsel %vm1156, %v5581, 0
    %v5646 = vsel %vm1156, %v5583, 0
    %v5648 = vsel %vm1156, %v5585, 0
    %v5650 = vsel %vm1156, %v5587, 0
    %v5652 = vsel %vm1156, %v5589, 0
    %v5654 = vsel %vm1156, %v5591, 0
    %v5656 = vsel %vm1156, %v5593, 0
    %v5658 = vsel %vm1156, %v5595, 0
    %v5660 = vsel %vm1156, %v5597, 0
    %v5662 = vsel %vm1156, %v5599, 0
    %v5664 = vsel %vm1156, %v5601, 0
    %v5666 = vsel %vm1156, %v5603, 0
    %v5668 = vsel %vm1156, %v5605, 0
    %v5670 = vsel %vm1156, %v5607, 0
    %v5672 = vsel %vm1156, %v5609, 0
    %v5674 = vsel %vm1156, %v5611, 0
    %v5676 = vsel %vm1156, %v5613, 0
    %v5678 = vsel %vm1156, %v5615, 0
    %v5680 = vsel %vm1156, %v5617, 0
    %v5682 = vsel %vm1156, %v5619, 0
    %v5684 = vsel %vm1156, %v5621, 0
    %v5686 = vsel %vm1156, %v5623, 0
    %v5688 = vsel %vm1156, %v5625, 0
    %v5690 = vsel %vm1156, %v5627, 0
    %5692 = vmatprep.subr.mxu0 0.0
    %5693 = vmatpush1.msra.mxu0 0.0
    %5694 = vmatprep.subr.mxu0 0.0
    %5695 = vmatpush1.msra.mxu0 0.0
    %5696 = vmatprep.subr.mxu0 0.0
    %5697 = vmatpush1.msra.mxu0 0.0
    %5698 = vmatprep.subr.mxu0 0.0
    %5699 = vmatpush1.msra.mxu0 0.0
    %5700 = vmatprep.subr.mxu0 0.0
    %5701 = vmatpush1.msra.mxu0 0.0
    %5702 = vmatprep.subr.mxu0 0.0
    %5703 = vmatpush1.msra.mxu0 0.0
    %5704 = vmatprep.subr.mxu0 0.0
    %5705 = vmatpush1.msra.mxu0 0.0
    %5706 = vmatprep.subr.mxu0 0.0
    %5707 = vmatpush1.msra.mxu0 0.0
    %5708 = vmatprep.subr.mxu0 %v5515
    %5709 = vmatpush1.msra.mxu0 %v5514
    %5710 = vmatprep.subr.mxu0 %v5507
    %5711 = vmatpush1.msra.mxu0 %v5506
    %5712 = vmatprep.subr.mxu0 %v5499
    %5713 = vmatpush1.msra.mxu0 %v5498
    %5714 = vmatprep.subr.mxu0 %v5491
    %5715 = vmatpush1.msra.mxu0 %v5490
    %5716 = vmatprep.subr.mxu0 %v5483
    %5717 = vmatpush1.msra.mxu0 %v5482
    %5718 = vmatprep.subr.mxu0 %v5475
    %5719 = vmatpush1.msra.mxu0 %v5474
    %5720 = vmatprep.subr.mxu0 %v5467
    %5721 = vmatpush1.msra.mxu0 %v5466
    %5722 = vmatprep.subr.mxu0 %v5459
    %5723 = vmatpush1.msra.mxu0 %v5458
    %5724 = vmatprep.subr.mxu0 0.0
    %5725 = vmatpush2.msra.mxu0 0.0
    %5726 = vmatprep.subr.mxu0 0.0
    %5727 = vmatpush2.msra.mxu0 0.0
    %5728 = vmatprep.subr.mxu0 0.0
    %5729 = vmatpush2.msra.mxu0 0.0
    %5730 = vmatprep.subr.mxu0 0.0
    %5731 = vmatpush2.msra.mxu0 0.0
    %5732 = vmatprep.subr.mxu0 0.0
    %5733 = vmatpush2.msra.mxu0 0.0
    %5734 = vmatprep.subr.mxu0 0.0
    %5735 = vmatpush2.msra.mxu0 0.0
    %5736 = vmatprep.subr.mxu0 0.0
    %5737 = vmatpush2.msra.mxu0 0.0
    %5738 = vmatprep.subr.mxu0 0.0
    %5739 = vmatpush2.msra.mxu0 0.0
    %5740 = vmatprep.subr.mxu0 0.0
    %5741 = vmatpush2.msra.mxu0 0.0
    %5742 = vmatprep.subr.mxu0 0.0
    %5743 = vmatpush2.msra.mxu0 0.0
    %5744 = vmatprep.subr.mxu0 0.0
    %5745 = vmatpush2.msra.mxu0 0.0
    %5746 = vmatprep.subr.mxu0 0.0
    %5747 = vmatpush2.msra.mxu0 0.0
    %5748 = vmatprep.subr.mxu0 0.0
    %5749 = vmatpush2.msra.mxu0 0.0
    %5750 = vmatprep.subr.mxu0 0.0
    %5751 = vmatpush2.msra.mxu0 0.0
    %5752 = vmatprep.subr.mxu0 0.0
    %5753 = vmatpush2.msra.mxu0 0.0
    %5754 = vmatprep.subr.mxu0 0.0
    %5755 = vmatpush2.msra.mxu0 0.0
    %5756 = vmatprep.mubr.f32.mxu0 0.0
    %5757 = vmatmul.mubr.f32.gmra.mxu0 %v5628
    %v5758 = vpop.f32.mrf.mxu0
    %v5759 = vadd.f32 %v5527, %v5758
    %v5760 = vpop.f32.mrf.mxu0
    %v5761 = vadd.f32 %v5531, %v5760
    %5762 = vmatprep.mubr.f32.mxu0 0.0
    %5763 = vmatmul.mubr.f32.gmra.mxu0 %v5630
    %v5764 = vpop.f32.mrf.mxu0
    %v5765 = vadd.f32 %v5527, %v5764
    %v5766 = vpop.f32.mrf.mxu0
    %v5767 = vadd.f32 %v5531, %v5766
    %5768 = vmatprep.mubr.f32.mxu0 0.0
    %5769 = vmatmul.mubr.f32.gmra.mxu0 %v5632
    %v5770 = vpop.f32.mrf.mxu0
    %v5771 = vadd.f32 %v5527, %v5770
    %v5772 = vpop.f32.mrf.mxu0
    %v5773 = vadd.f32 %v5531, %v5772
    %5774 = vmatprep.mubr.f32.mxu0 0.0
    %5775 = vmatmul.mubr.f32.gmra.mxu0 %v5634
    %v5776 = vpop.f32.mrf.mxu0
    %v5777 = vadd.f32 %v5527, %v5776
    %v5778 = vpop.f32.mrf.mxu0
    %v5779 = vadd.f32 %v5531, %v5778
    %5780 = vmatprep.mubr.f32.mxu0 0.0
    %5781 = vmatmul.mubr.f32.gmra.mxu0 %v5636
    %v5782 = vpop.f32.mrf.mxu0
    %v5783 = vadd.f32 %v5527, %v5782
    %v5784 = vpop.f32.mrf.mxu0
    %v5785 = vadd.f32 %v5531, %v5784
    %5786 = vmatprep.mubr.f32.mxu0 0.0
    %5787 = vmatmul.mubr.f32.gmra.mxu0 %v5638
    %v5788 = vpop.f32.mrf.mxu0
    %v5789 = vadd.f32 %v5527, %v5788
    %v5790 = vpop.f32.mrf.mxu0
    %v5791 = vadd.f32 %v5531, %v5790
    %5792 = vmatprep.mubr.f32.mxu0 0.0
    %5793 = vmatmul.mubr.f32.gmra.mxu0 %v5640
    %v5794 = vpop.f32.mrf.mxu0
    %v5795 = vadd.f32 %v5527, %v5794
    %v5796 = vpop.f32.mrf.mxu0
    %v5797 = vadd.f32 %v5531, %v5796
    %5798 = vmatprep.mubr.f32.mxu0 0.0
    %5799 = vmatmul.mubr.f32.gmra.mxu0 %v5642
    %v5800 = vpop.f32.mrf.mxu0
    %v5801 = vadd.f32 %v5527, %v5800
    %v5802 = vpop.f32.mrf.mxu0
    %v5803 = vadd.f32 %v5531, %v5802
    %5804 = vmatprep.mubr.f32.mxu0 0.0
    %5805 = vmatmul.mubr.f32.gmra.mxu0 %v5644
    %v5806 = vpop.f32.mrf.mxu0
    %v5807 = vadd.f32 %v5527, %v5806
    %v5808 = vpop.f32.mrf.mxu0
    %v5809 = vadd.f32 %v5531, %v5808
    %5810 = vmatprep.mubr.f32.mxu0 0.0
    %5811 = vmatmul.mubr.f32.gmra.mxu0 %v5646
    %v5812 = vpop.f32.mrf.mxu0
    %v5813 = vadd.f32 %v5527, %v5812
    %v5814 = vpop.f32.mrf.mxu0
    %v5815 = vadd.f32 %v5531, %v5814
    %5816 = vmatprep.mubr.f32.mxu0 0.0
    %5817 = vmatmul.mubr.f32.gmra.mxu0 %v5648
    %v5818 = vpop.f32.mrf.mxu0
    %v5819 = vadd.f32 %v5527, %v5818
    %v5820 = vpop.f32.mrf.mxu0
    %v5821 = vadd.f32 %v5531, %v5820
    %5822 = vmatprep.mubr.f32.mxu0 0.0
    %5823 = vmatmul.mubr.f32.gmra.mxu0 %v5650
    %v5824 = vpop.f32.mrf.mxu0
    %v5825 = vadd.f32 %v5527, %v5824
    %v5826 = vpop.f32.mrf.mxu0
    %v5827 = vadd.f32 %v5531, %v5826
    %5828 = vmatprep.mubr.f32.mxu0 0.0
    %5829 = vmatmul.mubr.f32.gmra.mxu0 %v5652
    %v5830 = vpop.f32.mrf.mxu0
    %v5831 = vadd.f32 %v5527, %v5830
    %v5832 = vpop.f32.mrf.mxu0
    %v5833 = vadd.f32 %v5531, %v5832
    %5834 = vmatprep.mubr.f32.mxu0 0.0
    %5835 = vmatmul.mubr.f32.gmra.mxu0 %v5654
    %v5836 = vpop.f32.mrf.mxu0
    %v5837 = vadd.f32 %v5527, %v5836
    %v5838 = vpop.f32.mrf.mxu0
    %v5839 = vadd.f32 %v5531, %v5838
    %5840 = vmatprep.mubr.f32.mxu0 0.0
    %5841 = vmatmul.mubr.f32.gmra.mxu0 %v5656
    %v5842 = vpop.f32.mrf.mxu0
    %v5843 = vadd.f32 %v5527, %v5842
    %v5844 = vpop.f32.mrf.mxu0
    %v5845 = vadd.f32 %v5531, %v5844
    %5846 = vmatprep.mubr.f32.mxu0 0.0
    %5847 = vmatmul.mubr.f32.gmra.mxu0 %v5658
    %v5848 = vpop.f32.mrf.mxu0
    %v5849 = vadd.f32 %v5527, %v5848
    %v5850 = vpop.f32.mrf.mxu0
    %v5851 = vadd.f32 %v5531, %v5850
    %5852 = vmatprep.mubr.f32.mxu0 0.0
    %5853 = vmatmul.mubr.f32.gmra.mxu0 %v5660
    %v5854 = vpop.f32.mrf.mxu0
    %v5855 = vadd.f32 %v5527, %v5854
    %v5856 = vpop.f32.mrf.mxu0
    %v5857 = vadd.f32 %v5531, %v5856
    %5858 = vmatprep.mubr.f32.mxu0 0.0
    %5859 = vmatmul.mubr.f32.gmra.mxu0 %v5662
    %v5860 = vpop.f32.mrf.mxu0
    %v5861 = vadd.f32 %v5527, %v5860
    %v5862 = vpop.f32.mrf.mxu0
    %v5863 = vadd.f32 %v5531, %v5862
    %5864 = vmatprep.mubr.f32.mxu0 0.0
    %5865 = vmatmul.mubr.f32.gmra.mxu0 %v5664
    %v5866 = vpop.f32.mrf.mxu0
    %v5867 = vadd.f32 %v5527, %v5866
    %v5868 = vpop.f32.mrf.mxu0
    %v5869 = vadd.f32 %v5531, %v5868
    %5870 = vmatprep.mubr.f32.mxu0 0.0
    %5871 = vmatmul.mubr.f32.gmra.mxu0 %v5666
    %v5872 = vpop.f32.mrf.mxu0
    %v5873 = vadd.f32 %v5527, %v5872
    %v5874 = vpop.f32.mrf.mxu0
    %v5875 = vadd.f32 %v5531, %v5874
    %5876 = vmatprep.mubr.f32.mxu0 0.0
    %5877 = vmatmul.mubr.f32.gmra.mxu0 %v5668
    %v5878 = vpop.f32.mrf.mxu0
    %v5879 = vadd.f32 %v5527, %v5878
    %v5880 = vpop.f32.mrf.mxu0
    %v5881 = vadd.f32 %v5531, %v5880
    %5882 = vmatprep.mubr.f32.mxu0 0.0
    %5883 = vmatmul.mubr.f32.gmra.mxu0 %v5670
    %v5884 = vpop.f32.mrf.mxu0
    %v5885 = vadd.f32 %v5527, %v5884
    %v5886 = vpop.f32.mrf.mxu0
    %v5887 = vadd.f32 %v5531, %v5886
    %5888 = vmatprep.mubr.f32.mxu0 0.0
    %5889 = vmatmul.mubr.f32.gmra.mxu0 %v5672
    %v5890 = vpop.f32.mrf.mxu0
    %v5891 = vadd.f32 %v5527, %v5890
    %v5892 = vpop.f32.mrf.mxu0
    %v5893 = vadd.f32 %v5531, %v5892
    %5894 = vmatprep.mubr.f32.mxu0 0.0
    %5895 = vmatmul.mubr.f32.gmra.mxu0 %v5674
    %v5896 = vpop.f32.mrf.mxu0
    %v5897 = vadd.f32 %v5527, %v5896
    %v5898 = vpop.f32.mrf.mxu0
    %v5899 = vadd.f32 %v5531, %v5898
    %5900 = vmatprep.mubr.f32.mxu0 0.0
    %5901 = vmatmul.mubr.f32.gmra.mxu0 %v5676
    %v5902 = vpop.f32.mrf.mxu0
    %v5903 = vadd.f32 %v5527, %v5902
    %v5904 = vpop.f32.mrf.mxu0
    %v5905 = vadd.f32 %v5531, %v5904
    %5906 = vmatprep.mubr.f32.mxu0 0.0
    %5907 = vmatmul.mubr.f32.gmra.mxu0 %v5678
    %v5908 = vpop.f32.mrf.mxu0
    %v5909 = vadd.f32 %v5527, %v5908
    %v5910 = vpop.f32.mrf.mxu0
    %v5911 = vadd.f32 %v5531, %v5910
    %5912 = vmatprep.mubr.f32.mxu0 0.0
    %5913 = vmatmul.mubr.f32.gmra.mxu0 %v5680
    %v5914 = vpop.f32.mrf.mxu0
    %v5915 = vadd.f32 %v5527, %v5914
    %v5916 = vpop.f32.mrf.mxu0
    %v5917 = vadd.f32 %v5531, %v5916
    %5918 = vmatprep.mubr.f32.mxu0 0.0
    %5919 = vmatmul.mubr.f32.gmra.mxu0 %v5682
    %v5920 = vpop.f32.mrf.mxu0
    %v5921 = vadd.f32 %v5527, %v5920
    %v5922 = vpop.f32.mrf.mxu0
    %v5923 = vadd.f32 %v5531, %v5922
    %5924 = vmatprep.mubr.f32.mxu0 0.0
    %5925 = vmatmul.mubr.f32.gmra.mxu0 %v5684
    %v5926 = vpop.f32.mrf.mxu0
    %v5927 = vadd.f32 %v5527, %v5926
    %v5928 = vpop.f32.mrf.mxu0
    %v5929 = vadd.f32 %v5531, %v5928
    %5930 = vmatprep.mubr.f32.mxu0 0.0
    %5931 = vmatmul.mubr.f32.gmra.mxu0 %v5686
    %v5932 = vpop.f32.mrf.mxu0
    %v5933 = vadd.f32 %v5527, %v5932
    %v5934 = vpop.f32.mrf.mxu0
    %v5935 = vadd.f32 %v5531, %v5934
    %5936 = vmatprep.mubr.f32.mxu0 0.0
    %5937 = vmatmul.mubr.f32.gmra.mxu0 %v5688
    %v5938 = vpop.f32.mrf.mxu0
    %v5939 = vadd.f32 %v5527, %v5938
    %v5940 = vpop.f32.mrf.mxu0
    %v5941 = vadd.f32 %v5531, %v5940
    %5942 = vmatprep.mubr.f32.mxu0 0.0
    %5943 = vmatmul.mubr.f32.gmra.mxu0 %v5690
    %v5944 = vpop.f32.mrf.mxu0
    %v5945 = vadd.f32 %v5527, %v5944
    %v5946 = vpop.f32.mrf.mxu0
    %v5947 = vadd.f32 %v5531, %v5946
    %5948 = vdwg.mxu0
    %5949 = vmatprep.subr.mxu0 0.0
    %5950 = vmatpush1.msra.mxu0 0.0
    %5951 = vmatprep.subr.mxu0 0.0
    %5952 = vmatpush1.msra.mxu0 0.0
    %5953 = vmatprep.subr.mxu0 0.0
    %5954 = vmatpush1.msra.mxu0 0.0
    %5955 = vmatprep.subr.mxu0 0.0
    %5956 = vmatpush1.msra.mxu0 0.0
    %5957 = vmatprep.subr.mxu0 0.0
    %5958 = vmatpush1.msra.mxu0 0.0
    %5959 = vmatprep.subr.mxu0 0.0
    %5960 = vmatpush1.msra.mxu0 0.0
    %5961 = vmatprep.subr.mxu0 0.0
    %5962 = vmatpush1.msra.mxu0 0.0
    %5963 = vmatprep.subr.mxu0 0.0
    %5964 = vmatpush1.msra.mxu0 0.0
    %5965 = vmatprep.subr.mxu0 %v5517
    %5966 = vmatpush1.msra.mxu0 %v5516
    %5967 = vmatprep.subr.mxu0 %v5509
    %5968 = vmatpush1.msra.mxu0 %v5508
    %5969 = vmatprep.subr.mxu0 %v5501
    %5970 = vmatpush1.msra.mxu0 %v5500
    %5971 = vmatprep.subr.mxu0 %v5493
    %5972 = vmatpush1.msra.mxu0 %v5492
    %5973 = vmatprep.subr.mxu0 %v5485
    %5974 = vmatpush1.msra.mxu0 %v5484
    %5975 = vmatprep.subr.mxu0 %v5477
    %5976 = vmatpush1.msra.mxu0 %v5476
    %5977 = vmatprep.subr.mxu0 %v5469
    %5978 = vmatpush1.msra.mxu0 %v5468
    %5979 = vmatprep.subr.mxu0 %v5461
    %5980 = vmatpush1.msra.mxu0 %v5460
    %5981 = vmatprep.subr.mxu0 0.0
    %5982 = vmatpush2.msra.mxu0 0.0
    %5983 = vmatprep.subr.mxu0 0.0
    %5984 = vmatpush2.msra.mxu0 0.0
    %5985 = vmatprep.subr.mxu0 0.0
    %5986 = vmatpush2.msra.mxu0 0.0
    %5987 = vmatprep.subr.mxu0 0.0
    %5988 = vmatpush2.msra.mxu0 0.0
    %5989 = vmatprep.subr.mxu0 0.0
    %5990 = vmatpush2.msra.mxu0 0.0
    %5991 = vmatprep.subr.mxu0 0.0
    %5992 = vmatpush2.msra.mxu0 0.0
    %5993 = vmatprep.subr.mxu0 0.0
    %5994 = vmatpush2.msra.mxu0 0.0
    %5995 = vmatprep.subr.mxu0 0.0
    %5996 = vmatpush2.msra.mxu0 0.0
    %5997 = vmatprep.subr.mxu0 0.0
    %5998 = vmatpush2.msra.mxu0 0.0
    %5999 = vmatprep.subr.mxu0 0.0
    %6000 = vmatpush2.msra.mxu0 0.0
    %6001 = vmatprep.subr.mxu0 0.0
    %6002 = vmatpush2.msra.mxu0 0.0
    %6003 = vmatprep.subr.mxu0 0.0
    %6004 = vmatpush2.msra.mxu0 0.0
    %6005 = vmatprep.subr.mxu0 0.0
    %6006 = vmatpush2.msra.mxu0 0.0
    %6007 = vmatprep.subr.mxu0 0.0
    %6008 = vmatpush2.msra.mxu0 0.0
    %6009 = vmatprep.subr.mxu0 0.0
    %6010 = vmatpush2.msra.mxu0 0.0
    %6011 = vmatprep.subr.mxu0 0.0
    %6012 = vmatpush2.msra.mxu0 0.0
    %6013 = vmatprep.mubr.f32.mxu0 0.0
    %6014 = vmatmul.mubr.f32.gmra.mxu0 %v5628
    %v6015 = vpop.f32.mrf.mxu0
    %v6016 = vadd.f32 %v5535, %v6015
    %v6017 = vpop.f32.mrf.mxu0
    %v6018 = vadd.f32 %v5539, %v6017
    %6019 = vmatprep.mubr.f32.mxu0 0.0
    %6020 = vmatmul.mubr.f32.gmra.mxu0 %v5630
    %v6021 = vpop.f32.mrf.mxu0
    %v6022 = vadd.f32 %v5535, %v6021
    %v6023 = vpop.f32.mrf.mxu0
    %v6024 = vadd.f32 %v5539, %v6023
    %6025 = vmatprep.mubr.f32.mxu0 0.0
    %6026 = vmatmul.mubr.f32.gmra.mxu0 %v5632
    %v6027 = vpop.f32.mrf.mxu0
    %v6028 = vadd.f32 %v5535, %v6027
    %v6029 = vpop.f32.mrf.mxu0
    %v6030 = vadd.f32 %v5539, %v6029
    %6031 = vmatprep.mubr.f32.mxu0 0.0
    %6032 = vmatmul.mubr.f32.gmra.mxu0 %v5634
    %v6033 = vpop.f32.mrf.mxu0
    %v6034 = vadd.f32 %v5535, %v6033
    %v6035 = vpop.f32.mrf.mxu0
    %v6036 = vadd.f32 %v5539, %v6035
    %6037 = vmatprep.mubr.f32.mxu0 0.0
    %6038 = vmatmul.mubr.f32.gmra.mxu0 %v5636
    %v6039 = vpop.f32.mrf.mxu0
    %v6040 = vadd.f32 %v5535, %v6039
    %v6041 = vpop.f32.mrf.mxu0
    %v6042 = vadd.f32 %v5539, %v6041
    %6043 = vmatprep.mubr.f32.mxu0 0.0
    %6044 = vmatmul.mubr.f32.gmra.mxu0 %v5638
    %v6045 = vpop.f32.mrf.mxu0
    %v6046 = vadd.f32 %v5535, %v6045
    %v6047 = vpop.f32.mrf.mxu0
    %v6048 = vadd.f32 %v5539, %v6047
    %6049 = vmatprep.mubr.f32.mxu0 0.0
    %6050 = vmatmul.mubr.f32.gmra.mxu0 %v5640
    %v6051 = vpop.f32.mrf.mxu0
    %v6052 = vadd.f32 %v5535, %v6051
    %v6053 = vpop.f32.mrf.mxu0
    %v6054 = vadd.f32 %v5539, %v6053
    %6055 = vmatprep.mubr.f32.mxu0 0.0
    %6056 = vmatmul.mubr.f32.gmra.mxu0 %v5642
    %v6057 = vpop.f32.mrf.mxu0
    %v6058 = vadd.f32 %v5535, %v6057
    %v6059 = vpop.f32.mrf.mxu0
    %v6060 = vadd.f32 %v5539, %v6059
    %6061 = vmatprep.mubr.f32.mxu0 0.0
    %6062 = vmatmul.mubr.f32.gmra.mxu0 %v5644
    %v6063 = vpop.f32.mrf.mxu0
    %v6064 = vadd.f32 %v5535, %v6063
    %v6065 = vpop.f32.mrf.mxu0
    %v6066 = vadd.f32 %v5539, %v6065
    %6067 = vmatprep.mubr.f32.mxu0 0.0
    %6068 = vmatmul.mubr.f32.gmra.mxu0 %v5646
    %v6069 = vpop.f32.mrf.mxu0
    %v6070 = vadd.f32 %v5535, %v6069
    %v6071 = vpop.f32.mrf.mxu0
    %v6072 = vadd.f32 %v5539, %v6071
    %6073 = vmatprep.mubr.f32.mxu0 0.0
    %6074 = vmatmul.mubr.f32.gmra.mxu0 %v5648
    %v6075 = vpop.f32.mrf.mxu0
    %v6076 = vadd.f32 %v5535, %v6075
    %v6077 = vpop.f32.mrf.mxu0
    %v6078 = vadd.f32 %v5539, %v6077
    %6079 = vmatprep.mubr.f32.mxu0 0.0
    %6080 = vmatmul.mubr.f32.gmra.mxu0 %v5650
    %v6081 = vpop.f32.mrf.mxu0
    %v6082 = vadd.f32 %v5535, %v6081
    %v6083 = vpop.f32.mrf.mxu0
    %v6084 = vadd.f32 %v5539, %v6083
    %6085 = vmatprep.mubr.f32.mxu0 0.0
    %6086 = vmatmul.mubr.f32.gmra.mxu0 %v5652
    %v6087 = vpop.f32.mrf.mxu0
    %v6088 = vadd.f32 %v5535, %v6087
    %v6089 = vpop.f32.mrf.mxu0
    %v6090 = vadd.f32 %v5539, %v6089
    %6091 = vmatprep.mubr.f32.mxu0 0.0
    %6092 = vmatmul.mubr.f32.gmra.mxu0 %v5654
    %v6093 = vpop.f32.mrf.mxu0
    %v6094 = vadd.f32 %v5535, %v6093
    %v6095 = vpop.f32.mrf.mxu0
    %v6096 = vadd.f32 %v5539, %v6095
    %6097 = vmatprep.mubr.f32.mxu0 0.0
    %6098 = vmatmul.mubr.f32.gmra.mxu0 %v5656
    %v6099 = vpop.f32.mrf.mxu0
    %v6100 = vadd.f32 %v5535, %v6099
    %v6101 = vpop.f32.mrf.mxu0
    %v6102 = vadd.f32 %v5539, %v6101
    %6103 = vmatprep.mubr.f32.mxu0 0.0
    %6104 = vmatmul.mubr.f32.gmra.mxu0 %v5658
    %v6105 = vpop.f32.mrf.mxu0
    %v6106 = vadd.f32 %v5535, %v6105
    %v6107 = vpop.f32.mrf.mxu0
    %v6108 = vadd.f32 %v5539, %v6107
    %6109 = vmatprep.mubr.f32.mxu0 0.0
    %6110 = vmatmul.mubr.f32.gmra.mxu0 %v5660
    %v6111 = vpop.f32.mrf.mxu0
    %v6112 = vadd.f32 %v5535, %v6111
    %v6113 = vpop.f32.mrf.mxu0
    %v6114 = vadd.f32 %v5539, %v6113
    %6115 = vmatprep.mubr.f32.mxu0 0.0
    %6116 = vmatmul.mubr.f32.gmra.mxu0 %v5662
    %v6117 = vpop.f32.mrf.mxu0
    %v6118 = vadd.f32 %v5535, %v6117
    %v6119 = vpop.f32.mrf.mxu0
    %v6120 = vadd.f32 %v5539, %v6119
    %6121 = vmatprep.mubr.f32.mxu0 0.0
    %6122 = vmatmul.mubr.f32.gmra.mxu0 %v5664
    %v6123 = vpop.f32.mrf.mxu0
    %v6124 = vadd.f32 %v5535, %v6123
    %v6125 = vpop.f32.mrf.mxu0
    %v6126 = vadd.f32 %v5539, %v6125
    %6127 = vmatprep.mubr.f32.mxu0 0.0
    %6128 = vmatmul.mubr.f32.gmra.mxu0 %v5666
    %v6129 = vpop.f32.mrf.mxu0
    %v6130 = vadd.f32 %v5535, %v6129
    %v6131 = vpop.f32.mrf.mxu0
    %v6132 = vadd.f32 %v5539, %v6131
    %6133 = vmatprep.mubr.f32.mxu0 0.0
    %6134 = vmatmul.mubr.f32.gmra.mxu0 %v5668
    %v6135 = vpop.f32.mrf.mxu0
    %v6136 = vadd.f32 %v5535, %v6135
    %v6137 = vpop.f32.mrf.mxu0
    %v6138 = vadd.f32 %v5539, %v6137
    %6139 = vmatprep.mubr.f32.mxu0 0.0
    %6140 = vmatmul.mubr.f32.gmra.mxu0 %v5670
    %v6141 = vpop.f32.mrf.mxu0
    %v6142 = vadd.f32 %v5535, %v6141
    %v6143 = vpop.f32.mrf.mxu0
    %v6144 = vadd.f32 %v5539, %v6143
    %6145 = vmatprep.mubr.f32.mxu0 0.0
    %6146 = vmatmul.mubr.f32.gmra.mxu0 %v5672
    %v6147 = vpop.f32.mrf.mxu0
    %v6148 = vadd.f32 %v5535, %v6147
    %v6149 = vpop.f32.mrf.mxu0
    %v6150 = vadd.f32 %v5539, %v6149
    %6151 = vmatprep.mubr.f32.mxu0 0.0
    %6152 = vmatmul.mubr.f32.gmra.mxu0 %v5674
    %v6153 = vpop.f32.mrf.mxu0
    %v6154 = vadd.f32 %v5535, %v6153
    %v6155 = vpop.f32.mrf.mxu0
    %v6156 = vadd.f32 %v5539, %v6155
    %6157 = vmatprep.mubr.f32.mxu0 0.0
    %6158 = vmatmul.mubr.f32.gmra.mxu0 %v5676
    %v6159 = vpop.f32.mrf.mxu0
    %v6160 = vadd.f32 %v5535, %v6159
    %v6161 = vpop.f32.mrf.mxu0
    %v6162 = vadd.f32 %v5539, %v6161
    %6163 = vmatprep.mubr.f32.mxu0 0.0
    %6164 = vmatmul.mubr.f32.gmra.mxu0 %v5678
    %v6165 = vpop.f32.mrf.mxu0
    %v6166 = vadd.f32 %v5535, %v6165
    %v6167 = vpop.f32.mrf.mxu0
    %v6168 = vadd.f32 %v5539, %v6167
    %6169 = vmatprep.mubr.f32.mxu0 0.0
    %6170 = vmatmul.mubr.f32.gmra.mxu0 %v5680
    %v6171 = vpop.f32.mrf.mxu0
    %v6172 = vadd.f32 %v5535, %v6171
    %v6173 = vpop.f32.mrf.mxu0
    %v6174 = vadd.f32 %v5539, %v6173
    %6175 = vmatprep.mubr.f32.mxu0 0.0
    %6176 = vmatmul.mubr.f32.gmra.mxu0 %v5682
    %v6177 = vpop.f32.mrf.mxu0
    %v6178 = vadd.f32 %v5535, %v6177
    %v6179 = vpop.f32.mrf.mxu0
    %v6180 = vadd.f32 %v5539, %v6179
    %6181 = vmatprep.mubr.f32.mxu0 0.0
    %6182 = vmatmul.mubr.f32.gmra.mxu0 %v5684
    %v6183 = vpop.f32.mrf.mxu0
    %v6184 = vadd.f32 %v5535, %v6183
    %v6185 = vpop.f32.mrf.mxu0
    %v6186 = vadd.f32 %v5539, %v6185
    %6187 = vmatprep.mubr.f32.mxu0 0.0
    %6188 = vmatmul.mubr.f32.gmra.mxu0 %v5686
    %v6189 = vpop.f32.mrf.mxu0
    %v6190 = vadd.f32 %v5535, %v6189
    %v6191 = vpop.f32.mrf.mxu0
    %v6192 = vadd.f32 %v5539, %v6191
    %6193 = vmatprep.mubr.f32.mxu0 0.0
    %6194 = vmatmul.mubr.f32.gmra.mxu0 %v5688
    %v6195 = vpop.f32.mrf.mxu0
    %v6196 = vadd.f32 %v5535, %v6195
    %v6197 = vpop.f32.mrf.mxu0
    %v6198 = vadd.f32 %v5539, %v6197
    %6199 = vmatprep.mubr.f32.mxu0 0.0
    %6200 = vmatmul.mubr.f32.gmra.mxu0 %v5690
    %v6201 = vpop.f32.mrf.mxu0
    %v6202 = vadd.f32 %v5535, %v6201
    %v6203 = vpop.f32.mrf.mxu0
    %v6204 = vadd.f32 %v5539, %v6203
    %6205 = vdwg.mxu0
    %6206 = vmatprep.subr.mxu0 0.0
    %6207 = vmatpush1.msra.mxu0 0.0
    %6208 = vmatprep.subr.mxu0 0.0
    %6209 = vmatpush1.msra.mxu0 0.0
    %6210 = vmatprep.subr.mxu0 0.0
    %6211 = vmatpush1.msra.mxu0 0.0
    %6212 = vmatprep.subr.mxu0 0.0
    %6213 = vmatpush1.msra.mxu0 0.0
    %6214 = vmatprep.subr.mxu0 0.0
    %6215 = vmatpush1.msra.mxu0 0.0
    %6216 = vmatprep.subr.mxu0 0.0
    %6217 = vmatpush1.msra.mxu0 0.0
    %6218 = vmatprep.subr.mxu0 0.0
    %6219 = vmatpush1.msra.mxu0 0.0
    %6220 = vmatprep.subr.mxu0 0.0
    %6221 = vmatpush1.msra.mxu0 0.0
    %6222 = vmatprep.subr.mxu0 %v5519
    %6223 = vmatpush1.msra.mxu0 %v5518
    %6224 = vmatprep.subr.mxu0 %v5511
    %6225 = vmatpush1.msra.mxu0 %v5510
    %6226 = vmatprep.subr.mxu0 %v5503
    %6227 = vmatpush1.msra.mxu0 %v5502
    %6228 = vmatprep.subr.mxu0 %v5495
    %6229 = vmatpush1.msra.mxu0 %v5494
    %6230 = vmatprep.subr.mxu0 %v5487
    %6231 = vmatpush1.msra.mxu0 %v5486
    %6232 = vmatprep.subr.mxu0 %v5479
    %6233 = vmatpush1.msra.mxu0 %v5478
    %6234 = vmatprep.subr.mxu0 %v5471
    %6235 = vmatpush1.msra.mxu0 %v5470
    %6236 = vmatprep.subr.mxu0 %v5463
    %6237 = vmatpush1.msra.mxu0 %v5462
    %6238 = vmatprep.subr.mxu0 0.0
    %6239 = vmatpush2.msra.mxu0 0.0
    %6240 = vmatprep.subr.mxu0 0.0
    %6241 = vmatpush2.msra.mxu0 0.0
    %6242 = vmatprep.subr.mxu0 0.0
    %6243 = vmatpush2.msra.mxu0 0.0
    %6244 = vmatprep.subr.mxu0 0.0
    %6245 = vmatpush2.msra.mxu0 0.0
    %6246 = vmatprep.subr.mxu0 0.0
    %6247 = vmatpush2.msra.mxu0 0.0
    %6248 = vmatprep.subr.mxu0 0.0
    %6249 = vmatpush2.msra.mxu0 0.0
    %6250 = vmatprep.subr.mxu0 0.0
    %6251 = vmatpush2.msra.mxu0 0.0
    %6252 = vmatprep.subr.mxu0 0.0
    %6253 = vmatpush2.msra.mxu0 0.0
    %6254 = vmatprep.subr.mxu0 0.0
    %6255 = vmatpush2.msra.mxu0 0.0
    %6256 = vmatprep.subr.mxu0 0.0
    %6257 = vmatpush2.msra.mxu0 0.0
    %6258 = vmatprep.subr.mxu0 0.0
    %6259 = vmatpush2.msra.mxu0 0.0
    %6260 = vmatprep.subr.mxu0 0.0
    %6261 = vmatpush2.msra.mxu0 0.0
    %6262 = vmatprep.subr.mxu0 0.0
    %6263 = vmatpush2.msra.mxu0 0.0
    %6264 = vmatprep.subr.mxu0 0.0
    %6265 = vmatpush2.msra.mxu0 0.0
    %6266 = vmatprep.subr.mxu0 0.0
    %6267 = vmatpush2.msra.mxu0 0.0
    %6268 = vmatprep.subr.mxu0 0.0
    %6269 = vmatpush2.msra.mxu0 0.0
    %6270 = vmatprep.mubr.f32.mxu0 0.0
    %6271 = vmatmul.mubr.f32.gmra.mxu0 %v5628
    %v6272 = vpop.f32.mrf.mxu0
    %v6273 = vadd.f32 %v5543, %v6272
    %v6274 = vpop.f32.mrf.mxu0
    %v6275 = vadd.f32 %v5547, %v6274
    %6276 = vmatprep.mubr.f32.mxu0 0.0
    %6277 = vmatmul.mubr.f32.gmra.mxu0 %v5630
    %v6278 = vpop.f32.mrf.mxu0
    %v6279 = vadd.f32 %v5543, %v6278
    %v6280 = vpop.f32.mrf.mxu0
    %v6281 = vadd.f32 %v5547, %v6280
    %6282 = vmatprep.mubr.f32.mxu0 0.0
    %6283 = vmatmul.mubr.f32.gmra.mxu0 %v5632
    %v6284 = vpop.f32.mrf.mxu0
    %v6285 = vadd.f32 %v5543, %v6284
    %v6286 = vpop.f32.mrf.mxu0
    %v6287 = vadd.f32 %v5547, %v6286
    %6288 = vmatprep.mubr.f32.mxu0 0.0
    %6289 = vmatmul.mubr.f32.gmra.mxu0 %v5634
    %v6290 = vpop.f32.mrf.mxu0
    %v6291 = vadd.f32 %v5543, %v6290
    %v6292 = vpop.f32.mrf.mxu0
    %v6293 = vadd.f32 %v5547, %v6292
    %6294 = vmatprep.mubr.f32.mxu0 0.0
    %6295 = vmatmul.mubr.f32.gmra.mxu0 %v5636
    %v6296 = vpop.f32.mrf.mxu0
    %v6297 = vadd.f32 %v5543, %v6296
    %v6298 = vpop.f32.mrf.mxu0
    %v6299 = vadd.f32 %v5547, %v6298
    %6300 = vmatprep.mubr.f32.mxu0 0.0
    %6301 = vmatmul.mubr.f32.gmra.mxu0 %v5638
    %v6302 = vpop.f32.mrf.mxu0
    %v6303 = vadd.f32 %v5543, %v6302
    %v6304 = vpop.f32.mrf.mxu0
    %v6305 = vadd.f32 %v5547, %v6304
    %6306 = vmatprep.mubr.f32.mxu0 0.0
    %6307 = vmatmul.mubr.f32.gmra.mxu0 %v5640
    %v6308 = vpop.f32.mrf.mxu0
    %v6309 = vadd.f32 %v5543, %v6308
    %v6310 = vpop.f32.mrf.mxu0
    %v6311 = vadd.f32 %v5547, %v6310
    %6312 = vmatprep.mubr.f32.mxu0 0.0
    %6313 = vmatmul.mubr.f32.gmra.mxu0 %v5642
    %v6314 = vpop.f32.mrf.mxu0
    %v6315 = vadd.f32 %v5543, %v6314
    %v6316 = vpop.f32.mrf.mxu0
    %v6317 = vadd.f32 %v5547, %v6316
    %6318 = vmatprep.mubr.f32.mxu0 0.0
    %6319 = vmatmul.mubr.f32.gmra.mxu0 %v5644
    %v6320 = vpop.f32.mrf.mxu0
    %v6321 = vadd.f32 %v5543, %v6320
    %v6322 = vpop.f32.mrf.mxu0
    %v6323 = vadd.f32 %v5547, %v6322
    %6324 = vmatprep.mubr.f32.mxu0 0.0
    %6325 = vmatmul.mubr.f32.gmra.mxu0 %v5646
    %v6326 = vpop.f32.mrf.mxu0
    %v6327 = vadd.f32 %v5543, %v6326
    %v6328 = vpop.f32.mrf.mxu0
    %v6329 = vadd.f32 %v5547, %v6328
    %6330 = vmatprep.mubr.f32.mxu0 0.0
    %6331 = vmatmul.mubr.f32.gmra.mxu0 %v5648
    %v6332 = vpop.f32.mrf.mxu0
    %v6333 = vadd.f32 %v5543, %v6332
    %v6334 = vpop.f32.mrf.mxu0
    %v6335 = vadd.f32 %v5547, %v6334
    %6336 = vmatprep.mubr.f32.mxu0 0.0
    %6337 = vmatmul.mubr.f32.gmra.mxu0 %v5650
    %v6338 = vpop.f32.mrf.mxu0
    %v6339 = vadd.f32 %v5543, %v6338
    %v6340 = vpop.f32.mrf.mxu0
    %v6341 = vadd.f32 %v5547, %v6340
    %6342 = vmatprep.mubr.f32.mxu0 0.0
    %6343 = vmatmul.mubr.f32.gmra.mxu0 %v5652
    %v6344 = vpop.f32.mrf.mxu0
    %v6345 = vadd.f32 %v5543, %v6344
    %v6346 = vpop.f32.mrf.mxu0
    %v6347 = vadd.f32 %v5547, %v6346
    %6348 = vmatprep.mubr.f32.mxu0 0.0
    %6349 = vmatmul.mubr.f32.gmra.mxu0 %v5654
    %v6350 = vpop.f32.mrf.mxu0
    %v6351 = vadd.f32 %v5543, %v6350
    %v6352 = vpop.f32.mrf.mxu0
    %v6353 = vadd.f32 %v5547, %v6352
    %6354 = vmatprep.mubr.f32.mxu0 0.0
    %6355 = vmatmul.mubr.f32.gmra.mxu0 %v5656
    %v6356 = vpop.f32.mrf.mxu0
    %v6357 = vadd.f32 %v5543, %v6356
    %v6358 = vpop.f32.mrf.mxu0
    %v6359 = vadd.f32 %v5547, %v6358
    %6360 = vmatprep.mubr.f32.mxu0 0.0
    %6361 = vmatmul.mubr.f32.gmra.mxu0 %v5658
    %v6362 = vpop.f32.mrf.mxu0
    %v6363 = vadd.f32 %v5543, %v6362
    %v6364 = vpop.f32.mrf.mxu0
    %v6365 = vadd.f32 %v5547, %v6364
    %6366 = vmatprep.mubr.f32.mxu0 0.0
    %6367 = vmatmul.mubr.f32.gmra.mxu0 %v5660
    %v6368 = vpop.f32.mrf.mxu0
    %v6369 = vadd.f32 %v5543, %v6368
    %v6370 = vpop.f32.mrf.mxu0
    %v6371 = vadd.f32 %v5547, %v6370
    %6372 = vmatprep.mubr.f32.mxu0 0.0
    %6373 = vmatmul.mubr.f32.gmra.mxu0 %v5662
    %v6374 = vpop.f32.mrf.mxu0
    %v6375 = vadd.f32 %v5543, %v6374
    %v6376 = vpop.f32.mrf.mxu0
    %v6377 = vadd.f32 %v5547, %v6376
    %6378 = vmatprep.mubr.f32.mxu0 0.0
    %6379 = vmatmul.mubr.f32.gmra.mxu0 %v5664
    %v6380 = vpop.f32.mrf.mxu0
    %v6381 = vadd.f32 %v5543, %v6380
    %v6382 = vpop.f32.mrf.mxu0
    %v6383 = vadd.f32 %v5547, %v6382
    %6384 = vmatprep.mubr.f32.mxu0 0.0
    %6385 = vmatmul.mubr.f32.gmra.mxu0 %v5666
    %v6386 = vpop.f32.mrf.mxu0
    %v6387 = vadd.f32 %v5543, %v6386
    %v6388 = vpop.f32.mrf.mxu0
    %v6389 = vadd.f32 %v5547, %v6388
    %6390 = vmatprep.mubr.f32.mxu0 0.0
    %6391 = vmatmul.mubr.f32.gmra.mxu0 %v5668
    %v6392 = vpop.f32.mrf.mxu0
    %v6393 = vadd.f32 %v5543, %v6392
    %v6394 = vpop.f32.mrf.mxu0
    %v6395 = vadd.f32 %v5547, %v6394
    %6396 = vmatprep.mubr.f32.mxu0 0.0
    %6397 = vmatmul.mubr.f32.gmra.mxu0 %v5670
    %v6398 = vpop.f32.mrf.mxu0
    %v6399 = vadd.f32 %v5543, %v6398
    %v6400 = vpop.f32.mrf.mxu0
    %v6401 = vadd.f32 %v5547, %v6400
    %6402 = vmatprep.mubr.f32.mxu0 0.0
    %6403 = vmatmul.mubr.f32.gmra.mxu0 %v5672
    %v6404 = vpop.f32.mrf.mxu0
    %v6405 = vadd.f32 %v5543, %v6404
    %v6406 = vpop.f32.mrf.mxu0
    %v6407 = vadd.f32 %v5547, %v6406
    %6408 = vmatprep.mubr.f32.mxu0 0.0
    %6409 = vmatmul.mubr.f32.gmra.mxu0 %v5674
    %v6410 = vpop.f32.mrf.mxu0
    %v6411 = vadd.f32 %v5543, %v6410
    %v6412 = vpop.f32.mrf.mxu0
    %v6413 = vadd.f32 %v5547, %v6412
    %6414 = vmatprep.mubr.f32.mxu0 0.0
    %6415 = vmatmul.mubr.f32.gmra.mxu0 %v5676
    %v6416 = vpop.f32.mrf.mxu0
    %v6417 = vadd.f32 %v5543, %v6416
    %v6418 = vpop.f32.mrf.mxu0
    %v6419 = vadd.f32 %v5547, %v6418
    %6420 = vmatprep.mubr.f32.mxu0 0.0
    %6421 = vmatmul.mubr.f32.gmra.mxu0 %v5678
    %v6422 = vpop.f32.mrf.mxu0
    %v6423 = vadd.f32 %v5543, %v6422
    %v6424 = vpop.f32.mrf.mxu0
    %v6425 = vadd.f32 %v5547, %v6424
    %6426 = vmatprep.mubr.f32.mxu0 0.0
    %6427 = vmatmul.mubr.f32.gmra.mxu0 %v5680
    %v6428 = vpop.f32.mrf.mxu0
    %v6429 = vadd.f32 %v5543, %v6428
    %v6430 = vpop.f32.mrf.mxu0
    %v6431 = vadd.f32 %v5547, %v6430
    %6432 = vmatprep.mubr.f32.mxu0 0.0
    %6433 = vmatmul.mubr.f32.gmra.mxu0 %v5682
    %v6434 = vpop.f32.mrf.mxu0
    %v6435 = vadd.f32 %v5543, %v6434
    %v6436 = vpop.f32.mrf.mxu0
    %v6437 = vadd.f32 %v5547, %v6436
    %6438 = vmatprep.mubr.f32.mxu0 0.0
    %6439 = vmatmul.mubr.f32.gmra.mxu0 %v5684
    %v6440 = vpop.f32.mrf.mxu0
    %v6441 = vadd.f32 %v5543, %v6440
    %v6442 = vpop.f32.mrf.mxu0
    %v6443 = vadd.f32 %v5547, %v6442
    %6444 = vmatprep.mubr.f32.mxu0 0.0
    %6445 = vmatmul.mubr.f32.gmra.mxu0 %v5686
    %v6446 = vpop.f32.mrf.mxu0
    %v6447 = vadd.f32 %v5543, %v6446
    %v6448 = vpop.f32.mrf.mxu0
    %v6449 = vadd.f32 %v5547, %v6448
    %6450 = vmatprep.mubr.f32.mxu0 0.0
    %6451 = vmatmul.mubr.f32.gmra.mxu0 %v5688
    %v6452 = vpop.f32.mrf.mxu0
    %v6453 = vadd.f32 %v5543, %v6452
    %v6454 = vpop.f32.mrf.mxu0
    %v6455 = vadd.f32 %v5547, %v6454
    %6456 = vmatprep.mubr.f32.mxu0 0.0
    %6457 = vmatmul.mubr.f32.gmra.mxu0 %v5690
    %v6458 = vpop.f32.mrf.mxu0
    %v6459 = vadd.f32 %v5543, %v6458
    %v6460 = vpop.f32.mrf.mxu0
    %v6461 = vadd.f32 %v5547, %v6460
    %6462 = vdwg.mxu0
    %6463 = vmatprep.subr.mxu0 0.0
    %6464 = vmatpush1.msra.mxu0 0.0
    %6465 = vmatprep.subr.mxu0 0.0
    %6466 = vmatpush1.msra.mxu0 0.0
    %6467 = vmatprep.subr.mxu0 0.0
    %6468 = vmatpush1.msra.mxu0 0.0
    %6469 = vmatprep.subr.mxu0 0.0
    %6470 = vmatpush1.msra.mxu0 0.0
    %6471 = vmatprep.subr.mxu0 0.0
    %6472 = vmatpush1.msra.mxu0 0.0
    %6473 = vmatprep.subr.mxu0 0.0
    %6474 = vmatpush1.msra.mxu0 0.0
    %6475 = vmatprep.subr.mxu0 0.0
    %6476 = vmatpush1.msra.mxu0 0.0
    %6477 = vmatprep.subr.mxu0 0.0
    %6478 = vmatpush1.msra.mxu0 0.0
    %6479 = vmatprep.subr.mxu0 %v5521
    %6480 = vmatpush1.msra.mxu0 %v5520
    %6481 = vmatprep.subr.mxu0 %v5513
    %6482 = vmatpush1.msra.mxu0 %v5512
    %6483 = vmatprep.subr.mxu0 %v5505
    %6484 = vmatpush1.msra.mxu0 %v5504
    %6485 = vmatprep.subr.mxu0 %v5497
    %6486 = vmatpush1.msra.mxu0 %v5496
    %6487 = vmatprep.subr.mxu0 %v5489
    %6488 = vmatpush1.msra.mxu0 %v5488
    %6489 = vmatprep.subr.mxu0 %v5481
    %6490 = vmatpush1.msra.mxu0 %v5480
    %6491 = vmatprep.subr.mxu0 %v5473
    %6492 = vmatpush1.msra.mxu0 %v5472
    %6493 = vmatprep.subr.mxu0 %v5465
    %6494 = vmatpush1.msra.mxu0 %v5464
    %6495 = vmatprep.subr.mxu0 0.0
    %6496 = vmatpush2.msra.mxu0 0.0
    %6497 = vmatprep.subr.mxu0 0.0
    %6498 = vmatpush2.msra.mxu0 0.0
    %6499 = vmatprep.subr.mxu0 0.0
    %6500 = vmatpush2.msra.mxu0 0.0
    %6501 = vmatprep.subr.mxu0 0.0
    %6502 = vmatpush2.msra.mxu0 0.0
    %6503 = vmatprep.subr.mxu0 0.0
    %6504 = vmatpush2.msra.mxu0 0.0
    %6505 = vmatprep.subr.mxu0 0.0
    %6506 = vmatpush2.msra.mxu0 0.0
    %6507 = vmatprep.subr.mxu0 0.0
    %6508 = vmatpush2.msra.mxu0 0.0
    %6509 = vmatprep.subr.mxu0 0.0
    %6510 = vmatpush2.msra.mxu0 0.0
    %6511 = vmatprep.subr.mxu0 0.0
    %6512 = vmatpush2.msra.mxu0 0.0
    %6513 = vmatprep.subr.mxu0 0.0
    %6514 = vmatpush2.msra.mxu0 0.0
    %6515 = vmatprep.subr.mxu0 0.0
    %6516 = vmatpush2.msra.mxu0 0.0
    %6517 = vmatprep.subr.mxu0 0.0
    %6518 = vmatpush2.msra.mxu0 0.0
    %6519 = vmatprep.subr.mxu0 0.0
    %6520 = vmatpush2.msra.mxu0 0.0
    %6521 = vmatprep.subr.mxu0 0.0
    %6522 = vmatpush2.msra.mxu0 0.0
    %6523 = vmatprep.subr.mxu0 0.0
    %6524 = vmatpush2.msra.mxu0 0.0
    %6525 = vmatprep.subr.mxu0 0.0
    %6526 = vmatpush2.msra.mxu0 0.0
    %6527 = vmatprep.mubr.f32.mxu0 0.0
    %6528 = vmatmul.mubr.f32.gmra.mxu0 %v5628
    %v6529 = vpop.f32.mrf.mxu0
    %v6530 = vadd.f32 %v5551, %v6529
    %v6531 = vpop.f32.mrf.mxu0
    %v6532 = vadd.f32 %v5555, %v6531
    %6533 = vmatprep.mubr.f32.mxu0 0.0
    %6534 = vmatmul.mubr.f32.gmra.mxu0 %v5630
    %v6535 = vpop.f32.mrf.mxu0
    %v6536 = vadd.f32 %v5551, %v6535
    %v6537 = vpop.f32.mrf.mxu0
    %v6538 = vadd.f32 %v5555, %v6537
    %6539 = vmatprep.mubr.f32.mxu0 0.0
    %6540 = vmatmul.mubr.f32.gmra.mxu0 %v5632
    %v6541 = vpop.f32.mrf.mxu0
    %v6542 = vadd.f32 %v5551, %v6541
    %v6543 = vpop.f32.mrf.mxu0
    %v6544 = vadd.f32 %v5555, %v6543
    %6545 = vmatprep.mubr.f32.mxu0 0.0
    %6546 = vmatmul.mubr.f32.gmra.mxu0 %v5634
    %v6547 = vpop.f32.mrf.mxu0
    %v6548 = vadd.f32 %v5551, %v6547
    %v6549 = vpop.f32.mrf.mxu0
    %v6550 = vadd.f32 %v5555, %v6549
    %6551 = vmatprep.mubr.f32.mxu0 0.0
    %6552 = vmatmul.mubr.f32.gmra.mxu0 %v5636
    %v6553 = vpop.f32.mrf.mxu0
    %v6554 = vadd.f32 %v5551, %v6553
    %v6555 = vpop.f32.mrf.mxu0
    %v6556 = vadd.f32 %v5555, %v6555
    %6557 = vmatprep.mubr.f32.mxu0 0.0
    %6558 = vmatmul.mubr.f32.gmra.mxu0 %v5638
    %v6559 = vpop.f32.mrf.mxu0
    %v6560 = vadd.f32 %v5551, %v6559
    %v6561 = vpop.f32.mrf.mxu0
    %v6562 = vadd.f32 %v5555, %v6561
    %6563 = vmatprep.mubr.f32.mxu0 0.0
    %6564 = vmatmul.mubr.f32.gmra.mxu0 %v5640
    %v6565 = vpop.f32.mrf.mxu0
    %v6566 = vadd.f32 %v5551, %v6565
    %v6567 = vpop.f32.mrf.mxu0
    %v6568 = vadd.f32 %v5555, %v6567
    %6569 = vmatprep.mubr.f32.mxu0 0.0
    %6570 = vmatmul.mubr.f32.gmra.mxu0 %v5642
    %v6571 = vpop.f32.mrf.mxu0
    %v6572 = vadd.f32 %v5551, %v6571
    %v6573 = vpop.f32.mrf.mxu0
    %v6574 = vadd.f32 %v5555, %v6573
    %6575 = vmatprep.mubr.f32.mxu0 0.0
    %6576 = vmatmul.mubr.f32.gmra.mxu0 %v5644
    %v6577 = vpop.f32.mrf.mxu0
    %v6578 = vadd.f32 %v5551, %v6577
    %v6579 = vpop.f32.mrf.mxu0
    %v6580 = vadd.f32 %v5555, %v6579
    %6581 = vmatprep.mubr.f32.mxu0 0.0
    %6582 = vmatmul.mubr.f32.gmra.mxu0 %v5646
    %v6583 = vpop.f32.mrf.mxu0
    %v6584 = vadd.f32 %v5551, %v6583
    %v6585 = vpop.f32.mrf.mxu0
    %v6586 = vadd.f32 %v5555, %v6585
    %6587 = vmatprep.mubr.f32.mxu0 0.0
    %6588 = vmatmul.mubr.f32.gmra.mxu0 %v5648
    %v6589 = vpop.f32.mrf.mxu0
    %v6590 = vadd.f32 %v5551, %v6589
    %v6591 = vpop.f32.mrf.mxu0
    %v6592 = vadd.f32 %v5555, %v6591
    %6593 = vmatprep.mubr.f32.mxu0 0.0
    %6594 = vmatmul.mubr.f32.gmra.mxu0 %v5650
    %v6595 = vpop.f32.mrf.mxu0
    %v6596 = vadd.f32 %v5551, %v6595
    %v6597 = vpop.f32.mrf.mxu0
    %v6598 = vadd.f32 %v5555, %v6597
    %6599 = vmatprep.mubr.f32.mxu0 0.0
    %6600 = vmatmul.mubr.f32.gmra.mxu0 %v5652
    %v6601 = vpop.f32.mrf.mxu0
    %v6602 = vadd.f32 %v5551, %v6601
    %v6603 = vpop.f32.mrf.mxu0
    %v6604 = vadd.f32 %v5555, %v6603
    %6605 = vmatprep.mubr.f32.mxu0 0.0
    %6606 = vmatmul.mubr.f32.gmra.mxu0 %v5654
    %v6607 = vpop.f32.mrf.mxu0
    %v6608 = vadd.f32 %v5551, %v6607
    %v6609 = vpop.f32.mrf.mxu0
    %v6610 = vadd.f32 %v5555, %v6609
    %6611 = vmatprep.mubr.f32.mxu0 0.0
    %6612 = vmatmul.mubr.f32.gmra.mxu0 %v5656
    %v6613 = vpop.f32.mrf.mxu0
    %v6614 = vadd.f32 %v5551, %v6613
    %v6615 = vpop.f32.mrf.mxu0
    %v6616 = vadd.f32 %v5555, %v6615
    %6617 = vmatprep.mubr.f32.mxu0 0.0
    %6618 = vmatmul.mubr.f32.gmra.mxu0 %v5658
    %v6619 = vpop.f32.mrf.mxu0
    %v6620 = vadd.f32 %v5551, %v6619
    %v6621 = vpop.f32.mrf.mxu0
    %v6622 = vadd.f32 %v5555, %v6621
    %6623 = vmatprep.mubr.f32.mxu0 0.0
    %6624 = vmatmul.mubr.f32.gmra.mxu0 %v5660
    %v6625 = vpop.f32.mrf.mxu0
    %v6626 = vadd.f32 %v5551, %v6625
    %v6627 = vpop.f32.mrf.mxu0
    %v6628 = vadd.f32 %v5555, %v6627
    %6629 = vmatprep.mubr.f32.mxu0 0.0
    %6630 = vmatmul.mubr.f32.gmra.mxu0 %v5662
    %v6631 = vpop.f32.mrf.mxu0
    %v6632 = vadd.f32 %v5551, %v6631
    %v6633 = vpop.f32.mrf.mxu0
    %v6634 = vadd.f32 %v5555, %v6633
    %6635 = vmatprep.mubr.f32.mxu0 0.0
    %6636 = vmatmul.mubr.f32.gmra.mxu0 %v5664
    %v6637 = vpop.f32.mrf.mxu0
    %v6638 = vadd.f32 %v5551, %v6637
    %v6639 = vpop.f32.mrf.mxu0
    %v6640 = vadd.f32 %v5555, %v6639
    %6641 = vmatprep.mubr.f32.mxu0 0.0
    %6642 = vmatmul.mubr.f32.gmra.mxu0 %v5666
    %v6643 = vpop.f32.mrf.mxu0
    %v6644 = vadd.f32 %v5551, %v6643
    %v6645 = vpop.f32.mrf.mxu0
    %v6646 = vadd.f32 %v5555, %v6645
    %6647 = vmatprep.mubr.f32.mxu0 0.0
    %6648 = vmatmul.mubr.f32.gmra.mxu0 %v5668
    %v6649 = vpop.f32.mrf.mxu0
    %v6650 = vadd.f32 %v5551, %v6649
    %v6651 = vpop.f32.mrf.mxu0
    %v6652 = vadd.f32 %v5555, %v6651
    %6653 = vmatprep.mubr.f32.mxu0 0.0
    %6654 = vmatmul.mubr.f32.gmra.mxu0 %v5670
    %v6655 = vpop.f32.mrf.mxu0
    %v6656 = vadd.f32 %v5551, %v6655
    %v6657 = vpop.f32.mrf.mxu0
    %v6658 = vadd.f32 %v5555, %v6657
    %6659 = vmatprep.mubr.f32.mxu0 0.0
    %6660 = vmatmul.mubr.f32.gmra.mxu0 %v5672
    %v6661 = vpop.f32.mrf.mxu0
    %v6662 = vadd.f32 %v5551, %v6661
    %v6663 = vpop.f32.mrf.mxu0
    %v6664 = vadd.f32 %v5555, %v6663
    %6665 = vmatprep.mubr.f32.mxu0 0.0
    %6666 = vmatmul.mubr.f32.gmra.mxu0 %v5674
    %v6667 = vpop.f32.mrf.mxu0
    %v6668 = vadd.f32 %v5551, %v6667
    %v6669 = vpop.f32.mrf.mxu0
    %v6670 = vadd.f32 %v5555, %v6669
    %6671 = vmatprep.mubr.f32.mxu0 0.0
    %6672 = vmatmul.mubr.f32.gmra.mxu0 %v5676
    %v6673 = vpop.f32.mrf.mxu0
    %v6674 = vadd.f32 %v5551, %v6673
    %v6675 = vpop.f32.mrf.mxu0
    %v6676 = vadd.f32 %v5555, %v6675
    %6677 = vmatprep.mubr.f32.mxu0 0.0
    %6678 = vmatmul.mubr.f32.gmra.mxu0 %v5678
    %v6679 = vpop.f32.mrf.mxu0
    %v6680 = vadd.f32 %v5551, %v6679
    %v6681 = vpop.f32.mrf.mxu0
    %v6682 = vadd.f32 %v5555, %v6681
    %6683 = vmatprep.mubr.f32.mxu0 0.0
    %6684 = vmatmul.mubr.f32.gmra.mxu0 %v5680
    %v6685 = vpop.f32.mrf.mxu0
    %v6686 = vadd.f32 %v5551, %v6685
    %v6687 = vpop.f32.mrf.mxu0
    %v6688 = vadd.f32 %v5555, %v6687
    %6689 = vmatprep.mubr.f32.mxu0 0.0
    %6690 = vmatmul.mubr.f32.gmra.mxu0 %v5682
    %v6691 = vpop.f32.mrf.mxu0
    %v6692 = vadd.f32 %v5551, %v6691
    %v6693 = vpop.f32.mrf.mxu0
    %v6694 = vadd.f32 %v5555, %v6693
    %6695 = vmatprep.mubr.f32.mxu0 0.0
    %6696 = vmatmul.mubr.f32.gmra.mxu0 %v5684
    %v6697 = vpop.f32.mrf.mxu0
    %v6698 = vadd.f32 %v5551, %v6697
    %v6699 = vpop.f32.mrf.mxu0
    %v6700 = vadd.f32 %v5555, %v6699
    %6701 = vmatprep.mubr.f32.mxu0 0.0
    %6702 = vmatmul.mubr.f32.gmra.mxu0 %v5686
    %v6703 = vpop.f32.mrf.mxu0
    %v6704 = vadd.f32 %v5551, %v6703
    %v6705 = vpop.f32.mrf.mxu0
    %v6706 = vadd.f32 %v5555, %v6705
    %6707 = vmatprep.mubr.f32.mxu0 0.0
    %6708 = vmatmul.mubr.f32.gmra.mxu0 %v5688
    %v6709 = vpop.f32.mrf.mxu0
    %v6710 = vadd.f32 %v5551, %v6709
    %v6711 = vpop.f32.mrf.mxu0
    %v6712 = vadd.f32 %v5555, %v6711
    %6713 = vmatprep.mubr.f32.mxu0 0.0
    %6714 = vmatmul.mubr.f32.gmra.mxu0 %v5690
    %v6715 = vpop.f32.mrf.mxu0
    %v6716 = vadd.f32 %v5551, %v6715
    %v6717 = vpop.f32.mrf.mxu0
    %v6718 = vadd.f32 %v5555, %v6717
    %6719 = vdwg.mxu0
    %v6720 = vand.u32 2147483647, %v5759
    %v6721 = vand.u32 2147483647, %v5761
    %v6722 = vand.u32 2147483647, %v6016
    %v6723 = vand.u32 2147483647, %v6018
    %v6724 = vand.u32 2147483647, %v6273
    %v6725 = vand.u32 2147483647, %v6275
    %v6726 = vand.u32 2147483647, %v6530
    %v6727 = vand.u32 2147483647, %v6532
    %v6728 = vand.u32 2147483647, %v5765
    %v6729 = vand.u32 2147483647, %v5767
    %v6730 = vand.u32 2147483647, %v6022
    %v6731 = vand.u32 2147483647, %v6024
    %v6732 = vand.u32 2147483647, %v6279
    %v6733 = vand.u32 2147483647, %v6281
    %v6734 = vand.u32 2147483647, %v6536
    %v6735 = vand.u32 2147483647, %v6538
    %v6736 = vand.u32 2147483647, %v5771
    %v6737 = vand.u32 2147483647, %v5773
    %v6738 = vand.u32 2147483647, %v6028
    %v6739 = vand.u32 2147483647, %v6030
    %v6740 = vand.u32 2147483647, %v6285
    %v6741 = vand.u32 2147483647, %v6287
    %v6742 = vand.u32 2147483647, %v6542
    %v6743 = vand.u32 2147483647, %v6544
    %v6744 = vand.u32 2147483647, %v5777
    %v6745 = vand.u32 2147483647, %v5779
    %v6746 = vand.u32 2147483647, %v6034
    %v6747 = vand.u32 2147483647, %v6036
    %v6748 = vand.u32 2147483647, %v6291
    %v6749 = vand.u32 2147483647, %v6293
    %v6750 = vand.u32 2147483647, %v6548
    %v6751 = vand.u32 2147483647, %v6550
    %v6752 = vand.u32 2147483647, %v5783
    %v6753 = vand.u32 2147483647, %v5785
    %v6754 = vand.u32 2147483647, %v6040
    %v6755 = vand.u32 2147483647, %v6042
    %v6756 = vand.u32 2147483647, %v6297
    %v6757 = vand.u32 2147483647, %v6299
    %v6758 = vand.u32 2147483647, %v6554
    %v6759 = vand.u32 2147483647, %v6556
    %v6760 = vand.u32 2147483647, %v5789
    %v6761 = vand.u32 2147483647, %v5791
    %v6762 = vand.u32 2147483647, %v6046
    %v6763 = vand.u32 2147483647, %v6048
    %v6764 = vand.u32 2147483647, %v6303
    %v6765 = vand.u32 2147483647, %v6305
    %v6766 = vand.u32 2147483647, %v6560
    %v6767 = vand.u32 2147483647, %v6562
    %v6768 = vand.u32 2147483647, %v5795
    %v6769 = vand.u32 2147483647, %v5797
    %v6770 = vand.u32 2147483647, %v6052
    %v6771 = vand.u32 2147483647, %v6054
    %v6772 = vand.u32 2147483647, %v6309
    %v6773 = vand.u32 2147483647, %v6311
    %v6774 = vand.u32 2147483647, %v6566
    %v6775 = vand.u32 2147483647, %v6568
    %v6776 = vand.u32 2147483647, %v5801
    %v6777 = vand.u32 2147483647, %v5803
    %v6778 = vand.u32 2147483647, %v6058
    %v6779 = vand.u32 2147483647, %v6060
    %v6780 = vand.u32 2147483647, %v6315
    %v6781 = vand.u32 2147483647, %v6317
    %v6782 = vand.u32 2147483647, %v6572
    %v6783 = vand.u32 2147483647, %v6574
    %v6784 = vand.u32 2147483647, %v5807
    %v6785 = vand.u32 2147483647, %v5809
    %v6786 = vand.u32 2147483647, %v6064
    %v6787 = vand.u32 2147483647, %v6066
    %v6788 = vand.u32 2147483647, %v6321
    %v6789 = vand.u32 2147483647, %v6323
    %v6790 = vand.u32 2147483647, %v6578
    %v6791 = vand.u32 2147483647, %v6580
    %v6792 = vand.u32 2147483647, %v5813
    %v6793 = vand.u32 2147483647, %v5815
    %v6794 = vand.u32 2147483647, %v6070
    %v6795 = vand.u32 2147483647, %v6072
    %v6796 = vand.u32 2147483647, %v6327
    %v6797 = vand.u32 2147483647, %v6329
    %v6798 = vand.u32 2147483647, %v6584
    %v6799 = vand.u32 2147483647, %v6586
    %v6800 = vand.u32 2147483647, %v5819
    %v6801 = vand.u32 2147483647, %v5821
    %v6802 = vand.u32 2147483647, %v6076
    %v6803 = vand.u32 2147483647, %v6078
    %v6804 = vand.u32 2147483647, %v6333
    %v6805 = vand.u32 2147483647, %v6335
    %v6806 = vand.u32 2147483647, %v6590
    %v6807 = vand.u32 2147483647, %v6592
    %v6808 = vand.u32 2147483647, %v5825
    %v6809 = vand.u32 2147483647, %v5827
    %v6810 = vand.u32 2147483647, %v6082
    %v6811 = vand.u32 2147483647, %v6084
    %v6812 = vand.u32 2147483647, %v6339
    %v6813 = vand.u32 2147483647, %v6341
    %v6814 = vand.u32 2147483647, %v6596
    %v6815 = vand.u32 2147483647, %v6598
    %v6816 = vand.u32 2147483647, %v5831
    %v6817 = vand.u32 2147483647, %v5833
    %v6818 = vand.u32 2147483647, %v6088
    %v6819 = vand.u32 2147483647, %v6090
    %v6820 = vand.u32 2147483647, %v6345
    %v6821 = vand.u32 2147483647, %v6347
    %v6822 = vand.u32 2147483647, %v6602
    %v6823 = vand.u32 2147483647, %v6604
    %v6824 = vand.u32 2147483647, %v5837
    %v6825 = vand.u32 2147483647, %v5839
    %v6826 = vand.u32 2147483647, %v6094
    %v6827 = vand.u32 2147483647, %v6096
    %v6828 = vand.u32 2147483647, %v6351
    %v6829 = vand.u32 2147483647, %v6353
    %v6830 = vand.u32 2147483647, %v6608
    %v6831 = vand.u32 2147483647, %v6610
    %v6832 = vand.u32 2147483647, %v5843
    %v6833 = vand.u32 2147483647, %v5845
    %v6834 = vand.u32 2147483647, %v6100
    %v6835 = vand.u32 2147483647, %v6102
    %v6836 = vand.u32 2147483647, %v6357
    %v6837 = vand.u32 2147483647, %v6359
    %v6838 = vand.u32 2147483647, %v6614
    %v6839 = vand.u32 2147483647, %v6616
    %v6840 = vand.u32 2147483647, %v5849
    %v6841 = vand.u32 2147483647, %v5851
    %v6842 = vand.u32 2147483647, %v6106
    %v6843 = vand.u32 2147483647, %v6108
    %v6844 = vand.u32 2147483647, %v6363
    %v6845 = vand.u32 2147483647, %v6365
    %v6846 = vand.u32 2147483647, %v6620
    %v6847 = vand.u32 2147483647, %v6622
    %v6848 = vand.u32 2147483647, %v5855
    %v6849 = vand.u32 2147483647, %v5857
    %v6850 = vand.u32 2147483647, %v6112
    %v6851 = vand.u32 2147483647, %v6114
    %v6852 = vand.u32 2147483647, %v6369
    %v6853 = vand.u32 2147483647, %v6371
    %v6854 = vand.u32 2147483647, %v6626
    %v6855 = vand.u32 2147483647, %v6628
    %v6856 = vand.u32 2147483647, %v5861
    %v6857 = vand.u32 2147483647, %v5863
    %v6858 = vand.u32 2147483647, %v6118
    %v6859 = vand.u32 2147483647, %v6120
    %v6860 = vand.u32 2147483647, %v6375
    %v6861 = vand.u32 2147483647, %v6377
    %v6862 = vand.u32 2147483647, %v6632
    %v6863 = vand.u32 2147483647, %v6634
    %v6864 = vand.u32 2147483647, %v5867
    %v6865 = vand.u32 2147483647, %v5869
    %v6866 = vand.u32 2147483647, %v6124
    %v6867 = vand.u32 2147483647, %v6126
    %v6868 = vand.u32 2147483647, %v6381
    %v6869 = vand.u32 2147483647, %v6383
    %v6870 = vand.u32 2147483647, %v6638
    %v6871 = vand.u32 2147483647, %v6640
    %v6872 = vand.u32 2147483647, %v5873
    %v6873 = vand.u32 2147483647, %v5875
    %v6874 = vand.u32 2147483647, %v6130
    %v6875 = vand.u32 2147483647, %v6132
    %v6876 = vand.u32 2147483647, %v6387
    %v6877 = vand.u32 2147483647, %v6389
    %v6878 = vand.u32 2147483647, %v6644
    %v6879 = vand.u32 2147483647, %v6646
    %v6880 = vand.u32 2147483647, %v5879
    %v6881 = vand.u32 2147483647, %v5881
    %v6882 = vand.u32 2147483647, %v6136
    %v6883 = vand.u32 2147483647, %v6138
    %v6884 = vand.u32 2147483647, %v6393
    %v6885 = vand.u32 2147483647, %v6395
    %v6886 = vand.u32 2147483647, %v6650
    %v6887 = vand.u32 2147483647, %v6652
    %v6888 = vand.u32 2147483647, %v5885
    %v6889 = vand.u32 2147483647, %v5887
    %v6890 = vand.u32 2147483647, %v6142
    %v6891 = vand.u32 2147483647, %v6144
    %v6892 = vand.u32 2147483647, %v6399
    %v6893 = vand.u32 2147483647, %v6401
    %v6894 = vand.u32 2147483647, %v6656
    %v6895 = vand.u32 2147483647, %v6658
    %v6896 = vand.u32 2147483647, %v5891
    %v6897 = vand.u32 2147483647, %v5893
    %v6898 = vand.u32 2147483647, %v6148
    %v6899 = vand.u32 2147483647, %v6150
    %v6900 = vand.u32 2147483647, %v6405
    %v6901 = vand.u32 2147483647, %v6407
    %v6902 = vand.u32 2147483647, %v6662
    %v6903 = vand.u32 2147483647, %v6664
    %v6904 = vand.u32 2147483647, %v5897
    %v6905 = vand.u32 2147483647, %v5899
    %v6906 = vand.u32 2147483647, %v6154
    %v6907 = vand.u32 2147483647, %v6156
    %v6908 = vand.u32 2147483647, %v6411
    %v6909 = vand.u32 2147483647, %v6413
    %v6910 = vand.u32 2147483647, %v6668
    %v6911 = vand.u32 2147483647, %v6670
    %v6912 = vand.u32 2147483647, %v5903
    %v6913 = vand.u32 2147483647, %v5905
    %v6914 = vand.u32 2147483647, %v6160
    %v6915 = vand.u32 2147483647, %v6162
    %v6916 = vand.u32 2147483647, %v6417
    %v6917 = vand.u32 2147483647, %v6419
    %v6918 = vand.u32 2147483647, %v6674
    %v6919 = vand.u32 2147483647, %v6676
    %v6920 = vand.u32 2147483647, %v5909
    %v6921 = vand.u32 2147483647, %v5911
    %v6922 = vand.u32 2147483647, %v6166
    %v6923 = vand.u32 2147483647, %v6168
    %v6924 = vand.u32 2147483647, %v6423
    %v6925 = vand.u32 2147483647, %v6425
    %v6926 = vand.u32 2147483647, %v6680
    %v6927 = vand.u32 2147483647, %v6682
    %v6928 = vand.u32 2147483647, %v5915
    %v6929 = vand.u32 2147483647, %v5917
    %v6930 = vand.u32 2147483647, %v6172
    %v6931 = vand.u32 2147483647, %v6174
    %v6932 = vand.u32 2147483647, %v6429
    %v6933 = vand.u32 2147483647, %v6431
    %v6934 = vand.u32 2147483647, %v6686
    %v6935 = vand.u32 2147483647, %v6688
    %v6936 = vand.u32 2147483647, %v5921
    %v6937 = vand.u32 2147483647, %v5923
    %v6938 = vand.u32 2147483647, %v6178
    %v6939 = vand.u32 2147483647, %v6180
    %v6940 = vand.u32 2147483647, %v6435
    %v6941 = vand.u32 2147483647, %v6437
    %v6942 = vand.u32 2147483647, %v6692
    %v6943 = vand.u32 2147483647, %v6694
    %v6944 = vand.u32 2147483647, %v5927
    %v6945 = vand.u32 2147483647, %v5929
    %v6946 = vand.u32 2147483647, %v6184
    %v6947 = vand.u32 2147483647, %v6186
    %v6948 = vand.u32 2147483647, %v6441
    %v6949 = vand.u32 2147483647, %v6443
    %v6950 = vand.u32 2147483647, %v6698
    %v6951 = vand.u32 2147483647, %v6700
    %v6952 = vand.u32 2147483647, %v5933
    %v6953 = vand.u32 2147483647, %v5935
    %v6954 = vand.u32 2147483647, %v6190
    %v6955 = vand.u32 2147483647, %v6192
    %v6956 = vand.u32 2147483647, %v6447
    %v6957 = vand.u32 2147483647, %v6449
    %v6958 = vand.u32 2147483647, %v6704
    %v6959 = vand.u32 2147483647, %v6706
    %v6960 = vand.u32 2147483647, %v5939
    %v6961 = vand.u32 2147483647, %v5941
    %v6962 = vand.u32 2147483647, %v6196
    %v6963 = vand.u32 2147483647, %v6198
    %v6964 = vand.u32 2147483647, %v6453
    %v6965 = vand.u32 2147483647, %v6455
    %v6966 = vand.u32 2147483647, %v6710
    %v6967 = vand.u32 2147483647, %v6712
    %v6968 = vand.u32 2147483647, %v5945
    %v6969 = vand.u32 2147483647, %v5947
    %v6970 = vand.u32 2147483647, %v6202
    %v6971 = vand.u32 2147483647, %v6204
    %v6972 = vand.u32 2147483647, %v6459
    %v6973 = vand.u32 2147483647, %v6461
    %v6974 = vand.u32 2147483647, %v6716
    %v6975 = vand.u32 2147483647, %v6718
    %v6977 = vsel %vm2537, %v5426, 0
    %v6980 = vsel %vm2537, %v5427, 0
    %v6983 = vsel %vm2537, %v5428, 0
    %v6986 = vsel %vm2537, %v5429, 0
    %v6989 = vsel %vm2537, %v5430, 0
    %v6992 = vsel %vm2537, %v5431, 0
    %v6995 = vsel %vm2537, %v5432, 0
    %v6998 = vsel %vm2537, %v5433, 0
    %v7001 = vsel %vm2537, %v5434, 0
    %v7004 = vsel %vm2537, %v5435, 0
    %v7007 = vsel %vm2537, %v5436, 0
    %v7010 = vsel %vm2537, %v5437, 0
    %v7013 = vsel %vm2537, %v5438, 0
    %v7016 = vsel %vm2537, %v5439, 0
    %v7019 = vsel %vm2537, %v5440, 0
    %v7022 = vsel %vm2537, %v5441, 0
    %v7025 = vsel %vm2537, %v5442, 0
    %v7028 = vsel %vm2537, %v5443, 0
    %v7031 = vsel %vm2537, %v5444, 0
    %v7034 = vsel %vm2537, %v5445, 0
    %v7037 = vsel %vm2537, %v5446, 0
    %v7040 = vsel %vm2537, %v5447, 0
    %v7043 = vsel %vm2537, %v5448, 0
    %v7046 = vsel %vm2537, %v5449, 0
    %v7049 = vsel %vm2537, %v5450, 0
    %v7052 = vsel %vm2537, %v5451, 0
    %v7055 = vsel %vm2537, %v5452, 0
    %v7058 = vsel %vm2537, %v5453, 0
    %v7061 = vsel %vm2537, %v5454, 0
    %v7064 = vsel %vm2537, %v5455, 0
    %v7067 = vsel %vm2537, %v5456, 0
    %v7070 = vsel %vm2537, %v5457, 0
    %7072 = vmatprep.subr.mxu0 0.0
    %7073 = vmatpush1.msra.mxu0 0.0
    %7074 = vmatprep.subr.mxu0 0.0
    %7075 = vmatpush1.msra.mxu0 0.0
    %7076 = vmatprep.subr.mxu0 0.0
    %7077 = vmatpush1.msra.mxu0 0.0
    %7078 = vmatprep.subr.mxu0 0.0
    %7079 = vmatpush1.msra.mxu0 0.0
    %7080 = vmatprep.subr.mxu0 0.0
    %7081 = vmatpush1.msra.mxu0 0.0
    %7082 = vmatprep.subr.mxu0 0.0
    %7083 = vmatpush1.msra.mxu0 0.0
    %7084 = vmatprep.subr.mxu0 0.0
    %7085 = vmatpush1.msra.mxu0 0.0
    %7086 = vmatprep.subr.mxu0 0.0
    %7087 = vmatpush1.msra.mxu0 0.0
    %7088 = vmatprep.subr.mxu0 0.0
    %7089 = vmatpush1.msra.mxu0 0.0
    %7090 = vmatprep.subr.mxu0 0.0
    %7091 = vmatpush1.msra.mxu0 0.0
    %7092 = vmatprep.subr.mxu0 0.0
    %7093 = vmatpush1.msra.mxu0 0.0
    %7094 = vmatprep.subr.mxu0 0.0
    %7095 = vmatpush1.msra.mxu0 0.0
    %7096 = vmatprep.subr.mxu0 %v915
    %7097 = vmatpush1.msra.mxu0 %v914
    %7098 = vmatprep.subr.mxu0 %v907
    %7099 = vmatpush1.msra.mxu0 %v906
    %7100 = vmatprep.subr.mxu0 %v899
    %7101 = vmatpush1.msra.mxu0 %v898
    %7102 = vmatprep.subr.mxu0 %v891
    %7103 = vmatpush1.msra.mxu0 %v890
    %7104 = vmatprep.subr.mxu0 0.0
    %7105 = vmatpush2.msra.mxu0 0.0
    %7106 = vmatprep.subr.mxu0 0.0
    %7107 = vmatpush2.msra.mxu0 0.0
    %7108 = vmatprep.subr.mxu0 0.0
    %7109 = vmatpush2.msra.mxu0 0.0
    %7110 = vmatprep.subr.mxu0 0.0
    %7111 = vmatpush2.msra.mxu0 0.0
    %7112 = vmatprep.subr.mxu0 0.0
    %7113 = vmatpush2.msra.mxu0 0.0
    %7114 = vmatprep.subr.mxu0 0.0
    %7115 = vmatpush2.msra.mxu0 0.0
    %7116 = vmatprep.subr.mxu0 0.0
    %7117 = vmatpush2.msra.mxu0 0.0
    %7118 = vmatprep.subr.mxu0 0.0
    %7119 = vmatpush2.msra.mxu0 0.0
    %7120 = vmatprep.subr.mxu0 0.0
    %7121 = vmatpush2.msra.mxu0 0.0
    %7122 = vmatprep.subr.mxu0 0.0
    %7123 = vmatpush2.msra.mxu0 0.0
    %7124 = vmatprep.subr.mxu0 0.0
    %7125 = vmatpush2.msra.mxu0 0.0
    %7126 = vmatprep.subr.mxu0 0.0
    %7127 = vmatpush2.msra.mxu0 0.0
    %7128 = vmatprep.subr.mxu0 0.0
    %7129 = vmatpush2.msra.mxu0 0.0
    %7130 = vmatprep.subr.mxu0 0.0
    %7131 = vmatpush2.msra.mxu0 0.0
    %7132 = vmatprep.subr.mxu0 0.0
    %7133 = vmatpush2.msra.mxu0 0.0
    %7134 = vmatprep.subr.mxu0 0.0
    %7135 = vmatpush2.msra.mxu0 0.0
    %7136 = vmatprep.mubr.f32.mxu0 0.0
    %7137 = vmatmul.mubr.f32.gmra.mxu0 %v6977
    %v7138 = vpop.f32.mrf.mxu0
    %v7139 = vadd.f32 0.0, %v7138
    %v7140 = vpop.f32.mrf.mxu0
    %v7141 = vadd.f32 0.0, %v7140
    %7142 = vmatprep.mubr.f32.mxu0 0.0
    %7143 = vmatmul.mubr.f32.gmra.mxu0 %v6980
    %v7144 = vpop.f32.mrf.mxu0
    %v7145 = vadd.f32 0.0, %v7144
    %v7146 = vpop.f32.mrf.mxu0
    %v7147 = vadd.f32 0.0, %v7146
    %7148 = vmatprep.mubr.f32.mxu0 0.0
    %7149 = vmatmul.mubr.f32.gmra.mxu0 %v6983
    %v7150 = vpop.f32.mrf.mxu0
    %v7151 = vadd.f32 0.0, %v7150
    %v7152 = vpop.f32.mrf.mxu0
    %v7153 = vadd.f32 0.0, %v7152
    %7154 = vmatprep.mubr.f32.mxu0 0.0
    %7155 = vmatmul.mubr.f32.gmra.mxu0 %v6986
    %v7156 = vpop.f32.mrf.mxu0
    %v7157 = vadd.f32 0.0, %v7156
    %v7158 = vpop.f32.mrf.mxu0
    %v7159 = vadd.f32 0.0, %v7158
    %7160 = vmatprep.mubr.f32.mxu0 0.0
    %7161 = vmatmul.mubr.f32.gmra.mxu0 %v6989
    %v7162 = vpop.f32.mrf.mxu0
    %v7163 = vadd.f32 0.0, %v7162
    %v7164 = vpop.f32.mrf.mxu0
    %v7165 = vadd.f32 0.0, %v7164
    %7166 = vmatprep.mubr.f32.mxu0 0.0
    %7167 = vmatmul.mubr.f32.gmra.mxu0 %v6992
    %v7168 = vpop.f32.mrf.mxu0
    %v7169 = vadd.f32 0.0, %v7168
    %v7170 = vpop.f32.mrf.mxu0
    %v7171 = vadd.f32 0.0, %v7170
    %7172 = vmatprep.mubr.f32.mxu0 0.0
    %7173 = vmatmul.mubr.f32.gmra.mxu0 %v6995
    %v7174 = vpop.f32.mrf.mxu0
    %v7175 = vadd.f32 0.0, %v7174
    %v7176 = vpop.f32.mrf.mxu0
    %v7177 = vadd.f32 0.0, %v7176
    %7178 = vmatprep.mubr.f32.mxu0 0.0
    %7179 = vmatmul.mubr.f32.gmra.mxu0 %v6998
    %v7180 = vpop.f32.mrf.mxu0
    %v7181 = vadd.f32 0.0, %v7180
    %v7182 = vpop.f32.mrf.mxu0
    %v7183 = vadd.f32 0.0, %v7182
    %7184 = vmatprep.mubr.f32.mxu0 0.0
    %7185 = vmatmul.mubr.f32.gmra.mxu0 %v7001
    %v7186 = vpop.f32.mrf.mxu0
    %v7187 = vadd.f32 0.0, %v7186
    %v7188 = vpop.f32.mrf.mxu0
    %v7189 = vadd.f32 0.0, %v7188
    %7190 = vmatprep.mubr.f32.mxu0 0.0
    %7191 = vmatmul.mubr.f32.gmra.mxu0 %v7004
    %v7192 = vpop.f32.mrf.mxu0
    %v7193 = vadd.f32 0.0, %v7192
    %v7194 = vpop.f32.mrf.mxu0
    %v7195 = vadd.f32 0.0, %v7194
    %7196 = vmatprep.mubr.f32.mxu0 0.0
    %7197 = vmatmul.mubr.f32.gmra.mxu0 %v7007
    %v7198 = vpop.f32.mrf.mxu0
    %v7199 = vadd.f32 0.0, %v7198
    %v7200 = vpop.f32.mrf.mxu0
    %v7201 = vadd.f32 0.0, %v7200
    %7202 = vmatprep.mubr.f32.mxu0 0.0
    %7203 = vmatmul.mubr.f32.gmra.mxu0 %v7010
    %v7204 = vpop.f32.mrf.mxu0
    %v7205 = vadd.f32 0.0, %v7204
    %v7206 = vpop.f32.mrf.mxu0
    %v7207 = vadd.f32 0.0, %v7206
    %7208 = vmatprep.mubr.f32.mxu0 0.0
    %7209 = vmatmul.mubr.f32.gmra.mxu0 %v7013
    %v7210 = vpop.f32.mrf.mxu0
    %v7211 = vadd.f32 0.0, %v7210
    %v7212 = vpop.f32.mrf.mxu0
    %v7213 = vadd.f32 0.0, %v7212
    %7214 = vmatprep.mubr.f32.mxu0 0.0
    %7215 = vmatmul.mubr.f32.gmra.mxu0 %v7016
    %v7216 = vpop.f32.mrf.mxu0
    %v7217 = vadd.f32 0.0, %v7216
    %v7218 = vpop.f32.mrf.mxu0
    %v7219 = vadd.f32 0.0, %v7218
    %7220 = vmatprep.mubr.f32.mxu0 0.0
    %7221 = vmatmul.mubr.f32.gmra.mxu0 %v7019
    %v7222 = vpop.f32.mrf.mxu0
    %v7223 = vadd.f32 0.0, %v7222
    %v7224 = vpop.f32.mrf.mxu0
    %v7225 = vadd.f32 0.0, %v7224
    %7226 = vmatprep.mubr.f32.mxu0 0.0
    %7227 = vmatmul.mubr.f32.gmra.mxu0 %v7022
    %v7228 = vpop.f32.mrf.mxu0
    %v7229 = vadd.f32 0.0, %v7228
    %v7230 = vpop.f32.mrf.mxu0
    %v7231 = vadd.f32 0.0, %v7230
    %7232 = vmatprep.mubr.f32.mxu0 0.0
    %7233 = vmatmul.mubr.f32.gmra.mxu0 %v7025
    %v7234 = vpop.f32.mrf.mxu0
    %v7235 = vadd.f32 0.0, %v7234
    %v7236 = vpop.f32.mrf.mxu0
    %v7237 = vadd.f32 0.0, %v7236
    %7238 = vmatprep.mubr.f32.mxu0 0.0
    %7239 = vmatmul.mubr.f32.gmra.mxu0 %v7028
    %v7240 = vpop.f32.mrf.mxu0
    %v7241 = vadd.f32 0.0, %v7240
    %v7242 = vpop.f32.mrf.mxu0
    %v7243 = vadd.f32 0.0, %v7242
    %7244 = vmatprep.mubr.f32.mxu0 0.0
    %7245 = vmatmul.mubr.f32.gmra.mxu0 %v7031
    %v7246 = vpop.f32.mrf.mxu0
    %v7247 = vadd.f32 0.0, %v7246
    %v7248 = vpop.f32.mrf.mxu0
    %v7249 = vadd.f32 0.0, %v7248
    %7250 = vmatprep.mubr.f32.mxu0 0.0
    %7251 = vmatmul.mubr.f32.gmra.mxu0 %v7034
    %v7252 = vpop.f32.mrf.mxu0
    %v7253 = vadd.f32 0.0, %v7252
    %v7254 = vpop.f32.mrf.mxu0
    %v7255 = vadd.f32 0.0, %v7254
    %7256 = vmatprep.mubr.f32.mxu0 0.0
    %7257 = vmatmul.mubr.f32.gmra.mxu0 %v7037
    %v7258 = vpop.f32.mrf.mxu0
    %v7259 = vadd.f32 0.0, %v7258
    %v7260 = vpop.f32.mrf.mxu0
    %v7261 = vadd.f32 0.0, %v7260
    %7262 = vmatprep.mubr.f32.mxu0 0.0
    %7263 = vmatmul.mubr.f32.gmra.mxu0 %v7040
    %v7264 = vpop.f32.mrf.mxu0
    %v7265 = vadd.f32 0.0, %v7264
    %v7266 = vpop.f32.mrf.mxu0
    %v7267 = vadd.f32 0.0, %v7266
    %7268 = vmatprep.mubr.f32.mxu0 0.0
    %7269 = vmatmul.mubr.f32.gmra.mxu0 %v7043
    %v7270 = vpop.f32.mrf.mxu0
    %v7271 = vadd.f32 0.0, %v7270
    %v7272 = vpop.f32.mrf.mxu0
    %v7273 = vadd.f32 0.0, %v7272
    %7274 = vmatprep.mubr.f32.mxu0 0.0
    %7275 = vmatmul.mubr.f32.gmra.mxu0 %v7046
    %v7276 = vpop.f32.mrf.mxu0
    %v7277 = vadd.f32 0.0, %v7276
    %v7278 = vpop.f32.mrf.mxu0
    %v7279 = vadd.f32 0.0, %v7278
    %7280 = vmatprep.mubr.f32.mxu0 0.0
    %7281 = vmatmul.mubr.f32.gmra.mxu0 %v7049
    %v7282 = vpop.f32.mrf.mxu0
    %v7283 = vadd.f32 0.0, %v7282
    %v7284 = vpop.f32.mrf.mxu0
    %v7285 = vadd.f32 0.0, %v7284
    %7286 = vmatprep.mubr.f32.mxu0 0.0
    %7287 = vmatmul.mubr.f32.gmra.mxu0 %v7052
    %v7288 = vpop.f32.mrf.mxu0
    %v7289 = vadd.f32 0.0, %v7288
    %v7290 = vpop.f32.mrf.mxu0
    %v7291 = vadd.f32 0.0, %v7290
    %7292 = vmatprep.mubr.f32.mxu0 0.0
    %7293 = vmatmul.mubr.f32.gmra.mxu0 %v7055
    %v7294 = vpop.f32.mrf.mxu0
    %v7295 = vadd.f32 0.0, %v7294
    %v7296 = vpop.f32.mrf.mxu0
    %v7297 = vadd.f32 0.0, %v7296
    %7298 = vmatprep.mubr.f32.mxu0 0.0
    %7299 = vmatmul.mubr.f32.gmra.mxu0 %v7058
    %v7300 = vpop.f32.mrf.mxu0
    %v7301 = vadd.f32 0.0, %v7300
    %v7302 = vpop.f32.mrf.mxu0
    %v7303 = vadd.f32 0.0, %v7302
    %7304 = vmatprep.mubr.f32.mxu0 0.0
    %7305 = vmatmul.mubr.f32.gmra.mxu0 %v7061
    %v7306 = vpop.f32.mrf.mxu0
    %v7307 = vadd.f32 0.0, %v7306
    %v7308 = vpop.f32.mrf.mxu0
    %v7309 = vadd.f32 0.0, %v7308
    %7310 = vmatprep.mubr.f32.mxu0 0.0
    %7311 = vmatmul.mubr.f32.gmra.mxu0 %v7064
    %v7312 = vpop.f32.mrf.mxu0
    %v7313 = vadd.f32 0.0, %v7312
    %v7314 = vpop.f32.mrf.mxu0
    %v7315 = vadd.f32 0.0, %v7314
    %7316 = vmatprep.mubr.f32.mxu0 0.0
    %7317 = vmatmul.mubr.f32.gmra.mxu0 %v7067
    %v7318 = vpop.f32.mrf.mxu0
    %v7319 = vadd.f32 0.0, %v7318
    %v7320 = vpop.f32.mrf.mxu0
    %v7321 = vadd.f32 0.0, %v7320
    %7322 = vmatprep.mubr.f32.mxu0 0.0
    %7323 = vmatmul.mubr.f32.gmra.mxu0 %v7070
    %v7324 = vpop.f32.mrf.mxu0
    %v7325 = vadd.f32 0.0, %v7324
    %v7326 = vpop.f32.mrf.mxu0
    %v7327 = vadd.f32 0.0, %v7326
    %7328 = vdwg.mxu0
    %7329 = vmatprep.subr.mxu0 0.0
    %7330 = vmatpush1.msra.mxu0 0.0
    %7331 = vmatprep.subr.mxu0 0.0
    %7332 = vmatpush1.msra.mxu0 0.0
    %7333 = vmatprep.subr.mxu0 0.0
    %7334 = vmatpush1.msra.mxu0 0.0
    %7335 = vmatprep.subr.mxu0 0.0
    %7336 = vmatpush1.msra.mxu0 0.0
    %7337 = vmatprep.subr.mxu0 0.0
    %7338 = vmatpush1.msra.mxu0 0.0
    %7339 = vmatprep.subr.mxu0 0.0
    %7340 = vmatpush1.msra.mxu0 0.0
    %7341 = vmatprep.subr.mxu0 0.0
    %7342 = vmatpush1.msra.mxu0 0.0
    %7343 = vmatprep.subr.mxu0 0.0
    %7344 = vmatpush1.msra.mxu0 0.0
    %7345 = vmatprep.subr.mxu0 0.0
    %7346 = vmatpush1.msra.mxu0 0.0
    %7347 = vmatprep.subr.mxu0 0.0
    %7348 = vmatpush1.msra.mxu0 0.0
    %7349 = vmatprep.subr.mxu0 0.0
    %7350 = vmatpush1.msra.mxu0 0.0
    %7351 = vmatprep.subr.mxu0 0.0
    %7352 = vmatpush1.msra.mxu0 0.0
    %7353 = vmatprep.subr.mxu0 %v917
    %7354 = vmatpush1.msra.mxu0 %v916
    %7355 = vmatprep.subr.mxu0 %v909
    %7356 = vmatpush1.msra.mxu0 %v908
    %7357 = vmatprep.subr.mxu0 %v901
    %7358 = vmatpush1.msra.mxu0 %v900
    %7359 = vmatprep.subr.mxu0 %v893
    %7360 = vmatpush1.msra.mxu0 %v892
    %7361 = vmatprep.subr.mxu0 0.0
    %7362 = vmatpush2.msra.mxu0 0.0
    %7363 = vmatprep.subr.mxu0 0.0
    %7364 = vmatpush2.msra.mxu0 0.0
    %7365 = vmatprep.subr.mxu0 0.0
    %7366 = vmatpush2.msra.mxu0 0.0
    %7367 = vmatprep.subr.mxu0 0.0
    %7368 = vmatpush2.msra.mxu0 0.0
    %7369 = vmatprep.subr.mxu0 0.0
    %7370 = vmatpush2.msra.mxu0 0.0
    %7371 = vmatprep.subr.mxu0 0.0
    %7372 = vmatpush2.msra.mxu0 0.0
    %7373 = vmatprep.subr.mxu0 0.0
    %7374 = vmatpush2.msra.mxu0 0.0
    %7375 = vmatprep.subr.mxu0 0.0
    %7376 = vmatpush2.msra.mxu0 0.0
    %7377 = vmatprep.subr.mxu0 0.0
    %7378 = vmatpush2.msra.mxu0 0.0
    %7379 = vmatprep.subr.mxu0 0.0
    %7380 = vmatpush2.msra.mxu0 0.0
    %7381 = vmatprep.subr.mxu0 0.0
    %7382 = vmatpush2.msra.mxu0 0.0
    %7383 = vmatprep.subr.mxu0 0.0
    %7384 = vmatpush2.msra.mxu0 0.0
    %7385 = vmatprep.subr.mxu0 0.0
    %7386 = vmatpush2.msra.mxu0 0.0
    %7387 = vmatprep.subr.mxu0 0.0
    %7388 = vmatpush2.msra.mxu0 0.0
    %7389 = vmatprep.subr.mxu0 0.0
    %7390 = vmatpush2.msra.mxu0 0.0
    %7391 = vmatprep.subr.mxu0 0.0
    %7392 = vmatpush2.msra.mxu0 0.0
    %7393 = vmatprep.mubr.f32.mxu0 0.0
    %7394 = vmatmul.mubr.f32.gmra.mxu0 %v6977
    %v7395 = vpop.f32.mrf.mxu0
    %v7396 = vadd.f32 0.0, %v7395
    %v7397 = vpop.f32.mrf.mxu0
    %v7398 = vadd.f32 0.0, %v7397
    %7399 = vmatprep.mubr.f32.mxu0 0.0
    %7400 = vmatmul.mubr.f32.gmra.mxu0 %v6980
    %v7401 = vpop.f32.mrf.mxu0
    %v7402 = vadd.f32 0.0, %v7401
    %v7403 = vpop.f32.mrf.mxu0
    %v7404 = vadd.f32 0.0, %v7403
    %7405 = vmatprep.mubr.f32.mxu0 0.0
    %7406 = vmatmul.mubr.f32.gmra.mxu0 %v6983
    %v7407 = vpop.f32.mrf.mxu0
    %v7408 = vadd.f32 0.0, %v7407
    %v7409 = vpop.f32.mrf.mxu0
    %v7410 = vadd.f32 0.0, %v7409
    %7411 = vmatprep.mubr.f32.mxu0 0.0
    %7412 = vmatmul.mubr.f32.gmra.mxu0 %v6986
    %v7413 = vpop.f32.mrf.mxu0
    %v7414 = vadd.f32 0.0, %v7413
    %v7415 = vpop.f32.mrf.mxu0
    %v7416 = vadd.f32 0.0, %v7415
    %7417 = vmatprep.mubr.f32.mxu0 0.0
    %7418 = vmatmul.mubr.f32.gmra.mxu0 %v6989
    %v7419 = vpop.f32.mrf.mxu0
    %v7420 = vadd.f32 0.0, %v7419
    %v7421 = vpop.f32.mrf.mxu0
    %v7422 = vadd.f32 0.0, %v7421
    %7423 = vmatprep.mubr.f32.mxu0 0.0
    %7424 = vmatmul.mubr.f32.gmra.mxu0 %v6992
    %v7425 = vpop.f32.mrf.mxu0
    %v7426 = vadd.f32 0.0, %v7425
    %v7427 = vpop.f32.mrf.mxu0
    %v7428 = vadd.f32 0.0, %v7427
    %7429 = vmatprep.mubr.f32.mxu0 0.0
    %7430 = vmatmul.mubr.f32.gmra.mxu0 %v6995
    %v7431 = vpop.f32.mrf.mxu0
    %v7432 = vadd.f32 0.0, %v7431
    %v7433 = vpop.f32.mrf.mxu0
    %v7434 = vadd.f32 0.0, %v7433
    %7435 = vmatprep.mubr.f32.mxu0 0.0
    %7436 = vmatmul.mubr.f32.gmra.mxu0 %v6998
    %v7437 = vpop.f32.mrf.mxu0
    %v7438 = vadd.f32 0.0, %v7437
    %v7439 = vpop.f32.mrf.mxu0
    %v7440 = vadd.f32 0.0, %v7439
    %7441 = vmatprep.mubr.f32.mxu0 0.0
    %7442 = vmatmul.mubr.f32.gmra.mxu0 %v7001
    %v7443 = vpop.f32.mrf.mxu0
    %v7444 = vadd.f32 0.0, %v7443
    %v7445 = vpop.f32.mrf.mxu0
    %v7446 = vadd.f32 0.0, %v7445
    %7447 = vmatprep.mubr.f32.mxu0 0.0
    %7448 = vmatmul.mubr.f32.gmra.mxu0 %v7004
    %v7449 = vpop.f32.mrf.mxu0
    %v7450 = vadd.f32 0.0, %v7449
    %v7451 = vpop.f32.mrf.mxu0
    %v7452 = vadd.f32 0.0, %v7451
    %7453 = vmatprep.mubr.f32.mxu0 0.0
    %7454 = vmatmul.mubr.f32.gmra.mxu0 %v7007
    %v7455 = vpop.f32.mrf.mxu0
    %v7456 = vadd.f32 0.0, %v7455
    %v7457 = vpop.f32.mrf.mxu0
    %v7458 = vadd.f32 0.0, %v7457
    %7459 = vmatprep.mubr.f32.mxu0 0.0
    %7460 = vmatmul.mubr.f32.gmra.mxu0 %v7010
    %v7461 = vpop.f32.mrf.mxu0
    %v7462 = vadd.f32 0.0, %v7461
    %v7463 = vpop.f32.mrf.mxu0
    %v7464 = vadd.f32 0.0, %v7463
    %7465 = vmatprep.mubr.f32.mxu0 0.0
    %7466 = vmatmul.mubr.f32.gmra.mxu0 %v7013
    %v7467 = vpop.f32.mrf.mxu0
    %v7468 = vadd.f32 0.0, %v7467
    %v7469 = vpop.f32.mrf.mxu0
    %v7470 = vadd.f32 0.0, %v7469
    %7471 = vmatprep.mubr.f32.mxu0 0.0
    %7472 = vmatmul.mubr.f32.gmra.mxu0 %v7016
    %v7473 = vpop.f32.mrf.mxu0
    %v7474 = vadd.f32 0.0, %v7473
    %v7475 = vpop.f32.mrf.mxu0
    %v7476 = vadd.f32 0.0, %v7475
    %7477 = vmatprep.mubr.f32.mxu0 0.0
    %7478 = vmatmul.mubr.f32.gmra.mxu0 %v7019
    %v7479 = vpop.f32.mrf.mxu0
    %v7480 = vadd.f32 0.0, %v7479
    %v7481 = vpop.f32.mrf.mxu0
    %v7482 = vadd.f32 0.0, %v7481
    %7483 = vmatprep.mubr.f32.mxu0 0.0
    %7484 = vmatmul.mubr.f32.gmra.mxu0 %v7022
    %v7485 = vpop.f32.mrf.mxu0
    %v7486 = vadd.f32 0.0, %v7485
    %v7487 = vpop.f32.mrf.mxu0
    %v7488 = vadd.f32 0.0, %v7487
    %7489 = vmatprep.mubr.f32.mxu0 0.0
    %7490 = vmatmul.mubr.f32.gmra.mxu0 %v7025
    %v7491 = vpop.f32.mrf.mxu0
    %v7492 = vadd.f32 0.0, %v7491
    %v7493 = vpop.f32.mrf.mxu0
    %v7494 = vadd.f32 0.0, %v7493
    %7495 = vmatprep.mubr.f32.mxu0 0.0
    %7496 = vmatmul.mubr.f32.gmra.mxu0 %v7028
    %v7497 = vpop.f32.mrf.mxu0
    %v7498 = vadd.f32 0.0, %v7497
    %v7499 = vpop.f32.mrf.mxu0
    %v7500 = vadd.f32 0.0, %v7499
    %7501 = vmatprep.mubr.f32.mxu0 0.0
    %7502 = vmatmul.mubr.f32.gmra.mxu0 %v7031
    %v7503 = vpop.f32.mrf.mxu0
    %v7504 = vadd.f32 0.0, %v7503
    %v7505 = vpop.f32.mrf.mxu0
    %v7506 = vadd.f32 0.0, %v7505
    %7507 = vmatprep.mubr.f32.mxu0 0.0
    %7508 = vmatmul.mubr.f32.gmra.mxu0 %v7034
    %v7509 = vpop.f32.mrf.mxu0
    %v7510 = vadd.f32 0.0, %v7509
    %v7511 = vpop.f32.mrf.mxu0
    %v7512 = vadd.f32 0.0, %v7511
    %7513 = vmatprep.mubr.f32.mxu0 0.0
    %7514 = vmatmul.mubr.f32.gmra.mxu0 %v7037
    %v7515 = vpop.f32.mrf.mxu0
    %v7516 = vadd.f32 0.0, %v7515
    %v7517 = vpop.f32.mrf.mxu0
    %v7518 = vadd.f32 0.0, %v7517
    %7519 = vmatprep.mubr.f32.mxu0 0.0
    %7520 = vmatmul.mubr.f32.gmra.mxu0 %v7040
    %v7521 = vpop.f32.mrf.mxu0
    %v7522 = vadd.f32 0.0, %v7521
    %v7523 = vpop.f32.mrf.mxu0
    %v7524 = vadd.f32 0.0, %v7523
    %7525 = vmatprep.mubr.f32.mxu0 0.0
    %7526 = vmatmul.mubr.f32.gmra.mxu0 %v7043
    %v7527 = vpop.f32.mrf.mxu0
    %v7528 = vadd.f32 0.0, %v7527
    %v7529 = vpop.f32.mrf.mxu0
    %v7530 = vadd.f32 0.0, %v7529
    %7531 = vmatprep.mubr.f32.mxu0 0.0
    %7532 = vmatmul.mubr.f32.gmra.mxu0 %v7046
    %v7533 = vpop.f32.mrf.mxu0
    %v7534 = vadd.f32 0.0, %v7533
    %v7535 = vpop.f32.mrf.mxu0
    %v7536 = vadd.f32 0.0, %v7535
    %7537 = vmatprep.mubr.f32.mxu0 0.0
    %7538 = vmatmul.mubr.f32.gmra.mxu0 %v7049
    %v7539 = vpop.f32.mrf.mxu0
    %v7540 = vadd.f32 0.0, %v7539
    %v7541 = vpop.f32.mrf.mxu0
    %v7542 = vadd.f32 0.0, %v7541
    %7543 = vmatprep.mubr.f32.mxu0 0.0
    %7544 = vmatmul.mubr.f32.gmra.mxu0 %v7052
    %v7545 = vpop.f32.mrf.mxu0
    %v7546 = vadd.f32 0.0, %v7545
    %v7547 = vpop.f32.mrf.mxu0
    %v7548 = vadd.f32 0.0, %v7547
    %7549 = vmatprep.mubr.f32.mxu0 0.0
    %7550 = vmatmul.mubr.f32.gmra.mxu0 %v7055
    %v7551 = vpop.f32.mrf.mxu0
    %v7552 = vadd.f32 0.0, %v7551
    %v7553 = vpop.f32.mrf.mxu0
    %v7554 = vadd.f32 0.0, %v7553
    %7555 = vmatprep.mubr.f32.mxu0 0.0
    %7556 = vmatmul.mubr.f32.gmra.mxu0 %v7058
    %v7557 = vpop.f32.mrf.mxu0
    %v7558 = vadd.f32 0.0, %v7557
    %v7559 = vpop.f32.mrf.mxu0
    %v7560 = vadd.f32 0.0, %v7559
    %7561 = vmatprep.mubr.f32.mxu0 0.0
    %7562 = vmatmul.mubr.f32.gmra.mxu0 %v7061
    %v7563 = vpop.f32.mrf.mxu0
    %v7564 = vadd.f32 0.0, %v7563
    %v7565 = vpop.f32.mrf.mxu0
    %v7566 = vadd.f32 0.0, %v7565
    %7567 = vmatprep.mubr.f32.mxu0 0.0
    %7568 = vmatmul.mubr.f32.gmra.mxu0 %v7064
    %v7569 = vpop.f32.mrf.mxu0
    %v7570 = vadd.f32 0.0, %v7569
    %v7571 = vpop.f32.mrf.mxu0
    %v7572 = vadd.f32 0.0, %v7571
    %7573 = vmatprep.mubr.f32.mxu0 0.0
    %7574 = vmatmul.mubr.f32.gmra.mxu0 %v7067
    %v7575 = vpop.f32.mrf.mxu0
    %v7576 = vadd.f32 0.0, %v7575
    %v7577 = vpop.f32.mrf.mxu0
    %v7578 = vadd.f32 0.0, %v7577
    %7579 = vmatprep.mubr.f32.mxu0 0.0
    %7580 = vmatmul.mubr.f32.gmra.mxu0 %v7070
    %v7581 = vpop.f32.mrf.mxu0
    %v7582 = vadd.f32 0.0, %v7581
    %v7583 = vpop.f32.mrf.mxu0
    %v7584 = vadd.f32 0.0, %v7583
    %7585 = vdwg.mxu0
    %7586 = vmatprep.subr.mxu0 0.0
    %7587 = vmatpush1.msra.mxu0 0.0
    %7588 = vmatprep.subr.mxu0 0.0
    %7589 = vmatpush1.msra.mxu0 0.0
    %7590 = vmatprep.subr.mxu0 0.0
    %7591 = vmatpush1.msra.mxu0 0.0
    %7592 = vmatprep.subr.mxu0 0.0
    %7593 = vmatpush1.msra.mxu0 0.0
    %7594 = vmatprep.subr.mxu0 0.0
    %7595 = vmatpush1.msra.mxu0 0.0
    %7596 = vmatprep.subr.mxu0 0.0
    %7597 = vmatpush1.msra.mxu0 0.0
    %7598 = vmatprep.subr.mxu0 0.0
    %7599 = vmatpush1.msra.mxu0 0.0
    %7600 = vmatprep.subr.mxu0 0.0
    %7601 = vmatpush1.msra.mxu0 0.0
    %7602 = vmatprep.subr.mxu0 0.0
    %7603 = vmatpush1.msra.mxu0 0.0
    %7604 = vmatprep.subr.mxu0 0.0
    %7605 = vmatpush1.msra.mxu0 0.0
    %7606 = vmatprep.subr.mxu0 0.0
    %7607 = vmatpush1.msra.mxu0 0.0
    %7608 = vmatprep.subr.mxu0 0.0
    %7609 = vmatpush1.msra.mxu0 0.0
    %7610 = vmatprep.subr.mxu0 %v919
    %7611 = vmatpush1.msra.mxu0 %v918
    %7612 = vmatprep.subr.mxu0 %v911
    %7613 = vmatpush1.msra.mxu0 %v910
    %7614 = vmatprep.subr.mxu0 %v903
    %7615 = vmatpush1.msra.mxu0 %v902
    %7616 = vmatprep.subr.mxu0 %v895
    %7617 = vmatpush1.msra.mxu0 %v894
    %7618 = vmatprep.subr.mxu0 0.0
    %7619 = vmatpush2.msra.mxu0 0.0
    %7620 = vmatprep.subr.mxu0 0.0
    %7621 = vmatpush2.msra.mxu0 0.0
    %7622 = vmatprep.subr.mxu0 0.0
    %7623 = vmatpush2.msra.mxu0 0.0
    %7624 = vmatprep.subr.mxu0 0.0
    %7625 = vmatpush2.msra.mxu0 0.0
    %7626 = vmatprep.subr.mxu0 0.0
    %7627 = vmatpush2.msra.mxu0 0.0
    %7628 = vmatprep.subr.mxu0 0.0
    %7629 = vmatpush2.msra.mxu0 0.0
    %7630 = vmatprep.subr.mxu0 0.0
    %7631 = vmatpush2.msra.mxu0 0.0
    %7632 = vmatprep.subr.mxu0 0.0
    %7633 = vmatpush2.msra.mxu0 0.0
    %7634 = vmatprep.subr.mxu0 0.0
    %7635 = vmatpush2.msra.mxu0 0.0
    %7636 = vmatprep.subr.mxu0 0.0
    %7637 = vmatpush2.msra.mxu0 0.0
    %7638 = vmatprep.subr.mxu0 0.0
    %7639 = vmatpush2.msra.mxu0 0.0
    %7640 = vmatprep.subr.mxu0 0.0
    %7641 = vmatpush2.msra.mxu0 0.0
    %7642 = vmatprep.subr.mxu0 0.0
    %7643 = vmatpush2.msra.mxu0 0.0
    %7644 = vmatprep.subr.mxu0 0.0
    %7645 = vmatpush2.msra.mxu0 0.0
    %7646 = vmatprep.subr.mxu0 0.0
    %7647 = vmatpush2.msra.mxu0 0.0
    %7648 = vmatprep.subr.mxu0 0.0
    %7649 = vmatpush2.msra.mxu0 0.0
    %7650 = vmatprep.mubr.f32.mxu0 0.0
    %7651 = vmatmul.mubr.f32.gmra.mxu0 %v6977
    %v7652 = vpop.f32.mrf.mxu0
    %v7653 = vadd.f32 0.0, %v7652
    %v7654 = vpop.f32.mrf.mxu0
    %v7655 = vadd.f32 0.0, %v7654
    %7656 = vmatprep.mubr.f32.mxu0 0.0
    %7657 = vmatmul.mubr.f32.gmra.mxu0 %v6980
    %v7658 = vpop.f32.mrf.mxu0
    %v7659 = vadd.f32 0.0, %v7658
    %v7660 = vpop.f32.mrf.mxu0
    %v7661 = vadd.f32 0.0, %v7660
    %7662 = vmatprep.mubr.f32.mxu0 0.0
    %7663 = vmatmul.mubr.f32.gmra.mxu0 %v6983
    %v7664 = vpop.f32.mrf.mxu0
    %v7665 = vadd.f32 0.0, %v7664
    %v7666 = vpop.f32.mrf.mxu0
    %v7667 = vadd.f32 0.0, %v7666
    %7668 = vmatprep.mubr.f32.mxu0 0.0
    %7669 = vmatmul.mubr.f32.gmra.mxu0 %v6986
    %v7670 = vpop.f32.mrf.mxu0
    %v7671 = vadd.f32 0.0, %v7670
    %v7672 = vpop.f32.mrf.mxu0
    %v7673 = vadd.f32 0.0, %v7672
    %7674 = vmatprep.mubr.f32.mxu0 0.0
    %7675 = vmatmul.mubr.f32.gmra.mxu0 %v6989
    %v7676 = vpop.f32.mrf.mxu0
    %v7677 = vadd.f32 0.0, %v7676
    %v7678 = vpop.f32.mrf.mxu0
    %v7679 = vadd.f32 0.0, %v7678
    %7680 = vmatprep.mubr.f32.mxu0 0.0
    %7681 = vmatmul.mubr.f32.gmra.mxu0 %v6992
    %v7682 = vpop.f32.mrf.mxu0
    %v7683 = vadd.f32 0.0, %v7682
    %v7684 = vpop.f32.mrf.mxu0
    %v7685 = vadd.f32 0.0, %v7684
    %7686 = vmatprep.mubr.f32.mxu0 0.0
    %7687 = vmatmul.mubr.f32.gmra.mxu0 %v6995
    %v7688 = vpop.f32.mrf.mxu0
    %v7689 = vadd.f32 0.0, %v7688
    %v7690 = vpop.f32.mrf.mxu0
    %v7691 = vadd.f32 0.0, %v7690
    %7692 = vmatprep.mubr.f32.mxu0 0.0
    %7693 = vmatmul.mubr.f32.gmra.mxu0 %v6998
    %v7694 = vpop.f32.mrf.mxu0
    %v7695 = vadd.f32 0.0, %v7694
    %v7696 = vpop.f32.mrf.mxu0
    %v7697 = vadd.f32 0.0, %v7696
    %7698 = vmatprep.mubr.f32.mxu0 0.0
    %7699 = vmatmul.mubr.f32.gmra.mxu0 %v7001
    %v7700 = vpop.f32.mrf.mxu0
    %v7701 = vadd.f32 0.0, %v7700
    %v7702 = vpop.f32.mrf.mxu0
    %v7703 = vadd.f32 0.0, %v7702
    %7704 = vmatprep.mubr.f32.mxu0 0.0
    %7705 = vmatmul.mubr.f32.gmra.mxu0 %v7004
    %v7706 = vpop.f32.mrf.mxu0
    %v7707 = vadd.f32 0.0, %v7706
    %v7708 = vpop.f32.mrf.mxu0
    %v7709 = vadd.f32 0.0, %v7708
    %7710 = vmatprep.mubr.f32.mxu0 0.0
    %7711 = vmatmul.mubr.f32.gmra.mxu0 %v7007
    %v7712 = vpop.f32.mrf.mxu0
    %v7713 = vadd.f32 0.0, %v7712
    %v7714 = vpop.f32.mrf.mxu0
    %v7715 = vadd.f32 0.0, %v7714
    %7716 = vmatprep.mubr.f32.mxu0 0.0
    %7717 = vmatmul.mubr.f32.gmra.mxu0 %v7010
    %v7718 = vpop.f32.mrf.mxu0
    %v7719 = vadd.f32 0.0, %v7718
    %v7720 = vpop.f32.mrf.mxu0
    %v7721 = vadd.f32 0.0, %v7720
    %7722 = vmatprep.mubr.f32.mxu0 0.0
    %7723 = vmatmul.mubr.f32.gmra.mxu0 %v7013
    %v7724 = vpop.f32.mrf.mxu0
    %v7725 = vadd.f32 0.0, %v7724
    %v7726 = vpop.f32.mrf.mxu0
    %v7727 = vadd.f32 0.0, %v7726
    %7728 = vmatprep.mubr.f32.mxu0 0.0
    %7729 = vmatmul.mubr.f32.gmra.mxu0 %v7016
    %v7730 = vpop.f32.mrf.mxu0
    %v7731 = vadd.f32 0.0, %v7730
    %v7732 = vpop.f32.mrf.mxu0
    %v7733 = vadd.f32 0.0, %v7732
    %7734 = vmatprep.mubr.f32.mxu0 0.0
    %7735 = vmatmul.mubr.f32.gmra.mxu0 %v7019
    %v7736 = vpop.f32.mrf.mxu0
    %v7737 = vadd.f32 0.0, %v7736
    %v7738 = vpop.f32.mrf.mxu0
    %v7739 = vadd.f32 0.0, %v7738
    %7740 = vmatprep.mubr.f32.mxu0 0.0
    %7741 = vmatmul.mubr.f32.gmra.mxu0 %v7022
    %v7742 = vpop.f32.mrf.mxu0
    %v7743 = vadd.f32 0.0, %v7742
    %v7744 = vpop.f32.mrf.mxu0
    %v7745 = vadd.f32 0.0, %v7744
    %7746 = vmatprep.mubr.f32.mxu0 0.0
    %7747 = vmatmul.mubr.f32.gmra.mxu0 %v7025
    %v7748 = vpop.f32.mrf.mxu0
    %v7749 = vadd.f32 0.0, %v7748
    %v7750 = vpop.f32.mrf.mxu0
    %v7751 = vadd.f32 0.0, %v7750
    %7752 = vmatprep.mubr.f32.mxu0 0.0
    %7753 = vmatmul.mubr.f32.gmra.mxu0 %v7028
    %v7754 = vpop.f32.mrf.mxu0
    %v7755 = vadd.f32 0.0, %v7754
    %v7756 = vpop.f32.mrf.mxu0
    %v7757 = vadd.f32 0.0, %v7756
    %7758 = vmatprep.mubr.f32.mxu0 0.0
    %7759 = vmatmul.mubr.f32.gmra.mxu0 %v7031
    %v7760 = vpop.f32.mrf.mxu0
    %v7761 = vadd.f32 0.0, %v7760
    %v7762 = vpop.f32.mrf.mxu0
    %v7763 = vadd.f32 0.0, %v7762
    %7764 = vmatprep.mubr.f32.mxu0 0.0
    %7765 = vmatmul.mubr.f32.gmra.mxu0 %v7034
    %v7766 = vpop.f32.mrf.mxu0
    %v7767 = vadd.f32 0.0, %v7766
    %v7768 = vpop.f32.mrf.mxu0
    %v7769 = vadd.f32 0.0, %v7768
    %7770 = vmatprep.mubr.f32.mxu0 0.0
    %7771 = vmatmul.mubr.f32.gmra.mxu0 %v7037
    %v7772 = vpop.f32.mrf.mxu0
    %v7773 = vadd.f32 0.0, %v7772
    %v7774 = vpop.f32.mrf.mxu0
    %v7775 = vadd.f32 0.0, %v7774
    %7776 = vmatprep.mubr.f32.mxu0 0.0
    %7777 = vmatmul.mubr.f32.gmra.mxu0 %v7040
    %v7778 = vpop.f32.mrf.mxu0
    %v7779 = vadd.f32 0.0, %v7778
    %v7780 = vpop.f32.mrf.mxu0
    %v7781 = vadd.f32 0.0, %v7780
    %7782 = vmatprep.mubr.f32.mxu0 0.0
    %7783 = vmatmul.mubr.f32.gmra.mxu0 %v7043
    %v7784 = vpop.f32.mrf.mxu0
    %v7785 = vadd.f32 0.0, %v7784
    %v7786 = vpop.f32.mrf.mxu0
    %v7787 = vadd.f32 0.0, %v7786
    %7788 = vmatprep.mubr.f32.mxu0 0.0
    %7789 = vmatmul.mubr.f32.gmra.mxu0 %v7046
    %v7790 = vpop.f32.mrf.mxu0
    %v7791 = vadd.f32 0.0, %v7790
    %v7792 = vpop.f32.mrf.mxu0
    %v7793 = vadd.f32 0.0, %v7792
    %7794 = vmatprep.mubr.f32.mxu0 0.0
    %7795 = vmatmul.mubr.f32.gmra.mxu0 %v7049
    %v7796 = vpop.f32.mrf.mxu0
    %v7797 = vadd.f32 0.0, %v7796
    %v7798 = vpop.f32.mrf.mxu0
    %v7799 = vadd.f32 0.0, %v7798
    %7800 = vmatprep.mubr.f32.mxu0 0.0
    %7801 = vmatmul.mubr.f32.gmra.mxu0 %v7052
    %v7802 = vpop.f32.mrf.mxu0
    %v7803 = vadd.f32 0.0, %v7802
    %v7804 = vpop.f32.mrf.mxu0
    %v7805 = vadd.f32 0.0, %v7804
    %7806 = vmatprep.mubr.f32.mxu0 0.0
    %7807 = vmatmul.mubr.f32.gmra.mxu0 %v7055
    %v7808 = vpop.f32.mrf.mxu0
    %v7809 = vadd.f32 0.0, %v7808
    %v7810 = vpop.f32.mrf.mxu0
    %v7811 = vadd.f32 0.0, %v7810
    %7812 = vmatprep.mubr.f32.mxu0 0.0
    %7813 = vmatmul.mubr.f32.gmra.mxu0 %v7058
    %v7814 = vpop.f32.mrf.mxu0
    %v7815 = vadd.f32 0.0, %v7814
    %v7816 = vpop.f32.mrf.mxu0
    %v7817 = vadd.f32 0.0, %v7816
    %7818 = vmatprep.mubr.f32.mxu0 0.0
    %7819 = vmatmul.mubr.f32.gmra.mxu0 %v7061
    %v7820 = vpop.f32.mrf.mxu0
    %v7821 = vadd.f32 0.0, %v7820
    %v7822 = vpop.f32.mrf.mxu0
    %v7823 = vadd.f32 0.0, %v7822
    %7824 = vmatprep.mubr.f32.mxu0 0.0
    %7825 = vmatmul.mubr.f32.gmra.mxu0 %v7064
    %v7826 = vpop.f32.mrf.mxu0
    %v7827 = vadd.f32 0.0, %v7826
    %v7828 = vpop.f32.mrf.mxu0
    %v7829 = vadd.f32 0.0, %v7828
    %7830 = vmatprep.mubr.f32.mxu0 0.0
    %7831 = vmatmul.mubr.f32.gmra.mxu0 %v7067
    %v7832 = vpop.f32.mrf.mxu0
    %v7833 = vadd.f32 0.0, %v7832
    %v7834 = vpop.f32.mrf.mxu0
    %v7835 = vadd.f32 0.0, %v7834
    %7836 = vmatprep.mubr.f32.mxu0 0.0
    %7837 = vmatmul.mubr.f32.gmra.mxu0 %v7070
    %v7838 = vpop.f32.mrf.mxu0
    %v7839 = vadd.f32 0.0, %v7838
    %v7840 = vpop.f32.mrf.mxu0
    %v7841 = vadd.f32 0.0, %v7840
    %7842 = vdwg.mxu0
    %7843 = vmatprep.subr.mxu0 0.0
    %7844 = vmatpush1.msra.mxu0 0.0
    %7845 = vmatprep.subr.mxu0 0.0
    %7846 = vmatpush1.msra.mxu0 0.0
    %7847 = vmatprep.subr.mxu0 0.0
    %7848 = vmatpush1.msra.mxu0 0.0
    %7849 = vmatprep.subr.mxu0 0.0
    %7850 = vmatpush1.msra.mxu0 0.0
    %7851 = vmatprep.subr.mxu0 0.0
    %7852 = vmatpush1.msra.mxu0 0.0
    %7853 = vmatprep.subr.mxu0 0.0
    %7854 = vmatpush1.msra.mxu0 0.0
    %7855 = vmatprep.subr.mxu0 0.0
    %7856 = vmatpush1.msra.mxu0 0.0
    %7857 = vmatprep.subr.mxu0 0.0
    %7858 = vmatpush1.msra.mxu0 0.0
    %7859 = vmatprep.subr.mxu0 0.0
    %7860 = vmatpush1.msra.mxu0 0.0
    %7861 = vmatprep.subr.mxu0 0.0
    %7862 = vmatpush1.msra.mxu0 0.0
    %7863 = vmatprep.subr.mxu0 0.0
    %7864 = vmatpush1.msra.mxu0 0.0
    %7865 = vmatprep.subr.mxu0 0.0
    %7866 = vmatpush1.msra.mxu0 0.0
    %7867 = vmatprep.subr.mxu0 %v921
    %7868 = vmatpush1.msra.mxu0 %v920
    %7869 = vmatprep.subr.mxu0 %v913
    %7870 = vmatpush1.msra.mxu0 %v912
    %7871 = vmatprep.subr.mxu0 %v905
    %7872 = vmatpush1.msra.mxu0 %v904
    %7873 = vmatprep.subr.mxu0 %v897
    %7874 = vmatpush1.msra.mxu0 %v896
    %7875 = vmatprep.subr.mxu0 0.0
    %7876 = vmatpush2.msra.mxu0 0.0
    %7877 = vmatprep.subr.mxu0 0.0
    %7878 = vmatpush2.msra.mxu0 0.0
    %7879 = vmatprep.subr.mxu0 0.0
    %7880 = vmatpush2.msra.mxu0 0.0
    %7881 = vmatprep.subr.mxu0 0.0
    %7882 = vmatpush2.msra.mxu0 0.0
    %7883 = vmatprep.subr.mxu0 0.0
    %7884 = vmatpush2.msra.mxu0 0.0
    %7885 = vmatprep.subr.mxu0 0.0
    %7886 = vmatpush2.msra.mxu0 0.0
    %7887 = vmatprep.subr.mxu0 0.0
    %7888 = vmatpush2.msra.mxu0 0.0
    %7889 = vmatprep.subr.mxu0 0.0
    %7890 = vmatpush2.msra.mxu0 0.0
    %7891 = vmatprep.subr.mxu0 0.0
    %7892 = vmatpush2.msra.mxu0 0.0
    %7893 = vmatprep.subr.mxu0 0.0
    %7894 = vmatpush2.msra.mxu0 0.0
    %7895 = vmatprep.subr.mxu0 0.0
    %7896 = vmatpush2.msra.mxu0 0.0
    %7897 = vmatprep.subr.mxu0 0.0
    %7898 = vmatpush2.msra.mxu0 0.0
    %7899 = vmatprep.subr.mxu0 0.0
    %7900 = vmatpush2.msra.mxu0 0.0
    %7901 = vmatprep.subr.mxu0 0.0
    %7902 = vmatpush2.msra.mxu0 0.0
    %7903 = vmatprep.subr.mxu0 0.0
    %7904 = vmatpush2.msra.mxu0 0.0
    %7905 = vmatprep.subr.mxu0 0.0
    %7906 = vmatpush2.msra.mxu0 0.0
    %7907 = vmatprep.mubr.f32.mxu0 0.0
    %7908 = vmatmul.mubr.f32.gmra.mxu0 %v6977
    %v7909 = vpop.f32.mrf.mxu0
    %v7910 = vadd.f32 0.0, %v7909
    %v7911 = vpop.f32.mrf.mxu0
    %v7912 = vadd.f32 0.0, %v7911
    %7913 = vmatprep.mubr.f32.mxu0 0.0
    %7914 = vmatmul.mubr.f32.gmra.mxu0 %v6980
    %v7915 = vpop.f32.mrf.mxu0
    %v7916 = vadd.f32 0.0, %v7915
    %v7917 = vpop.f32.mrf.mxu0
    %v7918 = vadd.f32 0.0, %v7917
    %7919 = vmatprep.mubr.f32.mxu0 0.0
    %7920 = vmatmul.mubr.f32.gmra.mxu0 %v6983
    %v7921 = vpop.f32.mrf.mxu0
    %v7922 = vadd.f32 0.0, %v7921
    %v7923 = vpop.f32.mrf.mxu0
    %v7924 = vadd.f32 0.0, %v7923
    %7925 = vmatprep.mubr.f32.mxu0 0.0
    %7926 = vmatmul.mubr.f32.gmra.mxu0 %v6986
    %v7927 = vpop.f32.mrf.mxu0
    %v7928 = vadd.f32 0.0, %v7927
    %v7929 = vpop.f32.mrf.mxu0
    %v7930 = vadd.f32 0.0, %v7929
    %7931 = vmatprep.mubr.f32.mxu0 0.0
    %7932 = vmatmul.mubr.f32.gmra.mxu0 %v6989
    %v7933 = vpop.f32.mrf.mxu0
    %v7934 = vadd.f32 0.0, %v7933
    %v7935 = vpop.f32.mrf.mxu0
    %v7936 = vadd.f32 0.0, %v7935
    %7937 = vmatprep.mubr.f32.mxu0 0.0
    %7938 = vmatmul.mubr.f32.gmra.mxu0 %v6992
    %v7939 = vpop.f32.mrf.mxu0
    %v7940 = vadd.f32 0.0, %v7939
    %v7941 = vpop.f32.mrf.mxu0
    %v7942 = vadd.f32 0.0, %v7941
    %7943 = vmatprep.mubr.f32.mxu0 0.0
    %7944 = vmatmul.mubr.f32.gmra.mxu0 %v6995
    %v7945 = vpop.f32.mrf.mxu0
    %v7946 = vadd.f32 0.0, %v7945
    %v7947 = vpop.f32.mrf.mxu0
    %v7948 = vadd.f32 0.0, %v7947
    %7949 = vmatprep.mubr.f32.mxu0 0.0
    %7950 = vmatmul.mubr.f32.gmra.mxu0 %v6998
    %v7951 = vpop.f32.mrf.mxu0
    %v7952 = vadd.f32 0.0, %v7951
    %v7953 = vpop.f32.mrf.mxu0
    %v7954 = vadd.f32 0.0, %v7953
    %7955 = vmatprep.mubr.f32.mxu0 0.0
    %7956 = vmatmul.mubr.f32.gmra.mxu0 %v7001
    %v7957 = vpop.f32.mrf.mxu0
    %v7958 = vadd.f32 0.0, %v7957
    %v7959 = vpop.f32.mrf.mxu0
    %v7960 = vadd.f32 0.0, %v7959
    %7961 = vmatprep.mubr.f32.mxu0 0.0
    %7962 = vmatmul.mubr.f32.gmra.mxu0 %v7004
    %v7963 = vpop.f32.mrf.mxu0
    %v7964 = vadd.f32 0.0, %v7963
    %v7965 = vpop.f32.mrf.mxu0
    %v7966 = vadd.f32 0.0, %v7965
    %7967 = vmatprep.mubr.f32.mxu0 0.0
    %7968 = vmatmul.mubr.f32.gmra.mxu0 %v7007
    %v7969 = vpop.f32.mrf.mxu0
    %v7970 = vadd.f32 0.0, %v7969
    %v7971 = vpop.f32.mrf.mxu0
    %v7972 = vadd.f32 0.0, %v7971
    %7973 = vmatprep.mubr.f32.mxu0 0.0
    %7974 = vmatmul.mubr.f32.gmra.mxu0 %v7010
    %v7975 = vpop.f32.mrf.mxu0
    %v7976 = vadd.f32 0.0, %v7975
    %v7977 = vpop.f32.mrf.mxu0
    %v7978 = vadd.f32 0.0, %v7977
    %7979 = vmatprep.mubr.f32.mxu0 0.0
    %7980 = vmatmul.mubr.f32.gmra.mxu0 %v7013
    %v7981 = vpop.f32.mrf.mxu0
    %v7982 = vadd.f32 0.0, %v7981
    %v7983 = vpop.f32.mrf.mxu0
    %v7984 = vadd.f32 0.0, %v7983
    %7985 = vmatprep.mubr.f32.mxu0 0.0
    %7986 = vmatmul.mubr.f32.gmra.mxu0 %v7016
    %v7987 = vpop.f32.mrf.mxu0
    %v7988 = vadd.f32 0.0, %v7987
    %v7989 = vpop.f32.mrf.mxu0
    %v7990 = vadd.f32 0.0, %v7989
    %7991 = vmatprep.mubr.f32.mxu0 0.0
    %7992 = vmatmul.mubr.f32.gmra.mxu0 %v7019
    %v7993 = vpop.f32.mrf.mxu0
    %v7994 = vadd.f32 0.0, %v7993
    %v7995 = vpop.f32.mrf.mxu0
    %v7996 = vadd.f32 0.0, %v7995
    %7997 = vmatprep.mubr.f32.mxu0 0.0
    %7998 = vmatmul.mubr.f32.gmra.mxu0 %v7022
    %v7999 = vpop.f32.mrf.mxu0
    %v8000 = vadd.f32 0.0, %v7999
    %v8001 = vpop.f32.mrf.mxu0
    %v8002 = vadd.f32 0.0, %v8001
    %8003 = vmatprep.mubr.f32.mxu0 0.0
    %8004 = vmatmul.mubr.f32.gmra.mxu0 %v7025
    %v8005 = vpop.f32.mrf.mxu0
    %v8006 = vadd.f32 0.0, %v8005
    %v8007 = vpop.f32.mrf.mxu0
    %v8008 = vadd.f32 0.0, %v8007
    %8009 = vmatprep.mubr.f32.mxu0 0.0
    %8010 = vmatmul.mubr.f32.gmra.mxu0 %v7028
    %v8011 = vpop.f32.mrf.mxu0
    %v8012 = vadd.f32 0.0, %v8011
    %v8013 = vpop.f32.mrf.mxu0
    %v8014 = vadd.f32 0.0, %v8013
    %8015 = vmatprep.mubr.f32.mxu0 0.0
    %8016 = vmatmul.mubr.f32.gmra.mxu0 %v7031
    %v8017 = vpop.f32.mrf.mxu0
    %v8018 = vadd.f32 0.0, %v8017
    %v8019 = vpop.f32.mrf.mxu0
    %v8020 = vadd.f32 0.0, %v8019
    %8021 = vmatprep.mubr.f32.mxu0 0.0
    %8022 = vmatmul.mubr.f32.gmra.mxu0 %v7034
    %v8023 = vpop.f32.mrf.mxu0
    %v8024 = vadd.f32 0.0, %v8023
    %v8025 = vpop.f32.mrf.mxu0
    %v8026 = vadd.f32 0.0, %v8025
    %8027 = vmatprep.mubr.f32.mxu0 0.0
    %8028 = vmatmul.mubr.f32.gmra.mxu0 %v7037
    %v8029 = vpop.f32.mrf.mxu0
    %v8030 = vadd.f32 0.0, %v8029
    %v8031 = vpop.f32.mrf.mxu0
    %v8032 = vadd.f32 0.0, %v8031
    %8033 = vmatprep.mubr.f32.mxu0 0.0
    %8034 = vmatmul.mubr.f32.gmra.mxu0 %v7040
    %v8035 = vpop.f32.mrf.mxu0
    %v8036 = vadd.f32 0.0, %v8035
    %v8037 = vpop.f32.mrf.mxu0
    %v8038 = vadd.f32 0.0, %v8037
    %8039 = vmatprep.mubr.f32.mxu0 0.0
    %8040 = vmatmul.mubr.f32.gmra.mxu0 %v7043
    %v8041 = vpop.f32.mrf.mxu0
    %v8042 = vadd.f32 0.0, %v8041
    %v8043 = vpop.f32.mrf.mxu0
    %v8044 = vadd.f32 0.0, %v8043
    %8045 = vmatprep.mubr.f32.mxu0 0.0
    %8046 = vmatmul.mubr.f32.gmra.mxu0 %v7046
    %v8047 = vpop.f32.mrf.mxu0
    %v8048 = vadd.f32 0.0, %v8047
    %v8049 = vpop.f32.mrf.mxu0
    %v8050 = vadd.f32 0.0, %v8049
    %8051 = vmatprep.mubr.f32.mxu0 0.0
    %8052 = vmatmul.mubr.f32.gmra.mxu0 %v7049
    %v8053 = vpop.f32.mrf.mxu0
    %v8054 = vadd.f32 0.0, %v8053
    %v8055 = vpop.f32.mrf.mxu0
    %v8056 = vadd.f32 0.0, %v8055
    %8057 = vmatprep.mubr.f32.mxu0 0.0
    %8058 = vmatmul.mubr.f32.gmra.mxu0 %v7052
    %v8059 = vpop.f32.mrf.mxu0
    %v8060 = vadd.f32 0.0, %v8059
    %v8061 = vpop.f32.mrf.mxu0
    %v8062 = vadd.f32 0.0, %v8061
    %8063 = vmatprep.mubr.f32.mxu0 0.0
    %8064 = vmatmul.mubr.f32.gmra.mxu0 %v7055
    %v8065 = vpop.f32.mrf.mxu0
    %v8066 = vadd.f32 0.0, %v8065
    %v8067 = vpop.f32.mrf.mxu0
    %v8068 = vadd.f32 0.0, %v8067
    %8069 = vmatprep.mubr.f32.mxu0 0.0
    %8070 = vmatmul.mubr.f32.gmra.mxu0 %v7058
    %v8071 = vpop.f32.mrf.mxu0
    %v8072 = vadd.f32 0.0, %v8071
    %v8073 = vpop.f32.mrf.mxu0
    %v8074 = vadd.f32 0.0, %v8073
    %8075 = vmatprep.mubr.f32.mxu0 0.0
    %8076 = vmatmul.mubr.f32.gmra.mxu0 %v7061
    %v8077 = vpop.f32.mrf.mxu0
    %v8078 = vadd.f32 0.0, %v8077
    %v8079 = vpop.f32.mrf.mxu0
    %v8080 = vadd.f32 0.0, %v8079
    %8081 = vmatprep.mubr.f32.mxu0 0.0
    %8082 = vmatmul.mubr.f32.gmra.mxu0 %v7064
    %v8083 = vpop.f32.mrf.mxu0
    %v8084 = vadd.f32 0.0, %v8083
    %v8085 = vpop.f32.mrf.mxu0
    %v8086 = vadd.f32 0.0, %v8085
    %8087 = vmatprep.mubr.f32.mxu0 0.0
    %8088 = vmatmul.mubr.f32.gmra.mxu0 %v7067
    %v8089 = vpop.f32.mrf.mxu0
    %v8090 = vadd.f32 0.0, %v8089
    %v8091 = vpop.f32.mrf.mxu0
    %v8092 = vadd.f32 0.0, %v8091
    %8093 = vmatprep.mubr.f32.mxu0 0.0
    %8094 = vmatmul.mubr.f32.gmra.mxu0 %v7070
    %v8095 = vpop.f32.mrf.mxu0
    %v8096 = vadd.f32 0.0, %v8095
    %v8097 = vpop.f32.mrf.mxu0
    %v8098 = vadd.f32 0.0, %v8097
    %8099 = vdwg.mxu0
    %v8100 = vmul.f32 %v7139, %v6720
    %v8101 = vmul.f32 %v7141, %v6721
    %v8102 = vmul.f32 %v7396, %v6722
    %v8103 = vmul.f32 %v7398, %v6723
    %v8104 = vmul.f32 %v7653, %v6724
    %v8105 = vmul.f32 %v7655, %v6725
    %v8106 = vmul.f32 %v7910, %v6726
    %v8107 = vmul.f32 %v7912, %v6727
    %v8108 = vmul.f32 %v7145, %v6728
    %v8109 = vmul.f32 %v7147, %v6729
    %v8110 = vmul.f32 %v7402, %v6730
    %v8111 = vmul.f32 %v7404, %v6731
    %v8112 = vmul.f32 %v7659, %v6732
    %v8113 = vmul.f32 %v7661, %v6733
    %v8114 = vmul.f32 %v7916, %v6734
    %v8115 = vmul.f32 %v7918, %v6735
    %v8116 = vmul.f32 %v7151, %v6736
    %v8117 = vmul.f32 %v7153, %v6737
    %v8118 = vmul.f32 %v7408, %v6738
    %v8119 = vmul.f32 %v7410, %v6739
    %v8120 = vmul.f32 %v7665, %v6740
    %v8121 = vmul.f32 %v7667, %v6741
    %v8122 = vmul.f32 %v7922, %v6742
    %v8123 = vmul.f32 %v7924, %v6743
    %v8124 = vmul.f32 %v7157, %v6744
    %v8125 = vmul.f32 %v7159, %v6745
    %v8126 = vmul.f32 %v7414, %v6746
    %v8127 = vmul.f32 %v7416, %v6747
    %v8128 = vmul.f32 %v7671, %v6748
    %v8129 = vmul.f32 %v7673, %v6749
    %v8130 = vmul.f32 %v7928, %v6750
    %v8131 = vmul.f32 %v7930, %v6751
    %v8132 = vmul.f32 %v7163, %v6752
    %v8133 = vmul.f32 %v7165, %v6753
    %v8134 = vmul.f32 %v7420, %v6754
    %v8135 = vmul.f32 %v7422, %v6755
    %v8136 = vmul.f32 %v7677, %v6756
    %v8137 = vmul.f32 %v7679, %v6757
    %v8138 = vmul.f32 %v7934, %v6758
    %v8139 = vmul.f32 %v7936, %v6759
    %v8140 = vmul.f32 %v7169, %v6760
    %v8141 = vmul.f32 %v7171, %v6761
    %v8142 = vmul.f32 %v7426, %v6762
    %v8143 = vmul.f32 %v7428, %v6763
    %v8144 = vmul.f32 %v7683, %v6764
    %v8145 = vmul.f32 %v7685, %v6765
    %v8146 = vmul.f32 %v7940, %v6766
    %v8147 = vmul.f32 %v7942, %v6767
    %v8148 = vmul.f32 %v7175, %v6768
    %v8149 = vmul.f32 %v7177, %v6769
    %v8150 = vmul.f32 %v7432, %v6770
    %v8151 = vmul.f32 %v7434, %v6771
    %v8152 = vmul.f32 %v7689, %v6772
    %v8153 = vmul.f32 %v7691, %v6773
    %v8154 = vmul.f32 %v7946, %v6774
    %v8155 = vmul.f32 %v7948, %v6775
    %v8156 = vmul.f32 %v7181, %v6776
    %v8157 = vmul.f32 %v7183, %v6777
    %v8158 = vmul.f32 %v7438, %v6778
    %v8159 = vmul.f32 %v7440, %v6779
    %v8160 = vmul.f32 %v7695, %v6780
    %v8161 = vmul.f32 %v7697, %v6781
    %v8162 = vmul.f32 %v7952, %v6782
    %v8163 = vmul.f32 %v7954, %v6783
    %v8164 = vmul.f32 %v7187, %v6784
    %v8165 = vmul.f32 %v7189, %v6785
    %v8166 = vmul.f32 %v7444, %v6786
    %v8167 = vmul.f32 %v7446, %v6787
    %v8168 = vmul.f32 %v7701, %v6788
    %v8169 = vmul.f32 %v7703, %v6789
    %v8170 = vmul.f32 %v7958, %v6790
    %v8171 = vmul.f32 %v7960, %v6791
    %v8172 = vmul.f32 %v7193, %v6792
    %v8173 = vmul.f32 %v7195, %v6793
    %v8174 = vmul.f32 %v7450, %v6794
    %v8175 = vmul.f32 %v7452, %v6795
    %v8176 = vmul.f32 %v7707, %v6796
    %v8177 = vmul.f32 %v7709, %v6797
    %v8178 = vmul.f32 %v7964, %v6798
    %v8179 = vmul.f32 %v7966, %v6799
    %v8180 = vmul.f32 %v7199, %v6800
    %v8181 = vmul.f32 %v7201, %v6801
    %v8182 = vmul.f32 %v7456, %v6802
    %v8183 = vmul.f32 %v7458, %v6803
    %v8184 = vmul.f32 %v7713, %v6804
    %v8185 = vmul.f32 %v7715, %v6805
    %v8186 = vmul.f32 %v7970, %v6806
    %v8187 = vmul.f32 %v7972, %v6807
    %v8188 = vmul.f32 %v7205, %v6808
    %v8189 = vmul.f32 %v7207, %v6809
    %v8190 = vmul.f32 %v7462, %v6810
    %v8191 = vmul.f32 %v7464, %v6811
    %v8192 = vmul.f32 %v7719, %v6812
    %v8193 = vmul.f32 %v7721, %v6813
    %v8194 = vmul.f32 %v7976, %v6814
    %v8195 = vmul.f32 %v7978, %v6815
    %v8196 = vmul.f32 %v7211, %v6816
    %v8197 = vmul.f32 %v7213, %v6817
    %v8198 = vmul.f32 %v7468, %v6818
    %v8199 = vmul.f32 %v7470, %v6819
    %v8200 = vmul.f32 %v7725, %v6820
    %v8201 = vmul.f32 %v7727, %v6821
    %v8202 = vmul.f32 %v7982, %v6822
    %v8203 = vmul.f32 %v7984, %v6823
    %v8204 = vmul.f32 %v7217, %v6824
    %v8205 = vmul.f32 %v7219, %v6825
    %v8206 = vmul.f32 %v7474, %v6826
    %v8207 = vmul.f32 %v7476, %v6827
    %v8208 = vmul.f32 %v7731, %v6828
    %v8209 = vmul.f32 %v7733, %v6829
    %v8210 = vmul.f32 %v7988, %v6830
    %v8211 = vmul.f32 %v7990, %v6831
    %v8212 = vmul.f32 %v7223, %v6832
    %v8213 = vmul.f32 %v7225, %v6833
    %v8214 = vmul.f32 %v7480, %v6834
    %v8215 = vmul.f32 %v7482, %v6835
    %v8216 = vmul.f32 %v7737, %v6836
    %v8217 = vmul.f32 %v7739, %v6837
    %v8218 = vmul.f32 %v7994, %v6838
    %v8219 = vmul.f32 %v7996, %v6839
    %v8220 = vmul.f32 %v7229, %v6840
    %v8221 = vmul.f32 %v7231, %v6841
    %v8222 = vmul.f32 %v7486, %v6842
    %v8223 = vmul.f32 %v7488, %v6843
    %v8224 = vmul.f32 %v7743, %v6844
    %v8225 = vmul.f32 %v7745, %v6845
    %v8226 = vmul.f32 %v8000, %v6846
    %v8227 = vmul.f32 %v8002, %v6847
    %v8228 = vmul.f32 %v7235, %v6848
    %v8229 = vmul.f32 %v7237, %v6849
    %v8230 = vmul.f32 %v7492, %v6850
    %v8231 = vmul.f32 %v7494, %v6851
    %v8232 = vmul.f32 %v7749, %v6852
    %v8233 = vmul.f32 %v7751, %v6853
    %v8234 = vmul.f32 %v8006, %v6854
    %v8235 = vmul.f32 %v8008, %v6855
    %v8236 = vmul.f32 %v7241, %v6856
    %v8237 = vmul.f32 %v7243, %v6857
    %v8238 = vmul.f32 %v7498, %v6858
    %v8239 = vmul.f32 %v7500, %v6859
    %v8240 = vmul.f32 %v7755, %v6860
    %v8241 = vmul.f32 %v7757, %v6861
    %v8242 = vmul.f32 %v8012, %v6862
    %v8243 = vmul.f32 %v8014, %v6863
    %v8244 = vmul.f32 %v7247, %v6864
    %v8245 = vmul.f32 %v7249, %v6865
    %v8246 = vmul.f32 %v7504, %v6866
    %v8247 = vmul.f32 %v7506, %v6867
    %v8248 = vmul.f32 %v7761, %v6868
    %v8249 = vmul.f32 %v7763, %v6869
    %v8250 = vmul.f32 %v8018, %v6870
    %v8251 = vmul.f32 %v8020, %v6871
    %v8252 = vmul.f32 %v7253, %v6872
    %v8253 = vmul.f32 %v7255, %v6873
    %v8254 = vmul.f32 %v7510, %v6874
    %v8255 = vmul.f32 %v7512, %v6875
    %v8256 = vmul.f32 %v7767, %v6876
    %v8257 = vmul.f32 %v7769, %v6877
    %v8258 = vmul.f32 %v8024, %v6878
    %v8259 = vmul.f32 %v8026, %v6879
    %v8260 = vmul.f32 %v7259, %v6880
    %v8261 = vmul.f32 %v7261, %v6881
    %v8262 = vmul.f32 %v7516, %v6882
    %v8263 = vmul.f32 %v7518, %v6883
    %v8264 = vmul.f32 %v7773, %v6884
    %v8265 = vmul.f32 %v7775, %v6885
    %v8266 = vmul.f32 %v8030, %v6886
    %v8267 = vmul.f32 %v8032, %v6887
    %v8268 = vmul.f32 %v7265, %v6888
    %v8269 = vmul.f32 %v7267, %v6889
    %v8270 = vmul.f32 %v7522, %v6890
    %v8271 = vmul.f32 %v7524, %v6891
    %v8272 = vmul.f32 %v7779, %v6892
    %v8273 = vmul.f32 %v7781, %v6893
    %v8274 = vmul.f32 %v8036, %v6894
    %v8275 = vmul.f32 %v8038, %v6895
    %v8276 = vmul.f32 %v7271, %v6896
    %v8277 = vmul.f32 %v7273, %v6897
    %v8278 = vmul.f32 %v7528, %v6898
    %v8279 = vmul.f32 %v7530, %v6899
    %v8280 = vmul.f32 %v7785, %v6900
    %v8281 = vmul.f32 %v7787, %v6901
    %v8282 = vmul.f32 %v8042, %v6902
    %v8283 = vmul.f32 %v8044, %v6903
    %v8284 = vmul.f32 %v7277, %v6904
    %v8285 = vmul.f32 %v7279, %v6905
    %v8286 = vmul.f32 %v7534, %v6906
    %v8287 = vmul.f32 %v7536, %v6907
    %v8288 = vmul.f32 %v7791, %v6908
    %v8289 = vmul.f32 %v7793, %v6909
    %v8290 = vmul.f32 %v8048, %v6910
    %v8291 = vmul.f32 %v8050, %v6911
    %v8292 = vmul.f32 %v7283, %v6912
    %v8293 = vmul.f32 %v7285, %v6913
    %v8294 = vmul.f32 %v7540, %v6914
    %v8295 = vmul.f32 %v7542, %v6915
    %v8296 = vmul.f32 %v7797, %v6916
    %v8297 = vmul.f32 %v7799, %v6917
    %v8298 = vmul.f32 %v8054, %v6918
    %v8299 = vmul.f32 %v8056, %v6919
    %v8300 = vmul.f32 %v7289, %v6920
    %v8301 = vmul.f32 %v7291, %v6921
    %v8302 = vmul.f32 %v7546, %v6922
    %v8303 = vmul.f32 %v7548, %v6923
    %v8304 = vmul.f32 %v7803, %v6924
    %v8305 = vmul.f32 %v7805, %v6925
    %v8306 = vmul.f32 %v8060, %v6926
    %v8307 = vmul.f32 %v8062, %v6927
    %v8308 = vmul.f32 %v7295, %v6928
    %v8309 = vmul.f32 %v7297, %v6929
    %v8310 = vmul.f32 %v7552, %v6930
    %v8311 = vmul.f32 %v7554, %v6931
    %v8312 = vmul.f32 %v7809, %v6932
    %v8313 = vmul.f32 %v7811, %v6933
    %v8314 = vmul.f32 %v8066, %v6934
    %v8315 = vmul.f32 %v8068, %v6935
    %v8316 = vmul.f32 %v7301, %v6936
    %v8317 = vmul.f32 %v7303, %v6937
    %v8318 = vmul.f32 %v7558, %v6938
    %v8319 = vmul.f32 %v7560, %v6939
    %v8320 = vmul.f32 %v7815, %v6940
    %v8321 = vmul.f32 %v7817, %v6941
    %v8322 = vmul.f32 %v8072, %v6942
    %v8323 = vmul.f32 %v8074, %v6943
    %v8324 = vmul.f32 %v7307, %v6944
    %v8325 = vmul.f32 %v7309, %v6945
    %v8326 = vmul.f32 %v7564, %v6946
    %v8327 = vmul.f32 %v7566, %v6947
    %v8328 = vmul.f32 %v7821, %v6948
    %v8329 = vmul.f32 %v7823, %v6949
    %v8330 = vmul.f32 %v8078, %v6950
    %v8331 = vmul.f32 %v8080, %v6951
    %v8332 = vmul.f32 %v7313, %v6952
    %v8333 = vmul.f32 %v7315, %v6953
    %v8334 = vmul.f32 %v7570, %v6954
    %v8335 = vmul.f32 %v7572, %v6955
    %v8336 = vmul.f32 %v7827, %v6956
    %v8337 = vmul.f32 %v7829, %v6957
    %v8338 = vmul.f32 %v8084, %v6958
    %v8339 = vmul.f32 %v8086, %v6959
    %v8340 = vmul.f32 %v7319, %v6960
    %v8341 = vmul.f32 %v7321, %v6961
    %v8342 = vmul.f32 %v7576, %v6962
    %v8343 = vmul.f32 %v7578, %v6963
    %v8344 = vmul.f32 %v7833, %v6964
    %v8345 = vmul.f32 %v7835, %v6965
    %v8346 = vmul.f32 %v8090, %v6966
    %v8347 = vmul.f32 %v8092, %v6967
    %v8348 = vmul.f32 %v7325, %v6968
    %v8349 = vmul.f32 %v7327, %v6969
    %v8350 = vmul.f32 %v7582, %v6970
    %v8351 = vmul.f32 %v7584, %v6971
    %v8352 = vmul.f32 %v7839, %v6972
    %v8353 = vmul.f32 %v7841, %v6973
    %v8354 = vmul.f32 %v8096, %v6974
    %v8355 = vmul.f32 %v8098, %v6975
    %8356 = vrot.lane.b32.xlu0 %v304, 32
    %v8357 = vpop.permute.xlu0 %8356
    %8358 = vrot.lane.b32.xlu0 %v310, 32
    %v8359 = vpop.permute.xlu0 %8358
    %8360 = vrot.lane.b32.xlu0 %v316, 32
    %v8361 = vpop.permute.xlu0 %8360
    %8362 = vrot.lane.b32.xlu0 %v322, 32
    %v8363 = vpop.permute.xlu0 %8362
    %8364 = vrot.lane.b32.xlu0 %v328, 32
    %v8365 = vpop.permute.xlu0 %8364
    %8366 = vrot.lane.b32.xlu0 %v334, 32
    %v8367 = vpop.permute.xlu0 %8366
    %8368 = vrot.lane.b32.xlu0 %v340, 32
    %v8369 = vpop.permute.xlu0 %8368
    %8370 = vrot.lane.b32.xlu0 %v346, 32
    %v8371 = vpop.permute.xlu0 %8370
    %8372 = vrot.lane.b32.xlu0 %v352, 32
    %v8373 = vpop.permute.xlu0 %8372
    %8374 = vrot.lane.b32.xlu0 %v358, 32
    %v8375 = vpop.permute.xlu0 %8374
    %8376 = vrot.lane.b32.xlu0 %v364, 32
    %v8377 = vpop.permute.xlu0 %8376
    %8378 = vrot.lane.b32.xlu0 %v370, 32
    %v8379 = vpop.permute.xlu0 %8378
    %8380 = vrot.lane.b32.xlu0 %v376, 32
    %v8381 = vpop.permute.xlu0 %8380
    %8382 = vrot.lane.b32.xlu0 %v382, 32
    %v8383 = vpop.permute.xlu0 %8382
    %8384 = vrot.lane.b32.xlu0 %v388, 32
    %v8385 = vpop.permute.xlu0 %8384
    %8386 = vrot.lane.b32.xlu0 %v394, 32
    %v8387 = vpop.permute.xlu0 %8386
    %8388 = vrot.lane.b32.xlu0 %v400, 32
    %v8389 = vpop.permute.xlu0 %8388
    %8390 = vrot.lane.b32.xlu0 %v406, 32
    %v8391 = vpop.permute.xlu0 %8390
    %8392 = vrot.lane.b32.xlu0 %v412, 32
    %v8393 = vpop.permute.xlu0 %8392
    %8394 = vrot.lane.b32.xlu0 %v418, 32
    %v8395 = vpop.permute.xlu0 %8394
    %8396 = vrot.lane.b32.xlu0 %v424, 32
    %v8397 = vpop.permute.xlu0 %8396
    %8398 = vrot.lane.b32.xlu0 %v430, 32
    %v8399 = vpop.permute.xlu0 %8398
    %8400 = vrot.lane.b32.xlu0 %v436, 32
    %v8401 = vpop.permute.xlu0 %8400
    %8402 = vrot.lane.b32.xlu0 %v442, 32
    %v8403 = vpop.permute.xlu0 %8402
    %8404 = vrot.lane.b32.xlu0 %v448, 32
    %v8405 = vpop.permute.xlu0 %8404
    %8406 = vrot.lane.b32.xlu0 %v454, 32
    %v8407 = vpop.permute.xlu0 %8406
    %8408 = vrot.lane.b32.xlu0 %v460, 32
    %v8409 = vpop.permute.xlu0 %8408
    %8410 = vrot.lane.b32.xlu0 %v466, 32
    %v8411 = vpop.permute.xlu0 %8410
    %8412 = vrot.lane.b32.xlu0 %v472, 32
    %v8413 = vpop.permute.xlu0 %8412
    %8414 = vrot.lane.b32.xlu0 %v478, 32
    %v8415 = vpop.permute.xlu0 %8414
    %8416 = vrot.lane.b32.xlu0 %v484, 32
    %v8417 = vpop.permute.xlu0 %8416
    %8418 = vrot.lane.b32.xlu0 %v490, 32
    %v8419 = vpop.permute.xlu0 %8418
    %8452 = vmatprep.subr.mxu0 0.0
    %8453 = vmatpush1.msra.mxu0 %v937
    %8454 = vmatprep.subr.mxu0 0.0
    %8455 = vmatpush1.msra.mxu0 %v936
    %8456 = vmatprep.subr.mxu0 0.0
    %8457 = vmatpush1.msra.mxu0 %v935
    %8458 = vmatprep.subr.mxu0 0.0
    %8459 = vmatpush1.msra.mxu0 %v934
    %8460 = vmatprep.subr.mxu0 0.0
    %8461 = vmatpush1.msra.mxu0 %v933
    %8462 = vmatprep.subr.mxu0 0.0
    %8463 = vmatpush1.msra.mxu0 %v932
    %8464 = vmatprep.subr.mxu0 0.0
    %8465 = vmatpush1.msra.mxu0 %v931
    %8466 = vmatprep.subr.mxu0 0.0
    %8467 = vmatpush1.msra.mxu0 %v930
    %8468 = vmatprep.subr.mxu0 0.0
    %8469 = vmatpush1.msra.mxu0 %v929
    %8470 = vmatprep.subr.mxu0 0.0
    %8471 = vmatpush1.msra.mxu0 %v928
    %8472 = vmatprep.subr.mxu0 0.0
    %8473 = vmatpush1.msra.mxu0 %v927
    %8474 = vmatprep.subr.mxu0 0.0
    %8475 = vmatpush1.msra.mxu0 %v926
    %8476 = vmatprep.subr.mxu0 0.0
    %8477 = vmatpush1.msra.mxu0 %v925
    %8478 = vmatprep.subr.mxu0 0.0
    %8479 = vmatpush1.msra.mxu0 %v924
    %8480 = vmatprep.subr.mxu0 0.0
    %8481 = vmatpush1.msra.mxu0 %v923
    %8482 = vmatprep.subr.mxu0 0.0
    %8483 = vmatpush1.msra.mxu0 %v922
    %8484 = vmatprep.subr.mxu0 0.0
    %8485 = vmatpush2.msra.mxu0 %v953
    %8486 = vmatprep.subr.mxu0 0.0
    %8487 = vmatpush2.msra.mxu0 %v952
    %8488 = vmatprep.subr.mxu0 0.0
    %8489 = vmatpush2.msra.mxu0 %v951
    %8490 = vmatprep.subr.mxu0 0.0
    %8491 = vmatpush2.msra.mxu0 %v950
    %8492 = vmatprep.subr.mxu0 0.0
    %8493 = vmatpush2.msra.mxu0 %v949
    %8494 = vmatprep.subr.mxu0 0.0
    %8495 = vmatpush2.msra.mxu0 %v948
    %8496 = vmatprep.subr.mxu0 0.0
    %8497 = vmatpush2.msra.mxu0 %v947
    %8498 = vmatprep.subr.mxu0 0.0
    %8499 = vmatpush2.msra.mxu0 %v946
    %8500 = vmatprep.subr.mxu0 0.0
    %8501 = vmatpush2.msra.mxu0 %v945
    %8502 = vmatprep.subr.mxu0 0.0
    %8503 = vmatpush2.msra.mxu0 %v944
    %8504 = vmatprep.subr.mxu0 0.0
    %8505 = vmatpush2.msra.mxu0 %v943
    %8506 = vmatprep.subr.mxu0 0.0
    %8507 = vmatpush2.msra.mxu0 %v942
    %8508 = vmatprep.subr.mxu0 0.0
    %8509 = vmatpush2.msra.mxu0 %v941
    %8510 = vmatprep.subr.mxu0 0.0
    %8511 = vmatpush2.msra.mxu0 %v940
    %8512 = vmatprep.subr.mxu0 0.0
    %8513 = vmatpush2.msra.mxu0 %v939
    %8514 = vmatprep.subr.mxu0 0.0
    %8515 = vmatpush2.msra.mxu0 %v938
    %8516 = vmatprep.mubr.f32.mxu0 %v8101
    %8517 = vmatmul.mubr.f32.gmra.mxu0 %v8100
    %v8518 = vpop.f32.mrf.mxu0
    %v8519 = vadd.f32 %v8357, %v8518
    %v8520 = vpop.f32.mrf.mxu0
    %8521 = vmatprep.mubr.f32.mxu0 %v8109
    %8522 = vmatmul.mubr.f32.gmra.mxu0 %v8108
    %v8523 = vpop.f32.mrf.mxu0
    %v8524 = vadd.f32 %v8359, %v8523
    %v8525 = vpop.f32.mrf.mxu0
    %8526 = vmatprep.mubr.f32.mxu0 %v8117
    %8527 = vmatmul.mubr.f32.gmra.mxu0 %v8116
    %v8528 = vpop.f32.mrf.mxu0
    %v8529 = vadd.f32 %v8361, %v8528
    %v8530 = vpop.f32.mrf.mxu0
    %8531 = vmatprep.mubr.f32.mxu0 %v8125
    %8532 = vmatmul.mubr.f32.gmra.mxu0 %v8124
    %v8533 = vpop.f32.mrf.mxu0
    %v8534 = vadd.f32 %v8363, %v8533
    %v8535 = vpop.f32.mrf.mxu0
    %8536 = vmatprep.mubr.f32.mxu0 %v8133
    %8537 = vmatmul.mubr.f32.gmra.mxu0 %v8132
    %v8538 = vpop.f32.mrf.mxu0
    %v8539 = vadd.f32 %v8365, %v8538
    %v8540 = vpop.f32.mrf.mxu0
    %8541 = vmatprep.mubr.f32.mxu0 %v8141
    %8542 = vmatmul.mubr.f32.gmra.mxu0 %v8140
    %v8543 = vpop.f32.mrf.mxu0
    %v8544 = vadd.f32 %v8367, %v8543
    %v8545 = vpop.f32.mrf.mxu0
    %8546 = vmatprep.mubr.f32.mxu0 %v8149
    %8547 = vmatmul.mubr.f32.gmra.mxu0 %v8148
    %v8548 = vpop.f32.mrf.mxu0
    %v8549 = vadd.f32 %v8369, %v8548
    %v8550 = vpop.f32.mrf.mxu0
    %8551 = vmatprep.mubr.f32.mxu0 %v8157
    %8552 = vmatmul.mubr.f32.gmra.mxu0 %v8156
    %v8553 = vpop.f32.mrf.mxu0
    %v8554 = vadd.f32 %v8371, %v8553
    %v8555 = vpop.f32.mrf.mxu0
    %8556 = vmatprep.mubr.f32.mxu0 %v8165
    %8557 = vmatmul.mubr.f32.gmra.mxu0 %v8164
    %v8558 = vpop.f32.mrf.mxu0
    %v8559 = vadd.f32 %v8373, %v8558
    %v8560 = vpop.f32.mrf.mxu0
    %8561 = vmatprep.mubr.f32.mxu0 %v8173
    %8562 = vmatmul.mubr.f32.gmra.mxu0 %v8172
    %v8563 = vpop.f32.mrf.mxu0
    %v8564 = vadd.f32 %v8375, %v8563
    %v8565 = vpop.f32.mrf.mxu0
    %8566 = vmatprep.mubr.f32.mxu0 %v8181
    %8567 = vmatmul.mubr.f32.gmra.mxu0 %v8180
    %v8568 = vpop.f32.mrf.mxu0
    %v8569 = vadd.f32 %v8377, %v8568
    %v8570 = vpop.f32.mrf.mxu0
    %8571 = vmatprep.mubr.f32.mxu0 %v8189
    %8572 = vmatmul.mubr.f32.gmra.mxu0 %v8188
    %v8573 = vpop.f32.mrf.mxu0
    %v8574 = vadd.f32 %v8379, %v8573
    %v8575 = vpop.f32.mrf.mxu0
    %8576 = vmatprep.mubr.f32.mxu0 %v8197
    %8577 = vmatmul.mubr.f32.gmra.mxu0 %v8196
    %v8578 = vpop.f32.mrf.mxu0
    %v8579 = vadd.f32 %v8381, %v8578
    %v8580 = vpop.f32.mrf.mxu0
    %8581 = vmatprep.mubr.f32.mxu0 %v8205
    %8582 = vmatmul.mubr.f32.gmra.mxu0 %v8204
    %v8583 = vpop.f32.mrf.mxu0
    %v8584 = vadd.f32 %v8383, %v8583
    %v8585 = vpop.f32.mrf.mxu0
    %8586 = vmatprep.mubr.f32.mxu0 %v8213
    %8587 = vmatmul.mubr.f32.gmra.mxu0 %v8212
    %v8588 = vpop.f32.mrf.mxu0
    %v8589 = vadd.f32 %v8385, %v8588
    %v8590 = vpop.f32.mrf.mxu0
    %8591 = vmatprep.mubr.f32.mxu0 %v8221
    %8592 = vmatmul.mubr.f32.gmra.mxu0 %v8220
    %v8593 = vpop.f32.mrf.mxu0
    %v8594 = vadd.f32 %v8387, %v8593
    %v8595 = vpop.f32.mrf.mxu0
    %8596 = vmatprep.mubr.f32.mxu0 %v8229
    %8597 = vmatmul.mubr.f32.gmra.mxu0 %v8228
    %v8598 = vpop.f32.mrf.mxu0
    %v8599 = vadd.f32 %v8389, %v8598
    %v8600 = vpop.f32.mrf.mxu0
    %8601 = vmatprep.mubr.f32.mxu0 %v8237
    %8602 = vmatmul.mubr.f32.gmra.mxu0 %v8236
    %v8603 = vpop.f32.mrf.mxu0
    %v8604 = vadd.f32 %v8391, %v8603
    %v8605 = vpop.f32.mrf.mxu0
    %8606 = vmatprep.mubr.f32.mxu0 %v8245
    %8607 = vmatmul.mubr.f32.gmra.mxu0 %v8244
    %v8608 = vpop.f32.mrf.mxu0
    %v8609 = vadd.f32 %v8393, %v8608
    %v8610 = vpop.f32.mrf.mxu0
    %8611 = vmatprep.mubr.f32.mxu0 %v8253
    %8612 = vmatmul.mubr.f32.gmra.mxu0 %v8252
    %v8613 = vpop.f32.mrf.mxu0
    %v8614 = vadd.f32 %v8395, %v8613
    %v8615 = vpop.f32.mrf.mxu0
    %8616 = vmatprep.mubr.f32.mxu0 %v8261
    %8617 = vmatmul.mubr.f32.gmra.mxu0 %v8260
    %v8618 = vpop.f32.mrf.mxu0
    %v8619 = vadd.f32 %v8397, %v8618
    %v8620 = vpop.f32.mrf.mxu0
    %8621 = vmatprep.mubr.f32.mxu0 %v8269
    %8622 = vmatmul.mubr.f32.gmra.mxu0 %v8268
    %v8623 = vpop.f32.mrf.mxu0
    %v8624 = vadd.f32 %v8399, %v8623
    %v8625 = vpop.f32.mrf.mxu0
    %8626 = vmatprep.mubr.f32.mxu0 %v8277
    %8627 = vmatmul.mubr.f32.gmra.mxu0 %v8276
    %v8628 = vpop.f32.mrf.mxu0
    %v8629 = vadd.f32 %v8401, %v8628
    %v8630 = vpop.f32.mrf.mxu0
    %8631 = vmatprep.mubr.f32.mxu0 %v8285
    %8632 = vmatmul.mubr.f32.gmra.mxu0 %v8284
    %v8633 = vpop.f32.mrf.mxu0
    %v8634 = vadd.f32 %v8403, %v8633
    %v8635 = vpop.f32.mrf.mxu0
    %8636 = vmatprep.mubr.f32.mxu0 %v8293
    %8637 = vmatmul.mubr.f32.gmra.mxu0 %v8292
    %v8638 = vpop.f32.mrf.mxu0
    %v8639 = vadd.f32 %v8405, %v8638
    %v8640 = vpop.f32.mrf.mxu0
    %8641 = vmatprep.mubr.f32.mxu0 %v8301
    %8642 = vmatmul.mubr.f32.gmra.mxu0 %v8300
    %v8643 = vpop.f32.mrf.mxu0
    %v8644 = vadd.f32 %v8407, %v8643
    %v8645 = vpop.f32.mrf.mxu0
    %8646 = vmatprep.mubr.f32.mxu0 %v8309
    %8647 = vmatmul.mubr.f32.gmra.mxu0 %v8308
    %v8648 = vpop.f32.mrf.mxu0
    %v8649 = vadd.f32 %v8409, %v8648
    %v8650 = vpop.f32.mrf.mxu0
    %8651 = vmatprep.mubr.f32.mxu0 %v8317
    %8652 = vmatmul.mubr.f32.gmra.mxu0 %v8316
    %v8653 = vpop.f32.mrf.mxu0
    %v8654 = vadd.f32 %v8411, %v8653
    %v8655 = vpop.f32.mrf.mxu0
    %8656 = vmatprep.mubr.f32.mxu0 %v8325
    %8657 = vmatmul.mubr.f32.gmra.mxu0 %v8324
    %v8658 = vpop.f32.mrf.mxu0
    %v8659 = vadd.f32 %v8413, %v8658
    %v8660 = vpop.f32.mrf.mxu0
    %8661 = vmatprep.mubr.f32.mxu0 %v8333
    %8662 = vmatmul.mubr.f32.gmra.mxu0 %v8332
    %v8663 = vpop.f32.mrf.mxu0
    %v8664 = vadd.f32 %v8415, %v8663
    %v8665 = vpop.f32.mrf.mxu0
    %8666 = vmatprep.mubr.f32.mxu0 %v8341
    %8667 = vmatmul.mubr.f32.gmra.mxu0 %v8340
    %v8668 = vpop.f32.mrf.mxu0
    %v8669 = vadd.f32 %v8417, %v8668
    %v8670 = vpop.f32.mrf.mxu0
    %8671 = vmatprep.mubr.f32.mxu0 %v8349
    %8672 = vmatmul.mubr.f32.gmra.mxu0 %v8348
    %v8673 = vpop.f32.mrf.mxu0
    %v8674 = vadd.f32 %v8419, %v8673
    %v8675 = vpop.f32.mrf.mxu0
    %8676 = vdwg.mxu0
    %8677 = vmatprep.subr.mxu0 0.0
    %8678 = vmatpush1.msra.mxu0 %v969
    %8679 = vmatprep.subr.mxu0 0.0
    %8680 = vmatpush1.msra.mxu0 %v968
    %8681 = vmatprep.subr.mxu0 0.0
    %8682 = vmatpush1.msra.mxu0 %v967
    %8683 = vmatprep.subr.mxu0 0.0
    %8684 = vmatpush1.msra.mxu0 %v966
    %8685 = vmatprep.subr.mxu0 0.0
    %8686 = vmatpush1.msra.mxu0 %v965
    %8687 = vmatprep.subr.mxu0 0.0
    %8688 = vmatpush1.msra.mxu0 %v964
    %8689 = vmatprep.subr.mxu0 0.0
    %8690 = vmatpush1.msra.mxu0 %v963
    %8691 = vmatprep.subr.mxu0 0.0
    %8692 = vmatpush1.msra.mxu0 %v962
    %8693 = vmatprep.subr.mxu0 0.0
    %8694 = vmatpush1.msra.mxu0 %v961
    %8695 = vmatprep.subr.mxu0 0.0
    %8696 = vmatpush1.msra.mxu0 %v960
    %8697 = vmatprep.subr.mxu0 0.0
    %8698 = vmatpush1.msra.mxu0 %v959
    %8699 = vmatprep.subr.mxu0 0.0
    %8700 = vmatpush1.msra.mxu0 %v958
    %8701 = vmatprep.subr.mxu0 0.0
    %8702 = vmatpush1.msra.mxu0 %v957
    %8703 = vmatprep.subr.mxu0 0.0
    %8704 = vmatpush1.msra.mxu0 %v956
    %8705 = vmatprep.subr.mxu0 0.0
    %8706 = vmatpush1.msra.mxu0 %v955
    %8707 = vmatprep.subr.mxu0 0.0
    %8708 = vmatpush1.msra.mxu0 %v954
    %8709 = vmatprep.subr.mxu0 0.0
    %8710 = vmatpush2.msra.mxu0 %v985
    %8711 = vmatprep.subr.mxu0 0.0
    %8712 = vmatpush2.msra.mxu0 %v984
    %8713 = vmatprep.subr.mxu0 0.0
    %8714 = vmatpush2.msra.mxu0 %v983
    %8715 = vmatprep.subr.mxu0 0.0
    %8716 = vmatpush2.msra.mxu0 %v982
    %8717 = vmatprep.subr.mxu0 0.0
    %8718 = vmatpush2.msra.mxu0 %v981
    %8719 = vmatprep.subr.mxu0 0.0
    %8720 = vmatpush2.msra.mxu0 %v980
    %8721 = vmatprep.subr.mxu0 0.0
    %8722 = vmatpush2.msra.mxu0 %v979
    %8723 = vmatprep.subr.mxu0 0.0
    %8724 = vmatpush2.msra.mxu0 %v978
    %8725 = vmatprep.subr.mxu0 0.0
    %8726 = vmatpush2.msra.mxu0 %v977
    %8727 = vmatprep.subr.mxu0 0.0
    %8728 = vmatpush2.msra.mxu0 %v976
    %8729 = vmatprep.subr.mxu0 0.0
    %8730 = vmatpush2.msra.mxu0 %v975
    %8731 = vmatprep.subr.mxu0 0.0
    %8732 = vmatpush2.msra.mxu0 %v974
    %8733 = vmatprep.subr.mxu0 0.0
    %8734 = vmatpush2.msra.mxu0 %v973
    %8735 = vmatprep.subr.mxu0 0.0
    %8736 = vmatpush2.msra.mxu0 %v972
    %8737 = vmatprep.subr.mxu0 0.0
    %8738 = vmatpush2.msra.mxu0 %v971
    %8739 = vmatprep.subr.mxu0 0.0
    %8740 = vmatpush2.msra.mxu0 %v970
    %8741 = vmatprep.mubr.f32.mxu0 %v8103
    %8742 = vmatmul.mubr.f32.gmra.mxu0 %v8102
    %v8743 = vpop.f32.mrf.mxu0
    %v8744 = vadd.f32 %v8519, %v8743
    %v8745 = vpop.f32.mrf.mxu0
    %8746 = vmatprep.mubr.f32.mxu0 %v8111
    %8747 = vmatmul.mubr.f32.gmra.mxu0 %v8110
    %v8748 = vpop.f32.mrf.mxu0
    %v8749 = vadd.f32 %v8524, %v8748
    %v8750 = vpop.f32.mrf.mxu0
    %8751 = vmatprep.mubr.f32.mxu0 %v8119
    %8752 = vmatmul.mubr.f32.gmra.mxu0 %v8118
    %v8753 = vpop.f32.mrf.mxu0
    %v8754 = vadd.f32 %v8529, %v8753
    %v8755 = vpop.f32.mrf.mxu0
    %8756 = vmatprep.mubr.f32.mxu0 %v8127
    %8757 = vmatmul.mubr.f32.gmra.mxu0 %v8126
    %v8758 = vpop.f32.mrf.mxu0
    %v8759 = vadd.f32 %v8534, %v8758
    %v8760 = vpop.f32.mrf.mxu0
    %8761 = vmatprep.mubr.f32.mxu0 %v8135
    %8762 = vmatmul.mubr.f32.gmra.mxu0 %v8134
    %v8763 = vpop.f32.mrf.mxu0
    %v8764 = vadd.f32 %v8539, %v8763
    %v8765 = vpop.f32.mrf.mxu0
    %8766 = vmatprep.mubr.f32.mxu0 %v8143
    %8767 = vmatmul.mubr.f32.gmra.mxu0 %v8142
    %v8768 = vpop.f32.mrf.mxu0
    %v8769 = vadd.f32 %v8544, %v8768
    %v8770 = vpop.f32.mrf.mxu0
    %8771 = vmatprep.mubr.f32.mxu0 %v8151
    %8772 = vmatmul.mubr.f32.gmra.mxu0 %v8150
    %v8773 = vpop.f32.mrf.mxu0
    %v8774 = vadd.f32 %v8549, %v8773
    %v8775 = vpop.f32.mrf.mxu0
    %8776 = vmatprep.mubr.f32.mxu0 %v8159
    %8777 = vmatmul.mubr.f32.gmra.mxu0 %v8158
    %v8778 = vpop.f32.mrf.mxu0
    %v8779 = vadd.f32 %v8554, %v8778
    %v8780 = vpop.f32.mrf.mxu0
    %8781 = vmatprep.mubr.f32.mxu0 %v8167
    %8782 = vmatmul.mubr.f32.gmra.mxu0 %v8166
    %v8783 = vpop.f32.mrf.mxu0
    %v8784 = vadd.f32 %v8559, %v8783
    %v8785 = vpop.f32.mrf.mxu0
    %8786 = vmatprep.mubr.f32.mxu0 %v8175
    %8787 = vmatmul.mubr.f32.gmra.mxu0 %v8174
    %v8788 = vpop.f32.mrf.mxu0
    %v8789 = vadd.f32 %v8564, %v8788
    %v8790 = vpop.f32.mrf.mxu0
    %8791 = vmatprep.mubr.f32.mxu0 %v8183
    %8792 = vmatmul.mubr.f32.gmra.mxu0 %v8182
    %v8793 = vpop.f32.mrf.mxu0
    %v8794 = vadd.f32 %v8569, %v8793
    %v8795 = vpop.f32.mrf.mxu0
    %8796 = vmatprep.mubr.f32.mxu0 %v8191
    %8797 = vmatmul.mubr.f32.gmra.mxu0 %v8190
    %v8798 = vpop.f32.mrf.mxu0
    %v8799 = vadd.f32 %v8574, %v8798
    %v8800 = vpop.f32.mrf.mxu0
    %8801 = vmatprep.mubr.f32.mxu0 %v8199
    %8802 = vmatmul.mubr.f32.gmra.mxu0 %v8198
    %v8803 = vpop.f32.mrf.mxu0
    %v8804 = vadd.f32 %v8579, %v8803
    %v8805 = vpop.f32.mrf.mxu0
    %8806 = vmatprep.mubr.f32.mxu0 %v8207
    %8807 = vmatmul.mubr.f32.gmra.mxu0 %v8206
    %v8808 = vpop.f32.mrf.mxu0
    %v8809 = vadd.f32 %v8584, %v8808
    %v8810 = vpop.f32.mrf.mxu0
    %8811 = vmatprep.mubr.f32.mxu0 %v8215
    %8812 = vmatmul.mubr.f32.gmra.mxu0 %v8214
    %v8813 = vpop.f32.mrf.mxu0
    %v8814 = vadd.f32 %v8589, %v8813
    %v8815 = vpop.f32.mrf.mxu0
    %8816 = vmatprep.mubr.f32.mxu0 %v8223
    %8817 = vmatmul.mubr.f32.gmra.mxu0 %v8222
    %v8818 = vpop.f32.mrf.mxu0
    %v8819 = vadd.f32 %v8594, %v8818
    %v8820 = vpop.f32.mrf.mxu0
    %8821 = vmatprep.mubr.f32.mxu0 %v8231
    %8822 = vmatmul.mubr.f32.gmra.mxu0 %v8230
    %v8823 = vpop.f32.mrf.mxu0
    %v8824 = vadd.f32 %v8599, %v8823
    %v8825 = vpop.f32.mrf.mxu0
    %8826 = vmatprep.mubr.f32.mxu0 %v8239
    %8827 = vmatmul.mubr.f32.gmra.mxu0 %v8238
    %v8828 = vpop.f32.mrf.mxu0
    %v8829 = vadd.f32 %v8604, %v8828
    %v8830 = vpop.f32.mrf.mxu0
    %8831 = vmatprep.mubr.f32.mxu0 %v8247
    %8832 = vmatmul.mubr.f32.gmra.mxu0 %v8246
    %v8833 = vpop.f32.mrf.mxu0
    %v8834 = vadd.f32 %v8609, %v8833
    %v8835 = vpop.f32.mrf.mxu0
    %8836 = vmatprep.mubr.f32.mxu0 %v8255
    %8837 = vmatmul.mubr.f32.gmra.mxu0 %v8254
    %v8838 = vpop.f32.mrf.mxu0
    %v8839 = vadd.f32 %v8614, %v8838
    %v8840 = vpop.f32.mrf.mxu0
    %8841 = vmatprep.mubr.f32.mxu0 %v8263
    %8842 = vmatmul.mubr.f32.gmra.mxu0 %v8262
    %v8843 = vpop.f32.mrf.mxu0
    %v8844 = vadd.f32 %v8619, %v8843
    %v8845 = vpop.f32.mrf.mxu0
    %8846 = vmatprep.mubr.f32.mxu0 %v8271
    %8847 = vmatmul.mubr.f32.gmra.mxu0 %v8270
    %v8848 = vpop.f32.mrf.mxu0
    %v8849 = vadd.f32 %v8624, %v8848
    %v8850 = vpop.f32.mrf.mxu0
    %8851 = vmatprep.mubr.f32.mxu0 %v8279
    %8852 = vmatmul.mubr.f32.gmra.mxu0 %v8278
    %v8853 = vpop.f32.mrf.mxu0
    %v8854 = vadd.f32 %v8629, %v8853
    %v8855 = vpop.f32.mrf.mxu0
    %8856 = vmatprep.mubr.f32.mxu0 %v8287
    %8857 = vmatmul.mubr.f32.gmra.mxu0 %v8286
    %v8858 = vpop.f32.mrf.mxu0
    %v8859 = vadd.f32 %v8634, %v8858
    %v8860 = vpop.f32.mrf.mxu0
    %8861 = vmatprep.mubr.f32.mxu0 %v8295
    %8862 = vmatmul.mubr.f32.gmra.mxu0 %v8294
    %v8863 = vpop.f32.mrf.mxu0
    %v8864 = vadd.f32 %v8639, %v8863
    %v8865 = vpop.f32.mrf.mxu0
    %8866 = vmatprep.mubr.f32.mxu0 %v8303
    %8867 = vmatmul.mubr.f32.gmra.mxu0 %v8302
    %v8868 = vpop.f32.mrf.mxu0
    %v8869 = vadd.f32 %v8644, %v8868
    %v8870 = vpop.f32.mrf.mxu0
    %8871 = vmatprep.mubr.f32.mxu0 %v8311
    %8872 = vmatmul.mubr.f32.gmra.mxu0 %v8310
    %v8873 = vpop.f32.mrf.mxu0
    %v8874 = vadd.f32 %v8649, %v8873
    %v8875 = vpop.f32.mrf.mxu0
    %8876 = vmatprep.mubr.f32.mxu0 %v8319
    %8877 = vmatmul.mubr.f32.gmra.mxu0 %v8318
    %v8878 = vpop.f32.mrf.mxu0
    %v8879 = vadd.f32 %v8654, %v8878
    %v8880 = vpop.f32.mrf.mxu0
    %8881 = vmatprep.mubr.f32.mxu0 %v8327
    %8882 = vmatmul.mubr.f32.gmra.mxu0 %v8326
    %v8883 = vpop.f32.mrf.mxu0
    %v8884 = vadd.f32 %v8659, %v8883
    %v8885 = vpop.f32.mrf.mxu0
    %8886 = vmatprep.mubr.f32.mxu0 %v8335
    %8887 = vmatmul.mubr.f32.gmra.mxu0 %v8334
    %v8888 = vpop.f32.mrf.mxu0
    %v8889 = vadd.f32 %v8664, %v8888
    %v8890 = vpop.f32.mrf.mxu0
    %8891 = vmatprep.mubr.f32.mxu0 %v8343
    %8892 = vmatmul.mubr.f32.gmra.mxu0 %v8342
    %v8893 = vpop.f32.mrf.mxu0
    %v8894 = vadd.f32 %v8669, %v8893
    %v8895 = vpop.f32.mrf.mxu0
    %8896 = vmatprep.mubr.f32.mxu0 %v8351
    %8897 = vmatmul.mubr.f32.gmra.mxu0 %v8350
    %v8898 = vpop.f32.mrf.mxu0
    %v8899 = vadd.f32 %v8674, %v8898
    %v8900 = vpop.f32.mrf.mxu0
    %8901 = vdwg.mxu0
    %8902 = vmatprep.subr.mxu0 0.0
    %8903 = vmatpush1.msra.mxu0 %v1001
    %8904 = vmatprep.subr.mxu0 0.0
    %8905 = vmatpush1.msra.mxu0 %v1000
    %8906 = vmatprep.subr.mxu0 0.0
    %8907 = vmatpush1.msra.mxu0 %v999
    %8908 = vmatprep.subr.mxu0 0.0
    %8909 = vmatpush1.msra.mxu0 %v998
    %8910 = vmatprep.subr.mxu0 0.0
    %8911 = vmatpush1.msra.mxu0 %v997
    %8912 = vmatprep.subr.mxu0 0.0
    %8913 = vmatpush1.msra.mxu0 %v996
    %8914 = vmatprep.subr.mxu0 0.0
    %8915 = vmatpush1.msra.mxu0 %v995
    %8916 = vmatprep.subr.mxu0 0.0
    %8917 = vmatpush1.msra.mxu0 %v994
    %8918 = vmatprep.subr.mxu0 0.0
    %8919 = vmatpush1.msra.mxu0 %v993
    %8920 = vmatprep.subr.mxu0 0.0
    %8921 = vmatpush1.msra.mxu0 %v992
    %8922 = vmatprep.subr.mxu0 0.0
    %8923 = vmatpush1.msra.mxu0 %v991
    %8924 = vmatprep.subr.mxu0 0.0
    %8925 = vmatpush1.msra.mxu0 %v990
    %8926 = vmatprep.subr.mxu0 0.0
    %8927 = vmatpush1.msra.mxu0 %v989
    %8928 = vmatprep.subr.mxu0 0.0
    %8929 = vmatpush1.msra.mxu0 %v988
    %8930 = vmatprep.subr.mxu0 0.0
    %8931 = vmatpush1.msra.mxu0 %v987
    %8932 = vmatprep.subr.mxu0 0.0
    %8933 = vmatpush1.msra.mxu0 %v986
    %8934 = vmatprep.subr.mxu0 0.0
    %8935 = vmatpush2.msra.mxu0 %v1017
    %8936 = vmatprep.subr.mxu0 0.0
    %8937 = vmatpush2.msra.mxu0 %v1016
    %8938 = vmatprep.subr.mxu0 0.0
    %8939 = vmatpush2.msra.mxu0 %v1015
    %8940 = vmatprep.subr.mxu0 0.0
    %8941 = vmatpush2.msra.mxu0 %v1014
    %8942 = vmatprep.subr.mxu0 0.0
    %8943 = vmatpush2.msra.mxu0 %v1013
    %8944 = vmatprep.subr.mxu0 0.0
    %8945 = vmatpush2.msra.mxu0 %v1012
    %8946 = vmatprep.subr.mxu0 0.0
    %8947 = vmatpush2.msra.mxu0 %v1011
    %8948 = vmatprep.subr.mxu0 0.0
    %8949 = vmatpush2.msra.mxu0 %v1010
    %8950 = vmatprep.subr.mxu0 0.0
    %8951 = vmatpush2.msra.mxu0 %v1009
    %8952 = vmatprep.subr.mxu0 0.0
    %8953 = vmatpush2.msra.mxu0 %v1008
    %8954 = vmatprep.subr.mxu0 0.0
    %8955 = vmatpush2.msra.mxu0 %v1007
    %8956 = vmatprep.subr.mxu0 0.0
    %8957 = vmatpush2.msra.mxu0 %v1006
    %8958 = vmatprep.subr.mxu0 0.0
    %8959 = vmatpush2.msra.mxu0 %v1005
    %8960 = vmatprep.subr.mxu0 0.0
    %8961 = vmatpush2.msra.mxu0 %v1004
    %8962 = vmatprep.subr.mxu0 0.0
    %8963 = vmatpush2.msra.mxu0 %v1003
    %8964 = vmatprep.subr.mxu0 0.0
    %8965 = vmatpush2.msra.mxu0 %v1002
    %8966 = vmatprep.mubr.f32.mxu0 %v8105
    %8967 = vmatmul.mubr.f32.gmra.mxu0 %v8104
    %v8968 = vpop.f32.mrf.mxu0
    %v8969 = vadd.f32 %v8744, %v8968
    %v8970 = vpop.f32.mrf.mxu0
    %8971 = vmatprep.mubr.f32.mxu0 %v8113
    %8972 = vmatmul.mubr.f32.gmra.mxu0 %v8112
    %v8973 = vpop.f32.mrf.mxu0
    %v8974 = vadd.f32 %v8749, %v8973
    %v8975 = vpop.f32.mrf.mxu0
    %8976 = vmatprep.mubr.f32.mxu0 %v8121
    %8977 = vmatmul.mubr.f32.gmra.mxu0 %v8120
    %v8978 = vpop.f32.mrf.mxu0
    %v8979 = vadd.f32 %v8754, %v8978
    %v8980 = vpop.f32.mrf.mxu0
    %8981 = vmatprep.mubr.f32.mxu0 %v8129
    %8982 = vmatmul.mubr.f32.gmra.mxu0 %v8128
    %v8983 = vpop.f32.mrf.mxu0
    %v8984 = vadd.f32 %v8759, %v8983
    %v8985 = vpop.f32.mrf.mxu0
    %8986 = vmatprep.mubr.f32.mxu0 %v8137
    %8987 = vmatmul.mubr.f32.gmra.mxu0 %v8136
    %v8988 = vpop.f32.mrf.mxu0
    %v8989 = vadd.f32 %v8764, %v8988
    %v8990 = vpop.f32.mrf.mxu0
    %8991 = vmatprep.mubr.f32.mxu0 %v8145
    %8992 = vmatmul.mubr.f32.gmra.mxu0 %v8144
    %v8993 = vpop.f32.mrf.mxu0
    %v8994 = vadd.f32 %v8769, %v8993
    %v8995 = vpop.f32.mrf.mxu0
    %8996 = vmatprep.mubr.f32.mxu0 %v8153
    %8997 = vmatmul.mubr.f32.gmra.mxu0 %v8152
    %v8998 = vpop.f32.mrf.mxu0
    %v8999 = vadd.f32 %v8774, %v8998
    %v9000 = vpop.f32.mrf.mxu0
    %9001 = vmatprep.mubr.f32.mxu0 %v8161
    %9002 = vmatmul.mubr.f32.gmra.mxu0 %v8160
    %v9003 = vpop.f32.mrf.mxu0
    %v9004 = vadd.f32 %v8779, %v9003
    %v9005 = vpop.f32.mrf.mxu0
    %9006 = vmatprep.mubr.f32.mxu0 %v8169
    %9007 = vmatmul.mubr.f32.gmra.mxu0 %v8168
    %v9008 = vpop.f32.mrf.mxu0
    %v9009 = vadd.f32 %v8784, %v9008
    %v9010 = vpop.f32.mrf.mxu0
    %9011 = vmatprep.mubr.f32.mxu0 %v8177
    %9012 = vmatmul.mubr.f32.gmra.mxu0 %v8176
    %v9013 = vpop.f32.mrf.mxu0
    %v9014 = vadd.f32 %v8789, %v9013
    %v9015 = vpop.f32.mrf.mxu0
    %9016 = vmatprep.mubr.f32.mxu0 %v8185
    %9017 = vmatmul.mubr.f32.gmra.mxu0 %v8184
    %v9018 = vpop.f32.mrf.mxu0
    %v9019 = vadd.f32 %v8794, %v9018
    %v9020 = vpop.f32.mrf.mxu0
    %9021 = vmatprep.mubr.f32.mxu0 %v8193
    %9022 = vmatmul.mubr.f32.gmra.mxu0 %v8192
    %v9023 = vpop.f32.mrf.mxu0
    %v9024 = vadd.f32 %v8799, %v9023
    %v9025 = vpop.f32.mrf.mxu0
    %9026 = vmatprep.mubr.f32.mxu0 %v8201
    %9027 = vmatmul.mubr.f32.gmra.mxu0 %v8200
    %v9028 = vpop.f32.mrf.mxu0
    %v9029 = vadd.f32 %v8804, %v9028
    %v9030 = vpop.f32.mrf.mxu0
    %9031 = vmatprep.mubr.f32.mxu0 %v8209
    %9032 = vmatmul.mubr.f32.gmra.mxu0 %v8208
    %v9033 = vpop.f32.mrf.mxu0
    %v9034 = vadd.f32 %v8809, %v9033
    %v9035 = vpop.f32.mrf.mxu0
    %9036 = vmatprep.mubr.f32.mxu0 %v8217
    %9037 = vmatmul.mubr.f32.gmra.mxu0 %v8216
    %v9038 = vpop.f32.mrf.mxu0
    %v9039 = vadd.f32 %v8814, %v9038
    %v9040 = vpop.f32.mrf.mxu0
    %9041 = vmatprep.mubr.f32.mxu0 %v8225
    %9042 = vmatmul.mubr.f32.gmra.mxu0 %v8224
    %v9043 = vpop.f32.mrf.mxu0
    %v9044 = vadd.f32 %v8819, %v9043
    %v9045 = vpop.f32.mrf.mxu0
    %9046 = vmatprep.mubr.f32.mxu0 %v8233
    %9047 = vmatmul.mubr.f32.gmra.mxu0 %v8232
    %v9048 = vpop.f32.mrf.mxu0
    %v9049 = vadd.f32 %v8824, %v9048
    %v9050 = vpop.f32.mrf.mxu0
    %9051 = vmatprep.mubr.f32.mxu0 %v8241
    %9052 = vmatmul.mubr.f32.gmra.mxu0 %v8240
    %v9053 = vpop.f32.mrf.mxu0
    %v9054 = vadd.f32 %v8829, %v9053
    %v9055 = vpop.f32.mrf.mxu0
    %9056 = vmatprep.mubr.f32.mxu0 %v8249
    %9057 = vmatmul.mubr.f32.gmra.mxu0 %v8248
    %v9058 = vpop.f32.mrf.mxu0
    %v9059 = vadd.f32 %v8834, %v9058
    %v9060 = vpop.f32.mrf.mxu0
    %9061 = vmatprep.mubr.f32.mxu0 %v8257
    %9062 = vmatmul.mubr.f32.gmra.mxu0 %v8256
    %v9063 = vpop.f32.mrf.mxu0
    %v9064 = vadd.f32 %v8839, %v9063
    %v9065 = vpop.f32.mrf.mxu0
    %9066 = vmatprep.mubr.f32.mxu0 %v8265
    %9067 = vmatmul.mubr.f32.gmra.mxu0 %v8264
    %v9068 = vpop.f32.mrf.mxu0
    %v9069 = vadd.f32 %v8844, %v9068
    %v9070 = vpop.f32.mrf.mxu0
    %9071 = vmatprep.mubr.f32.mxu0 %v8273
    %9072 = vmatmul.mubr.f32.gmra.mxu0 %v8272
    %v9073 = vpop.f32.mrf.mxu0
    %v9074 = vadd.f32 %v8849, %v9073
    %v9075 = vpop.f32.mrf.mxu0
    %9076 = vmatprep.mubr.f32.mxu0 %v8281
    %9077 = vmatmul.mubr.f32.gmra.mxu0 %v8280
    %v9078 = vpop.f32.mrf.mxu0
    %v9079 = vadd.f32 %v8854, %v9078
    %v9080 = vpop.f32.mrf.mxu0
    %9081 = vmatprep.mubr.f32.mxu0 %v8289
    %9082 = vmatmul.mubr.f32.gmra.mxu0 %v8288
    %v9083 = vpop.f32.mrf.mxu0
    %v9084 = vadd.f32 %v8859, %v9083
    %v9085 = vpop.f32.mrf.mxu0
    %9086 = vmatprep.mubr.f32.mxu0 %v8297
    %9087 = vmatmul.mubr.f32.gmra.mxu0 %v8296
    %v9088 = vpop.f32.mrf.mxu0
    %v9089 = vadd.f32 %v8864, %v9088
    %v9090 = vpop.f32.mrf.mxu0
    %9091 = vmatprep.mubr.f32.mxu0 %v8305
    %9092 = vmatmul.mubr.f32.gmra.mxu0 %v8304
    %v9093 = vpop.f32.mrf.mxu0
    %v9094 = vadd.f32 %v8869, %v9093
    %v9095 = vpop.f32.mrf.mxu0
    %9096 = vmatprep.mubr.f32.mxu0 %v8313
    %9097 = vmatmul.mubr.f32.gmra.mxu0 %v8312
    %v9098 = vpop.f32.mrf.mxu0
    %v9099 = vadd.f32 %v8874, %v9098
    %v9100 = vpop.f32.mrf.mxu0
    %9101 = vmatprep.mubr.f32.mxu0 %v8321
    %9102 = vmatmul.mubr.f32.gmra.mxu0 %v8320
    %v9103 = vpop.f32.mrf.mxu0
    %v9104 = vadd.f32 %v8879, %v9103
    %v9105 = vpop.f32.mrf.mxu0
    %9106 = vmatprep.mubr.f32.mxu0 %v8329
    %9107 = vmatmul.mubr.f32.gmra.mxu0 %v8328
    %v9108 = vpop.f32.mrf.mxu0
    %v9109 = vadd.f32 %v8884, %v9108
    %v9110 = vpop.f32.mrf.mxu0
    %9111 = vmatprep.mubr.f32.mxu0 %v8337
    %9112 = vmatmul.mubr.f32.gmra.mxu0 %v8336
    %v9113 = vpop.f32.mrf.mxu0
    %v9114 = vadd.f32 %v8889, %v9113
    %v9115 = vpop.f32.mrf.mxu0
    %9116 = vmatprep.mubr.f32.mxu0 %v8345
    %9117 = vmatmul.mubr.f32.gmra.mxu0 %v8344
    %v9118 = vpop.f32.mrf.mxu0
    %v9119 = vadd.f32 %v8894, %v9118
    %v9120 = vpop.f32.mrf.mxu0
    %9121 = vmatprep.mubr.f32.mxu0 %v8353
    %9122 = vmatmul.mubr.f32.gmra.mxu0 %v8352
    %v9123 = vpop.f32.mrf.mxu0
    %v9124 = vadd.f32 %v8899, %v9123
    %v9125 = vpop.f32.mrf.mxu0
    %9126 = vdwg.mxu0
    %9127 = vmatprep.subr.mxu0 0.0
    %9128 = vmatpush1.msra.mxu0 %v1033
    %9129 = vmatprep.subr.mxu0 0.0
    %9130 = vmatpush1.msra.mxu0 %v1032
    %9131 = vmatprep.subr.mxu0 0.0
    %9132 = vmatpush1.msra.mxu0 %v1031
    %9133 = vmatprep.subr.mxu0 0.0
    %9134 = vmatpush1.msra.mxu0 %v1030
    %9135 = vmatprep.subr.mxu0 0.0
    %9136 = vmatpush1.msra.mxu0 %v1029
    %9137 = vmatprep.subr.mxu0 0.0
    %9138 = vmatpush1.msra.mxu0 %v1028
    %9139 = vmatprep.subr.mxu0 0.0
    %9140 = vmatpush1.msra.mxu0 %v1027
    %9141 = vmatprep.subr.mxu0 0.0
    %9142 = vmatpush1.msra.mxu0 %v1026
    %9143 = vmatprep.subr.mxu0 0.0
    %9144 = vmatpush1.msra.mxu0 %v1025
    %9145 = vmatprep.subr.mxu0 0.0
    %9146 = vmatpush1.msra.mxu0 %v1024
    %9147 = vmatprep.subr.mxu0 0.0
    %9148 = vmatpush1.msra.mxu0 %v1023
    %9149 = vmatprep.subr.mxu0 0.0
    %9150 = vmatpush1.msra.mxu0 %v1022
    %9151 = vmatprep.subr.mxu0 0.0
    %9152 = vmatpush1.msra.mxu0 %v1021
    %9153 = vmatprep.subr.mxu0 0.0
    %9154 = vmatpush1.msra.mxu0 %v1020
    %9155 = vmatprep.subr.mxu0 0.0
    %9156 = vmatpush1.msra.mxu0 %v1019
    %9157 = vmatprep.subr.mxu0 0.0
    %9158 = vmatpush1.msra.mxu0 %v1018
    %9159 = vmatprep.subr.mxu0 0.0
    %9160 = vmatpush2.msra.mxu0 %v1049
    %9161 = vmatprep.subr.mxu0 0.0
    %9162 = vmatpush2.msra.mxu0 %v1048
    %9163 = vmatprep.subr.mxu0 0.0
    %9164 = vmatpush2.msra.mxu0 %v1047
    %9165 = vmatprep.subr.mxu0 0.0
    %9166 = vmatpush2.msra.mxu0 %v1046
    %9167 = vmatprep.subr.mxu0 0.0
    %9168 = vmatpush2.msra.mxu0 %v1045
    %9169 = vmatprep.subr.mxu0 0.0
    %9170 = vmatpush2.msra.mxu0 %v1044
    %9171 = vmatprep.subr.mxu0 0.0
    %9172 = vmatpush2.msra.mxu0 %v1043
    %9173 = vmatprep.subr.mxu0 0.0
    %9174 = vmatpush2.msra.mxu0 %v1042
    %9175 = vmatprep.subr.mxu0 0.0
    %9176 = vmatpush2.msra.mxu0 %v1041
    %9177 = vmatprep.subr.mxu0 0.0
    %9178 = vmatpush2.msra.mxu0 %v1040
    %9179 = vmatprep.subr.mxu0 0.0
    %9180 = vmatpush2.msra.mxu0 %v1039
    %9181 = vmatprep.subr.mxu0 0.0
    %9182 = vmatpush2.msra.mxu0 %v1038
    %9183 = vmatprep.subr.mxu0 0.0
    %9184 = vmatpush2.msra.mxu0 %v1037
    %9185 = vmatprep.subr.mxu0 0.0
    %9186 = vmatpush2.msra.mxu0 %v1036
    %9187 = vmatprep.subr.mxu0 0.0
    %9188 = vmatpush2.msra.mxu0 %v1035
    %9189 = vmatprep.subr.mxu0 0.0
    %9190 = vmatpush2.msra.mxu0 %v1034
    %9191 = vmatprep.mubr.f32.mxu0 %v8107
    %9192 = vmatmul.mubr.f32.gmra.mxu0 %v8106
    %v9193 = vpop.f32.mrf.mxu0
    %v9194 = vadd.f32 %v8969, %v9193
    %v9195 = vpop.f32.mrf.mxu0
    %9196 = vmatprep.mubr.f32.mxu0 %v8115
    %9197 = vmatmul.mubr.f32.gmra.mxu0 %v8114
    %v9198 = vpop.f32.mrf.mxu0
    %v9199 = vadd.f32 %v8974, %v9198
    %v9200 = vpop.f32.mrf.mxu0
    %9201 = vmatprep.mubr.f32.mxu0 %v8123
    %9202 = vmatmul.mubr.f32.gmra.mxu0 %v8122
    %v9203 = vpop.f32.mrf.mxu0
    %v9204 = vadd.f32 %v8979, %v9203
    %v9205 = vpop.f32.mrf.mxu0
    %9206 = vmatprep.mubr.f32.mxu0 %v8131
    %9207 = vmatmul.mubr.f32.gmra.mxu0 %v8130
    %v9208 = vpop.f32.mrf.mxu0
    %v9209 = vadd.f32 %v8984, %v9208
    %v9210 = vpop.f32.mrf.mxu0
    %9211 = vmatprep.mubr.f32.mxu0 %v8139
    %9212 = vmatmul.mubr.f32.gmra.mxu0 %v8138
    %v9213 = vpop.f32.mrf.mxu0
    %v9214 = vadd.f32 %v8989, %v9213
    %v9215 = vpop.f32.mrf.mxu0
    %9216 = vmatprep.mubr.f32.mxu0 %v8147
    %9217 = vmatmul.mubr.f32.gmra.mxu0 %v8146
    %v9218 = vpop.f32.mrf.mxu0
    %v9219 = vadd.f32 %v8994, %v9218
    %v9220 = vpop.f32.mrf.mxu0
    %9221 = vmatprep.mubr.f32.mxu0 %v8155
    %9222 = vmatmul.mubr.f32.gmra.mxu0 %v8154
    %v9223 = vpop.f32.mrf.mxu0
    %v9224 = vadd.f32 %v8999, %v9223
    %v9225 = vpop.f32.mrf.mxu0
    %9226 = vmatprep.mubr.f32.mxu0 %v8163
    %9227 = vmatmul.mubr.f32.gmra.mxu0 %v8162
    %v9228 = vpop.f32.mrf.mxu0
    %v9229 = vadd.f32 %v9004, %v9228
    %v9230 = vpop.f32.mrf.mxu0
    %9231 = vmatprep.mubr.f32.mxu0 %v8171
    %9232 = vmatmul.mubr.f32.gmra.mxu0 %v8170
    %v9233 = vpop.f32.mrf.mxu0
    %v9234 = vadd.f32 %v9009, %v9233
    %v9235 = vpop.f32.mrf.mxu0
    %9236 = vmatprep.mubr.f32.mxu0 %v8179
    %9237 = vmatmul.mubr.f32.gmra.mxu0 %v8178
    %v9238 = vpop.f32.mrf.mxu0
    %v9239 = vadd.f32 %v9014, %v9238
    %v9240 = vpop.f32.mrf.mxu0
    %9241 = vmatprep.mubr.f32.mxu0 %v8187
    %9242 = vmatmul.mubr.f32.gmra.mxu0 %v8186
    %v9243 = vpop.f32.mrf.mxu0
    %v9244 = vadd.f32 %v9019, %v9243
    %v9245 = vpop.f32.mrf.mxu0
    %9246 = vmatprep.mubr.f32.mxu0 %v8195
    %9247 = vmatmul.mubr.f32.gmra.mxu0 %v8194
    %v9248 = vpop.f32.mrf.mxu0
    %v9249 = vadd.f32 %v9024, %v9248
    %v9250 = vpop.f32.mrf.mxu0
    %9251 = vmatprep.mubr.f32.mxu0 %v8203
    %9252 = vmatmul.mubr.f32.gmra.mxu0 %v8202
    %v9253 = vpop.f32.mrf.mxu0
    %v9254 = vadd.f32 %v9029, %v9253
    %v9255 = vpop.f32.mrf.mxu0
    %9256 = vmatprep.mubr.f32.mxu0 %v8211
    %9257 = vmatmul.mubr.f32.gmra.mxu0 %v8210
    %v9258 = vpop.f32.mrf.mxu0
    %v9259 = vadd.f32 %v9034, %v9258
    %v9260 = vpop.f32.mrf.mxu0
    %9261 = vmatprep.mubr.f32.mxu0 %v8219
    %9262 = vmatmul.mubr.f32.gmra.mxu0 %v8218
    %v9263 = vpop.f32.mrf.mxu0
    %v9264 = vadd.f32 %v9039, %v9263
    %v9265 = vpop.f32.mrf.mxu0
    %9266 = vmatprep.mubr.f32.mxu0 %v8227
    %9267 = vmatmul.mubr.f32.gmra.mxu0 %v8226
    %v9268 = vpop.f32.mrf.mxu0
    %v9269 = vadd.f32 %v9044, %v9268
    %v9270 = vpop.f32.mrf.mxu0
    %9271 = vmatprep.mubr.f32.mxu0 %v8235
    %9272 = vmatmul.mubr.f32.gmra.mxu0 %v8234
    %v9273 = vpop.f32.mrf.mxu0
    %v9274 = vadd.f32 %v9049, %v9273
    %v9275 = vpop.f32.mrf.mxu0
    %9276 = vmatprep.mubr.f32.mxu0 %v8243
    %9277 = vmatmul.mubr.f32.gmra.mxu0 %v8242
    %v9278 = vpop.f32.mrf.mxu0
    %v9279 = vadd.f32 %v9054, %v9278
    %v9280 = vpop.f32.mrf.mxu0
    %9281 = vmatprep.mubr.f32.mxu0 %v8251
    %9282 = vmatmul.mubr.f32.gmra.mxu0 %v8250
    %v9283 = vpop.f32.mrf.mxu0
    %v9284 = vadd.f32 %v9059, %v9283
    %v9285 = vpop.f32.mrf.mxu0
    %9286 = vmatprep.mubr.f32.mxu0 %v8259
    %9287 = vmatmul.mubr.f32.gmra.mxu0 %v8258
    %v9288 = vpop.f32.mrf.mxu0
    %v9289 = vadd.f32 %v9064, %v9288
    %v9290 = vpop.f32.mrf.mxu0
    %9291 = vmatprep.mubr.f32.mxu0 %v8267
    %9292 = vmatmul.mubr.f32.gmra.mxu0 %v8266
    %v9293 = vpop.f32.mrf.mxu0
    %v9294 = vadd.f32 %v9069, %v9293
    %v9295 = vpop.f32.mrf.mxu0
    %9296 = vmatprep.mubr.f32.mxu0 %v8275
    %9297 = vmatmul.mubr.f32.gmra.mxu0 %v8274
    %v9298 = vpop.f32.mrf.mxu0
    %v9299 = vadd.f32 %v9074, %v9298
    %v9300 = vpop.f32.mrf.mxu0
    %9301 = vmatprep.mubr.f32.mxu0 %v8283
    %9302 = vmatmul.mubr.f32.gmra.mxu0 %v8282
    %v9303 = vpop.f32.mrf.mxu0
    %v9304 = vadd.f32 %v9079, %v9303
    %v9305 = vpop.f32.mrf.mxu0
    %9306 = vmatprep.mubr.f32.mxu0 %v8291
    %9307 = vmatmul.mubr.f32.gmra.mxu0 %v8290
    %v9308 = vpop.f32.mrf.mxu0
    %v9309 = vadd.f32 %v9084, %v9308
    %v9310 = vpop.f32.mrf.mxu0
    %9311 = vmatprep.mubr.f32.mxu0 %v8299
    %9312 = vmatmul.mubr.f32.gmra.mxu0 %v8298
    %v9313 = vpop.f32.mrf.mxu0
    %v9314 = vadd.f32 %v9089, %v9313
    %v9315 = vpop.f32.mrf.mxu0
    %9316 = vmatprep.mubr.f32.mxu0 %v8307
    %9317 = vmatmul.mubr.f32.gmra.mxu0 %v8306
    %v9318 = vpop.f32.mrf.mxu0
    %v9319 = vadd.f32 %v9094, %v9318
    %v9320 = vpop.f32.mrf.mxu0
    %9321 = vmatprep.mubr.f32.mxu0 %v8315
    %9322 = vmatmul.mubr.f32.gmra.mxu0 %v8314
    %v9323 = vpop.f32.mrf.mxu0
    %v9324 = vadd.f32 %v9099, %v9323
    %v9325 = vpop.f32.mrf.mxu0
    %9326 = vmatprep.mubr.f32.mxu0 %v8323
    %9327 = vmatmul.mubr.f32.gmra.mxu0 %v8322
    %v9328 = vpop.f32.mrf.mxu0
    %v9329 = vadd.f32 %v9104, %v9328
    %v9330 = vpop.f32.mrf.mxu0
    %9331 = vmatprep.mubr.f32.mxu0 %v8331
    %9332 = vmatmul.mubr.f32.gmra.mxu0 %v8330
    %v9333 = vpop.f32.mrf.mxu0
    %v9334 = vadd.f32 %v9109, %v9333
    %v9335 = vpop.f32.mrf.mxu0
    %9336 = vmatprep.mubr.f32.mxu0 %v8339
    %9337 = vmatmul.mubr.f32.gmra.mxu0 %v8338
    %v9338 = vpop.f32.mrf.mxu0
    %v9339 = vadd.f32 %v9114, %v9338
    %v9340 = vpop.f32.mrf.mxu0
    %9341 = vmatprep.mubr.f32.mxu0 %v8347
    %9342 = vmatmul.mubr.f32.gmra.mxu0 %v8346
    %v9343 = vpop.f32.mrf.mxu0
    %v9344 = vadd.f32 %v9119, %v9343
    %v9345 = vpop.f32.mrf.mxu0
    %9346 = vmatprep.mubr.f32.mxu0 %v8355
    %9347 = vmatmul.mubr.f32.gmra.mxu0 %v8354
    %v9348 = vpop.f32.mrf.mxu0
    %v9349 = vadd.f32 %v9124, %v9348
    %v9350 = vpop.f32.mrf.mxu0
    %9351 = vdwg.mxu0
    %vm9352 = vcmp.gt.f32.partialorder %v9194, 0.0
    %vm9353 = vcmp.gt.f32.partialorder %v9199, 0.0
    %vm9354 = vcmp.gt.f32.partialorder %v9204, 0.0
    %vm9355 = vcmp.gt.f32.partialorder %v9209, 0.0
    %vm9356 = vcmp.gt.f32.partialorder %v9214, 0.0
    %vm9357 = vcmp.gt.f32.partialorder %v9219, 0.0
    %vm9358 = vcmp.gt.f32.partialorder %v9224, 0.0
    %vm9359 = vcmp.gt.f32.partialorder %v9229, 0.0
    %vm9360 = vcmp.gt.f32.partialorder %v9234, 0.0
    %vm9361 = vcmp.gt.f32.partialorder %v9239, 0.0
    %vm9362 = vcmp.gt.f32.partialorder %v9244, 0.0
    %vm9363 = vcmp.gt.f32.partialorder %v9249, 0.0
    %vm9364 = vcmp.gt.f32.partialorder %v9254, 0.0
    %vm9365 = vcmp.gt.f32.partialorder %v9259, 0.0
    %vm9366 = vcmp.gt.f32.partialorder %v9264, 0.0
    %vm9367 = vcmp.gt.f32.partialorder %v9269, 0.0
    %vm9368 = vcmp.gt.f32.partialorder %v9274, 0.0
    %vm9369 = vcmp.gt.f32.partialorder %v9279, 0.0
    %vm9370 = vcmp.gt.f32.partialorder %v9284, 0.0
    %vm9371 = vcmp.gt.f32.partialorder %v9289, 0.0
    %vm9372 = vcmp.gt.f32.partialorder %v9294, 0.0
    %vm9373 = vcmp.gt.f32.partialorder %v9299, 0.0
    %vm9374 = vcmp.gt.f32.partialorder %v9304, 0.0
    %vm9375 = vcmp.gt.f32.partialorder %v9309, 0.0
    %vm9376 = vcmp.gt.f32.partialorder %v9314, 0.0
    %vm9377 = vcmp.gt.f32.partialorder %v9319, 0.0
    %vm9378 = vcmp.gt.f32.partialorder %v9324, 0.0
    %vm9379 = vcmp.gt.f32.partialorder %v9329, 0.0
    %vm9380 = vcmp.gt.f32.partialorder %v9334, 0.0
    %vm9381 = vcmp.gt.f32.partialorder %v9339, 0.0
    %vm9382 = vcmp.gt.f32.partialorder %v9344, 0.0
    %vm9383 = vcmp.gt.f32.partialorder %v9349, 0.0
    %v9384 = vmin.f32 %v9194, 0.0
    %v9385 = vmin.f32 %v9199, 0.0
    %v9386 = vmin.f32 %v9204, 0.0
    %v9387 = vmin.f32 %v9209, 0.0
    %v9388 = vmin.f32 %v9214, 0.0
    %v9389 = vmin.f32 %v9219, 0.0
    %v9390 = vmin.f32 %v9224, 0.0
    %v9391 = vmin.f32 %v9229, 0.0
    %v9392 = vmin.f32 %v9234, 0.0
    %v9393 = vmin.f32 %v9239, 0.0
    %v9394 = vmin.f32 %v9244, 0.0
    %v9395 = vmin.f32 %v9249, 0.0
    %v9396 = vmin.f32 %v9254, 0.0
    %v9397 = vmin.f32 %v9259, 0.0
    %v9398 = vmin.f32 %v9264, 0.0
    %v9399 = vmin.f32 %v9269, 0.0
    %v9400 = vmin.f32 %v9274, 0.0
    %v9401 = vmin.f32 %v9279, 0.0
    %v9402 = vmin.f32 %v9284, 0.0
    %v9403 = vmin.f32 %v9289, 0.0
    %v9404 = vmin.f32 %v9294, 0.0
    %v9405 = vmin.f32 %v9299, 0.0
    %v9406 = vmin.f32 %v9304, 0.0
    %v9407 = vmin.f32 %v9309, 0.0
    %v9408 = vmin.f32 %v9314, 0.0
    %v9409 = vmin.f32 %v9319, 0.0
    %v9410 = vmin.f32 %v9324, 0.0
    %v9411 = vmin.f32 %v9329, 0.0
    %v9412 = vmin.f32 %v9334, 0.0
    %v9413 = vmin.f32 %v9339, 0.0
    %v9414 = vmin.f32 %v9344, 0.0
    %v9415 = vmin.f32 %v9349, 0.0
    %v9416 = vmul.f32 %v9384, 1.442695
    %v9417 = vpow.pop %v9416
    %v9418 = vmul.f32 %v9385, 1.442695
    %v9419 = vpow.pop %v9418
    %v9420 = vmul.f32 %v9386, 1.442695
    %v9421 = vpow.pop %v9420
    %v9422 = vmul.f32 %v9387, 1.442695
    %v9423 = vpow.pop %v9422
    %v9424 = vmul.f32 %v9388, 1.442695
    %v9425 = vpow.pop %v9424
    %v9426 = vmul.f32 %v9389, 1.442695
    %v9427 = vpow.pop %v9426
    %v9428 = vmul.f32 %v9390, 1.442695
    %v9429 = vpow.pop %v9428
    %v9430 = vmul.f32 %v9391, 1.442695
    %v9431 = vpow.pop %v9430
    %v9432 = vmul.f32 %v9392, 1.442695
    %v9433 = vpow.pop %v9432
    %v9434 = vmul.f32 %v9393, 1.442695
    %v9435 = vpow.pop %v9434
    %v9436 = vmul.f32 %v9394, 1.442695
    %v9437 = vpow.pop %v9436
    %v9438 = vmul.f32 %v9395, 1.442695
    %v9439 = vpow.pop %v9438
    %v9440 = vmul.f32 %v9396, 1.442695
    %v9441 = vpow.pop %v9440
    %v9442 = vmul.f32 %v9397, 1.442695
    %v9443 = vpow.pop %v9442
    %v9444 = vmul.f32 %v9398, 1.442695
    %v9445 = vpow.pop %v9444
    %v9446 = vmul.f32 %v9399, 1.442695
    %v9447 = vpow.pop %v9446
    %v9448 = vmul.f32 %v9400, 1.442695
    %v9449 = vpow.pop %v9448
    %v9450 = vmul.f32 %v9401, 1.442695
    %v9451 = vpow.pop %v9450
    %v9452 = vmul.f32 %v9402, 1.442695
    %v9453 = vpow.pop %v9452
    %v9454 = vmul.f32 %v9403, 1.442695
    %v9455 = vpow.pop %v9454
    %v9456 = vmul.f32 %v9404, 1.442695
    %v9457 = vpow.pop %v9456
    %v9458 = vmul.f32 %v9405, 1.442695
    %v9459 = vpow.pop %v9458
    %v9460 = vmul.f32 %v9406, 1.442695
    %v9461 = vpow.pop %v9460
    %v9462 = vmul.f32 %v9407, 1.442695
    %v9463 = vpow.pop %v9462
    %v9464 = vmul.f32 %v9408, 1.442695
    %v9465 = vpow.pop %v9464
    %v9466 = vmul.f32 %v9409, 1.442695
    %v9467 = vpow.pop %v9466
    %v9468 = vmul.f32 %v9410, 1.442695
    %v9469 = vpow.pop %v9468
    %v9470 = vmul.f32 %v9411, 1.442695
    %v9471 = vpow.pop %v9470
    %v9472 = vmul.f32 %v9412, 1.442695
    %v9473 = vpow.pop %v9472
    %v9474 = vmul.f32 %v9413, 1.442695
    %v9475 = vpow.pop %v9474
    %v9476 = vmul.f32 %v9414, 1.442695
    %v9477 = vpow.pop %v9476
    %v9478 = vmul.f32 %v9415, 1.442695
    %v9479 = vpow.pop %v9478
    %v9480 = vsub.f32 %v9417, 1.0
    %v9481 = vsub.f32 %v9419, 1.0
    %v9482 = vsub.f32 %v9421, 1.0
    %v9483 = vsub.f32 %v9423, 1.0
    %v9484 = vsub.f32 %v9425, 1.0
    %v9485 = vsub.f32 %v9427, 1.0
    %v9486 = vsub.f32 %v9429, 1.0
    %v9487 = vsub.f32 %v9431, 1.0
    %v9488 = vsub.f32 %v9433, 1.0
    %v9489 = vsub.f32 %v9435, 1.0
    %v9490 = vsub.f32 %v9437, 1.0
    %v9491 = vsub.f32 %v9439, 1.0
    %v9492 = vsub.f32 %v9441, 1.0
    %v9493 = vsub.f32 %v9443, 1.0
    %v9494 = vsub.f32 %v9445, 1.0
    %v9495 = vsub.f32 %v9447, 1.0
    %v9496 = vsub.f32 %v9449, 1.0
    %v9497 = vsub.f32 %v9451, 1.0
    %v9498 = vsub.f32 %v9453, 1.0
    %v9499 = vsub.f32 %v9455, 1.0
    %v9500 = vsub.f32 %v9457, 1.0
    %v9501 = vsub.f32 %v9459, 1.0
    %v9502 = vsub.f32 %v9461, 1.0
    %v9503 = vsub.f32 %v9463, 1.0
    %v9504 = vsub.f32 %v9465, 1.0
    %v9505 = vsub.f32 %v9467, 1.0
    %v9506 = vsub.f32 %v9469, 1.0
    %v9507 = vsub.f32 %v9471, 1.0
    %v9508 = vsub.f32 %v9473, 1.0
    %v9509 = vsub.f32 %v9475, 1.0
    %v9510 = vsub.f32 %v9477, 1.0
    %v9511 = vsub.f32 %v9479, 1.0
    %v9512 = vsel %vm9352, %v9194, %v9480
    %v9513 = vsel %vm9353, %v9199, %v9481
    %v9514 = vsel %vm9354, %v9204, %v9482
    %v9515 = vsel %vm9355, %v9209, %v9483
    %v9516 = vsel %vm9356, %v9214, %v9484
    %v9517 = vsel %vm9357, %v9219, %v9485
    %v9518 = vsel %vm9358, %v9224, %v9486
    %v9519 = vsel %vm9359, %v9229, %v9487
    %v9520 = vsel %vm9360, %v9234, %v9488
    %v9521 = vsel %vm9361, %v9239, %v9489
    %v9522 = vsel %vm9362, %v9244, %v9490
    %v9523 = vsel %vm9363, %v9249, %v9491
    %v9524 = vsel %vm9364, %v9254, %v9492
    %v9525 = vsel %vm9365, %v9259, %v9493
    %v9526 = vsel %vm9366, %v9264, %v9494
    %v9527 = vsel %vm9367, %v9269, %v9495
    %v9528 = vsel %vm9368, %v9274, %v9496
    %v9529 = vsel %vm9369, %v9279, %v9497
    %v9530 = vsel %vm9370, %v9284, %v9498
    %v9531 = vsel %vm9371, %v9289, %v9499
    %v9532 = vsel %vm9372, %v9294, %v9500
    %v9533 = vsel %vm9373, %v9299, %v9501
    %v9534 = vsel %vm9374, %v9304, %v9502
    %v9535 = vsel %vm9375, %v9309, %v9503
    %v9536 = vsel %vm9376, %v9314, %v9504
    %v9537 = vsel %vm9377, %v9319, %v9505
    %v9538 = vsel %vm9378, %v9324, %v9506
    %v9539 = vsel %vm9379, %v9329, %v9507
    %v9540 = vsel %vm9380, %v9334, %v9508
    %v9541 = vsel %vm9381, %v9339, %v9509
    %v9542 = vsel %vm9382, %v9344, %v9510
    %v9543 = vsel %vm9383, %v9349, %v9511
    %9544 = vrot.lane.b32.xlu0 %v732, 64
    %v9545 = vpop.permute.xlu0 %9544
    %9546 = vrot.lane.b32.xlu0 %v737, 64
    %v9547 = vpop.permute.xlu0 %9546
    %9548 = vrot.lane.b32.xlu0 %v742, 64
    %v9549 = vpop.permute.xlu0 %9548
    %9550 = vrot.lane.b32.xlu0 %v747, 64
    %v9551 = vpop.permute.xlu0 %9550
    %9552 = vrot.lane.b32.xlu0 %v752, 64
    %v9553 = vpop.permute.xlu0 %9552
    %9554 = vrot.lane.b32.xlu0 %v757, 64
    %v9555 = vpop.permute.xlu0 %9554
    %9556 = vrot.lane.b32.xlu0 %v762, 64
    %v9557 = vpop.permute.xlu0 %9556
    %9558 = vrot.lane.b32.xlu0 %v767, 64
    %v9559 = vpop.permute.xlu0 %9558
    %9560 = vrot.lane.b32.xlu0 %v772, 64
    %v9561 = vpop.permute.xlu0 %9560
    %9562 = vrot.lane.b32.xlu0 %v777, 64
    %v9563 = vpop.permute.xlu0 %9562
    %9564 = vrot.lane.b32.xlu0 %v782, 64
    %v9565 = vpop.permute.xlu0 %9564
    %9566 = vrot.lane.b32.xlu0 %v787, 64
    %v9567 = vpop.permute.xlu0 %9566
    %9568 = vrot.lane.b32.xlu0 %v792, 64
    %v9569 = vpop.permute.xlu0 %9568
    %9570 = vrot.lane.b32.xlu0 %v797, 64
    %v9571 = vpop.permute.xlu0 %9570
    %9572 = vrot.lane.b32.xlu0 %v802, 64
    %v9573 = vpop.permute.xlu0 %9572
    %9574 = vrot.lane.b32.xlu0 %v807, 64
    %v9575 = vpop.permute.xlu0 %9574
    %9576 = vrot.lane.b32.xlu0 %v812, 64
    %v9577 = vpop.permute.xlu0 %9576
    %9578 = vrot.lane.b32.xlu0 %v817, 64
    %v9579 = vpop.permute.xlu0 %9578
    %9580 = vrot.lane.b32.xlu0 %v822, 64
    %v9581 = vpop.permute.xlu0 %9580
    %9582 = vrot.lane.b32.xlu0 %v827, 64
    %v9583 = vpop.permute.xlu0 %9582
    %9584 = vrot.lane.b32.xlu0 %v832, 64
    %v9585 = vpop.permute.xlu0 %9584
    %9586 = vrot.lane.b32.xlu0 %v837, 64
    %v9587 = vpop.permute.xlu0 %9586
    %9588 = vrot.lane.b32.xlu0 %v842, 64
    %v9589 = vpop.permute.xlu0 %9588
    %9590 = vrot.lane.b32.xlu0 %v847, 64
    %v9591 = vpop.permute.xlu0 %9590
    %9592 = vrot.lane.b32.xlu0 %v852, 64
    %v9593 = vpop.permute.xlu0 %9592
    %9594 = vrot.lane.b32.xlu0 %v857, 64
    %v9595 = vpop.permute.xlu0 %9594
    %9596 = vrot.lane.b32.xlu0 %v862, 64
    %v9597 = vpop.permute.xlu0 %9596
    %9598 = vrot.lane.b32.xlu0 %v867, 64
    %v9599 = vpop.permute.xlu0 %9598
    %9600 = vrot.lane.b32.xlu0 %v872, 64
    %v9601 = vpop.permute.xlu0 %9600
    %9602 = vrot.lane.b32.xlu0 %v877, 64
    %v9603 = vpop.permute.xlu0 %9602
    %9604 = vrot.lane.b32.xlu0 %v882, 64
    %v9605 = vpop.permute.xlu0 %9604
    %9606 = vrot.lane.b32.xlu0 %v887, 64
    %v9607 = vpop.permute.xlu0 %9606
    %v9640 = vadd.f32 %v9512, %v9545
    %v9641 = vadd.f32 %v9513, %v9547
    %v9642 = vadd.f32 %v9514, %v9549
    %v9643 = vadd.f32 %v9515, %v9551
    %v9644 = vadd.f32 %v9516, %v9553
    %v9645 = vadd.f32 %v9517, %v9555
    %v9646 = vadd.f32 %v9518, %v9557
    %v9647 = vadd.f32 %v9519, %v9559
    %v9648 = vadd.f32 %v9520, %v9561
    %v9649 = vadd.f32 %v9521, %v9563
    %v9650 = vadd.f32 %v9522, %v9565
    %v9651 = vadd.f32 %v9523, %v9567
    %v9652 = vadd.f32 %v9524, %v9569
    %v9653 = vadd.f32 %v9525, %v9571
    %v9654 = vadd.f32 %v9526, %v9573
    %v9655 = vadd.f32 %v9527, %v9575
    %v9656 = vadd.f32 %v9528, %v9577
    %v9657 = vadd.f32 %v9529, %v9579
    %v9658 = vadd.f32 %v9530, %v9581
    %v9659 = vadd.f32 %v9531, %v9583
    %v9660 = vadd.f32 %v9532, %v9585
    %v9661 = vadd.f32 %v9533, %v9587
    %v9662 = vadd.f32 %v9534, %v9589
    %v9663 = vadd.f32 %v9535, %v9591
    %v9664 = vadd.f32 %v9536, %v9593
    %v9665 = vadd.f32 %v9537, %v9595
    %v9666 = vadd.f32 %v9538, %v9597
    %v9667 = vadd.f32 %v9539, %v9599
    %v9668 = vadd.f32 %v9540, %v9601
    %v9669 = vadd.f32 %v9541, %v9603
    %v9670 = vadd.f32 %v9542, %v9605
    %v9671 = vadd.f32 %v9543, %v9607
    %vm9672 = vcmp.gt.f32.partialorder %v9640, 0.0
    %vm9673 = vcmp.gt.f32.partialorder %v9641, 0.0
    %vm9674 = vcmp.gt.f32.partialorder %v9642, 0.0
    %vm9675 = vcmp.gt.f32.partialorder %v9643, 0.0
    %vm9676 = vcmp.gt.f32.partialorder %v9644, 0.0
    %vm9677 = vcmp.gt.f32.partialorder %v9645, 0.0
    %vm9678 = vcmp.gt.f32.partialorder %v9646, 0.0
    %vm9679 = vcmp.gt.f32.partialorder %v9647, 0.0
    %vm9680 = vcmp.gt.f32.partialorder %v9648, 0.0
    %vm9681 = vcmp.gt.f32.partialorder %v9649, 0.0
    %vm9682 = vcmp.gt.f32.partialorder %v9650, 0.0
    %vm9683 = vcmp.gt.f32.partialorder %v9651, 0.0
    %vm9684 = vcmp.gt.f32.partialorder %v9652, 0.0
    %vm9685 = vcmp.gt.f32.partialorder %v9653, 0.0
    %vm9686 = vcmp.gt.f32.partialorder %v9654, 0.0
    %vm9687 = vcmp.gt.f32.partialorder %v9655, 0.0
    %vm9688 = vcmp.gt.f32.partialorder %v9656, 0.0
    %vm9689 = vcmp.gt.f32.partialorder %v9657, 0.0
    %vm9690 = vcmp.gt.f32.partialorder %v9658, 0.0
    %vm9691 = vcmp.gt.f32.partialorder %v9659, 0.0
    %vm9692 = vcmp.gt.f32.partialorder %v9660, 0.0
    %vm9693 = vcmp.gt.f32.partialorder %v9661, 0.0
    %vm9694 = vcmp.gt.f32.partialorder %v9662, 0.0
    %vm9695 = vcmp.gt.f32.partialorder %v9663, 0.0
    %vm9696 = vcmp.gt.f32.partialorder %v9664, 0.0
    %vm9697 = vcmp.gt.f32.partialorder %v9665, 0.0
    %vm9698 = vcmp.gt.f32.partialorder %v9666, 0.0
    %vm9699 = vcmp.gt.f32.partialorder %v9667, 0.0
    %vm9700 = vcmp.gt.f32.partialorder %v9668, 0.0
    %vm9701 = vcmp.gt.f32.partialorder %v9669, 0.0
    %vm9702 = vcmp.gt.f32.partialorder %v9670, 0.0
    %vm9703 = vcmp.gt.f32.partialorder %v9671, 0.0
    %v9704 = vmin.f32 %v9640, 0.0
    %v9705 = vmin.f32 %v9641, 0.0
    %v9706 = vmin.f32 %v9642, 0.0
    %v9707 = vmin.f32 %v9643, 0.0
    %v9708 = vmin.f32 %v9644, 0.0
    %v9709 = vmin.f32 %v9645, 0.0
    %v9710 = vmin.f32 %v9646, 0.0
    %v9711 = vmin.f32 %v9647, 0.0
    %v9712 = vmin.f32 %v9648, 0.0
    %v9713 = vmin.f32 %v9649, 0.0
    %v9714 = vmin.f32 %v9650, 0.0
    %v9715 = vmin.f32 %v9651, 0.0
    %v9716 = vmin.f32 %v9652, 0.0
    %v9717 = vmin.f32 %v9653, 0.0
    %v9718 = vmin.f32 %v9654, 0.0
    %v9719 = vmin.f32 %v9655, 0.0
    %v9720 = vmin.f32 %v9656, 0.0
    %v9721 = vmin.f32 %v9657, 0.0
    %v9722 = vmin.f32 %v9658, 0.0
    %v9723 = vmin.f32 %v9659, 0.0
    %v9724 = vmin.f32 %v9660, 0.0
    %v9725 = vmin.f32 %v9661, 0.0
    %v9726 = vmin.f32 %v9662, 0.0
    %v9727 = vmin.f32 %v9663, 0.0
    %v9728 = vmin.f32 %v9664, 0.0
    %v9729 = vmin.f32 %v9665, 0.0
    %v9730 = vmin.f32 %v9666, 0.0
    %v9731 = vmin.f32 %v9667, 0.0
    %v9732 = vmin.f32 %v9668, 0.0
    %v9733 = vmin.f32 %v9669, 0.0
    %v9734 = vmin.f32 %v9670, 0.0
    %v9735 = vmin.f32 %v9671, 0.0
    %v9736 = vmul.f32 %v9704, 1.442695
    %v9737 = vpow.pop %v9736
    %v9738 = vmul.f32 %v9705, 1.442695
    %v9739 = vpow.pop %v9738
    %v9740 = vmul.f32 %v9706, 1.442695
    %v9741 = vpow.pop %v9740
    %v9742 = vmul.f32 %v9707, 1.442695
    %v9743 = vpow.pop %v9742
    %v9744 = vmul.f32 %v9708, 1.442695
    %v9745 = vpow.pop %v9744
    %v9746 = vmul.f32 %v9709, 1.442695
    %v9747 = vpow.pop %v9746
    %v9748 = vmul.f32 %v9710, 1.442695
    %v9749 = vpow.pop %v9748
    %v9750 = vmul.f32 %v9711, 1.442695
    %v9751 = vpow.pop %v9750
    %v9752 = vmul.f32 %v9712, 1.442695
    %v9753 = vpow.pop %v9752
    %v9754 = vmul.f32 %v9713, 1.442695
    %v9755 = vpow.pop %v9754
    %v9756 = vmul.f32 %v9714, 1.442695
    %v9757 = vpow.pop %v9756
    %v9758 = vmul.f32 %v9715, 1.442695
    %v9759 = vpow.pop %v9758
    %v9760 = vmul.f32 %v9716, 1.442695
    %v9761 = vpow.pop %v9760
    %v9762 = vmul.f32 %v9717, 1.442695
    %v9763 = vpow.pop %v9762
    %v9764 = vmul.f32 %v9718, 1.442695
    %v9765 = vpow.pop %v9764
    %v9766 = vmul.f32 %v9719, 1.442695
    %v9767 = vpow.pop %v9766
    %v9768 = vmul.f32 %v9720, 1.442695
    %v9769 = vpow.pop %v9768
    %v9770 = vmul.f32 %v9721, 1.442695
    %v9771 = vpow.pop %v9770
    %v9772 = vmul.f32 %v9722, 1.442695
    %v9773 = vpow.pop %v9772
    %v9774 = vmul.f32 %v9723, 1.442695
    %v9775 = vpow.pop %v9774
    %v9776 = vmul.f32 %v9724, 1.442695
    %v9777 = vpow.pop %v9776
    %v9778 = vmul.f32 %v9725, 1.442695
    %v9779 = vpow.pop %v9778
    %v9780 = vmul.f32 %v9726, 1.442695
    %v9781 = vpow.pop %v9780
    %v9782 = vmul.f32 %v9727, 1.442695
    %v9783 = vpow.pop %v9782
    %v9784 = vmul.f32 %v9728, 1.442695
    %v9785 = vpow.pop %v9784
    %v9786 = vmul.f32 %v9729, 1.442695
    %v9787 = vpow.pop %v9786
    %v9788 = vmul.f32 %v9730, 1.442695
    %v9789 = vpow.pop %v9788
    %v9790 = vmul.f32 %v9731, 1.442695
    %v9791 = vpow.pop %v9790
    %v9792 = vmul.f32 %v9732, 1.442695
    %v9793 = vpow.pop %v9792
    %v9794 = vmul.f32 %v9733, 1.442695
    %v9795 = vpow.pop %v9794
    %v9796 = vmul.f32 %v9734, 1.442695
    %v9797 = vpow.pop %v9796
    %v9798 = vmul.f32 %v9735, 1.442695
    %v9799 = vpow.pop %v9798
    %v9800 = vsub.f32 %v9737, 1.0
    %v9801 = vsub.f32 %v9739, 1.0
    %v9802 = vsub.f32 %v9741, 1.0
    %v9803 = vsub.f32 %v9743, 1.0
    %v9804 = vsub.f32 %v9745, 1.0
    %v9805 = vsub.f32 %v9747, 1.0
    %v9806 = vsub.f32 %v9749, 1.0
    %v9807 = vsub.f32 %v9751, 1.0
    %v9808 = vsub.f32 %v9753, 1.0
    %v9809 = vsub.f32 %v9755, 1.0
    %v9810 = vsub.f32 %v9757, 1.0
    %v9811 = vsub.f32 %v9759, 1.0
    %v9812 = vsub.f32 %v9761, 1.0
    %v9813 = vsub.f32 %v9763, 1.0
    %v9814 = vsub.f32 %v9765, 1.0
    %v9815 = vsub.f32 %v9767, 1.0
    %v9816 = vsub.f32 %v9769, 1.0
    %v9817 = vsub.f32 %v9771, 1.0
    %v9818 = vsub.f32 %v9773, 1.0
    %v9819 = vsub.f32 %v9775, 1.0
    %v9820 = vsub.f32 %v9777, 1.0
    %v9821 = vsub.f32 %v9779, 1.0
    %v9822 = vsub.f32 %v9781, 1.0
    %v9823 = vsub.f32 %v9783, 1.0
    %v9824 = vsub.f32 %v9785, 1.0
    %v9825 = vsub.f32 %v9787, 1.0
    %v9826 = vsub.f32 %v9789, 1.0
    %v9827 = vsub.f32 %v9791, 1.0
    %v9828 = vsub.f32 %v9793, 1.0
    %v9829 = vsub.f32 %v9795, 1.0
    %v9830 = vsub.f32 %v9797, 1.0
    %v9831 = vsub.f32 %v9799, 1.0
    %v9832 = vsel %vm9672, %v9640, %v9800
    %v9833 = vsel %vm9673, %v9641, %v9801
    %v9834 = vsel %vm9674, %v9642, %v9802
    %v9835 = vsel %vm9675, %v9643, %v9803
    %v9836 = vsel %vm9676, %v9644, %v9804
    %v9837 = vsel %vm9677, %v9645, %v9805
    %v9838 = vsel %vm9678, %v9646, %v9806
    %v9839 = vsel %vm9679, %v9647, %v9807
    %v9840 = vsel %vm9680, %v9648, %v9808
    %v9841 = vsel %vm9681, %v9649, %v9809
    %v9842 = vsel %vm9682, %v9650, %v9810
    %v9843 = vsel %vm9683, %v9651, %v9811
    %v9844 = vsel %vm9684, %v9652, %v9812
    %v9845 = vsel %vm9685, %v9653, %v9813
    %v9846 = vsel %vm9686, %v9654, %v9814
    %v9847 = vsel %vm9687, %v9655, %v9815
    %v9848 = vsel %vm9688, %v9656, %v9816
    %v9849 = vsel %vm9689, %v9657, %v9817
    %v9850 = vsel %vm9690, %v9658, %v9818
    %v9851 = vsel %vm9691, %v9659, %v9819
    %v9852 = vsel %vm9692, %v9660, %v9820
    %v9853 = vsel %vm9693, %v9661, %v9821
    %v9854 = vsel %vm9694, %v9662, %v9822
    %v9855 = vsel %vm9695, %v9663, %v9823
    %v9856 = vsel %vm9696, %v9664, %v9824
    %v9857 = vsel %vm9697, %v9665, %v9825
    %v9858 = vsel %vm9698, %v9666, %v9826
    %v9859 = vsel %vm9699, %v9667, %v9827
    %v9860 = vsel %vm9700, %v9668, %v9828
    %v9861 = vsel %vm9701, %v9669, %v9829
    %v9862 = vsel %vm9702, %v9670, %v9830
    %v9863 = vsel %vm9703, %v9671, %v9831
    %v9864 = vld [vmem:[%s10] sm:$0xff]
    %v9865 = vld [vmem:[%s10 + $0x8] sm:$0xff]
    %v9866 = vld [vmem:[%s10 + $0x10] sm:$0xff]
    %v9867 = vld [vmem:[%s10 + $0x18] sm:$0xff]
    %v9868 = vld [vmem:[%s10 + $0x20] sm:$0xff]
    %v9869 = vld [vmem:[%s10 + $0x28] sm:$0xff]
    %v9870 = vld [vmem:[%s10 + $0x30] sm:$0xff]
    %v9871 = vld [vmem:[%s10 + $0x38] sm:$0xff]
    %v9872 = vld [vmem:[%s11] sm:$0x1]
    %v9874 = vlaneseq
    %v9875 = vshrl.u32 %v9874, 7
    %v9876 = vsub.s32 0, %v9875
    %v9877 = vrot.slane %v9872, %v9876
    %v9880 = vsel %vm1156, %v524, 0
    %v9883 = vsel %vm1156, %v525, 0
    %v9886 = vsel %vm1156, %v526, 0
    %v9889 = vsel %vm1156, %v527, 0
    %v9892 = vsel %vm1156, %v528, 0
    %v9895 = vsel %vm1156, %v529, 0
    %v9898 = vsel %vm1156, %v530, 0
    %v9901 = vsel %vm1156, %v531, 0
    %v9904 = vsel %vm1156, %v532, 0
    %v9907 = vsel %vm1156, %v533, 0
    %v9910 = vsel %vm1156, %v534, 0
    %v9913 = vsel %vm1156, %v535, 0
    %v9916 = vsel %vm1156, %v536, 0
    %v9919 = vsel %vm1156, %v537, 0
    %v9922 = vsel %vm1156, %v538, 0
    %v9925 = vsel %vm1156, %v539, 0
    %v9928 = vsel %vm1156, %v540, 0
    %v9931 = vsel %vm1156, %v541, 0
    %v9934 = vsel %vm1156, %v542, 0
    %v9937 = vsel %vm1156, %v543, 0
    %v9940 = vsel %vm1156, %v544, 0
    %v9943 = vsel %vm1156, %v545, 0
    %v9946 = vsel %vm1156, %v546, 0
    %v9949 = vsel %vm1156, %v547, 0
    %v9952 = vsel %vm1156, %v548, 0
    %v9955 = vsel %vm1156, %v549, 0
    %v9958 = vsel %vm1156, %v550, 0
    %v9961 = vsel %vm1156, %v551, 0
    %v9964 = vsel %vm1156, %v552, 0
    %v9967 = vsel %vm1156, %v553, 0
    %v9970 = vsel %vm1156, %v554, 0
    %v9973 = vsel %vm1156, %v555, 0
    %9975 = vmatprep.subr.mxu0 0.0
    %9976 = vmatpush1.msra.mxu0 0.0
    %9977 = vmatprep.subr.mxu0 0.0
    %9978 = vmatpush1.msra.mxu0 0.0
    %9979 = vmatprep.subr.mxu0 0.0
    %9980 = vmatpush1.msra.mxu0 0.0
    %9981 = vmatprep.subr.mxu0 0.0
    %9982 = vmatpush1.msra.mxu0 0.0
    %9983 = vmatprep.subr.mxu0 0.0
    %9984 = vmatpush1.msra.mxu0 0.0
    %9985 = vmatprep.subr.mxu0 0.0
    %9986 = vmatpush1.msra.mxu0 0.0
    %9987 = vmatprep.subr.mxu0 0.0
    %9988 = vmatpush1.msra.mxu0 0.0
    %9989 = vmatprep.subr.mxu0 0.0
    %9990 = vmatpush1.msra.mxu0 0.0
    %9991 = vmatprep.subr.mxu0 0.0
    %9992 = vmatpush1.msra.mxu0 %v9871
    %9993 = vmatprep.subr.mxu0 0.0
    %9994 = vmatpush1.msra.mxu0 %v9870
    %9995 = vmatprep.subr.mxu0 0.0
    %9996 = vmatpush1.msra.mxu0 %v9869
    %9997 = vmatprep.subr.mxu0 0.0
    %9998 = vmatpush1.msra.mxu0 %v9868
    %9999 = vmatprep.subr.mxu0 0.0
    %10000 = vmatpush1.msra.mxu0 %v9867
    %10001 = vmatprep.subr.mxu0 0.0
    %10002 = vmatpush1.msra.mxu0 %v9866
    %10003 = vmatprep.subr.mxu0 0.0
    %10004 = vmatpush1.msra.mxu0 %v9865
    %10005 = vmatprep.subr.mxu0 0.0
    %10006 = vmatpush1.msra.mxu0 %v9864
    %10007 = vmatprep.subr.mxu0 0.0
    %10008 = vmatpush2.msra.mxu0 0.0
    %10009 = vmatprep.subr.mxu0 0.0
    %10010 = vmatpush2.msra.mxu0 0.0
    %10011 = vmatprep.subr.mxu0 0.0
    %10012 = vmatpush2.msra.mxu0 0.0
    %10013 = vmatprep.subr.mxu0 0.0
    %10014 = vmatpush2.msra.mxu0 0.0
    %10015 = vmatprep.subr.mxu0 0.0
    %10016 = vmatpush2.msra.mxu0 0.0
    %10017 = vmatprep.subr.mxu0 0.0
    %10018 = vmatpush2.msra.mxu0 0.0
    %10019 = vmatprep.subr.mxu0 0.0
    %10020 = vmatpush2.msra.mxu0 0.0
    %10021 = vmatprep.subr.mxu0 0.0
    %10022 = vmatpush2.msra.mxu0 0.0
    %10023 = vmatprep.subr.mxu0 0.0
    %10024 = vmatpush2.msra.mxu0 0.0
    %10025 = vmatprep.subr.mxu0 0.0
    %10026 = vmatpush2.msra.mxu0 0.0
    %10027 = vmatprep.subr.mxu0 0.0
    %10028 = vmatpush2.msra.mxu0 0.0
    %10029 = vmatprep.subr.mxu0 0.0
    %10030 = vmatpush2.msra.mxu0 0.0
    %10031 = vmatprep.subr.mxu0 0.0
    %10032 = vmatpush2.msra.mxu0 0.0
    %10033 = vmatprep.subr.mxu0 0.0
    %10034 = vmatpush2.msra.mxu0 0.0
    %10035 = vmatprep.subr.mxu0 0.0
    %10036 = vmatpush2.msra.mxu0 0.0
    %10037 = vmatprep.subr.mxu0 0.0
    %10038 = vmatpush2.msra.mxu0 0.0
    %10039 = vmatprep.mubr.f32.mxu0 0.0
    %10040 = vmatmul.mubr.f32.gmra.mxu0 %v9880
    %v10041 = vpop.f32.mrf.mxu0
    %v10042 = vadd.f32 %v9877, %v10041
    %v10043 = vpop.f32.mrf.mxu0
    %10044 = vmatprep.mubr.f32.mxu0 0.0
    %10045 = vmatmul.mubr.f32.gmra.mxu0 %v9883
    %v10046 = vpop.f32.mrf.mxu0
    %v10047 = vadd.f32 %v9877, %v10046
    %v10048 = vpop.f32.mrf.mxu0
    %10049 = vmatprep.mubr.f32.mxu0 0.0
    %10050 = vmatmul.mubr.f32.gmra.mxu0 %v9886
    %v10051 = vpop.f32.mrf.mxu0
    %v10052 = vadd.f32 %v9877, %v10051
    %v10053 = vpop.f32.mrf.mxu0
    %10054 = vmatprep.mubr.f32.mxu0 0.0
    %10055 = vmatmul.mubr.f32.gmra.mxu0 %v9889
    %v10056 = vpop.f32.mrf.mxu0
    %v10057 = vadd.f32 %v9877, %v10056
    %v10058 = vpop.f32.mrf.mxu0
    %10059 = vmatprep.mubr.f32.mxu0 0.0
    %10060 = vmatmul.mubr.f32.gmra.mxu0 %v9892
    %v10061 = vpop.f32.mrf.mxu0
    %v10062 = vadd.f32 %v9877, %v10061
    %v10063 = vpop.f32.mrf.mxu0
    %10064 = vmatprep.mubr.f32.mxu0 0.0
    %10065 = vmatmul.mubr.f32.gmra.mxu0 %v9895
    %v10066 = vpop.f32.mrf.mxu0
    %v10067 = vadd.f32 %v9877, %v10066
    %v10068 = vpop.f32.mrf.mxu0
    %10069 = vmatprep.mubr.f32.mxu0 0.0
    %10070 = vmatmul.mubr.f32.gmra.mxu0 %v9898
    %v10071 = vpop.f32.mrf.mxu0
    %v10072 = vadd.f32 %v9877, %v10071
    %v10073 = vpop.f32.mrf.mxu0
    %10074 = vmatprep.mubr.f32.mxu0 0.0
    %10075 = vmatmul.mubr.f32.gmra.mxu0 %v9901
    %v10076 = vpop.f32.mrf.mxu0
    %v10077 = vadd.f32 %v9877, %v10076
    %v10078 = vpop.f32.mrf.mxu0
    %10079 = vmatprep.mubr.f32.mxu0 0.0
    %10080 = vmatmul.mubr.f32.gmra.mxu0 %v9904
    %v10081 = vpop.f32.mrf.mxu0
    %v10082 = vadd.f32 %v9877, %v10081
    %v10083 = vpop.f32.mrf.mxu0
    %10084 = vmatprep.mubr.f32.mxu0 0.0
    %10085 = vmatmul.mubr.f32.gmra.mxu0 %v9907
    %v10086 = vpop.f32.mrf.mxu0
    %v10087 = vadd.f32 %v9877, %v10086
    %v10088 = vpop.f32.mrf.mxu0
    %10089 = vmatprep.mubr.f32.mxu0 0.0
    %10090 = vmatmul.mubr.f32.gmra.mxu0 %v9910
    %v10091 = vpop.f32.mrf.mxu0
    %v10092 = vadd.f32 %v9877, %v10091
    %v10093 = vpop.f32.mrf.mxu0
    %10094 = vmatprep.mubr.f32.mxu0 0.0
    %10095 = vmatmul.mubr.f32.gmra.mxu0 %v9913
    %v10096 = vpop.f32.mrf.mxu0
    %v10097 = vadd.f32 %v9877, %v10096
    %v10098 = vpop.f32.mrf.mxu0
    %10099 = vmatprep.mubr.f32.mxu0 0.0
    %10100 = vmatmul.mubr.f32.gmra.mxu0 %v9916
    %v10101 = vpop.f32.mrf.mxu0
    %v10102 = vadd.f32 %v9877, %v10101
    %v10103 = vpop.f32.mrf.mxu0
    %10104 = vmatprep.mubr.f32.mxu0 0.0
    %10105 = vmatmul.mubr.f32.gmra.mxu0 %v9919
    %v10106 = vpop.f32.mrf.mxu0
    %v10107 = vadd.f32 %v9877, %v10106
    %v10108 = vpop.f32.mrf.mxu0
    %10109 = vmatprep.mubr.f32.mxu0 0.0
    %10110 = vmatmul.mubr.f32.gmra.mxu0 %v9922
    %v10111 = vpop.f32.mrf.mxu0
    %v10112 = vadd.f32 %v9877, %v10111
    %v10113 = vpop.f32.mrf.mxu0
    %10114 = vmatprep.mubr.f32.mxu0 0.0
    %10115 = vmatmul.mubr.f32.gmra.mxu0 %v9925
    %v10116 = vpop.f32.mrf.mxu0
    %v10117 = vadd.f32 %v9877, %v10116
    %v10118 = vpop.f32.mrf.mxu0
    %10119 = vmatprep.mubr.f32.mxu0 0.0
    %10120 = vmatmul.mubr.f32.gmra.mxu0 %v9928
    %v10121 = vpop.f32.mrf.mxu0
    %v10122 = vadd.f32 %v9877, %v10121
    %v10123 = vpop.f32.mrf.mxu0
    %10124 = vmatprep.mubr.f32.mxu0 0.0
    %10125 = vmatmul.mubr.f32.gmra.mxu0 %v9931
    %v10126 = vpop.f32.mrf.mxu0
    %v10127 = vadd.f32 %v9877, %v10126
    %v10128 = vpop.f32.mrf.mxu0
    %10129 = vmatprep.mubr.f32.mxu0 0.0
    %10130 = vmatmul.mubr.f32.gmra.mxu0 %v9934
    %v10131 = vpop.f32.mrf.mxu0
    %v10132 = vadd.f32 %v9877, %v10131
    %v10133 = vpop.f32.mrf.mxu0
    %10134 = vmatprep.mubr.f32.mxu0 0.0
    %10135 = vmatmul.mubr.f32.gmra.mxu0 %v9937
    %v10136 = vpop.f32.mrf.mxu0
    %v10137 = vadd.f32 %v9877, %v10136
    %v10138 = vpop.f32.mrf.mxu0
    %10139 = vmatprep.mubr.f32.mxu0 0.0
    %10140 = vmatmul.mubr.f32.gmra.mxu0 %v9940
    %v10141 = vpop.f32.mrf.mxu0
    %v10142 = vadd.f32 %v9877, %v10141
    %v10143 = vpop.f32.mrf.mxu0
    %10144 = vmatprep.mubr.f32.mxu0 0.0
    %10145 = vmatmul.mubr.f32.gmra.mxu0 %v9943
    %v10146 = vpop.f32.mrf.mxu0
    %v10147 = vadd.f32 %v9877, %v10146
    %v10148 = vpop.f32.mrf.mxu0
    %10149 = vmatprep.mubr.f32.mxu0 0.0
    %10150 = vmatmul.mubr.f32.gmra.mxu0 %v9946
    %v10151 = vpop.f32.mrf.mxu0
    %v10152 = vadd.f32 %v9877, %v10151
    %v10153 = vpop.f32.mrf.mxu0
    %10154 = vmatprep.mubr.f32.mxu0 0.0
    %10155 = vmatmul.mubr.f32.gmra.mxu0 %v9949
    %v10156 = vpop.f32.mrf.mxu0
    %v10157 = vadd.f32 %v9877, %v10156
    %v10158 = vpop.f32.mrf.mxu0
    %10159 = vmatprep.mubr.f32.mxu0 0.0
    %10160 = vmatmul.mubr.f32.gmra.mxu0 %v9952
    %v10161 = vpop.f32.mrf.mxu0
    %v10162 = vadd.f32 %v9877, %v10161
    %v10163 = vpop.f32.mrf.mxu0
    %10164 = vmatprep.mubr.f32.mxu0 0.0
    %10165 = vmatmul.mubr.f32.gmra.mxu0 %v9955
    %v10166 = vpop.f32.mrf.mxu0
    %v10167 = vadd.f32 %v9877, %v10166
    %v10168 = vpop.f32.mrf.mxu0
    %10169 = vmatprep.mubr.f32.mxu0 0.0
    %10170 = vmatmul.mubr.f32.gmra.mxu0 %v9958
    %v10171 = vpop.f32.mrf.mxu0
    %v10172 = vadd.f32 %v9877, %v10171
    %v10173 = vpop.f32.mrf.mxu0
    %10174 = vmatprep.mubr.f32.mxu0 0.0
    %10175 = vmatmul.mubr.f32.gmra.mxu0 %v9961
    %v10176 = vpop.f32.mrf.mxu0
    %v10177 = vadd.f32 %v9877, %v10176
    %v10178 = vpop.f32.mrf.mxu0
    %10179 = vmatprep.mubr.f32.mxu0 0.0
    %10180 = vmatmul.mubr.f32.gmra.mxu0 %v9964
    %v10181 = vpop.f32.mrf.mxu0
    %v10182 = vadd.f32 %v9877, %v10181
    %v10183 = vpop.f32.mrf.mxu0
    %10184 = vmatprep.mubr.f32.mxu0 0.0
    %10185 = vmatmul.mubr.f32.gmra.mxu0 %v9967
    %v10186 = vpop.f32.mrf.mxu0
    %v10187 = vadd.f32 %v9877, %v10186
    %v10188 = vpop.f32.mrf.mxu0
    %10189 = vmatprep.mubr.f32.mxu0 0.0
    %10190 = vmatmul.mubr.f32.gmra.mxu0 %v9970
    %v10191 = vpop.f32.mrf.mxu0
    %v10192 = vadd.f32 %v9877, %v10191
    %v10193 = vpop.f32.mrf.mxu0
    %10194 = vmatprep.mubr.f32.mxu0 0.0
    %10195 = vmatmul.mubr.f32.gmra.mxu0 %v9973
    %v10196 = vpop.f32.mrf.mxu0
    %v10197 = vadd.f32 %v9877, %v10196
    %v10198 = vpop.f32.mrf.mxu0
    %10199 = vdwg.mxu0
    %v10200 = vand.u32 2147483647, %v10042
    %v10201 = vand.u32 2147483647, %v10047
    %v10202 = vand.u32 2147483647, %v10052
    %v10203 = vand.u32 2147483647, %v10057
    %v10204 = vand.u32 2147483647, %v10062
    %v10205 = vand.u32 2147483647, %v10067
    %v10206 = vand.u32 2147483647, %v10072
    %v10207 = vand.u32 2147483647, %v10077
    %v10208 = vand.u32 2147483647, %v10082
    %v10209 = vand.u32 2147483647, %v10087
    %v10210 = vand.u32 2147483647, %v10092
    %v10211 = vand.u32 2147483647, %v10097
    %v10212 = vand.u32 2147483647, %v10102
    %v10213 = vand.u32 2147483647, %v10107
    %v10214 = vand.u32 2147483647, %v10112
    %v10215 = vand.u32 2147483647, %v10117
    %v10216 = vand.u32 2147483647, %v10122
    %v10217 = vand.u32 2147483647, %v10127
    %v10218 = vand.u32 2147483647, %v10132
    %v10219 = vand.u32 2147483647, %v10137
    %v10220 = vand.u32 2147483647, %v10142
    %v10221 = vand.u32 2147483647, %v10147
    %v10222 = vand.u32 2147483647, %v10152
    %v10223 = vand.u32 2147483647, %v10157
    %v10224 = vand.u32 2147483647, %v10162
    %v10225 = vand.u32 2147483647, %v10167
    %v10226 = vand.u32 2147483647, %v10172
    %v10227 = vand.u32 2147483647, %v10177
    %v10228 = vand.u32 2147483647, %v10182
    %v10229 = vand.u32 2147483647, %v10187
    %v10230 = vand.u32 2147483647, %v10192
    %v10231 = vand.u32 2147483647, %v10197
    %v10232 = vsub.f32 0.0, %v10200
    %v10233 = vsub.f32 0.0, %v10201
    %v10234 = vsub.f32 0.0, %v10202
    %v10235 = vsub.f32 0.0, %v10203
    %v10236 = vsub.f32 0.0, %v10204
    %v10237 = vsub.f32 0.0, %v10205
    %v10238 = vsub.f32 0.0, %v10206
    %v10239 = vsub.f32 0.0, %v10207
    %v10240 = vsub.f32 0.0, %v10208
    %v10241 = vsub.f32 0.0, %v10209
    %v10242 = vsub.f32 0.0, %v10210
    %v10243 = vsub.f32 0.0, %v10211
    %v10244 = vsub.f32 0.0, %v10212
    %v10245 = vsub.f32 0.0, %v10213
    %v10246 = vsub.f32 0.0, %v10214
    %v10247 = vsub.f32 0.0, %v10215
    %v10248 = vsub.f32 0.0, %v10216
    %v10249 = vsub.f32 0.0, %v10217
    %v10250 = vsub.f32 0.0, %v10218
    %v10251 = vsub.f32 0.0, %v10219
    %v10252 = vsub.f32 0.0, %v10220
    %v10253 = vsub.f32 0.0, %v10221
    %v10254 = vsub.f32 0.0, %v10222
    %v10255 = vsub.f32 0.0, %v10223
    %v10256 = vsub.f32 0.0, %v10224
    %v10257 = vsub.f32 0.0, %v10225
    %v10258 = vsub.f32 0.0, %v10226
    %v10259 = vsub.f32 0.0, %v10227
    %v10260 = vsub.f32 0.0, %v10228
    %v10261 = vsub.f32 0.0, %v10229
    %v10262 = vsub.f32 0.0, %v10230
    %v10263 = vsub.f32 0.0, %v10231
    %v10264 = vmul.f32 %v9832, %v10232
    %v10265 = vmul.f32 %v9833, %v10233
    %v10266 = vmul.f32 %v9834, %v10234
    %v10267 = vmul.f32 %v9835, %v10235
    %v10268 = vmul.f32 %v9836, %v10236
    %v10269 = vmul.f32 %v9837, %v10237
    %v10270 = vmul.f32 %v9838, %v10238
    %v10271 = vmul.f32 %v9839, %v10239
    %v10272 = vmul.f32 %v9840, %v10240
    %v10273 = vmul.f32 %v9841, %v10241
    %v10274 = vmul.f32 %v9842, %v10242
    %v10275 = vmul.f32 %v9843, %v10243
    %v10276 = vmul.f32 %v9844, %v10244
    %v10277 = vmul.f32 %v9845, %v10245
    %v10278 = vmul.f32 %v9846, %v10246
    %v10279 = vmul.f32 %v9847, %v10247
    %v10280 = vmul.f32 %v9848, %v10248
    %v10281 = vmul.f32 %v9849, %v10249
    %v10282 = vmul.f32 %v9850, %v10250
    %v10283 = vmul.f32 %v9851, %v10251
    %v10284 = vmul.f32 %v9852, %v10252
    %v10285 = vmul.f32 %v9853, %v10253
    %v10286 = vmul.f32 %v9854, %v10254
    %v10287 = vmul.f32 %v9855, %v10255
    %v10288 = vmul.f32 %v9856, %v10256
    %v10289 = vmul.f32 %v9857, %v10257
    %v10290 = vmul.f32 %v9858, %v10258
    %v10291 = vmul.f32 %v9859, %v10259
    %v10292 = vmul.f32 %v9860, %v10260
    %v10293 = vmul.f32 %v9861, %v10261
    %v10294 = vmul.f32 %v9862, %v10262
    %v10295 = vmul.f32 %v9863, %v10263
    %v10296 = vmul.f32 %v56, %v56
    %v10297 = vmul.f32 %v57, %v57
    %v10298 = vmul.f32 %v58, %v58
    %v10299 = vmul.f32 %v59, %v59
    %v10300 = vmul.f32 %v60, %v60
    %v10301 = vmul.f32 %v61, %v61
    %v10302 = vmul.f32 %v62, %v62
    %v10303 = vmul.f32 %v63, %v63
    %v10304 = vmul.f32 %v64, %v64
    %v10305 = vmul.f32 %v65, %v65
    %v10306 = vmul.f32 %v66, %v66
    %v10307 = vmul.f32 %v67, %v67
    %v10308 = vmul.f32 %v68, %v68
    %v10309 = vmul.f32 %v69, %v69
    %v10310 = vmul.f32 %v70, %v70
    %v10311 = vmul.f32 %v71, %v71
    %v10312 = vmul.f32 %v72, %v72
    %v10313 = vmul.f32 %v73, %v73
    %v10314 = vmul.f32 %v74, %v74
    %v10315 = vmul.f32 %v75, %v75
    %v10316 = vmul.f32 %v76, %v76
    %v10317 = vmul.f32 %v77, %v77
    %v10318 = vmul.f32 %v78, %v78
    %v10319 = vmul.f32 %v79, %v79
    %v10320 = vmul.f32 %v80, %v80
    %v10321 = vmul.f32 %v81, %v81
    %v10322 = vmul.f32 %v82, %v82
    %v10323 = vmul.f32 %v83, %v83
    %v10324 = vmul.f32 %v84, %v84
    %v10325 = vmul.f32 %v85, %v85
    %v10326 = vmul.f32 %v86, %v86
    %v10327 = vmul.f32 %v87, %v87
    %10328 = vrot.lane.b32.xlu0 %v88, 32
    %v10329 = vpop.permute.xlu0 %10328
    %10330 = vrot.lane.b32.xlu0 %v89, 32
    %v10331 = vpop.permute.xlu0 %10330
    %10332 = vrot.lane.b32.xlu0 %v90, 32
    %v10333 = vpop.permute.xlu0 %10332
    %10334 = vrot.lane.b32.xlu0 %v91, 32
    %v10335 = vpop.permute.xlu0 %10334
    %10336 = vrot.lane.b32.xlu0 %v92, 32
    %v10337 = vpop.permute.xlu0 %10336
    %10338 = vrot.lane.b32.xlu0 %v93, 32
    %v10339 = vpop.permute.xlu0 %10338
    %10340 = vrot.lane.b32.xlu0 %v94, 32
    %v10341 = vpop.permute.xlu0 %10340
    %10342 = vrot.lane.b32.xlu0 %v95, 32
    %v10343 = vpop.permute.xlu0 %10342
    %10344 = vrot.lane.b32.xlu0 %v96, 32
    %v10345 = vpop.permute.xlu0 %10344
    %10346 = vrot.lane.b32.xlu0 %v97, 32
    %v10347 = vpop.permute.xlu0 %10346
    %10348 = vrot.lane.b32.xlu0 %v98, 32
    %v10349 = vpop.permute.xlu0 %10348
    %10350 = vrot.lane.b32.xlu0 %v99, 32
    %v10351 = vpop.permute.xlu0 %10350
    %10352 = vrot.lane.b32.xlu0 %v100, 32
    %v10353 = vpop.permute.xlu0 %10352
    %10354 = vrot.lane.b32.xlu0 %v101, 32
    %v10355 = vpop.permute.xlu0 %10354
    %10356 = vrot.lane.b32.xlu0 %v102, 32
    %v10357 = vpop.permute.xlu0 %10356
    %10358 = vrot.lane.b32.xlu0 %v103, 32
    %v10359 = vpop.permute.xlu0 %10358
    %10360 = vrot.lane.b32.xlu0 %v104, 32
    %v10361 = vpop.permute.xlu0 %10360
    %10362 = vrot.lane.b32.xlu0 %v105, 32
    %v10363 = vpop.permute.xlu0 %10362
    %10364 = vrot.lane.b32.xlu0 %v106, 32
    %v10365 = vpop.permute.xlu0 %10364
    %10366 = vrot.lane.b32.xlu0 %v107, 32
    %v10367 = vpop.permute.xlu0 %10366
    %10368 = vrot.lane.b32.xlu0 %v108, 32
    %v10369 = vpop.permute.xlu0 %10368
    %10370 = vrot.lane.b32.xlu0 %v109, 32
    %v10371 = vpop.permute.xlu0 %10370
    %10372 = vrot.lane.b32.xlu0 %v110, 32
    %v10373 = vpop.permute.xlu0 %10372
    %10374 = vrot.lane.b32.xlu0 %v111, 32
    %v10375 = vpop.permute.xlu0 %10374
    %10376 = vrot.lane.b32.xlu0 %v112, 32
    %v10377 = vpop.permute.xlu0 %10376
    %10378 = vrot.lane.b32.xlu0 %v113, 32
    %v10379 = vpop.permute.xlu0 %10378
    %10380 = vrot.lane.b32.xlu0 %v114, 32
    %v10381 = vpop.permute.xlu0 %10380
    %10382 = vrot.lane.b32.xlu0 %v115, 32
    %v10383 = vpop.permute.xlu0 %10382
    %10384 = vrot.lane.b32.xlu0 %v116, 32
    %v10385 = vpop.permute.xlu0 %10384
    %10386 = vrot.lane.b32.xlu0 %v117, 32
    %v10387 = vpop.permute.xlu0 %10386
    %10388 = vrot.lane.b32.xlu0 %v118, 32
    %v10389 = vpop.permute.xlu0 %10388
    %10390 = vrot.lane.b32.xlu0 %v119, 32
    %v10391 = vpop.permute.xlu0 %10390
    %10456 = vrot.lane.b32.xlu0 %v10296, 56
    %v10457 = vpop.permute.xlu0 %10456
    %10458 = vrot.lane.b32.xlu0 %v10297, 56
    %v10459 = vpop.permute.xlu0 %10458
    %10460 = vrot.lane.b32.xlu0 %v10298, 56
    %v10461 = vpop.permute.xlu0 %10460
    %10462 = vrot.lane.b32.xlu0 %v10299, 56
    %v10463 = vpop.permute.xlu0 %10462
    %10464 = vrot.lane.b32.xlu0 %v10300, 56
    %v10465 = vpop.permute.xlu0 %10464
    %10466 = vrot.lane.b32.xlu0 %v10301, 56
    %v10467 = vpop.permute.xlu0 %10466
    %10468 = vrot.lane.b32.xlu0 %v10302, 56
    %v10469 = vpop.permute.xlu0 %10468
    %10470 = vrot.lane.b32.xlu0 %v10303, 56
    %v10471 = vpop.permute.xlu0 %10470
    %10472 = vrot.lane.b32.xlu0 %v10304, 56
    %v10473 = vpop.permute.xlu0 %10472
    %10474 = vrot.lane.b32.xlu0 %v10305, 56
    %v10475 = vpop.permute.xlu0 %10474
    %10476 = vrot.lane.b32.xlu0 %v10306, 56
    %v10477 = vpop.permute.xlu0 %10476
    %10478 = vrot.lane.b32.xlu0 %v10307, 56
    %v10479 = vpop.permute.xlu0 %10478
    %10480 = vrot.lane.b32.xlu0 %v10308, 56
    %v10481 = vpop.permute.xlu0 %10480
    %10482 = vrot.lane.b32.xlu0 %v10309, 56
    %v10483 = vpop.permute.xlu0 %10482
    %10484 = vrot.lane.b32.xlu0 %v10310, 56
    %v10485 = vpop.permute.xlu0 %10484
    %10486 = vrot.lane.b32.xlu0 %v10311, 56
    %v10487 = vpop.permute.xlu0 %10486
    %10488 = vrot.lane.b32.xlu0 %v10312, 56
    %v10489 = vpop.permute.xlu0 %10488
    %10490 = vrot.lane.b32.xlu0 %v10313, 56
    %v10491 = vpop.permute.xlu0 %10490
    %10492 = vrot.lane.b32.xlu0 %v10314, 56
    %v10493 = vpop.permute.xlu0 %10492
    %10494 = vrot.lane.b32.xlu0 %v10315, 56
    %v10495 = vpop.permute.xlu0 %10494
    %10496 = vrot.lane.b32.xlu0 %v10316, 56
    %v10497 = vpop.permute.xlu0 %10496
    %10498 = vrot.lane.b32.xlu0 %v10317, 56
    %v10499 = vpop.permute.xlu0 %10498
    %10500 = vrot.lane.b32.xlu0 %v10318, 56
    %v10501 = vpop.permute.xlu0 %10500
    %10502 = vrot.lane.b32.xlu0 %v10319, 56
    %v10503 = vpop.permute.xlu0 %10502
    %10504 = vrot.lane.b32.xlu0 %v10320, 56
    %v10505 = vpop.permute.xlu0 %10504
    %10506 = vrot.lane.b32.xlu0 %v10321, 56
    %v10507 = vpop.permute.xlu0 %10506
    %10508 = vrot.lane.b32.xlu0 %v10322, 56
    %v10509 = vpop.permute.xlu0 %10508
    %10510 = vrot.lane.b32.xlu0 %v10323, 56
    %v10511 = vpop.permute.xlu0 %10510
    %10512 = vrot.lane.b32.xlu0 %v10324, 56
    %v10513 = vpop.permute.xlu0 %10512
    %10514 = vrot.lane.b32.xlu0 %v10325, 56
    %v10515 = vpop.permute.xlu0 %10514
    %10516 = vrot.lane.b32.xlu0 %v10326, 56
    %v10517 = vpop.permute.xlu0 %10516
    %10518 = vrot.lane.b32.xlu0 %v10327, 56
    %v10519 = vpop.permute.xlu0 %10518
    %v10552 = vsel %vm2537, %v10264, %v10329
    %v10553 = vsel %vm2537, %v10265, %v10331
    %v10554 = vsel %vm2537, %v10266, %v10333
    %v10555 = vsel %vm2537, %v10267, %v10335
    %v10556 = vsel %vm2537, %v10268, %v10337
    %v10557 = vsel %vm2537, %v10269, %v10339
    %v10558 = vsel %vm2537, %v10270, %v10341
    %v10559 = vsel %vm2537, %v10271, %v10343
    %v10560 = vsel %vm2537, %v10272, %v10345
    %v10561 = vsel %vm2537, %v10273, %v10347
    %v10562 = vsel %vm2537, %v10274, %v10349
    %v10563 = vsel %vm2537, %v10275, %v10351
    %v10564 = vsel %vm2537, %v10276, %v10353
    %v10565 = vsel %vm2537, %v10277, %v10355
    %v10566 = vsel %vm2537, %v10278, %v10357
    %v10567 = vsel %vm2537, %v10279, %v10359
    %v10568 = vsel %vm2537, %v10280, %v10361
    %v10569 = vsel %vm2537, %v10281, %v10363
    %v10570 = vsel %vm2537, %v10282, %v10365
    %v10571 = vsel %vm2537, %v10283, %v10367
    %v10572 = vsel %vm2537, %v10284, %v10369
    %v10573 = vsel %vm2537, %v10285, %v10371
    %v10574 = vsel %vm2537, %v10286, %v10373
    %v10575 = vsel %vm2537, %v10287, %v10375
    %v10576 = vsel %vm2537, %v10288, %v10377
    %v10577 = vsel %vm2537, %v10289, %v10379
    %v10578 = vsel %vm2537, %v10290, %v10381
    %v10579 = vsel %vm2537, %v10291, %v10383
    %v10580 = vsel %vm2537, %v10292, %v10385
    %v10581 = vsel %vm2537, %v10293, %v10387
    %v10582 = vsel %vm2537, %v10294, %v10389
    %v10583 = vsel %vm2537, %v10295, %v10391
    %vm10584 = vcmask 457728
    %v10585 = vsel %vm10584, %v10552, %v10457
    %v10586 = vsel %vm10584, %v10553, %v10459
    %v10587 = vsel %vm10584, %v10554, %v10461
    %v10588 = vsel %vm10584, %v10555, %v10463
    %v10589 = vsel %vm10584, %v10556, %v10465
    %v10590 = vsel %vm10584, %v10557, %v10467
    %v10591 = vsel %vm10584, %v10558, %v10469
    %v10592 = vsel %vm10584, %v10559, %v10471
    %v10593 = vsel %vm10584, %v10560, %v10473
    %v10594 = vsel %vm10584, %v10561, %v10475
    %v10595 = vsel %vm10584, %v10562, %v10477
    %v10596 = vsel %vm10584, %v10563, %v10479
    %v10597 = vsel %vm10584, %v10564, %v10481
    %v10598 = vsel %vm10584, %v10565, %v10483
    %v10599 = vsel %vm10584, %v10566, %v10485
    %v10600 = vsel %vm10584, %v10567, %v10487
    %v10601 = vsel %vm10584, %v10568, %v10489
    %v10602 = vsel %vm10584, %v10569, %v10491
    %v10603 = vsel %vm10584, %v10570, %v10493
    %v10604 = vsel %vm10584, %v10571, %v10495
    %v10605 = vsel %vm10584, %v10572, %v10497
    %v10606 = vsel %vm10584, %v10573, %v10499
    %v10607 = vsel %vm10584, %v10574, %v10501
    %v10608 = vsel %vm10584, %v10575, %v10503
    %v10609 = vsel %vm10584, %v10576, %v10505
    %v10610 = vsel %vm10584, %v10577, %v10507
    %v10611 = vsel %vm10584, %v10578, %v10509
    %v10612 = vsel %vm10584, %v10579, %v10511
    %v10613 = vsel %vm10584, %v10580, %v10513
    %v10614 = vsel %vm10584, %v10581, %v10515
    %v10615 = vsel %vm10584, %v10582, %v10517
    %v10616 = vsel %vm10584, %v10583, %v10519
    %v10617 = vld [vmem:[%s14] sm:$0x1]
    %v10618 = vld [vmem:[#allocation2] sm:$0x1]
    %10620 = vset.pattern.permute.xlu0 0
    %10621 = vperm.xlu0 %10620, %v10618
    %v10622 = vpop.permute.xlu0 %10621
    %v10624 = vlaneseq
    %v10625 = vshrl.u32 %v10624, 7
    %v10626 = vsub.s32 0, %v10625
    %v10627 = vrot.slane %v10622, %v10626
    %vm10628 = vcmask 490496
    %v10630 = vsel %vm10628, %v10617, 0
    %v10633 = vsel %vm10628, %v10585, 0
    %v10636 = vsel %vm10628, %v10586, 0
    %v10639 = vsel %vm10628, %v10587, 0
    %v10642 = vsel %vm10628, %v10588, 0
    %v10645 = vsel %vm10628, %v10589, 0
    %v10648 = vsel %vm10628, %v10590, 0
    %v10651 = vsel %vm10628, %v10591, 0
    %v10654 = vsel %vm10628, %v10592, 0
    %v10657 = vsel %vm10628, %v10593, 0
    %v10660 = vsel %vm10628, %v10594, 0
    %v10663 = vsel %vm10628, %v10595, 0
    %v10666 = vsel %vm10628, %v10596, 0
    %v10669 = vsel %vm10628, %v10597, 0
    %v10672 = vsel %vm10628, %v10598, 0
    %v10675 = vsel %vm10628, %v10599, 0
    %v10678 = vsel %vm10628, %v10600, 0
    %v10681 = vsel %vm10628, %v10601, 0
    %v10684 = vsel %vm10628, %v10602, 0
    %v10687 = vsel %vm10628, %v10603, 0
    %v10690 = vsel %vm10628, %v10604, 0
    %v10693 = vsel %vm10628, %v10605, 0
    %v10696 = vsel %vm10628, %v10606, 0
    %v10699 = vsel %vm10628, %v10607, 0
    %v10702 = vsel %vm10628, %v10608, 0
    %v10705 = vsel %vm10628, %v10609, 0
    %v10708 = vsel %vm10628, %v10610, 0
    %v10711 = vsel %vm10628, %v10611, 0
    %v10714 = vsel %vm10628, %v10612, 0
    %v10717 = vsel %vm10628, %v10613, 0
    %v10720 = vsel %vm10628, %v10614, 0
    %v10723 = vsel %vm10628, %v10615, 0
    %v10726 = vsel %vm10628, %v10616, 0
    %10728 = vmatprep.subr.mxu0 0.0
    %10729 = vmatpush1.xpose.msra.mxu0 %v10678
    %10730 = vmatprep.subr.mxu0 0.0
    %10731 = vmatpush1.xpose.msra.mxu0 %v10675
    %10732 = vmatprep.subr.mxu0 0.0
    %10733 = vmatpush1.xpose.msra.mxu0 %v10672
    %10734 = vmatprep.subr.mxu0 0.0
    %10735 = vmatpush1.xpose.msra.mxu0 %v10669
    %10736 = vmatprep.subr.mxu0 0.0
    %10737 = vmatpush1.xpose.msra.mxu0 %v10666
    %10738 = vmatprep.subr.mxu0 0.0
    %10739 = vmatpush1.xpose.msra.mxu0 %v10663
    %10740 = vmatprep.subr.mxu0 0.0
    %10741 = vmatpush1.xpose.msra.mxu0 %v10660
    %10742 = vmatprep.subr.mxu0 0.0
    %10743 = vmatpush1.xpose.msra.mxu0 %v10657
    %10744 = vmatprep.subr.mxu0 0.0
    %10745 = vmatpush1.xpose.msra.mxu0 %v10654
    %10746 = vmatprep.subr.mxu0 0.0
    %10747 = vmatpush1.xpose.msra.mxu0 %v10651
    %10748 = vmatprep.subr.mxu0 0.0
    %10749 = vmatpush1.xpose.msra.mxu0 %v10648
    %10750 = vmatprep.subr.mxu0 0.0
    %10751 = vmatpush1.xpose.msra.mxu0 %v10645
    %10752 = vmatprep.subr.mxu0 0.0
    %10753 = vmatpush1.xpose.msra.mxu0 %v10642
    %10754 = vmatprep.subr.mxu0 0.0
    %10755 = vmatpush1.xpose.msra.mxu0 %v10639
    %10756 = vmatprep.subr.mxu0 0.0
    %10757 = vmatpush1.xpose.msra.mxu0 %v10636
    %10758 = vmatprep.subr.mxu0 0.0
    %10759 = vmatpush1.xpose.msra.mxu0 %v10633
    %10760 = vmatprep.subr.mxu0 0.0
    %10761 = vmatpush2.xpose.msra.mxu0 %v10726
    %10762 = vmatprep.subr.mxu0 0.0
    %10763 = vmatpush2.xpose.msra.mxu0 %v10723
    %10764 = vmatprep.subr.mxu0 0.0
    %10765 = vmatpush2.xpose.msra.mxu0 %v10720
    %10766 = vmatprep.subr.mxu0 0.0
    %10767 = vmatpush2.xpose.msra.mxu0 %v10717
    %10768 = vmatprep.subr.mxu0 0.0
    %10769 = vmatpush2.xpose.msra.mxu0 %v10714
    %10770 = vmatprep.subr.mxu0 0.0
    %10771 = vmatpush2.xpose.msra.mxu0 %v10711
    %10772 = vmatprep.subr.mxu0 0.0
    %10773 = vmatpush2.xpose.msra.mxu0 %v10708
    %10774 = vmatprep.subr.mxu0 0.0
    %10775 = vmatpush2.xpose.msra.mxu0 %v10705
    %10776 = vmatprep.subr.mxu0 0.0
    %10777 = vmatpush2.xpose.msra.mxu0 %v10702
    %10778 = vmatprep.subr.mxu0 0.0
    %10779 = vmatpush2.xpose.msra.mxu0 %v10699
    %10780 = vmatprep.subr.mxu0 0.0
    %10781 = vmatpush2.xpose.msra.mxu0 %v10696
    %10782 = vmatprep.subr.mxu0 0.0
    %10783 = vmatpush2.xpose.msra.mxu0 %v10693
    %10784 = vmatprep.subr.mxu0 0.0
    %10785 = vmatpush2.xpose.msra.mxu0 %v10690
    %10786 = vmatprep.subr.mxu0 0.0
    %10787 = vmatpush2.xpose.msra.mxu0 %v10687
    %10788 = vmatprep.subr.mxu0 0.0
    %10789 = vmatpush2.xpose.msra.mxu0 %v10684
    %10790 = vmatprep.subr.mxu0 0.0
    %10791 = vmatpush2.xpose.msra.mxu0 %v10681
    %10792 = vmatprep.mubr.f32.mxu0 0.0
    %10793 = vmatmul.mubr.f32.gmra.mxu0 %v10630
    %v10794 = vpop.f32.mrf.mxu0
    %v10795 = vadd.f32 %v10627, %v10794
    %v10796 = vpop.f32.mrf.mxu0
    %v10797 = vadd.f32 %v10627, %v10796
    %10798 = vdwg.mxu0
    %v10801 = vcombine.low %v10795, %v10797
    %v10803 = vunpack.c.l.s4 1966171168
    %v10804 = vunpack.c.0.s8 %v10803
    %v10805 = vlaneseq
    %v10806 = vshrl.u32 %v10805, 7
    %v10807 = vsub.s32 %v10804, %v10806
    %v10808 = vrot.slane %v10801, %v10807
    %v10810 = vunpack.c.l.s4 1966171168
    %v10811 = vunpack.c.0.s8 %v10810
    %v10812 = vlaneseq
    %v10813 = vshrl.u32 %v10812, 7
    %v10814 = vsub.s32 %v10811, %v10813
    %v10815 = vrot.slane %v10808, %v10814
    %v10817 = vlaneseq
    %vm10818 = vcmp.ge.s32.totalorder %v10817, 0
    %vm10819 = vcmp.lt.s32.totalorder %v10817, 256
    %vm10820 = vmand %vm10818, %vm10819
    %10821 = vst.msk [vmem:[#allocation3] sm:$0x3] %vm10820, %v10815
    // Predicated region
    $region66: #{tpu_custom_call.1} parent=1 // pred_check
      _
    $region67: #{tpu_custom_call.1} parent=1 // pred_check_branch
      %10823 = sbr.rel (0) target = $region69
    $region68: #{tpu_custom_call.1} parent=1 // pred_region
      %s10825 = ssub.s32 32, 32
      %10826 = vsyncadd [#allocation4], %s10825
      %s10828 = sshll.u32 [#allocation3], 4
      %s10829 = int_to_ptr.vmem [resolvable:$true] %s10828
      %10831 = dma.vmem_to_hbm [thread:$0]  %s10829, 32, %s16, [#allocation4]
    $region69: #{tpu_custom_call.1} parent=1 // pred_fallthru
      _
    // Predicated region
    $region70: #{tpu_custom_call.1} parent=1 // pred_check
      _
    $region71: #{tpu_custom_call.1} parent=1 // pred_check_branch
      %10833 = sbr.rel (0) target = $region73
    $region72: #{tpu_custom_call.1} parent=1 // pred_region
      %10834 = dma.done [#allocation4], 32
    $region73: #{tpu_custom_call.1} parent=1 // pred_fallthru
      _
    %10835 = vsyncpa [#allocation4], 1

</llo_original>
